<compile_context>
chip_gen: v7x
topology: tpu7x:2x2x1
jax: 0.10.0
libtpu: 0.0.40
codegen_flags: <defaults>
</compile_context>

<pallas_src>
import functools
import math

import numpy as np
import jax
import jax.numpy as jnp
from jax.experimental import pallas as pl
from jax.experimental.pallas import tpu as pltpu

# ----------------------------- config (small) -----------------------------
INPUT_SIZE = 32                              # token vocab; cls_token = INPUT_SIZE
VOCAB_SIZE = INPUT_SIZE + 1
N_HEADS = 4
HIDDEN = (32 // N_HEADS) * N_HEADS           # = 32
HEAD_DIM = HIDDEN // N_HEADS                 # = 8
N_LAYERS = 2
INTERMEDIATE = 64
MAX_SEQ_LEN = 16
OUT_SIZE = 4                                 # len(labels_to_int)
SEQ_LEN = 8
BATCH = 2
LN_EPS = 1e-12
ATTN_SCALE = 1.0 / math.sqrt(HEAD_DIM)

# ---- packed table 'tab' (lane width = HIDDEN) row layout -------------------
PAD_VOCAB = 40                                # 33 -> 40 (sublane-aligned)
TAB_WORD = 0                                  # rows [0, 40): word embeddings
TAB_POS = PAD_VOCAB                           # rows [40, 56): pos_emb + type_emb
TAB_EMB_G = TAB_POS + MAX_SEQ_LEN             # 56: embedding LN gamma
TAB_EMB_B = TAB_EMB_G + 1                     # 57: embedding LN beta
TAB_CLS_W = 64                                # rows [64, 96): classifier W (cols 0:4)
TAB_CLS_B = TAB_CLS_W + HIDDEN                # 96: classifier bias (cols 0:4)
TAB_ROWS = 104

# ---- per-layer vector slab 'lvec' (lane width = INTERMEDIATE) row layout ----
LV_AO_B, LV_LN1_G, LV_LN1_B, LV_I_B, LV_O_B, LV_LN2_G, LV_LN2_B = range(7)
LV_BQ = 8                                     # rows [8, 12):  per-head q bias (scaled)
LV_BK = LV_BQ + N_HEADS                       # rows [12, 16): per-head k bias
LV_BV = LV_BK + N_HEADS                       # rows [16, 20): per-head v bias
LV_ROWS = 24


# ----------------------------- kernel helpers ------------------------------
def _layernorm(x, g, b):
    mu = jnp.mean(x, axis=-1, keepdims=True)
    xc = x - mu
    var = jnp.mean(xc * xc, axis=-1, keepdims=True)
    return xc * jax.lax.rsqrt(var + LN_EPS) * g + b


def _softmax_attn(x):
    # max-stabilized; divide moved to the otherwise-idle EUP slot (review item)
    x = x - jnp.max(x, axis=-1, keepdims=True)
    e = jnp.exp(x)
    return e * pl.reciprocal(jnp.sum(e, axis=-1, keepdims=True), approx=True)


def _softmax_exact(x):
    # exact divide for the classifier so output rows sum to 1 exactly (f32)
    x = x - jnp.max(x, axis=-1, keepdims=True)
    e = jnp.exp(x)
    return e / jnp.sum(e, axis=-1, keepdims=True)


# ----------------------------- fused kernel --------------------------------
def _bert_fused_kernel(batch, seq,
                       ids_ref, tab_ref, wqkv_ref, wao_ref, wffn_ref, lvec_ref,
                       probs_ref):
    f32 = jnp.float32
    bs = batch * seq

    # ---- embeddings: one-hot(ids) @ word_emb + (pos+type) table, then LN ----
    ids = ids_ref[...]                                               # (bs, 1) int32
    iota = jax.lax.broadcasted_iota(jnp.int32, (bs, PAD_VOCAB), 1)
    onehot = (iota == ids).astype(f32)                               # (bs, PAD_VOCAB)
    word = jnp.dot(onehot, tab_ref[TAB_WORD:TAB_WORD + PAD_VOCAB, :],
                   preferred_element_type=f32)                       # (bs, H)
    pos_type = tab_ref[TAB_POS:TAB_POS + seq, :]                     # (seq, H)
    # broadcast add on a (B, S, H) view — no replicated concat
    emb = (word.reshape(batch, seq, HIDDEN) + pos_type[None, :, :]).reshape(bs, HIDDEN)
    h = _layernorm(emb, tab_ref[TAB_EMB_G:TAB_EMB_G + 1, :],
                   tab_ref[TAB_EMB_B:TAB_EMB_B + 1, :])

    # ---- encoder layers (static unroll) ----
    for l in range(N_LAYERS):
        # attention: per-head weight blocks, batched dot_general over batch,
        # per-head accumulation into the output projection (no slices/concats)
        attn = jnp.zeros((bs, HIDDEN), f32)
        for n in range(N_HEADS):
            bq = lvec_ref[l, LV_BQ + n:LV_BQ + n + 1, 0:HEAD_DIM]    # (1, HD)
            bk = lvec_ref[l, LV_BK + n:LV_BK + n + 1, 0:HEAD_DIM]
            bv = lvec_ref[l, LV_BV + n:LV_BV + n + 1, 0:HEAD_DIM]
            q = jnp.dot(h, wqkv_ref[l, 0, n], preferred_element_type=f32) + bq
            k = jnp.dot(h, wqkv_ref[l, 1, n], preferred_element_type=f32) + bk
            v = jnp.dot(h, wqkv_ref[l, 2, n], preferred_element_type=f32) + bv
            q3 = q.reshape(batch, seq, HEAD_DIM)                     # tile-aligned split
            k3 = k.reshape(batch, seq, HEAD_DIM)
            v3 = v.reshape(batch, seq, HEAD_DIM)
            # scores: (B, S, S); ATTN_SCALE already folded into wq / bq at init
            s = jax.lax.dot_general(q3, k3, (((2,), (2,)), ((0,), (0,))),
                                    preferred_element_type=f32)
            p = _softmax_attn(s)
            ctx = jax.lax.dot_general(p, v3, (((2,), (1,)), ((0,), (0,))),
                                      preferred_element_type=f32)    # (B, S, HD)
            attn = attn + jnp.dot(ctx.reshape(bs, HEAD_DIM), wao_ref[l, n],
                                  preferred_element_type=f32)        # (bs, H)
        attn = attn + lvec_ref[l, LV_AO_B:LV_AO_B + 1, 0:HIDDEN]
        h = _layernorm(attn + h,
                       lvec_ref[l, LV_LN1_G:LV_LN1_G + 1, 0:HIDDEN],
                       lvec_ref[l, LV_LN1_B:LV_LN1_B + 1, 0:HIDDEN])

        # FFN: intermediate (relu) + output dense + residual + LN
        inter = (jnp.dot(h, wffn_ref[l, 0:HIDDEN, :], preferred_element_type=f32)
                 + lvec_ref[l, LV_I_B:LV_I_B + 1, 0:INTERMEDIATE])
        inter = jnp.maximum(inter, 0.0)                              # hidden_act='relu'
        ffn = (jnp.dot(inter, wffn_ref[l, HIDDEN:HIDDEN + INTERMEDIATE, 0:HIDDEN],
                       preferred_element_type=f32)
               + lvec_ref[l, LV_O_B:LV_O_B + 1, 0:HIDDEN])
        h = _layernorm(ffn + h,
                       lvec_ref[l, LV_LN2_G:LV_LN2_G + 1, 0:HIDDEN],
                       lvec_ref[l, LV_LN2_B:LV_LN2_B + 1, 0:HIDDEN])

    # ---- classifier on all positions (position 0 selected in the wrapper;
    #      avoids an in-kernel cross-tile row gather and costs nothing here) ----
    logits = (jnp.dot(h, tab_ref[TAB_CLS_W:TAB_CLS_W + HIDDEN, :],
                      preferred_element_type=f32)
              + tab_ref[TAB_CLS_B:TAB_CLS_B + 1, :])                 # (bs, H) padded
    probs_ref[...] = _softmax_exact(logits[:, 0:OUT_SIZE])           # (bs, OUT_SIZE)


# ----------------------------- model wrapper -------------------------------
@jax.jit
def bert_forward(x_tokens, params):
    """x_tokens: (seq_len, batch) int32 token ids.  y=None inference path."""
    S, B = x_tokens.shape
    # like x.permute(1, 0) then flatten: row index = b*S + s
    ids = x_tokens.T.reshape(B * S, 1).astype(jnp.int32)

    kernel = functools.partial(_bert_fused_kernel, B, S)
    vmem = lambda: pl.BlockSpec(memory_space=pltpu.MemorySpace.VMEM)
    probs_all = pl.pallas_call(
        kernel,
        out_shape=jax.ShapeDtypeStruct((B * S, OUT_SIZE), jnp.float32),
        in_specs=[vmem() for _ in range(6)],
        out_specs=vmem(),
    )(ids, params["tab"], params["w_qkv"], params["w_ao"],
      params["w_ffn"], params["lvec"])

    probs = probs_all.reshape(B, S, OUT_SIZE)[:, 0, :]               # position 0
    predicted_labels = jnp.argmax(probs, axis=-1)                    # (B,)
    # TODO(synk): CrossEntropyLoss branch (y is not None) not exercised here.
    return predicted_labels, probs


# ----------------------------- parameter init ------------------------------
def init_params(key):
    def nrm(k, shape, scale=0.02):
        return np.asarray(scale * jax.random.normal(k, shape), dtype=np.float32)

    keys = iter(jax.random.split(key, 4 + 6 * N_LAYERS))

    word_emb = nrm(next(keys), (VOCAB_SIZE, HIDDEN))
    pos_emb = nrm(next(keys), (MAX_SEQ_LEN, HIDDEN))
    type_emb = nrm(next(keys), (1, HIDDEN))
    cls_w = nrm(next(keys), (HIDDEN, OUT_SIZE))

    # ---- non-per-layer table (word | pos+type | emb-LN | classifier) ----
    tab = np.zeros((TAB_ROWS, HIDDEN), np.float32)
    tab[TAB_WORD:TAB_WORD + VOCAB_SIZE] = word_emb
    tab[TAB_POS:TAB_POS + MAX_SEQ_LEN] = pos_emb + type_emb          # pre-folded
    tab[TAB_EMB_G] = 1.0                                             # emb LN gamma
    tab[TAB_EMB_B] = 0.0                                             # emb LN beta
    tab[TAB_CLS_W:TAB_CLS_W + HIDDEN, 0:OUT_SIZE] = cls_w
    tab[TAB_CLS_B, 0:OUT_SIZE] = 0.0                                 # classifier bias

    # ---- per-layer packed slabs ----
    w_qkv = np.zeros((N_LAYERS, 3, N_HEADS, HIDDEN, HEAD_DIM), np.float32)
    w_ao = np.zeros((N_LAYERS, N_HEADS, HEAD_DIM, HIDDEN), np.float32)
    w_ffn = np.zeros((N_LAYERS, HIDDEN + INTERMEDIATE, INTERMEDIATE), np.float32)
    lvec = np.zeros((N_LAYERS, LV_ROWS, INTERMEDIATE), np.float32)

    def per_head_cols(w):    # (HIDDEN, HIDDEN) -> (NH, HIDDEN, HD) column blocks
        return np.transpose(w.reshape(HIDDEN, N_HEADS, HEAD_DIM), (1, 0, 2))

    for l in range(N_LAYERS):
        wq = nrm(next(keys), (HIDDEN, HIDDEN))
        wk = nrm(next(keys), (HIDDEN, HIDDEN))
        wv = nrm(next(keys), (HIDDEN, HIDDEN))
        ao = nrm(next(keys), (HIDDEN, HIDDEN))
        iw = nrm(next(keys), (HIDDEN, INTERMEDIATE))
        ow = nrm(next(keys), (INTERMEDIATE, HIDDEN))
        bq = np.zeros((HIDDEN,), np.float32)          # BERT has Q/K/V biases;
        bk = np.zeros((HIDDEN,), np.float32)          # zero-initialized here
        bv = np.zeros((HIDDEN,), np.float32)

        w_qkv[l, 0] = per_head_cols(wq) * ATTN_SCALE  # scale folded into Q
        w_qkv[l, 1] = per_head_cols(wk)
        w_qkv[l, 2] = per_head_cols(wv)
        w_ao[l] = ao.reshape(N_HEADS, HEAD_DIM, HIDDEN)
        w_ffn[l, 0:HIDDEN, :] = iw
        w_ffn[l, HIDDEN:HIDDEN + INTERMEDIATE, 0:HIDDEN] = ow

        lvec[l, LV_AO_B, 0:HIDDEN] = 0.0              # attention-output bias
        lvec[l, LV_LN1_G, 0:HIDDEN] = 1.0
        lvec[l, LV_LN1_B, 0:HIDDEN] = 0.0
        lvec[l, LV_I_B, 0:INTERMEDIATE] = 0.0
        lvec[l, LV_O_B, 0:HIDDEN] = 0.0
        lvec[l, LV_LN2_G, 0:HIDDEN] = 1.0
        lvec[l, LV_LN2_B, 0:HIDDEN] = 0.0
        lvec[l, LV_BQ:LV_BQ + N_HEADS, 0:HEAD_DIM] = (bq * ATTN_SCALE).reshape(N_HEADS, HEAD_DIM)
        lvec[l, LV_BK:LV_BK + N_HEADS, 0:HEAD_DIM] = bk.reshape(N_HEADS, HEAD_DIM)
        lvec[l, LV_BV:LV_BV + N_HEADS, 0:HEAD_DIM] = bv.reshape(N_HEADS, HEAD_DIM)

    return {
        "tab": jnp.asarray(tab),
        "w_qkv": jnp.asarray(w_qkv),
        "w_ao": jnp.asarray(w_ao),
        "w_ffn": jnp.asarray(w_ffn),
        "lvec": jnp.asarray(lvec),
    }


# ----------------------------- main ----------------------------------------
if __name__ == "__main__":
    root = jax.random.PRNGKey(0)
    k_param, k_data = jax.random.split(root)

    params = init_params(k_param)
    x = jax.random.randint(k_data, (SEQ_LEN, BATCH), 0, INPUT_SIZE, dtype=jnp.int32)

    predicted_labels, probs = bert_forward(x, params)
    predicted_labels = jax.block_until_ready(predicted_labels)
    probs = jax.block_until_ready(probs)

    assert predicted_labels.shape == (BATCH,)
    assert probs.shape == (BATCH, OUT_SIZE)
    assert bool(jnp.all(jnp.isfinite(probs)))
    assert bool(jnp.allclose(jnp.sum(probs, axis=-1), 1.0, atol=1e-5))
    print("KERNEL_OK")
</pallas_src>

<mosaic_0001>
module attributes {stable_mosaic.version = 11 : i64} {
  func.func @_bert_fused_kernel(%arg0: memref<16x1xi32, #tpu.memory_space<vmem>>, %arg1: memref<104x32xf32, #tpu.memory_space<vmem>>, %arg2: memref<2x3x4x32x8xf32, #tpu.memory_space<vmem>>, %arg3: memref<2x4x8x32xf32, #tpu.memory_space<vmem>>, %arg4: memref<2x96x64xf32, #tpu.memory_space<vmem>>, %arg5: memref<2x24x64xf32, #tpu.memory_space<vmem>>, %arg6: memref<16x4xf32, #tpu.memory_space<vmem>>) attributes {dimension_semantics = [], scalar_prefetch = 0 : i64, scratch_operands = 0 : i64, tpu.core_type = #tpu.core_type<tc>} {
    %c0 = arith.constant 0 : index
    %c0_0 = arith.constant 0 : index
    %0 = vector.load %arg0[%c0, %c0_0] : memref<16x1xi32, #tpu.memory_space<vmem>>, vector<16x1xi32>
    %1 = tpu.iota {dimensions = array<i32: 1>} : vector<16x40xi32>
    %2 = vector.broadcast %0 : vector<16x1xi32> to vector<16x40xi32>
    %3 = arith.cmpi eq, %1, %2 : vector<16x40xi32>
    %4 = arith.extui %3 : vector<16x40xi1> to vector<16x40xi32>
    %5 = arith.sitofp %4 : vector<16x40xi32> to vector<16x40xf32>
    %c0_1 = arith.constant 0 : index
    %c0_2 = arith.constant 0 : index
    %6 = vector.load %arg1[%c0_1, %c0_2] : memref<104x32xf32, #tpu.memory_space<vmem>>, vector<40x32xf32>
    %cst = arith.constant dense<0.000000e+00> : vector<16x32xf32>
    %7 = tpu.matmul %5, %6, %cst {dimension_numbers = #tpu.dot_dimension_numbers<[1], [0], [0], [1], [0, 0, 1, 1], [], []>} : vector<16x40xf32>, vector<40x32xf32>, vector<16x32xf32> -> vector<16x32xf32>
    %c40 = arith.constant 40 : index
    %c0_3 = arith.constant 0 : index
    %8 = vector.load %arg1[%c40, %c0_3] : memref<104x32xf32, #tpu.memory_space<vmem>>, vector<8x32xf32>
    %9 = vector.shape_cast %7 : vector<16x32xf32> to vector<2x8x32xf32>
    %10 = vector.shape_cast %8 : vector<8x32xf32> to vector<1x8x32xf32>
    %11 = vector.broadcast %10 : vector<1x8x32xf32> to vector<2x8x32xf32>
    %12 = arith.addf %9, %11 : vector<2x8x32xf32>
    %13 = vector.shape_cast %12 : vector<2x8x32xf32> to vector<16x32xf32>
    %c56 = arith.constant 56 : index
    %c0_4 = arith.constant 0 : index
    %14 = vector.load %arg1[%c56, %c0_4] : memref<104x32xf32, #tpu.memory_space<vmem>>, vector<1x32xf32>
    %c57 = arith.constant 57 : index
    %c0_5 = arith.constant 0 : index
    %15 = vector.load %arg1[%c57, %c0_5] : memref<104x32xf32, #tpu.memory_space<vmem>>, vector<1x32xf32>
    %cst_6 = arith.constant dense<0.000000e+00> : vector<16xf32>
    %16 = vector.multi_reduction <add>, %13, %cst_6 [1] : vector<16x32xf32> to vector<16xf32>
    %17 = vector.shape_cast %16 : vector<16xf32> to vector<16x1xf32>
    %cst_7 = arith.constant 3.200000e+01 : f32
    %18 = vector.broadcast %cst_7 : f32 to vector<16x1xf32>
    %19 = arith.divf %17, %18 : vector<16x1xf32>
    %20 = vector.broadcast %19 : vector<16x1xf32> to vector<16x32xf32>
    %21 = arith.subf %13, %20 : vector<16x32xf32>
    %22 = arith.mulf %21, %21 : vector<16x32xf32>
    %cst_8 = arith.constant dense<0.000000e+00> : vector<16xf32>
    %23 = vector.multi_reduction <add>, %22, %cst_8 [1] : vector<16x32xf32> to vector<16xf32>
    %24 = vector.shape_cast %23 : vector<16xf32> to vector<16x1xf32>
    %cst_9 = arith.constant 3.200000e+01 : f32
    %25 = vector.broadcast %cst_9 : f32 to vector<16x1xf32>
    %26 = arith.divf %24, %25 : vector<16x1xf32>
    %cst_10 = arith.constant 9.99999996E-13 : f32
    %27 = vector.broadcast %cst_10 : f32 to vector<16x1xf32>
    %28 = arith.addf %26, %27 : vector<16x1xf32>
    %29 = math.rsqrt %28 : vector<16x1xf32>
    %30 = vector.broadcast %29 : vector<16x1xf32> to vector<16x32xf32>
    %31 = arith.mulf %21, %30 : vector<16x32xf32>
    %32 = vector.broadcast %14 : vector<1x32xf32> to vector<16x32xf32>
    %33 = arith.mulf %31, %32 : vector<16x32xf32>
    %34 = vector.broadcast %15 : vector<1x32xf32> to vector<16x32xf32>
    %35 = arith.addf %33, %34 : vector<16x32xf32>
    %cst_11 = arith.constant 0.000000e+00 : f32
    %36 = vector.broadcast %cst_11 : f32 to vector<16x32xf32>
    %c0_12 = arith.constant 0 : index
    %c8 = arith.constant 8 : index
    %c0_13 = arith.constant 0 : index
    %37 = vector.load %arg5[%c0_12, %c8, %c0_13] : memref<2x24x64xf32, #tpu.memory_space<vmem>>, vector<1x1x8xf32>
    %38 = vector.shape_cast %37 : vector<1x1x8xf32> to vector<1x8xf32>
    %c0_14 = arith.constant 0 : index
    %c12 = arith.constant 12 : index
    %c0_15 = arith.constant 0 : index
    %39 = vector.load %arg5[%c0_14, %c12, %c0_15] : memref<2x24x64xf32, #tpu.memory_space<vmem>>, vector<1x1x8xf32>
    %40 = vector.shape_cast %39 : vector<1x1x8xf32> to vector<1x8xf32>
    %c0_16 = arith.constant 0 : index
    %c16 = arith.constant 16 : index
    %c0_17 = arith.constant 0 : index
    %41 = vector.load %arg5[%c0_16, %c16, %c0_17] : memref<2x24x64xf32, #tpu.memory_space<vmem>>, vector<1x1x8xf32>
    %42 = vector.shape_cast %41 : vector<1x1x8xf32> to vector<1x8xf32>
    %c0_18 = arith.constant 0 : index
    %c0_19 = arith.constant 0 : index
    %c0_20 = arith.constant 0 : index
    %c0_21 = arith.constant 0 : index
    %c0_22 = arith.constant 0 : index
    %43 = vector.load %arg2[%c0_18, %c0_19, %c0_20, %c0_21, %c0_22] : memref<2x3x4x32x8xf32, #tpu.memory_space<vmem>>, vector<1x1x1x32x8xf32>
    %44 = vector.shape_cast %43 : vector<1x1x1x32x8xf32> to vector<32x8xf32>
    %cst_23 = arith.constant dense<0.000000e+00> : vector<16x8xf32>
    %45 = tpu.matmul %35, %44, %cst_23 {dimension_numbers = #tpu.dot_dimension_numbers<[1], [0], [0], [1], [0, 0, 1, 1], [], []>} : vector<16x32xf32>, vector<32x8xf32>, vector<16x8xf32> -> vector<16x8xf32>
    %46 = vector.broadcast %38 : vector<1x8xf32> to vector<16x8xf32>
    %47 = arith.addf %45, %46 : vector<16x8xf32>
    %c0_24 = arith.constant 0 : index
    %c1 = arith.constant 1 : index
    %c0_25 = arith.constant 0 : index
    %c0_26 = arith.constant 0 : index
    %c0_27 = arith.constant 0 : index
    %48 = vector.load %arg2[%c0_24, %c1, %c0_25, %c0_26, %c0_27] : memref<2x3x4x32x8xf32, #tpu.memory_space<vmem>>, vector<1x1x1x32x8xf32>
    %49 = vector.shape_cast %48 : vector<1x1x1x32x8xf32> to vector<32x8xf32>
    %cst_28 = arith.constant dense<0.000000e+00> : vector<16x8xf32>
    %50 = tpu.matmul %35, %49, %cst_28 {dimension_numbers = #tpu.dot_dimension_numbers<[1], [0], [0], [1], [0, 0, 1, 1], [], []>} : vector<16x32xf32>, vector<32x8xf32>, vector<16x8xf32> -> vector<16x8xf32>
    %51 = vector.broadcast %40 : vector<1x8xf32> to vector<16x8xf32>
    %52 = arith.addf %50, %51 : vector<16x8xf32>
    %c0_29 = arith.constant 0 : index
    %c2 = arith.constant 2 : index
    %c0_30 = arith.constant 0 : index
    %c0_31 = arith.constant 0 : index
    %c0_32 = arith.constant 0 : index
    %53 = vector.load %arg2[%c0_29, %c2, %c0_30, %c0_31, %c0_32] : memref<2x3x4x32x8xf32, #tpu.memory_space<vmem>>, vector<1x1x1x32x8xf32>
    %54 = vector.shape_cast %53 : vector<1x1x1x32x8xf32> to vector<32x8xf32>
    %cst_33 = arith.constant dense<0.000000e+00> : vector<16x8xf32>
    %55 = tpu.matmul %35, %54, %cst_33 {dimension_numbers = #tpu.dot_dimension_numbers<[1], [0], [0], [1], [0, 0, 1, 1], [], []>} : vector<16x32xf32>, vector<32x8xf32>, vector<16x8xf32> -> vector<16x8xf32>
    %56 = vector.broadcast %42 : vector<1x8xf32> to vector<16x8xf32>
    %57 = arith.addf %55, %56 : vector<16x8xf32>
    %58 = vector.shape_cast %47 : vector<16x8xf32> to vector<2x8x8xf32>
    %59 = vector.shape_cast %52 : vector<16x8xf32> to vector<2x8x8xf32>
    %60 = vector.shape_cast %57 : vector<16x8xf32> to vector<2x8x8xf32>
    %cst_34 = arith.constant dense<0.000000e+00> : vector<2x8x8xf32>
    %61 = tpu.matmul %58, %59, %cst_34 {dimension_numbers = #tpu.dot_dimension_numbers<[2], [2], [1], [1], [0, 0, 0, 1, 1, 1], [0], [0]>} : vector<2x8x8xf32>, vector<2x8x8xf32>, vector<2x8x8xf32> -> vector<2x8x8xf32>
    %cst_35 = arith.constant dense<0xFF800000> : vector<2x8xf32>
    %62 = vector.multi_reduction <maximumf>, %61, %cst_35 [2] : vector<2x8x8xf32> to vector<2x8xf32>
    %63 = vector.shape_cast %62 : vector<2x8xf32> to vector<2x8x1xf32>
    %64 = vector.broadcast %63 : vector<2x8x1xf32> to vector<2x8x8xf32>
    %65 = arith.subf %61, %64 : vector<2x8x8xf32>
    %66 = math.exp %65 : vector<2x8x8xf32>
    %cst_36 = arith.constant dense<0.000000e+00> : vector<2x8xf32>
    %67 = vector.multi_reduction <add>, %66, %cst_36 [2] : vector<2x8x8xf32> to vector<2x8xf32>
    %68 = vector.shape_cast %67 : vector<2x8xf32> to vector<2x8x1xf32>
    %69 = tpu.reciprocal %68 {approx = true} : vector<2x8x1xf32> -> vector<2x8x1xf32>
    %70 = vector.broadcast %69 : vector<2x8x1xf32> to vector<2x8x8xf32>
    %71 = arith.mulf %66, %70 : vector<2x8x8xf32>
    %cst_37 = arith.constant dense<0.000000e+00> : vector<2x8x8xf32>
    %72 = tpu.matmul %71, %60, %cst_37 {dimension_numbers = #tpu.dot_dimension_numbers<[2], [1], [1], [2], [0, 0, 0, 1, 1, 2], [0], [0]>} : vector<2x8x8xf32>, vector<2x8x8xf32>, vector<2x8x8xf32> -> vector<2x8x8xf32>
    %73 = vector.shape_cast %72 : vector<2x8x8xf32> to vector<16x8xf32>
    %c0_38 = arith.constant 0 : index
    %c0_39 = arith.constant 0 : index
    %c0_40 = arith.constant 0 : index
    %c0_41 = arith.constant 0 : index
    %74 = vector.load %arg3[%c0_38, %c0_39, %c0_40, %c0_41] : memref<2x4x8x32xf32, #tpu.memory_space<vmem>>, vector<1x1x8x32xf32>
    %75 = vector.shape_cast %74 : vector<1x1x8x32xf32> to vector<8x32xf32>
    %cst_42 = arith.constant dense<0.000000e+00> : vector<16x32xf32>
    %76 = tpu.matmul %73, %75, %cst_42 {dimension_numbers = #tpu.dot_dimension_numbers<[1], [0], [0], [1], [0, 0, 1, 1], [], []>} : vector<16x8xf32>, vector<8x32xf32>, vector<16x32xf32> -> vector<16x32xf32>
    %77 = arith.addf %36, %76 : vector<16x32xf32>
    %c0_43 = arith.constant 0 : index
    %c9 = arith.constant 9 : index
    %c0_44 = arith.constant 0 : index
    %78 = vector.load %arg5[%c0_43, %c9, %c0_44] : memref<2x24x64xf32, #tpu.memory_space<vmem>>, vector<1x1x8xf32>
    %79 = vector.shape_cast %78 : vector<1x1x8xf32> to vector<1x8xf32>
    %c0_45 = arith.constant 0 : index
    %c13 = arith.constant 13 : index
    %c0_46 = arith.constant 0 : index
    %80 = vector.load %arg5[%c0_45, %c13, %c0_46] : memref<2x24x64xf32, #tpu.memory_space<vmem>>, vector<1x1x8xf32>
    %81 = vector.shape_cast %80 : vector<1x1x8xf32> to vector<1x8xf32>
    %c0_47 = arith.constant 0 : index
    %c17 = arith.constant 17 : index
    %c0_48 = arith.constant 0 : index
    %82 = vector.load %arg5[%c0_47, %c17, %c0_48] : memref<2x24x64xf32, #tpu.memory_space<vmem>>, vector<1x1x8xf32>
    %83 = vector.shape_cast %82 : vector<1x1x8xf32> to vector<1x8xf32>
    %c0_49 = arith.constant 0 : index
    %c0_50 = arith.constant 0 : index
    %c1_51 = arith.constant 1 : index
    %c0_52 = arith.constant 0 : index
    %c0_53 = arith.constant 0 : index
    %84 = vector.load %arg2[%c0_49, %c0_50, %c1_51, %c0_52, %c0_53] : memref<2x3x4x32x8xf32, #tpu.memory_space<vmem>>, vector<1x1x1x32x8xf32>
    %85 = vector.shape_cast %84 : vector<1x1x1x32x8xf32> to vector<32x8xf32>
    %cst_54 = arith.constant dense<0.000000e+00> : vector<16x8xf32>
    %86 = tpu.matmul %35, %85, %cst_54 {dimension_numbers = #tpu.dot_dimension_numbers<[1], [0], [0], [1], [0, 0, 1, 1], [], []>} : vector<16x32xf32>, vector<32x8xf32>, vector<16x8xf32> -> vector<16x8xf32>
    %87 = vector.broadcast %79 : vector<1x8xf32> to vector<16x8xf32>
    %88 = arith.addf %86, %87 : vector<16x8xf32>
    %c0_55 = arith.constant 0 : index
    %c1_56 = arith.constant 1 : index
    %c1_57 = arith.constant 1 : index
    %c0_58 = arith.constant 0 : index
    %c0_59 = arith.constant 0 : index
    %89 = vector.load %arg2[%c0_55, %c1_56, %c1_57, %c0_58, %c0_59] : memref<2x3x4x32x8xf32, #tpu.memory_space<vmem>>, vector<1x1x1x32x8xf32>
    %90 = vector.shape_cast %89 : vector<1x1x1x32x8xf32> to vector<32x8xf32>
    %cst_60 = arith.constant dense<0.000000e+00> : vector<16x8xf32>
    %91 = tpu.matmul %35, %90, %cst_60 {dimension_numbers = #tpu.dot_dimension_numbers<[1], [0], [0], [1], [0, 0, 1, 1], [], []>} : vector<16x32xf32>, vector<32x8xf32>, vector<16x8xf32> -> vector<16x8xf32>
    %92 = vector.broadcast %81 : vector<1x8xf32> to vector<16x8xf32>
    %93 = arith.addf %91, %92 : vector<16x8xf32>
    %c0_61 = arith.constant 0 : index
    %c2_62 = arith.constant 2 : index
    %c1_63 = arith.constant 1 : index
    %c0_64 = arith.constant 0 : index
    %c0_65 = arith.constant 0 : index
    %94 = vector.load %arg2[%c0_61, %c2_62, %c1_63, %c0_64, %c0_65] : memref<2x3x4x32x8xf32, #tpu.memory_space<vmem>>, vector<1x1x1x32x8xf32>
    %95 = vector.shape_cast %94 : vector<1x1x1x32x8xf32> to vector<32x8xf32>
    %cst_66 = arith.constant dense<0.000000e+00> : vector<16x8xf32>
    %96 = tpu.matmul %35, %95, %cst_66 {dimension_numbers = #tpu.dot_dimension_numbers<[1], [0], [0], [1], [0, 0, 1, 1], [], []>} : vector<16x32xf32>, vector<32x8xf32>, vector<16x8xf32> -> vector<16x8xf32>
    %97 = vector.broadcast %83 : vector<1x8xf32> to vector<16x8xf32>
    %98 = arith.addf %96, %97 : vector<16x8xf32>
    %99 = vector.shape_cast %88 : vector<16x8xf32> to vector<2x8x8xf32>
    %100 = vector.shape_cast %93 : vector<16x8xf32> to vector<2x8x8xf32>
    %101 = vector.shape_cast %98 : vector<16x8xf32> to vector<2x8x8xf32>
    %cst_67 = arith.constant dense<0.000000e+00> : vector<2x8x8xf32>
    %102 = tpu.matmul %99, %100, %cst_67 {dimension_numbers = #tpu.dot_dimension_numbers<[2], [2], [1], [1], [0, 0, 0, 1, 1, 1], [0], [0]>} : vector<2x8x8xf32>, vector<2x8x8xf32>, vector<2x8x8xf32> -> vector<2x8x8xf32>
    %cst_68 = arith.constant dense<0xFF800000> : vector<2x8xf32>
    %103 = vector.multi_reduction <maximumf>, %102, %cst_68 [2] : vector<2x8x8xf32> to vector<2x8xf32>
    %104 = vector.shape_cast %103 : vector<2x8xf32> to vector<2x8x1xf32>
    %105 = vector.broadcast %104 : vector<2x8x1xf32> to vector<2x8x8xf32>
    %106 = arith.subf %102, %105 : vector<2x8x8xf32>
    %107 = math.exp %106 : vector<2x8x8xf32>
    %cst_69 = arith.constant dense<0.000000e+00> : vector<2x8xf32>
    %108 = vector.multi_reduction <add>, %107, %cst_69 [2] : vector<2x8x8xf32> to vector<2x8xf32>
    %109 = vector.shape_cast %108 : vector<2x8xf32> to vector<2x8x1xf32>
    %110 = tpu.reciprocal %109 {approx = true} : vector<2x8x1xf32> -> vector<2x8x1xf32>
    %111 = vector.broadcast %110 : vector<2x8x1xf32> to vector<2x8x8xf32>
    %112 = arith.mulf %107, %111 : vector<2x8x8xf32>
    %cst_70 = arith.constant dense<0.000000e+00> : vector<2x8x8xf32>
    %113 = tpu.matmul %112, %101, %cst_70 {dimension_numbers = #tpu.dot_dimension_numbers<[2], [1], [1], [2], [0, 0, 0, 1, 1, 2], [0], [0]>} : vector<2x8x8xf32>, vector<2x8x8xf32>, vector<2x8x8xf32> -> vector<2x8x8xf32>
    %114 = vector.shape_cast %113 : vector<2x8x8xf32> to vector<16x8xf32>
    %c0_71 = arith.constant 0 : index
    %c1_72 = arith.constant 1 : index
    %c0_73 = arith.constant 0 : index
    %c0_74 = arith.constant 0 : index
    %115 = vector.load %arg3[%c0_71, %c1_72, %c0_73, %c0_74] : memref<2x4x8x32xf32, #tpu.memory_space<vmem>>, vector<1x1x8x32xf32>
    %116 = vector.shape_cast %115 : vector<1x1x8x32xf32> to vector<8x32xf32>
    %cst_75 = arith.constant dense<0.000000e+00> : vector<16x32xf32>
    %117 = tpu.matmul %114, %116, %cst_75 {dimension_numbers = #tpu.dot_dimension_numbers<[1], [0], [0], [1], [0, 0, 1, 1], [], []>} : vector<16x8xf32>, vector<8x32xf32>, vector<16x32xf32> -> vector<16x32xf32>
    %118 = arith.addf %77, %117 : vector<16x32xf32>
    %c0_76 = arith.constant 0 : index
    %c10 = arith.constant 10 : index
    %c0_77 = arith.constant 0 : index
    %119 = vector.load %arg5[%c0_76, %c10, %c0_77] : memref<2x24x64xf32, #tpu.memory_space<vmem>>, vector<1x1x8xf32>
    %120 = vector.shape_cast %119 : vector<1x1x8xf32> to vector<1x8xf32>
    %c0_78 = arith.constant 0 : index
    %c14 = arith.constant 14 : index
    %c0_79 = arith.constant 0 : index
    %121 = vector.load %arg5[%c0_78, %c14, %c0_79] : memref<2x24x64xf32, #tpu.memory_space<vmem>>, vector<1x1x8xf32>
    %122 = vector.shape_cast %121 : vector<1x1x8xf32> to vector<1x8xf32>
    %c0_80 = arith.constant 0 : index
    %c18 = arith.constant 18 : index
    %c0_81 = arith.constant 0 : index
    %123 = vector.load %arg5[%c0_80, %c18, %c0_81] : memref<2x24x64xf32, #tpu.memory_space<vmem>>, vector<1x1x8xf32>
    %124 = vector.shape_cast %123 : vector<1x1x8xf32> to vector<1x8xf32>
    %c0_82 = arith.constant 0 : index
    %c0_83 = arith.constant 0 : index
    %c2_84 = arith.constant 2 : index
    %c0_85 = arith.constant 0 : index
    %c0_86 = arith.constant 0 : index
    %125 = vector.load %arg2[%c0_82, %c0_83, %c2_84, %c0_85, %c0_86] : memref<2x3x4x32x8xf32, #tpu.memory_space<vmem>>, vector<1x1x1x32x8xf32>
    %126 = vector.shape_cast %125 : vector<1x1x1x32x8xf32> to vector<32x8xf32>
    %cst_87 = arith.constant dense<0.000000e+00> : vector<16x8xf32>
    %127 = tpu.matmul %35, %126, %cst_87 {dimension_numbers = #tpu.dot_dimension_numbers<[1], [0], [0], [1], [0, 0, 1, 1], [], []>} : vector<16x32xf32>, vector<32x8xf32>, vector<16x8xf32> -> vector<16x8xf32>
    %128 = vector.broadcast %120 : vector<1x8xf32> to vector<16x8xf32>
    %129 = arith.addf %127, %128 : vector<16x8xf32>
    %c0_88 = arith.constant 0 : index
    %c1_89 = arith.constant 1 : index
    %c2_90 = arith.constant 2 : index
    %c0_91 = arith.constant 0 : index
    %c0_92 = arith.constant 0 : index
    %130 = vector.load %arg2[%c0_88, %c1_89, %c2_90, %c0_91, %c0_92] : memref<2x3x4x32x8xf32, #tpu.memory_space<vmem>>, vector<1x1x1x32x8xf32>
    %131 = vector.shape_cast %130 : vector<1x1x1x32x8xf32> to vector<32x8xf32>
    %cst_93 = arith.constant dense<0.000000e+00> : vector<16x8xf32>
    %132 = tpu.matmul %35, %131, %cst_93 {dimension_numbers = #tpu.dot_dimension_numbers<[1], [0], [0], [1], [0, 0, 1, 1], [], []>} : vector<16x32xf32>, vector<32x8xf32>, vector<16x8xf32> -> vector<16x8xf32>
    %133 = vector.broadcast %122 : vector<1x8xf32> to vector<16x8xf32>
    %134 = arith.addf %132, %133 : vector<16x8xf32>
    %c0_94 = arith.constant 0 : index
    %c2_95 = arith.constant 2 : index
    %c2_96 = arith.constant 2 : index
    %c0_97 = arith.constant 0 : index
    %c0_98 = arith.constant 0 : index
    %135 = vector.load %arg2[%c0_94, %c2_95, %c2_96, %c0_97, %c0_98] : memref<2x3x4x32x8xf32, #tpu.memory_space<vmem>>, vector<1x1x1x32x8xf32>
    %136 = vector.shape_cast %135 : vector<1x1x1x32x8xf32> to vector<32x8xf32>
    %cst_99 = arith.constant dense<0.000000e+00> : vector<16x8xf32>
    %137 = tpu.matmul %35, %136, %cst_99 {dimension_numbers = #tpu.dot_dimension_numbers<[1], [0], [0], [1], [0, 0, 1, 1], [], []>} : vector<16x32xf32>, vector<32x8xf32>, vector<16x8xf32> -> vector<16x8xf32>
    %138 = vector.broadcast %124 : vector<1x8xf32> to vector<16x8xf32>
    %139 = arith.addf %137, %138 : vector<16x8xf32>
    %140 = vector.shape_cast %129 : vector<16x8xf32> to vector<2x8x8xf32>
    %141 = vector.shape_cast %134 : vector<16x8xf32> to vector<2x8x8xf32>
    %142 = vector.shape_cast %139 : vector<16x8xf32> to vector<2x8x8xf32>
    %cst_100 = arith.constant dense<0.000000e+00> : vector<2x8x8xf32>
    %143 = tpu.matmul %140, %141, %cst_100 {dimension_numbers = #tpu.dot_dimension_numbers<[2], [2], [1], [1], [0, 0, 0, 1, 1, 1], [0], [0]>} : vector<2x8x8xf32>, vector<2x8x8xf32>, vector<2x8x8xf32> -> vector<2x8x8xf32>
    %cst_101 = arith.constant dense<0xFF800000> : vector<2x8xf32>
    %144 = vector.multi_reduction <maximumf>, %143, %cst_101 [2] : vector<2x8x8xf32> to vector<2x8xf32>
    %145 = vector.shape_cast %144 : vector<2x8xf32> to vector<2x8x1xf32>
    %146 = vector.broadcast %145 : vector<2x8x1xf32> to vector<2x8x8xf32>
    %147 = arith.subf %143, %146 : vector<2x8x8xf32>
    %148 = math.exp %147 : vector<2x8x8xf32>
    %cst_102 = arith.constant dense<0.000000e+00> : vector<2x8xf32>
    %149 = vector.multi_reduction <add>, %148, %cst_102 [2] : vector<2x8x8xf32> to vector<2x8xf32>
    %150 = vector.shape_cast %149 : vector<2x8xf32> to vector<2x8x1xf32>
    %151 = tpu.reciprocal %150 {approx = true} : vector<2x8x1xf32> -> vector<2x8x1xf32>
    %152 = vector.broadcast %151 : vector<2x8x1xf32> to vector<2x8x8xf32>
    %153 = arith.mulf %148, %152 : vector<2x8x8xf32>
    %cst_103 = arith.constant dense<0.000000e+00> : vector<2x8x8xf32>
    %154 = tpu.matmul %153, %142, %cst_103 {dimension_numbers = #tpu.dot_dimension_numbers<[2], [1], [1], [2], [0, 0, 0, 1, 1, 2], [0], [0]>} : vector<2x8x8xf32>, vector<2x8x8xf32>, vector<2x8x8xf32> -> vector<2x8x8xf32>
    %155 = vector.shape_cast %154 : vector<2x8x8xf32> to vector<16x8xf32>
    %c0_104 = arith.constant 0 : index
    %c2_105 = arith.constant 2 : index
    %c0_106 = arith.constant 0 : index
    %c0_107 = arith.constant 0 : index
    %156 = vector.load %arg3[%c0_104, %c2_105, %c0_106, %c0_107] : memref<2x4x8x32xf32, #tpu.memory_space<vmem>>, vector<1x1x8x32xf32>
    %157 = vector.shape_cast %156 : vector<1x1x8x32xf32> to vector<8x32xf32>
    %cst_108 = arith.constant dense<0.000000e+00> : vector<16x32xf32>
    %158 = tpu.matmul %155, %157, %cst_108 {dimension_numbers = #tpu.dot_dimension_numbers<[1], [0], [0], [1], [0, 0, 1, 1], [], []>} : vector<16x8xf32>, vector<8x32xf32>, vector<16x32xf32> -> vector<16x32xf32>
    %159 = arith.addf %118, %158 : vector<16x32xf32>
    %c0_109 = arith.constant 0 : index
    %c11 = arith.constant 11 : index
    %c0_110 = arith.constant 0 : index
    %160 = vector.load %arg5[%c0_109, %c11, %c0_110] : memref<2x24x64xf32, #tpu.memory_space<vmem>>, vector<1x1x8xf32>
    %161 = vector.shape_cast %160 : vector<1x1x8xf32> to vector<1x8xf32>
    %c0_111 = arith.constant 0 : index
    %c15 = arith.constant 15 : index
    %c0_112 = arith.constant 0 : index
    %162 = vector.load %arg5[%c0_111, %c15, %c0_112] : memref<2x24x64xf32, #tpu.memory_space<vmem>>, vector<1x1x8xf32>
    %163 = vector.shape_cast %162 : vector<1x1x8xf32> to vector<1x8xf32>
    %c0_113 = arith.constant 0 : index
    %c19 = arith.constant 19 : index
    %c0_114 = arith.constant 0 : index
    %164 = vector.load %arg5[%c0_113, %c19, %c0_114] : memref<2x24x64xf32, #tpu.memory_space<vmem>>, vector<1x1x8xf32>
    %165 = vector.shape_cast %164 : vector<1x1x8xf32> to vector<1x8xf32>
    %c0_115 = arith.constant 0 : index
    %c0_116 = arith.constant 0 : index
    %c3 = arith.constant 3 : index
    %c0_117 = arith.constant 0 : index
    %c0_118 = arith.constant 0 : index
    %166 = vector.load %arg2[%c0_115, %c0_116, %c3, %c0_117, %c0_118] : memref<2x3x4x32x8xf32, #tpu.memory_space<vmem>>, vector<1x1x1x32x8xf32>
    %167 = vector.shape_cast %166 : vector<1x1x1x32x8xf32> to vector<32x8xf32>
    %cst_119 = arith.constant dense<0.000000e+00> : vector<16x8xf32>
    %168 = tpu.matmul %35, %167, %cst_119 {dimension_numbers = #tpu.dot_dimension_numbers<[1], [0], [0], [1], [0, 0, 1, 1], [], []>} : vector<16x32xf32>, vector<32x8xf32>, vector<16x8xf32> -> vector<16x8xf32>
    %169 = vector.broadcast %161 : vector<1x8xf32> to vector<16x8xf32>
    %170 = arith.addf %168, %169 : vector<16x8xf32>
    %c0_120 = arith.constant 0 : index
    %c1_121 = arith.constant 1 : index
    %c3_122 = arith.constant 3 : index
    %c0_123 = arith.constant 0 : index
    %c0_124 = arith.constant 0 : index
    %171 = vector.load %arg2[%c0_120, %c1_121, %c3_122, %c0_123, %c0_124] : memref<2x3x4x32x8xf32, #tpu.memory_space<vmem>>, vector<1x1x1x32x8xf32>
    %172 = vector.shape_cast %171 : vector<1x1x1x32x8xf32> to vector<32x8xf32>
    %cst_125 = arith.constant dense<0.000000e+00> : vector<16x8xf32>
    %173 = tpu.matmul %35, %172, %cst_125 {dimension_numbers = #tpu.dot_dimension_numbers<[1], [0], [0], [1], [0, 0, 1, 1], [], []>} : vector<16x32xf32>, vector<32x8xf32>, vector<16x8xf32> -> vector<16x8xf32>
    %174 = vector.broadcast %163 : vector<1x8xf32> to vector<16x8xf32>
    %175 = arith.addf %173, %174 : vector<16x8xf32>
    %c0_126 = arith.constant 0 : index
    %c2_127 = arith.constant 2 : index
    %c3_128 = arith.constant 3 : index
    %c0_129 = arith.constant 0 : index
    %c0_130 = arith.constant 0 : index
    %176 = vector.load %arg2[%c0_126, %c2_127, %c3_128, %c0_129, %c0_130] : memref<2x3x4x32x8xf32, #tpu.memory_space<vmem>>, vector<1x1x1x32x8xf32>
    %177 = vector.shape_cast %176 : vector<1x1x1x32x8xf32> to vector<32x8xf32>
    %cst_131 = arith.constant dense<0.000000e+00> : vector<16x8xf32>
    %178 = tpu.matmul %35, %177, %cst_131 {dimension_numbers = #tpu.dot_dimension_numbers<[1], [0], [0], [1], [0, 0, 1, 1], [], []>} : vector<16x32xf32>, vector<32x8xf32>, vector<16x8xf32> -> vector<16x8xf32>
    %179 = vector.broadcast %165 : vector<1x8xf32> to vector<16x8xf32>
    %180 = arith.addf %178, %179 : vector<16x8xf32>
    %181 = vector.shape_cast %170 : vector<16x8xf32> to vector<2x8x8xf32>
    %182 = vector.shape_cast %175 : vector<16x8xf32> to vector<2x8x8xf32>
    %183 = vector.shape_cast %180 : vector<16x8xf32> to vector<2x8x8xf32>
    %cst_132 = arith.constant dense<0.000000e+00> : vector<2x8x8xf32>
    %184 = tpu.matmul %181, %182, %cst_132 {dimension_numbers = #tpu.dot_dimension_numbers<[2], [2], [1], [1], [0, 0, 0, 1, 1, 1], [0], [0]>} : vector<2x8x8xf32>, vector<2x8x8xf32>, vector<2x8x8xf32> -> vector<2x8x8xf32>
    %cst_133 = arith.constant dense<0xFF800000> : vector<2x8xf32>
    %185 = vector.multi_reduction <maximumf>, %184, %cst_133 [2] : vector<2x8x8xf32> to vector<2x8xf32>
    %186 = vector.shape_cast %185 : vector<2x8xf32> to vector<2x8x1xf32>
    %187 = vector.broadcast %186 : vector<2x8x1xf32> to vector<2x8x8xf32>
    %188 = arith.subf %184, %187 : vector<2x8x8xf32>
    %189 = math.exp %188 : vector<2x8x8xf32>
    %cst_134 = arith.constant dense<0.000000e+00> : vector<2x8xf32>
    %190 = vector.multi_reduction <add>, %189, %cst_134 [2] : vector<2x8x8xf32> to vector<2x8xf32>
    %191 = vector.shape_cast %190 : vector<2x8xf32> to vector<2x8x1xf32>
    %192 = tpu.reciprocal %191 {approx = true} : vector<2x8x1xf32> -> vector<2x8x1xf32>
    %193 = vector.broadcast %192 : vector<2x8x1xf32> to vector<2x8x8xf32>
    %194 = arith.mulf %189, %193 : vector<2x8x8xf32>
    %cst_135 = arith.constant dense<0.000000e+00> : vector<2x8x8xf32>
    %195 = tpu.matmul %194, %183, %cst_135 {dimension_numbers = #tpu.dot_dimension_numbers<[2], [1], [1], [2], [0, 0, 0, 1, 1, 2], [0], [0]>} : vector<2x8x8xf32>, vector<2x8x8xf32>, vector<2x8x8xf32> -> vector<2x8x8xf32>
    %196 = vector.shape_cast %195 : vector<2x8x8xf32> to vector<16x8xf32>
    %c0_136 = arith.constant 0 : index
    %c3_137 = arith.constant 3 : index
    %c0_138 = arith.constant 0 : index
    %c0_139 = arith.constant 0 : index
    %197 = vector.load %arg3[%c0_136, %c3_137, %c0_138, %c0_139] : memref<2x4x8x32xf32, #tpu.memory_space<vmem>>, vector<1x1x8x32xf32>
    %198 = vector.shape_cast %197 : vector<1x1x8x32xf32> to vector<8x32xf32>
    %cst_140 = arith.constant dense<0.000000e+00> : vector<16x32xf32>
    %199 = tpu.matmul %196, %198, %cst_140 {dimension_numbers = #tpu.dot_dimension_numbers<[1], [0], [0], [1], [0, 0, 1, 1], [], []>} : vector<16x8xf32>, vector<8x32xf32>, vector<16x32xf32> -> vector<16x32xf32>
    %200 = arith.addf %159, %199 : vector<16x32xf32>
    %c0_141 = arith.constant 0 : index
    %c0_142 = arith.constant 0 : index
    %c0_143 = arith.constant 0 : index
    %201 = vector.load %arg5[%c0_141, %c0_142, %c0_143] : memref<2x24x64xf32, #tpu.memory_space<vmem>>, vector<1x1x32xf32>
    %202 = vector.shape_cast %201 : vector<1x1x32xf32> to vector<1x32xf32>
    %203 = vector.broadcast %202 : vector<1x32xf32> to vector<16x32xf32>
    %204 = arith.addf %200, %203 : vector<16x32xf32>
    %205 = arith.addf %204, %35 : vector<16x32xf32>
    %c0_144 = arith.constant 0 : index
    %c1_145 = arith.constant 1 : index
    %c0_146 = arith.constant 0 : index
    %206 = vector.load %arg5[%c0_144, %c1_145, %c0_146] : memref<2x24x64xf32, #tpu.memory_space<vmem>>, vector<1x1x32xf32>
    %207 = vector.shape_cast %206 : vector<1x1x32xf32> to vector<1x32xf32>
    %c0_147 = arith.constant 0 : index
    %c2_148 = arith.constant 2 : index
    %c0_149 = arith.constant 0 : index
    %208 = vector.load %arg5[%c0_147, %c2_148, %c0_149] : memref<2x24x64xf32, #tpu.memory_space<vmem>>, vector<1x1x32xf32>
    %209 = vector.shape_cast %208 : vector<1x1x32xf32> to vector<1x32xf32>
    %cst_150 = arith.constant dense<0.000000e+00> : vector<16xf32>
    %210 = vector.multi_reduction <add>, %205, %cst_150 [1] : vector<16x32xf32> to vector<16xf32>
    %211 = vector.shape_cast %210 : vector<16xf32> to vector<16x1xf32>
    %cst_151 = arith.constant 3.200000e+01 : f32
    %212 = vector.broadcast %cst_151 : f32 to vector<16x1xf32>
    %213 = arith.divf %211, %212 : vector<16x1xf32>
    %214 = vector.broadcast %213 : vector<16x1xf32> to vector<16x32xf32>
    %215 = arith.subf %205, %214 : vector<16x32xf32>
    %216 = arith.mulf %215, %215 : vector<16x32xf32>
    %cst_152 = arith.constant dense<0.000000e+00> : vector<16xf32>
    %217 = vector.multi_reduction <add>, %216, %cst_152 [1] : vector<16x32xf32> to vector<16xf32>
    %218 = vector.shape_cast %217 : vector<16xf32> to vector<16x1xf32>
    %cst_153 = arith.constant 3.200000e+01 : f32
    %219 = vector.broadcast %cst_153 : f32 to vector<16x1xf32>
    %220 = arith.divf %218, %219 : vector<16x1xf32>
    %cst_154 = arith.constant 9.99999996E-13 : f32
    %221 = vector.broadcast %cst_154 : f32 to vector<16x1xf32>
    %222 = arith.addf %220, %221 : vector<16x1xf32>
    %223 = math.rsqrt %222 : vector<16x1xf32>
    %224 = vector.broadcast %223 : vector<16x1xf32> to vector<16x32xf32>
    %225 = arith.mulf %215, %224 : vector<16x32xf32>
    %226 = vector.broadcast %207 : vector<1x32xf32> to vector<16x32xf32>
    %227 = arith.mulf %225, %226 : vector<16x32xf32>
    %228 = vector.broadcast %209 : vector<1x32xf32> to vector<16x32xf32>
    %229 = arith.addf %227, %228 : vector<16x32xf32>
    %c0_155 = arith.constant 0 : index
    %c0_156 = arith.constant 0 : index
    %c0_157 = arith.constant 0 : index
    %230 = vector.load %arg4[%c0_155, %c0_156, %c0_157] : memref<2x96x64xf32, #tpu.memory_space<vmem>>, vector<1x32x64xf32>
    %231 = vector.shape_cast %230 : vector<1x32x64xf32> to vector<32x64xf32>
    %cst_158 = arith.constant dense<0.000000e+00> : vector<16x64xf32>
    %232 = tpu.matmul %229, %231, %cst_158 {dimension_numbers = #tpu.dot_dimension_numbers<[1], [0], [0], [1], [0, 0, 1, 1], [], []>} : vector<16x32xf32>, vector<32x64xf32>, vector<16x64xf32> -> vector<16x64xf32>
    %c0_159 = arith.constant 0 : index
    %c3_160 = arith.constant 3 : index
    %c0_161 = arith.constant 0 : index
    %233 = vector.load %arg5[%c0_159, %c3_160, %c0_161] : memref<2x24x64xf32, #tpu.memory_space<vmem>>, vector<1x1x64xf32>
    %234 = vector.shape_cast %233 : vector<1x1x64xf32> to vector<1x64xf32>
    %235 = vector.broadcast %234 : vector<1x64xf32> to vector<16x64xf32>
    %236 = arith.addf %232, %235 : vector<16x64xf32>
    %cst_162 = arith.constant 0.000000e+00 : f32
    %237 = vector.broadcast %cst_162 : f32 to vector<16x64xf32>
    %238 = arith.maximumf %236, %237 : vector<16x64xf32>
    %c0_163 = arith.constant 0 : index
    %c32 = arith.constant 32 : index
    %c0_164 = arith.constant 0 : index
    %239 = vector.load %arg4[%c0_163, %c32, %c0_164] : memref<2x96x64xf32, #tpu.memory_space<vmem>>, vector<1x64x32xf32>
    %240 = vector.shape_cast %239 : vector<1x64x32xf32> to vector<64x32xf32>
    %cst_165 = arith.constant dense<0.000000e+00> : vector<16x32xf32>
    %241 = tpu.matmul %238, %240, %cst_165 {dimension_numbers = #tpu.dot_dimension_numbers<[1], [0], [0], [1], [0, 0, 1, 1], [], []>} : vector<16x64xf32>, vector<64x32xf32>, vector<16x32xf32> -> vector<16x32xf32>
    %c0_166 = arith.constant 0 : index
    %c4 = arith.constant 4 : index
    %c0_167 = arith.constant 0 : index
    %242 = vector.load %arg5[%c0_166, %c4, %c0_167] : memref<2x24x64xf32, #tpu.memory_space<vmem>>, vector<1x1x32xf32>
    %243 = vector.shape_cast %242 : vector<1x1x32xf32> to vector<1x32xf32>
    %244 = vector.broadcast %243 : vector<1x32xf32> to vector<16x32xf32>
    %245 = arith.addf %241, %244 : vector<16x32xf32>
    %246 = arith.addf %245, %229 : vector<16x32xf32>
    %c0_168 = arith.constant 0 : index
    %c5 = arith.constant 5 : index
    %c0_169 = arith.constant 0 : index
    %247 = vector.load %arg5[%c0_168, %c5, %c0_169] : memref<2x24x64xf32, #tpu.memory_space<vmem>>, vector<1x1x32xf32>
    %248 = vector.shape_cast %247 : vector<1x1x32xf32> to vector<1x32xf32>
    %c0_170 = arith.constant 0 : index
    %c6 = arith.constant 6 : index
    %c0_171 = arith.constant 0 : index
    %249 = vector.load %arg5[%c0_170, %c6, %c0_171] : memref<2x24x64xf32, #tpu.memory_space<vmem>>, vector<1x1x32xf32>
    %250 = vector.shape_cast %249 : vector<1x1x32xf32> to vector<1x32xf32>
    %cst_172 = arith.constant dense<0.000000e+00> : vector<16xf32>
    %251 = vector.multi_reduction <add>, %246, %cst_172 [1] : vector<16x32xf32> to vector<16xf32>
    %252 = vector.shape_cast %251 : vector<16xf32> to vector<16x1xf32>
    %cst_173 = arith.constant 3.200000e+01 : f32
    %253 = vector.broadcast %cst_173 : f32 to vector<16x1xf32>
    %254 = arith.divf %252, %253 : vector<16x1xf32>
    %255 = vector.broadcast %254 : vector<16x1xf32> to vector<16x32xf32>
    %256 = arith.subf %246, %255 : vector<16x32xf32>
    %257 = arith.mulf %256, %256 : vector<16x32xf32>
    %cst_174 = arith.constant dense<0.000000e+00> : vector<16xf32>
    %258 = vector.multi_reduction <add>, %257, %cst_174 [1] : vector<16x32xf32> to vector<16xf32>
    %259 = vector.shape_cast %258 : vector<16xf32> to vector<16x1xf32>
    %cst_175 = arith.constant 3.200000e+01 : f32
    %260 = vector.broadcast %cst_175 : f32 to vector<16x1xf32>
    %261 = arith.divf %259, %260 : vector<16x1xf32>
    %cst_176 = arith.constant 9.99999996E-13 : f32
    %262 = vector.broadcast %cst_176 : f32 to vector<16x1xf32>
    %263 = arith.addf %261, %262 : vector<16x1xf32>
    %264 = math.rsqrt %263 : vector<16x1xf32>
    %265 = vector.broadcast %264 : vector<16x1xf32> to vector<16x32xf32>
    %266 = arith.mulf %256, %265 : vector<16x32xf32>
    %267 = vector.broadcast %248 : vector<1x32xf32> to vector<16x32xf32>
    %268 = arith.mulf %266, %267 : vector<16x32xf32>
    %269 = vector.broadcast %250 : vector<1x32xf32> to vector<16x32xf32>
    %270 = arith.addf %268, %269 : vector<16x32xf32>
    %cst_177 = arith.constant 0.000000e+00 : f32
    %271 = vector.broadcast %cst_177 : f32 to vector<16x32xf32>
    %c1_178 = arith.constant 1 : index
    %c8_179 = arith.constant 8 : index
    %c0_180 = arith.constant 0 : index
    %272 = vector.load %arg5[%c1_178, %c8_179, %c0_180] : memref<2x24x64xf32, #tpu.memory_space<vmem>>, vector<1x1x8xf32>
    %273 = vector.shape_cast %272 : vector<1x1x8xf32> to vector<1x8xf32>
    %c1_181 = arith.constant 1 : index
    %c12_182 = arith.constant 12 : index
    %c0_183 = arith.constant 0 : index
    %274 = vector.load %arg5[%c1_181, %c12_182, %c0_183] : memref<2x24x64xf32, #tpu.memory_space<vmem>>, vector<1x1x8xf32>
    %275 = vector.shape_cast %274 : vector<1x1x8xf32> to vector<1x8xf32>
    %c1_184 = arith.constant 1 : index
    %c16_185 = arith.constant 16 : index
    %c0_186 = arith.constant 0 : index
    %276 = vector.load %arg5[%c1_184, %c16_185, %c0_186] : memref<2x24x64xf32, #tpu.memory_space<vmem>>, vector<1x1x8xf32>
    %277 = vector.shape_cast %276 : vector<1x1x8xf32> to vector<1x8xf32>
    %c1_187 = arith.constant 1 : index
    %c0_188 = arith.constant 0 : index
    %c0_189 = arith.constant 0 : index
    %c0_190 = arith.constant 0 : index
    %c0_191 = arith.constant 0 : index
    %278 = vector.load %arg2[%c1_187, %c0_188, %c0_189, %c0_190, %c0_191] : memref<2x3x4x32x8xf32, #tpu.memory_space<vmem>>, vector<1x1x1x32x8xf32>
    %279 = vector.shape_cast %278 : vector<1x1x1x32x8xf32> to vector<32x8xf32>
    %cst_192 = arith.constant dense<0.000000e+00> : vector<16x8xf32>
    %280 = tpu.matmul %270, %279, %cst_192 {dimension_numbers = #tpu.dot_dimension_numbers<[1], [0], [0], [1], [0, 0, 1, 1], [], []>} : vector<16x32xf32>, vector<32x8xf32>, vector<16x8xf32> -> vector<16x8xf32>
    %281 = vector.broadcast %273 : vector<1x8xf32> to vector<16x8xf32>
    %282 = arith.addf %280, %281 : vector<16x8xf32>
    %c1_193 = arith.constant 1 : index
    %c1_194 = arith.constant 1 : index
    %c0_195 = arith.constant 0 : index
    %c0_196 = arith.constant 0 : index
    %c0_197 = arith.constant 0 : index
    %283 = vector.load %arg2[%c1_193, %c1_194, %c0_195, %c0_196, %c0_197] : memref<2x3x4x32x8xf32, #tpu.memory_space<vmem>>, vector<1x1x1x32x8xf32>
    %284 = vector.shape_cast %283 : vector<1x1x1x32x8xf32> to vector<32x8xf32>
    %cst_198 = arith.constant dense<0.000000e+00> : vector<16x8xf32>
    %285 = tpu.matmul %270, %284, %cst_198 {dimension_numbers = #tpu.dot_dimension_numbers<[1], [0], [0], [1], [0, 0, 1, 1], [], []>} : vector<16x32xf32>, vector<32x8xf32>, vector<16x8xf32> -> vector<16x8xf32>
    %286 = vector.broadcast %275 : vector<1x8xf32> to vector<16x8xf32>
    %287 = arith.addf %285, %286 : vector<16x8xf32>
    %c1_199 = arith.constant 1 : index
    %c2_200 = arith.constant 2 : index
    %c0_201 = arith.constant 0 : index
    %c0_202 = arith.constant 0 : index
    %c0_203 = arith.constant 0 : index
    %288 = vector.load %arg2[%c1_199, %c2_200, %c0_201, %c0_202, %c0_203] : memref<2x3x4x32x8xf32, #tpu.memory_space<vmem>>, vector<1x1x1x32x8xf32>
    %289 = vector.shape_cast %288 : vector<1x1x1x32x8xf32> to vector<32x8xf32>
    %cst_204 = arith.constant dense<0.000000e+00> : vector<16x8xf32>
    %290 = tpu.matmul %270, %289, %cst_204 {dimension_numbers = #tpu.dot_dimension_numbers<[1], [0], [0], [1], [0, 0, 1, 1], [], []>} : vector<16x32xf32>, vector<32x8xf32>, vector<16x8xf32> -> vector<16x8xf32>
    %291 = vector.broadcast %277 : vector<1x8xf32> to vector<16x8xf32>
    %292 = arith.addf %290, %291 : vector<16x8xf32>
    %293 = vector.shape_cast %282 : vector<16x8xf32> to vector<2x8x8xf32>
    %294 = vector.shape_cast %287 : vector<16x8xf32> to vector<2x8x8xf32>
    %295 = vector.shape_cast %292 : vector<16x8xf32> to vector<2x8x8xf32>
    %cst_205 = arith.constant dense<0.000000e+00> : vector<2x8x8xf32>
    %296 = tpu.matmul %293, %294, %cst_205 {dimension_numbers = #tpu.dot_dimension_numbers<[2], [2], [1], [1], [0, 0, 0, 1, 1, 1], [0], [0]>} : vector<2x8x8xf32>, vector<2x8x8xf32>, vector<2x8x8xf32> -> vector<2x8x8xf32>
    %cst_206 = arith.constant dense<0xFF800000> : vector<2x8xf32>
    %297 = vector.multi_reduction <maximumf>, %296, %cst_206 [2] : vector<2x8x8xf32> to vector<2x8xf32>
    %298 = vector.shape_cast %297 : vector<2x8xf32> to vector<2x8x1xf32>
    %299 = vector.broadcast %298 : vector<2x8x1xf32> to vector<2x8x8xf32>
    %300 = arith.subf %296, %299 : vector<2x8x8xf32>
    %301 = math.exp %300 : vector<2x8x8xf32>
    %cst_207 = arith.constant dense<0.000000e+00> : vector<2x8xf32>
    %302 = vector.multi_reduction <add>, %301, %cst_207 [2] : vector<2x8x8xf32> to vector<2x8xf32>
    %303 = vector.shape_cast %302 : vector<2x8xf32> to vector<2x8x1xf32>
    %304 = tpu.reciprocal %303 {approx = true} : vector<2x8x1xf32> -> vector<2x8x1xf32>
    %305 = vector.broadcast %304 : vector<2x8x1xf32> to vector<2x8x8xf32>
    %306 = arith.mulf %301, %305 : vector<2x8x8xf32>
    %cst_208 = arith.constant dense<0.000000e+00> : vector<2x8x8xf32>
    %307 = tpu.matmul %306, %295, %cst_208 {dimension_numbers = #tpu.dot_dimension_numbers<[2], [1], [1], [2], [0, 0, 0, 1, 1, 2], [0], [0]>} : vector<2x8x8xf32>, vector<2x8x8xf32>, vector<2x8x8xf32> -> vector<2x8x8xf32>
    %308 = vector.shape_cast %307 : vector<2x8x8xf32> to vector<16x8xf32>
    %c1_209 = arith.constant 1 : index
    %c0_210 = arith.constant 0 : index
    %c0_211 = arith.constant 0 : index
    %c0_212 = arith.constant 0 : index
    %309 = vector.load %arg3[%c1_209, %c0_210, %c0_211, %c0_212] : memref<2x4x8x32xf32, #tpu.memory_space<vmem>>, vector<1x1x8x32xf32>
    %310 = vector.shape_cast %309 : vector<1x1x8x32xf32> to vector<8x32xf32>
    %cst_213 = arith.constant dense<0.000000e+00> : vector<16x32xf32>
    %311 = tpu.matmul %308, %310, %cst_213 {dimension_numbers = #tpu.dot_dimension_numbers<[1], [0], [0], [1], [0, 0, 1, 1], [], []>} : vector<16x8xf32>, vector<8x32xf32>, vector<16x32xf32> -> vector<16x32xf32>
    %312 = arith.addf %271, %311 : vector<16x32xf32>
    %c1_214 = arith.constant 1 : index
    %c9_215 = arith.constant 9 : index
    %c0_216 = arith.constant 0 : index
    %313 = vector.load %arg5[%c1_214, %c9_215, %c0_216] : memref<2x24x64xf32, #tpu.memory_space<vmem>>, vector<1x1x8xf32>
    %314 = vector.shape_cast %313 : vector<1x1x8xf32> to vector<1x8xf32>
    %c1_217 = arith.constant 1 : index
    %c13_218 = arith.constant 13 : index
    %c0_219 = arith.constant 0 : index
    %315 = vector.load %arg5[%c1_217, %c13_218, %c0_219] : memref<2x24x64xf32, #tpu.memory_space<vmem>>, vector<1x1x8xf32>
    %316 = vector.shape_cast %315 : vector<1x1x8xf32> to vector<1x8xf32>
    %c1_220 = arith.constant 1 : index
    %c17_221 = arith.constant 17 : index
    %c0_222 = arith.constant 0 : index
    %317 = vector.load %arg5[%c1_220, %c17_221, %c0_222] : memref<2x24x64xf32, #tpu.memory_space<vmem>>, vector<1x1x8xf32>
    %318 = vector.shape_cast %317 : vector<1x1x8xf32> to vector<1x8xf32>
    %c1_223 = arith.constant 1 : index
    %c0_224 = arith.constant 0 : index
    %c1_225 = arith.constant 1 : index
    %c0_226 = arith.constant 0 : index
    %c0_227 = arith.constant 0 : index
    %319 = vector.load %arg2[%c1_223, %c0_224, %c1_225, %c0_226, %c0_227] : memref<2x3x4x32x8xf32, #tpu.memory_space<vmem>>, vector<1x1x1x32x8xf32>
    %320 = vector.shape_cast %319 : vector<1x1x1x32x8xf32> to vector<32x8xf32>
    %cst_228 = arith.constant dense<0.000000e+00> : vector<16x8xf32>
    %321 = tpu.matmul %270, %320, %cst_228 {dimension_numbers = #tpu.dot_dimension_numbers<[1], [0], [0], [1], [0, 0, 1, 1], [], []>} : vector<16x32xf32>, vector<32x8xf32>, vector<16x8xf32> -> vector<16x8xf32>
    %322 = vector.broadcast %314 : vector<1x8xf32> to vector<16x8xf32>
    %323 = arith.addf %321, %322 : vector<16x8xf32>
    %c1_229 = arith.constant 1 : index
    %c1_230 = arith.constant 1 : index
    %c1_231 = arith.constant 1 : index
    %c0_232 = arith.constant 0 : index
    %c0_233 = arith.constant 0 : index
    %324 = vector.load %arg2[%c1_229, %c1_230, %c1_231, %c0_232, %c0_233] : memref<2x3x4x32x8xf32, #tpu.memory_space<vmem>>, vector<1x1x1x32x8xf32>
    %325 = vector.shape_cast %324 : vector<1x1x1x32x8xf32> to vector<32x8xf32>
    %cst_234 = arith.constant dense<0.000000e+00> : vector<16x8xf32>
    %326 = tpu.matmul %270, %325, %cst_234 {dimension_numbers = #tpu.dot_dimension_numbers<[1], [0], [0], [1], [0, 0, 1, 1], [], []>} : vector<16x32xf32>, vector<32x8xf32>, vector<16x8xf32> -> vector<16x8xf32>
    %327 = vector.broadcast %316 : vector<1x8xf32> to vector<16x8xf32>
    %328 = arith.addf %326, %327 : vector<16x8xf32>
    %c1_235 = arith.constant 1 : index
    %c2_236 = arith.constant 2 : index
    %c1_237 = arith.constant 1 : index
    %c0_238 = arith.constant 0 : index
    %c0_239 = arith.constant 0 : index
    %329 = vector.load %arg2[%c1_235, %c2_236, %c1_237, %c0_238, %c0_239] : memref<2x3x4x32x8xf32, #tpu.memory_space<vmem>>, vector<1x1x1x32x8xf32>
    %330 = vector.shape_cast %329 : vector<1x1x1x32x8xf32> to vector<32x8xf32>
    %cst_240 = arith.constant dense<0.000000e+00> : vector<16x8xf32>
    %331 = tpu.matmul %270, %330, %cst_240 {dimension_numbers = #tpu.dot_dimension_numbers<[1], [0], [0], [1], [0, 0, 1, 1], [], []>} : vector<16x32xf32>, vector<32x8xf32>, vector<16x8xf32> -> vector<16x8xf32>
    %332 = vector.broadcast %318 : vector<1x8xf32> to vector<16x8xf32>
    %333 = arith.addf %331, %332 : vector<16x8xf32>
    %334 = vector.shape_cast %323 : vector<16x8xf32> to vector<2x8x8xf32>
    %335 = vector.shape_cast %328 : vector<16x8xf32> to vector<2x8x8xf32>
    %336 = vector.shape_cast %333 : vector<16x8xf32> to vector<2x8x8xf32>
    %cst_241 = arith.constant dense<0.000000e+00> : vector<2x8x8xf32>
    %337 = tpu.matmul %334, %335, %cst_241 {dimension_numbers = #tpu.dot_dimension_numbers<[2], [2], [1], [1], [0, 0, 0, 1, 1, 1], [0], [0]>} : vector<2x8x8xf32>, vector<2x8x8xf32>, vector<2x8x8xf32> -> vector<2x8x8xf32>
    %cst_242 = arith.constant dense<0xFF800000> : vector<2x8xf32>
    %338 = vector.multi_reduction <maximumf>, %337, %cst_242 [2] : vector<2x8x8xf32> to vector<2x8xf32>
    %339 = vector.shape_cast %338 : vector<2x8xf32> to vector<2x8x1xf32>
    %340 = vector.broadcast %339 : vector<2x8x1xf32> to vector<2x8x8xf32>
    %341 = arith.subf %337, %340 : vector<2x8x8xf32>
    %342 = math.exp %341 : vector<2x8x8xf32>
    %cst_243 = arith.constant dense<0.000000e+00> : vector<2x8xf32>
    %343 = vector.multi_reduction <add>, %342, %cst_243 [2] : vector<2x8x8xf32> to vector<2x8xf32>
    %344 = vector.shape_cast %343 : vector<2x8xf32> to vector<2x8x1xf32>
    %345 = tpu.reciprocal %344 {approx = true} : vector<2x8x1xf32> -> vector<2x8x1xf32>
    %346 = vector.broadcast %345 : vector<2x8x1xf32> to vector<2x8x8xf32>
    %347 = arith.mulf %342, %346 : vector<2x8x8xf32>
    %cst_244 = arith.constant dense<0.000000e+00> : vector<2x8x8xf32>
    %348 = tpu.matmul %347, %336, %cst_244 {dimension_numbers = #tpu.dot_dimension_numbers<[2], [1], [1], [2], [0, 0, 0, 1, 1, 2], [0], [0]>} : vector<2x8x8xf32>, vector<2x8x8xf32>, vector<2x8x8xf32> -> vector<2x8x8xf32>
    %349 = vector.shape_cast %348 : vector<2x8x8xf32> to vector<16x8xf32>
    %c1_245 = arith.constant 1 : index
    %c1_246 = arith.constant 1 : index
    %c0_247 = arith.constant 0 : index
    %c0_248 = arith.constant 0 : index
    %350 = vector.load %arg3[%c1_245, %c1_246, %c0_247, %c0_248] : memref<2x4x8x32xf32, #tpu.memory_space<vmem>>, vector<1x1x8x32xf32>
    %351 = vector.shape_cast %350 : vector<1x1x8x32xf32> to vector<8x32xf32>
    %cst_249 = arith.constant dense<0.000000e+00> : vector<16x32xf32>
    %352 = tpu.matmul %349, %351, %cst_249 {dimension_numbers = #tpu.dot_dimension_numbers<[1], [0], [0], [1], [0, 0, 1, 1], [], []>} : vector<16x8xf32>, vector<8x32xf32>, vector<16x32xf32> -> vector<16x32xf32>
    %353 = arith.addf %312, %352 : vector<16x32xf32>
    %c1_250 = arith.constant 1 : index
    %c10_251 = arith.constant 10 : index
    %c0_252 = arith.constant 0 : index
    %354 = vector.load %arg5[%c1_250, %c10_251, %c0_252] : memref<2x24x64xf32, #tpu.memory_space<vmem>>, vector<1x1x8xf32>
    %355 = vector.shape_cast %354 : vector<1x1x8xf32> to vector<1x8xf32>
    %c1_253 = arith.constant 1 : index
    %c14_254 = arith.constant 14 : index
    %c0_255 = arith.constant 0 : index
    %356 = vector.load %arg5[%c1_253, %c14_254, %c0_255] : memref<2x24x64xf32, #tpu.memory_space<vmem>>, vector<1x1x8xf32>
    %357 = vector.shape_cast %356 : vector<1x1x8xf32> to vector<1x8xf32>
    %c1_256 = arith.constant 1 : index
    %c18_257 = arith.constant 18 : index
    %c0_258 = arith.constant 0 : index
    %358 = vector.load %arg5[%c1_256, %c18_257, %c0_258] : memref<2x24x64xf32, #tpu.memory_space<vmem>>, vector<1x1x8xf32>
    %359 = vector.shape_cast %358 : vector<1x1x8xf32> to vector<1x8xf32>
    %c1_259 = arith.constant 1 : index
    %c0_260 = arith.constant 0 : index
    %c2_261 = arith.constant 2 : index
    %c0_262 = arith.constant 0 : index
    %c0_263 = arith.constant 0 : index
    %360 = vector.load %arg2[%c1_259, %c0_260, %c2_261, %c0_262, %c0_263] : memref<2x3x4x32x8xf32, #tpu.memory_space<vmem>>, vector<1x1x1x32x8xf32>
    %361 = vector.shape_cast %360 : vector<1x1x1x32x8xf32> to vector<32x8xf32>
    %cst_264 = arith.constant dense<0.000000e+00> : vector<16x8xf32>
    %362 = tpu.matmul %270, %361, %cst_264 {dimension_numbers = #tpu.dot_dimension_numbers<[1], [0], [0], [1], [0, 0, 1, 1], [], []>} : vector<16x32xf32>, vector<32x8xf32>, vector<16x8xf32> -> vector<16x8xf32>
    %363 = vector.broadcast %355 : vector<1x8xf32> to vector<16x8xf32>
    %364 = arith.addf %362, %363 : vector<16x8xf32>
    %c1_265 = arith.constant 1 : index
    %c1_266 = arith.constant 1 : index
    %c2_267 = arith.constant 2 : index
    %c0_268 = arith.constant 0 : index
    %c0_269 = arith.constant 0 : index
    %365 = vector.load %arg2[%c1_265, %c1_266, %c2_267, %c0_268, %c0_269] : memref<2x3x4x32x8xf32, #tpu.memory_space<vmem>>, vector<1x1x1x32x8xf32>
    %366 = vector.shape_cast %365 : vector<1x1x1x32x8xf32> to vector<32x8xf32>
    %cst_270 = arith.constant dense<0.000000e+00> : vector<16x8xf32>
    %367 = tpu.matmul %270, %366, %cst_270 {dimension_numbers = #tpu.dot_dimension_numbers<[1], [0], [0], [1], [0, 0, 1, 1], [], []>} : vector<16x32xf32>, vector<32x8xf32>, vector<16x8xf32> -> vector<16x8xf32>
    %368 = vector.broadcast %357 : vector<1x8xf32> to vector<16x8xf32>
    %369 = arith.addf %367, %368 : vector<16x8xf32>
    %c1_271 = arith.constant 1 : index
    %c2_272 = arith.constant 2 : index
    %c2_273 = arith.constant 2 : index
    %c0_274 = arith.constant 0 : index
    %c0_275 = arith.constant 0 : index
    %370 = vector.load %arg2[%c1_271, %c2_272, %c2_273, %c0_274, %c0_275] : memref<2x3x4x32x8xf32, #tpu.memory_space<vmem>>, vector<1x1x1x32x8xf32>
    %371 = vector.shape_cast %370 : vector<1x1x1x32x8xf32> to vector<32x8xf32>
    %cst_276 = arith.constant dense<0.000000e+00> : vector<16x8xf32>
    %372 = tpu.matmul %270, %371, %cst_276 {dimension_numbers = #tpu.dot_dimension_numbers<[1], [0], [0], [1], [0, 0, 1, 1], [], []>} : vector<16x32xf32>, vector<32x8xf32>, vector<16x8xf32> -> vector<16x8xf32>
    %373 = vector.broadcast %359 : vector<1x8xf32> to vector<16x8xf32>
    %374 = arith.addf %372, %373 : vector<16x8xf32>
    %375 = vector.shape_cast %364 : vector<16x8xf32> to vector<2x8x8xf32>
    %376 = vector.shape_cast %369 : vector<16x8xf32> to vector<2x8x8xf32>
    %377 = vector.shape_cast %374 : vector<16x8xf32> to vector<2x8x8xf32>
    %cst_277 = arith.constant dense<0.000000e+00> : vector<2x8x8xf32>
    %378 = tpu.matmul %375, %376, %cst_277 {dimension_numbers = #tpu.dot_dimension_numbers<[2], [2], [1], [1], [0, 0, 0, 1, 1, 1], [0], [0]>} : vector<2x8x8xf32>, vector<2x8x8xf32>, vector<2x8x8xf32> -> vector<2x8x8xf32>
    %cst_278 = arith.constant dense<0xFF800000> : vector<2x8xf32>
    %379 = vector.multi_reduction <maximumf>, %378, %cst_278 [2] : vector<2x8x8xf32> to vector<2x8xf32>
    %380 = vector.shape_cast %379 : vector<2x8xf32> to vector<2x8x1xf32>
    %381 = vector.broadcast %380 : vector<2x8x1xf32> to vector<2x8x8xf32>
    %382 = arith.subf %378, %381 : vector<2x8x8xf32>
    %383 = math.exp %382 : vector<2x8x8xf32>
    %cst_279 = arith.constant dense<0.000000e+00> : vector<2x8xf32>
    %384 = vector.multi_reduction <add>, %383, %cst_279 [2] : vector<2x8x8xf32> to vector<2x8xf32>
    %385 = vector.shape_cast %384 : vector<2x8xf32> to vector<2x8x1xf32>
    %386 = tpu.reciprocal %385 {approx = true} : vector<2x8x1xf32> -> vector<2x8x1xf32>
    %387 = vector.broadcast %386 : vector<2x8x1xf32> to vector<2x8x8xf32>
    %388 = arith.mulf %383, %387 : vector<2x8x8xf32>
    %cst_280 = arith.constant dense<0.000000e+00> : vector<2x8x8xf32>
    %389 = tpu.matmul %388, %377, %cst_280 {dimension_numbers = #tpu.dot_dimension_numbers<[2], [1], [1], [2], [0, 0, 0, 1, 1, 2], [0], [0]>} : vector<2x8x8xf32>, vector<2x8x8xf32>, vector<2x8x8xf32> -> vector<2x8x8xf32>
    %390 = vector.shape_cast %389 : vector<2x8x8xf32> to vector<16x8xf32>
    %c1_281 = arith.constant 1 : index
    %c2_282 = arith.constant 2 : index
    %c0_283 = arith.constant 0 : index
    %c0_284 = arith.constant 0 : index
    %391 = vector.load %arg3[%c1_281, %c2_282, %c0_283, %c0_284] : memref<2x4x8x32xf32, #tpu.memory_space<vmem>>, vector<1x1x8x32xf32>
    %392 = vector.shape_cast %391 : vector<1x1x8x32xf32> to vector<8x32xf32>
    %cst_285 = arith.constant dense<0.000000e+00> : vector<16x32xf32>
    %393 = tpu.matmul %390, %392, %cst_285 {dimension_numbers = #tpu.dot_dimension_numbers<[1], [0], [0], [1], [0, 0, 1, 1], [], []>} : vector<16x8xf32>, vector<8x32xf32>, vector<16x32xf32> -> vector<16x32xf32>
    %394 = arith.addf %353, %393 : vector<16x32xf32>
    %c1_286 = arith.constant 1 : index
    %c11_287 = arith.constant 11 : index
    %c0_288 = arith.constant 0 : index
    %395 = vector.load %arg5[%c1_286, %c11_287, %c0_288] : memref<2x24x64xf32, #tpu.memory_space<vmem>>, vector<1x1x8xf32>
    %396 = vector.shape_cast %395 : vector<1x1x8xf32> to vector<1x8xf32>
    %c1_289 = arith.constant 1 : index
    %c15_290 = arith.constant 15 : index
    %c0_291 = arith.constant 0 : index
    %397 = vector.load %arg5[%c1_289, %c15_290, %c0_291] : memref<2x24x64xf32, #tpu.memory_space<vmem>>, vector<1x1x8xf32>
    %398 = vector.shape_cast %397 : vector<1x1x8xf32> to vector<1x8xf32>
    %c1_292 = arith.constant 1 : index
    %c19_293 = arith.constant 19 : index
    %c0_294 = arith.constant 0 : index
    %399 = vector.load %arg5[%c1_292, %c19_293, %c0_294] : memref<2x24x64xf32, #tpu.memory_space<vmem>>, vector<1x1x8xf32>
    %400 = vector.shape_cast %399 : vector<1x1x8xf32> to vector<1x8xf32>
    %c1_295 = arith.constant 1 : index
    %c0_296 = arith.constant 0 : index
    %c3_297 = arith.constant 3 : index
    %c0_298 = arith.constant 0 : index
    %c0_299 = arith.constant 0 : index
    %401 = vector.load %arg2[%c1_295, %c0_296, %c3_297, %c0_298, %c0_299] : memref<2x3x4x32x8xf32, #tpu.memory_space<vmem>>, vector<1x1x1x32x8xf32>
    %402 = vector.shape_cast %401 : vector<1x1x1x32x8xf32> to vector<32x8xf32>
    %cst_300 = arith.constant dense<0.000000e+00> : vector<16x8xf32>
    %403 = tpu.matmul %270, %402, %cst_300 {dimension_numbers = #tpu.dot_dimension_numbers<[1], [0], [0], [1], [0, 0, 1, 1], [], []>} : vector<16x32xf32>, vector<32x8xf32>, vector<16x8xf32> -> vector<16x8xf32>
    %404 = vector.broadcast %396 : vector<1x8xf32> to vector<16x8xf32>
    %405 = arith.addf %403, %404 : vector<16x8xf32>
    %c1_301 = arith.constant 1 : index
    %c1_302 = arith.constant 1 : index
    %c3_303 = arith.constant 3 : index
    %c0_304 = arith.constant 0 : index
    %c0_305 = arith.constant 0 : index
    %406 = vector.load %arg2[%c1_301, %c1_302, %c3_303, %c0_304, %c0_305] : memref<2x3x4x32x8xf32, #tpu.memory_space<vmem>>, vector<1x1x1x32x8xf32>
    %407 = vector.shape_cast %406 : vector<1x1x1x32x8xf32> to vector<32x8xf32>
    %cst_306 = arith.constant dense<0.000000e+00> : vector<16x8xf32>
    %408 = tpu.matmul %270, %407, %cst_306 {dimension_numbers = #tpu.dot_dimension_numbers<[1], [0], [0], [1], [0, 0, 1, 1], [], []>} : vector<16x32xf32>, vector<32x8xf32>, vector<16x8xf32> -> vector<16x8xf32>
    %409 = vector.broadcast %398 : vector<1x8xf32> to vector<16x8xf32>
    %410 = arith.addf %408, %409 : vector<16x8xf32>
    %c1_307 = arith.constant 1 : index
    %c2_308 = arith.constant 2 : index
    %c3_309 = arith.constant 3 : index
    %c0_310 = arith.constant 0 : index
    %c0_311 = arith.constant 0 : index
    %411 = vector.load %arg2[%c1_307, %c2_308, %c3_309, %c0_310, %c0_311] : memref<2x3x4x32x8xf32, #tpu.memory_space<vmem>>, vector<1x1x1x32x8xf32>
    %412 = vector.shape_cast %411 : vector<1x1x1x32x8xf32> to vector<32x8xf32>
    %cst_312 = arith.constant dense<0.000000e+00> : vector<16x8xf32>
    %413 = tpu.matmul %270, %412, %cst_312 {dimension_numbers = #tpu.dot_dimension_numbers<[1], [0], [0], [1], [0, 0, 1, 1], [], []>} : vector<16x32xf32>, vector<32x8xf32>, vector<16x8xf32> -> vector<16x8xf32>
    %414 = vector.broadcast %400 : vector<1x8xf32> to vector<16x8xf32>
    %415 = arith.addf %413, %414 : vector<16x8xf32>
    %416 = vector.shape_cast %405 : vector<16x8xf32> to vector<2x8x8xf32>
    %417 = vector.shape_cast %410 : vector<16x8xf32> to vector<2x8x8xf32>
    %418 = vector.shape_cast %415 : vector<16x8xf32> to vector<2x8x8xf32>
    %cst_313 = arith.constant dense<0.000000e+00> : vector<2x8x8xf32>
    %419 = tpu.matmul %416, %417, %cst_313 {dimension_numbers = #tpu.dot_dimension_numbers<[2], [2], [1], [1], [0, 0, 0, 1, 1, 1], [0], [0]>} : vector<2x8x8xf32>, vector<2x8x8xf32>, vector<2x8x8xf32> -> vector<2x8x8xf32>
    %cst_314 = arith.constant dense<0xFF800000> : vector<2x8xf32>
    %420 = vector.multi_reduction <maximumf>, %419, %cst_314 [2] : vector<2x8x8xf32> to vector<2x8xf32>
    %421 = vector.shape_cast %420 : vector<2x8xf32> to vector<2x8x1xf32>
    %422 = vector.broadcast %421 : vector<2x8x1xf32> to vector<2x8x8xf32>
    %423 = arith.subf %419, %422 : vector<2x8x8xf32>
    %424 = math.exp %423 : vector<2x8x8xf32>
    %cst_315 = arith.constant dense<0.000000e+00> : vector<2x8xf32>
    %425 = vector.multi_reduction <add>, %424, %cst_315 [2] : vector<2x8x8xf32> to vector<2x8xf32>
    %426 = vector.shape_cast %425 : vector<2x8xf32> to vector<2x8x1xf32>
    %427 = tpu.reciprocal %426 {approx = true} : vector<2x8x1xf32> -> vector<2x8x1xf32>
    %428 = vector.broadcast %427 : vector<2x8x1xf32> to vector<2x8x8xf32>
    %429 = arith.mulf %424, %428 : vector<2x8x8xf32>
    %cst_316 = arith.constant dense<0.000000e+00> : vector<2x8x8xf32>
    %430 = tpu.matmul %429, %418, %cst_316 {dimension_numbers = #tpu.dot_dimension_numbers<[2], [1], [1], [2], [0, 0, 0, 1, 1, 2], [0], [0]>} : vector<2x8x8xf32>, vector<2x8x8xf32>, vector<2x8x8xf32> -> vector<2x8x8xf32>
    %431 = vector.shape_cast %430 : vector<2x8x8xf32> to vector<16x8xf32>
    %c1_317 = arith.constant 1 : index
    %c3_318 = arith.constant 3 : index
    %c0_319 = arith.constant 0 : index
    %c0_320 = arith.constant 0 : index
    %432 = vector.load %arg3[%c1_317, %c3_318, %c0_319, %c0_320] : memref<2x4x8x32xf32, #tpu.memory_space<vmem>>, vector<1x1x8x32xf32>
    %433 = vector.shape_cast %432 : vector<1x1x8x32xf32> to vector<8x32xf32>
    %cst_321 = arith.constant dense<0.000000e+00> : vector<16x32xf32>
    %434 = tpu.matmul %431, %433, %cst_321 {dimension_numbers = #tpu.dot_dimension_numbers<[1], [0], [0], [1], [0, 0, 1, 1], [], []>} : vector<16x8xf32>, vector<8x32xf32>, vector<16x32xf32> -> vector<16x32xf32>
    %435 = arith.addf %394, %434 : vector<16x32xf32>
    %c1_322 = arith.constant 1 : index
    %c0_323 = arith.constant 0 : index
    %c0_324 = arith.constant 0 : index
    %436 = vector.load %arg5[%c1_322, %c0_323, %c0_324] : memref<2x24x64xf32, #tpu.memory_space<vmem>>, vector<1x1x32xf32>
    %437 = vector.shape_cast %436 : vector<1x1x32xf32> to vector<1x32xf32>
    %438 = vector.broadcast %437 : vector<1x32xf32> to vector<16x32xf32>
    %439 = arith.addf %435, %438 : vector<16x32xf32>
    %440 = arith.addf %439, %270 : vector<16x32xf32>
    %c1_325 = arith.constant 1 : index
    %c1_326 = arith.constant 1 : index
    %c0_327 = arith.constant 0 : index
    %441 = vector.load %arg5[%c1_325, %c1_326, %c0_327] : memref<2x24x64xf32, #tpu.memory_space<vmem>>, vector<1x1x32xf32>
    %442 = vector.shape_cast %441 : vector<1x1x32xf32> to vector<1x32xf32>
    %c1_328 = arith.constant 1 : index
    %c2_329 = arith.constant 2 : index
    %c0_330 = arith.constant 0 : index
    %443 = vector.load %arg5[%c1_328, %c2_329, %c0_330] : memref<2x24x64xf32, #tpu.memory_space<vmem>>, vector<1x1x32xf32>
    %444 = vector.shape_cast %443 : vector<1x1x32xf32> to vector<1x32xf32>
    %cst_331 = arith.constant dense<0.000000e+00> : vector<16xf32>
    %445 = vector.multi_reduction <add>, %440, %cst_331 [1] : vector<16x32xf32> to vector<16xf32>
    %446 = vector.shape_cast %445 : vector<16xf32> to vector<16x1xf32>
    %cst_332 = arith.constant 3.200000e+01 : f32
    %447 = vector.broadcast %cst_332 : f32 to vector<16x1xf32>
    %448 = arith.divf %446, %447 : vector<16x1xf32>
    %449 = vector.broadcast %448 : vector<16x1xf32> to vector<16x32xf32>
    %450 = arith.subf %440, %449 : vector<16x32xf32>
    %451 = arith.mulf %450, %450 : vector<16x32xf32>
    %cst_333 = arith.constant dense<0.000000e+00> : vector<16xf32>
    %452 = vector.multi_reduction <add>, %451, %cst_333 [1] : vector<16x32xf32> to vector<16xf32>
    %453 = vector.shape_cast %452 : vector<16xf32> to vector<16x1xf32>
    %cst_334 = arith.constant 3.200000e+01 : f32
    %454 = vector.broadcast %cst_334 : f32 to vector<16x1xf32>
    %455 = arith.divf %453, %454 : vector<16x1xf32>
    %cst_335 = arith.constant 9.99999996E-13 : f32
    %456 = vector.broadcast %cst_335 : f32 to vector<16x1xf32>
    %457 = arith.addf %455, %456 : vector<16x1xf32>
    %458 = math.rsqrt %457 : vector<16x1xf32>
    %459 = vector.broadcast %458 : vector<16x1xf32> to vector<16x32xf32>
    %460 = arith.mulf %450, %459 : vector<16x32xf32>
    %461 = vector.broadcast %442 : vector<1x32xf32> to vector<16x32xf32>
    %462 = arith.mulf %460, %461 : vector<16x32xf32>
    %463 = vector.broadcast %444 : vector<1x32xf32> to vector<16x32xf32>
    %464 = arith.addf %462, %463 : vector<16x32xf32>
    %c1_336 = arith.constant 1 : index
    %c0_337 = arith.constant 0 : index
    %c0_338 = arith.constant 0 : index
    %465 = vector.load %arg4[%c1_336, %c0_337, %c0_338] : memref<2x96x64xf32, #tpu.memory_space<vmem>>, vector<1x32x64xf32>
    %466 = vector.shape_cast %465 : vector<1x32x64xf32> to vector<32x64xf32>
    %cst_339 = arith.constant dense<0.000000e+00> : vector<16x64xf32>
    %467 = tpu.matmul %464, %466, %cst_339 {dimension_numbers = #tpu.dot_dimension_numbers<[1], [0], [0], [1], [0, 0, 1, 1], [], []>} : vector<16x32xf32>, vector<32x64xf32>, vector<16x64xf32> -> vector<16x64xf32>
    %c1_340 = arith.constant 1 : index
    %c3_341 = arith.constant 3 : index
    %c0_342 = arith.constant 0 : index
    %468 = vector.load %arg5[%c1_340, %c3_341, %c0_342] : memref<2x24x64xf32, #tpu.memory_space<vmem>>, vector<1x1x64xf32>
    %469 = vector.shape_cast %468 : vector<1x1x64xf32> to vector<1x64xf32>
    %470 = vector.broadcast %469 : vector<1x64xf32> to vector<16x64xf32>
    %471 = arith.addf %467, %470 : vector<16x64xf32>
    %cst_343 = arith.constant 0.000000e+00 : f32
    %472 = vector.broadcast %cst_343 : f32 to vector<16x64xf32>
    %473 = arith.maximumf %471, %472 : vector<16x64xf32>
    %c1_344 = arith.constant 1 : index
    %c32_345 = arith.constant 32 : index
    %c0_346 = arith.constant 0 : index
    %474 = vector.load %arg4[%c1_344, %c32_345, %c0_346] : memref<2x96x64xf32, #tpu.memory_space<vmem>>, vector<1x64x32xf32>
    %475 = vector.shape_cast %474 : vector<1x64x32xf32> to vector<64x32xf32>
    %cst_347 = arith.constant dense<0.000000e+00> : vector<16x32xf32>
    %476 = tpu.matmul %473, %475, %cst_347 {dimension_numbers = #tpu.dot_dimension_numbers<[1], [0], [0], [1], [0, 0, 1, 1], [], []>} : vector<16x64xf32>, vector<64x32xf32>, vector<16x32xf32> -> vector<16x32xf32>
    %c1_348 = arith.constant 1 : index
    %c4_349 = arith.constant 4 : index
    %c0_350 = arith.constant 0 : index
    %477 = vector.load %arg5[%c1_348, %c4_349, %c0_350] : memref<2x24x64xf32, #tpu.memory_space<vmem>>, vector<1x1x32xf32>
    %478 = vector.shape_cast %477 : vector<1x1x32xf32> to vector<1x32xf32>
    %479 = vector.broadcast %478 : vector<1x32xf32> to vector<16x32xf32>
    %480 = arith.addf %476, %479 : vector<16x32xf32>
    %481 = arith.addf %480, %464 : vector<16x32xf32>
    %c1_351 = arith.constant 1 : index
    %c5_352 = arith.constant 5 : index
    %c0_353 = arith.constant 0 : index
    %482 = vector.load %arg5[%c1_351, %c5_352, %c0_353] : memref<2x24x64xf32, #tpu.memory_space<vmem>>, vector<1x1x32xf32>
    %483 = vector.shape_cast %482 : vector<1x1x32xf32> to vector<1x32xf32>
    %c1_354 = arith.constant 1 : index
    %c6_355 = arith.constant 6 : index
    %c0_356 = arith.constant 0 : index
    %484 = vector.load %arg5[%c1_354, %c6_355, %c0_356] : memref<2x24x64xf32, #tpu.memory_space<vmem>>, vector<1x1x32xf32>
    %485 = vector.shape_cast %484 : vector<1x1x32xf32> to vector<1x32xf32>
    %cst_357 = arith.constant dense<0.000000e+00> : vector<16xf32>
    %486 = vector.multi_reduction <add>, %481, %cst_357 [1] : vector<16x32xf32> to vector<16xf32>
    %487 = vector.shape_cast %486 : vector<16xf32> to vector<16x1xf32>
    %cst_358 = arith.constant 3.200000e+01 : f32
    %488 = vector.broadcast %cst_358 : f32 to vector<16x1xf32>
    %489 = arith.divf %487, %488 : vector<16x1xf32>
    %490 = vector.broadcast %489 : vector<16x1xf32> to vector<16x32xf32>
    %491 = arith.subf %481, %490 : vector<16x32xf32>
    %492 = arith.mulf %491, %491 : vector<16x32xf32>
    %cst_359 = arith.constant dense<0.000000e+00> : vector<16xf32>
    %493 = vector.multi_reduction <add>, %492, %cst_359 [1] : vector<16x32xf32> to vector<16xf32>
    %494 = vector.shape_cast %493 : vector<16xf32> to vector<16x1xf32>
    %cst_360 = arith.constant 3.200000e+01 : f32
    %495 = vector.broadcast %cst_360 : f32 to vector<16x1xf32>
    %496 = arith.divf %494, %495 : vector<16x1xf32>
    %cst_361 = arith.constant 9.99999996E-13 : f32
    %497 = vector.broadcast %cst_361 : f32 to vector<16x1xf32>
    %498 = arith.addf %496, %497 : vector<16x1xf32>
    %499 = math.rsqrt %498 : vector<16x1xf32>
    %500 = vector.broadcast %499 : vector<16x1xf32> to vector<16x32xf32>
    %501 = arith.mulf %491, %500 : vector<16x32xf32>
    %502 = vector.broadcast %483 : vector<1x32xf32> to vector<16x32xf32>
    %503 = arith.mulf %501, %502 : vector<16x32xf32>
    %504 = vector.broadcast %485 : vector<1x32xf32> to vector<16x32xf32>
    %505 = arith.addf %503, %504 : vector<16x32xf32>
    %c64 = arith.constant 64 : index
    %c0_362 = arith.constant 0 : index
    %506 = vector.load %arg1[%c64, %c0_362] : memref<104x32xf32, #tpu.memory_space<vmem>>, vector<32x32xf32>
    %cst_363 = arith.constant dense<0.000000e+00> : vector<16x32xf32>
    %507 = tpu.matmul %505, %506, %cst_363 {dimension_numbers = #tpu.dot_dimension_numbers<[1], [0], [0], [1], [0, 0, 1, 1], [], []>} : vector<16x32xf32>, vector<32x32xf32>, vector<16x32xf32> -> vector<16x32xf32>
    %c96 = arith.constant 96 : index
    %c0_364 = arith.constant 0 : index
    %508 = vector.load %arg1[%c96, %c0_364] : memref<104x32xf32, #tpu.memory_space<vmem>>, vector<1x32xf32>
    %509 = vector.broadcast %508 : vector<1x32xf32> to vector<16x32xf32>
    %510 = arith.addf %507, %509 : vector<16x32xf32>
    %511 = vector.extract_strided_slice %510 {offsets = [0, 0], sizes = [16, 4], strides = [1, 1]} : vector<16x32xf32> to vector<16x4xf32>
    %cst_365 = arith.constant dense<0xFF800000> : vector<16xf32>
    %512 = vector.multi_reduction <maximumf>, %511, %cst_365 [1] : vector<16x4xf32> to vector<16xf32>
    %513 = vector.shape_cast %512 : vector<16xf32> to vector<16x1xf32>
    %514 = vector.broadcast %513 : vector<16x1xf32> to vector<16x4xf32>
    %515 = arith.subf %511, %514 : vector<16x4xf32>
    %516 = math.exp %515 : vector<16x4xf32>
    %cst_366 = arith.constant dense<0.000000e+00> : vector<16xf32>
    %517 = vector.multi_reduction <add>, %516, %cst_366 [1] : vector<16x4xf32> to vector<16xf32>
    %518 = vector.shape_cast %517 : vector<16xf32> to vector<16x1xf32>
    %519 = vector.broadcast %518 : vector<16x1xf32> to vector<16x4xf32>
    %520 = arith.divf %516, %519 : vector<16x4xf32>
    %c0_367 = arith.constant 0 : index
    %c0_368 = arith.constant 0 : index
    %521 = vector.load %arg6[%c0_367, %c0_368] : memref<16x4xf32, #tpu.memory_space<vmem>>, vector<16x4xf32>
    tpu.vector_store %arg6[%c0_367, %c0_368], %520 {strides = array<i32>} : memref<16x4xf32, #tpu.memory_space<vmem>>, vector<16x4xf32>,
    return
  }
}

</mosaic_0001>

<llo_original>
// kernel: bert_forward.1
$region0: #{bert_forward.1}
  #allocation0 [shape = 'u32[]', space=smem, size = 0x4, offset = 0x4, fixed_abs, tag = 'smem constant byte address 0x4 - core index']
  #allocation1 [shape = 'u32[144,128]{1,0:T(1,128)}', space=vmem, size = 0x12000, scoped, tag = 'internal scratch']
  %s0 = inlined_call_operand.vmem [shape: s32[16,1], index: 0, kind: input, shape index: {}]
  %s1 = inlined_call_operand.vmem [shape: f32[104,32], index: 1, kind: input, shape index: {}]
  %s2 = inlined_call_operand.vmem [shape: f32[2,3,4,32,8], index: 2, kind: input, shape index: {}]
  %s3 = inlined_call_operand.vmem [shape: f32[2,4,8,32], index: 3, kind: input, shape index: {}]
  %s4 = inlined_call_operand.vmem [shape: f32[2,96,64], index: 4, kind: input, shape index: {}]
  %s5 = inlined_call_operand.vmem [shape: f32[2,24,64], index: 5, kind: input, shape index: {}]
  %s6 = inlined_call_operand.vmem [shape: f32[16,4], index: 6, kind: output, shape index: {}]
  %s7 = sld [smem:[#allocation0]]
  $region34: #{bert_forward.1} parent=0
    _
  %s9 = ssub.s32 1, %s7
  %s10 = scalar_select 0, %s9, %s7
  // Predicated region
  $region2: #{bert_forward.1} parent=0 // pred_check
    _
  $region3: #{bert_forward.1} parent=0 // pred_check_branch
    %12 = sbr.rel (0) target = $region5
  $region4: #{bert_forward.1} parent=0 // pred_region
    _
  $region5: #{bert_forward.1} parent=0 // pred_fallthru
    _
  // Predicated region
  $region6: #{bert_forward.1} parent=0 // pred_check
    _
  $region7: #{bert_forward.1} parent=0 // pred_check_branch
    %14 = sbr.rel (0) target = $region9
  $region8: #{bert_forward.1} parent=0 // pred_region
    _
  $region9: #{bert_forward.1} parent=0 // pred_fallthru
    _
  // Predicated region
  $region10: #{bert_forward.1} parent=0 // pred_check
    _
  $region11: #{bert_forward.1} parent=0 // pred_check_branch
    %16 = sbr.rel (0) target = $region13
  $region12: #{bert_forward.1} parent=0 // pred_region
    _
  $region13: #{bert_forward.1} parent=0 // pred_fallthru
    _
  // Predicated region
  $region14: #{bert_forward.1} parent=0 // pred_check
    _
  $region15: #{bert_forward.1} parent=0 // pred_check_branch
    %18 = sbr.rel (0) target = $region17
  $region16: #{bert_forward.1} parent=0 // pred_region
    _
  $region17: #{bert_forward.1} parent=0 // pred_fallthru
    _
  // Predicated region
  $region18: #{bert_forward.1} parent=0 // pred_check
    _
  $region19: #{bert_forward.1} parent=0 // pred_check_branch
    %20 = sbr.rel (0) target = $region21
  $region20: #{bert_forward.1} parent=0 // pred_region
    _
  $region21: #{bert_forward.1} parent=0 // pred_fallthru
    _
  // Predicated region
  $region22: #{bert_forward.1} parent=0 // pred_check
    _
  $region23: #{bert_forward.1} parent=0 // pred_check_branch
    %22 = sbr.rel (0) target = $region25
  $region24: #{bert_forward.1} parent=0 // pred_region
    _
  $region25: #{bert_forward.1} parent=0 // pred_fallthru
    _
  %v23 = vld [vmem:[%s0] sm:$0xff]
  %v24 = vld [vmem:[%s0 + $0x8] sm:$0xff]
  %v25 = vlaneseq
  %v26 = vand.u32 %v25, 127
  %27 = vset.pattern.permute.xlu0 0
  %28 = vperm.xlu0 %27, %v23
  %v29 = vpop.permute.xlu0 %28
  %30 = vset.pattern.permute.xlu0 0
  %31 = vperm.xlu0 %30, %v24
  %v32 = vpop.permute.xlu0 %31
  %vm33 = vcmp.eq.s32.totalorder %v26, %v29
  %vm34 = vcmp.eq.s32.totalorder %v26, %v32
  %v35 = vsel %vm33, 1, 0
  %v36 = vsel %vm34, 1, 0
  %v37 = vcvt.s32.f32 %v35
  %v38 = vcvt.s32.f32 %v36
  %v39 = vld [vmem:[%s1] sm:$0xff]
  %v40 = vld [vmem:[%s1 + $0x8] sm:$0xff]
  %v41 = vld [vmem:[%s1 + $0x10] sm:$0xff]
  %v42 = vld [vmem:[%s1 + $0x18] sm:$0xff]
  %v43 = vld [vmem:[%s1 + $0x20] sm:$0xff]
  %vm44 = vcmask 326656
  %v46 = vsel %vm44, %v37, 0
  %v49 = vsel %vm44, %v38, 0
  %51 = vmatprep.subr.mxu0 0.0
  %52 = vmatpush1.msra.mxu0 %v39
  %53 = vmatprep.subr.mxu0 0.0
  %54 = vmatpush1.msra.mxu0 %v40
  %55 = vmatprep.subr.mxu0 0.0
  %56 = vmatpush1.msra.mxu0 %v41
  %57 = vmatprep.subr.mxu0 0.0
  %58 = vmatpush1.msra.mxu0 %v42
  %59 = vmatprep.subr.mxu0 0.0
  %60 = vmatpush1.msra.mxu0 %v43
  %61 = vmatprep.subr.mxu0 0.0
  %62 = vmatpush1.msra.mxu0 0.0
  %63 = vmatprep.subr.mxu0 0.0
  %64 = vmatpush1.msra.mxu0 0.0
  %65 = vmatprep.subr.mxu0 0.0
  %66 = vmatpush1.msra.mxu0 0.0
  %67 = vmatprep.subr.mxu0 0.0
  %68 = vmatpush1.msra.mxu0 0.0
  %69 = vmatprep.subr.mxu0 0.0
  %70 = vmatpush1.msra.mxu0 0.0
  %71 = vmatprep.subr.mxu0 0.0
  %72 = vmatpush1.msra.mxu0 0.0
  %73 = vmatprep.subr.mxu0 0.0
  %74 = vmatpush1.msra.mxu0 0.0
  %75 = vmatprep.subr.mxu0 0.0
  %76 = vmatpush1.msra.mxu0 0.0
  %77 = vmatprep.subr.mxu0 0.0
  %78 = vmatpush1.msra.mxu0 0.0
  %79 = vmatprep.subr.mxu0 0.0
  %80 = vmatpush1.msra.mxu0 0.0
  %81 = vmatprep.subr.mxu0 0.0
  %82 = vmatpush1.msra.mxu0 0.0
  %83 = vmatprep.subr.mxu0 0.0
  %84 = vmatpush1.msra.mxu0 0.0
  %85 = vmatprep.subr.mxu0 0.0
  %86 = vmatpush1.msra.mxu0 0.0
  %87 = vmatprep.subr.mxu0 0.0
  %88 = vmatpush1.msra.mxu0 0.0
  %89 = vmatprep.subr.mxu0 0.0
  %90 = vmatpush1.msra.mxu0 0.0
  %91 = vmatprep.subr.mxu0 0.0
  %92 = vmatpush1.msra.mxu0 0.0
  %93 = vmatprep.subr.mxu0 0.0
  %94 = vmatpush1.msra.mxu0 0.0
  %95 = vmatprep.subr.mxu0 0.0
  %96 = vmatpush1.msra.mxu0 0.0
  %97 = vmatprep.subr.mxu0 0.0
  %98 = vmatpush1.msra.mxu0 0.0
  %99 = vmatprep.subr.mxu0 0.0
  %100 = vmatpush1.msra.mxu0 0.0
  %101 = vmatprep.subr.mxu0 0.0
  %102 = vmatpush1.msra.mxu0 0.0
  %103 = vmatprep.subr.mxu0 0.0
  %104 = vmatpush1.msra.mxu0 0.0
  %105 = vmatprep.subr.mxu0 0.0
  %106 = vmatpush1.msra.mxu0 0.0
  %107 = vmatprep.subr.mxu0 0.0
  %108 = vmatpush1.msra.mxu0 0.0
  %109 = vmatprep.subr.mxu0 0.0
  %110 = vmatpush1.msra.mxu0 0.0
  %111 = vmatprep.subr.mxu0 0.0
  %112 = vmatpush1.msra.mxu0 0.0
  %113 = vmatprep.subr.mxu0 0.0
  %114 = vmatpush1.msra.mxu0 0.0
  %115 = vmatprep.mubr.f32.mxu0 0.0
  %116 = vmatmul.mubr.f32.gmra.mrb[0].mxu0 %v46
  %v117 = vpop.f32.mrb[0].mxu0
  %v118 = vadd.f32 0.0, %v117
  %v119 = vpop.f32.mrb[0].mxu0
  %120 = vmatprep.mubr.f32.mxu0 0.0
  %121 = vmatmul.mubr.f32.gmra.mrb[0].mxu0 %v49
  %v122 = vpop.f32.mrb[0].mxu0
  %v123 = vadd.f32 0.0, %v122
  %v124 = vpop.f32.mrb[0].mxu0
  %125 = vdwg.mxu0
  %v126 = vld [vmem:[%s1 + $0x28] sm:$0xff]
  %v127 = vadd.f32 %v118, %v126
  %v128 = vadd.f32 %v123, %v126
  %v129 = vld [vmem:[%s1 + $0x38] sm:$0x1]
  %v130 = vld [vmem:[%s1 + $0x39] sm:$0x1]
  %vm131 = vcmask 261120
  %v132 = vsel %vm131, %v127, 0.0
  %133 = vadd.xlane.f32.xlu0 %v132
  %v134 = vpop.xlane.xlu0 %133
  %v135 = vsel %vm131, %v128, 0.0
  %136 = vadd.xlane.f32.xlu0 %v135
  %v137 = vpop.xlane.xlu0 %136
  %v138 = vrcp.pop 32.0
  %v139 = vmul.f32 %v134, %v138
  %v140 = vmul.f32 %v137, %v138
  %v141 = vsub.f32 %v127, %v139
  %v142 = vsub.f32 %v128, %v140
  %v143 = vmul.f32 %v141, %v141
  %v144 = vmul.f32 %v142, %v142
  %v145 = vsel %vm131, %v143, 0.0
  %146 = vadd.xlane.f32.xlu0 %v145
  %v147 = vpop.xlane.xlu0 %146
  %v148 = vsel %vm131, %v144, 0.0
  %149 = vadd.xlane.f32.xlu0 %v148
  %v150 = vpop.xlane.xlu0 %149
  %v151 = vmul.f32 %v147, %v138
  %v152 = vmul.f32 %v150, %v138
  %v153 = vadd.f32 %v151, 1e-12
  %v154 = vadd.f32 %v152, 1e-12
  %v155 = vrsqrt.pop %v153
  %v156 = vrsqrt.pop %v154
  %v157 = vmul.f32 %v141, %v155
  %v158 = vmul.f32 %v142, %v156
  %v159 = vlaneseq
  %v160 = vshrl.u32 %v159, 7
  %v161 = vsub.s32 0, %v160
  %v162 = vrot.slane %v129, %v161
  %v163 = vmul.f32 %v157, %v162
  %v164 = vmul.f32 %v158, %v162
  %v165 = vlaneseq
  %v166 = vshrl.u32 %v165, 7
  %v167 = vsub.s32 0, %v166
  %v168 = vrot.slane %v130, %v167
  %v169 = vadd.f32 %v163, %v168
  %v170 = vadd.f32 %v164, %v168
  %v171 = vld [vmem:[%s5 + $0x8] sm:$0x1]
  %v172 = vld [vmem:[%s5 + $0xc] sm:$0x1]
  %v173 = vld [vmem:[%s5 + $0x10] sm:$0x1]
  %v174 = vld [vmem:[%s2] sm:$0xff]
  %v175 = vld [vmem:[%s2 + $0x8] sm:$0xff]
  %v176 = vld [vmem:[%s2 + $0x10] sm:$0xff]
  %v177 = vld [vmem:[%s2 + $0x18] sm:$0xff]
  %v178 = vlaneseq
  %v179 = vshrl.u32 %v178, 7
  %v180 = vsub.s32 0, %v179
  %v181 = vrot.slane %v171, %v180
  %v183 = vsel %vm131, %v169, 0
  %v186 = vsel %vm131, %v170, 0
  %188 = vmatprep.subr.mxu0 0.0
  %189 = vmatpush1.msra.mxu0 %v174
  %190 = vmatprep.subr.mxu0 0.0
  %191 = vmatpush1.msra.mxu0 %v175
  %192 = vmatprep.subr.mxu0 0.0
  %193 = vmatpush1.msra.mxu0 %v176
  %194 = vmatprep.subr.mxu0 0.0
  %195 = vmatpush1.msra.mxu0 %v177
  %196 = vmatprep.subr.mxu0 0.0
  %197 = vmatpush1.msra.mxu0 0.0
  %198 = vmatprep.subr.mxu0 0.0
  %199 = vmatpush1.msra.mxu0 0.0
  %200 = vmatprep.subr.mxu0 0.0
  %201 = vmatpush1.msra.mxu0 0.0
  %202 = vmatprep.subr.mxu0 0.0
  %203 = vmatpush1.msra.mxu0 0.0
  %204 = vmatprep.subr.mxu0 0.0
  %205 = vmatpush1.msra.mxu0 0.0
  %206 = vmatprep.subr.mxu0 0.0
  %207 = vmatpush1.msra.mxu0 0.0
  %208 = vmatprep.subr.mxu0 0.0
  %209 = vmatpush1.msra.mxu0 0.0
  %210 = vmatprep.subr.mxu0 0.0
  %211 = vmatpush1.msra.mxu0 0.0
  %212 = vmatprep.subr.mxu0 0.0
  %213 = vmatpush1.msra.mxu0 0.0
  %214 = vmatprep.subr.mxu0 0.0
  %215 = vmatpush1.msra.mxu0 0.0
  %216 = vmatprep.subr.mxu0 0.0
  %217 = vmatpush1.msra.mxu0 0.0
  %218 = vmatprep.subr.mxu0 0.0
  %219 = vmatpush1.msra.mxu0 0.0
  %220 = vmatprep.subr.mxu0 0.0
  %221 = vmatpush1.msra.mxu0 0.0
  %222 = vmatprep.subr.mxu0 0.0
  %223 = vmatpush1.msra.mxu0 0.0
  %224 = vmatprep.subr.mxu0 0.0
  %225 = vmatpush1.msra.mxu0 0.0
  %226 = vmatprep.subr.mxu0 0.0
  %227 = vmatpush1.msra.mxu0 0.0
  %228 = vmatprep.subr.mxu0 0.0
  %229 = vmatpush1.msra.mxu0 0.0
  %230 = vmatprep.subr.mxu0 0.0
  %231 = vmatpush1.msra.mxu0 0.0
  %232 = vmatprep.subr.mxu0 0.0
  %233 = vmatpush1.msra.mxu0 0.0
  %234 = vmatprep.subr.mxu0 0.0
  %235 = vmatpush1.msra.mxu0 0.0
  %236 = vmatprep.subr.mxu0 0.0
  %237 = vmatpush1.msra.mxu0 0.0
  %238 = vmatprep.subr.mxu0 0.0
  %239 = vmatpush1.msra.mxu0 0.0
  %240 = vmatprep.subr.mxu0 0.0
  %241 = vmatpush1.msra.mxu0 0.0
  %242 = vmatprep.subr.mxu0 0.0
  %243 = vmatpush1.msra.mxu0 0.0
  %244 = vmatprep.subr.mxu0 0.0
  %245 = vmatpush1.msra.mxu0 0.0
  %246 = vmatprep.subr.mxu0 0.0
  %247 = vmatpush1.msra.mxu0 0.0
  %248 = vmatprep.subr.mxu0 0.0
  %249 = vmatpush1.msra.mxu0 0.0
  %250 = vmatprep.subr.mxu0 0.0
  %251 = vmatpush1.msra.mxu0 0.0
  %252 = vmatprep.mubr.f32.mxu0 0.0
  %253 = vmatmul.mubr.f32.gmra.mrb[0].mxu0 %v183
  %v254 = vpop.f32.mrb[0].mxu0
  %v255 = vadd.f32 %v181, %v254
  %v256 = vpop.f32.mrb[0].mxu0
  %257 = vmatprep.mubr.f32.mxu0 0.0
  %258 = vmatmul.mubr.f32.gmra.mrb[0].mxu0 %v186
  %v259 = vpop.f32.mrb[0].mxu0
  %v260 = vadd.f32 %v181, %v259
  %v261 = vpop.f32.mrb[0].mxu0
  %262 = vdwg.mxu0
  %s263 = scalar_lea.vmem %s2, 128
  %v264 = vld [vmem:[%s263] sm:$0xff]
  %v265 = vld [vmem:[%s263 + $0x8] sm:$0xff]
  %v266 = vld [vmem:[%s263 + $0x10] sm:$0xff]
  %v267 = vld [vmem:[%s263 + $0x18] sm:$0xff]
  %v268 = vlaneseq
  %v269 = vshrl.u32 %v268, 7
  %v270 = vsub.s32 0, %v269
  %v271 = vrot.slane %v172, %v270
  %272 = vmatprep.subr.mxu0 0.0
  %273 = vmatpush1.msra.mxu0 %v264
  %274 = vmatprep.subr.mxu0 0.0
  %275 = vmatpush1.msra.mxu0 %v265
  %276 = vmatprep.subr.mxu0 0.0
  %277 = vmatpush1.msra.mxu0 %v266
  %278 = vmatprep.subr.mxu0 0.0
  %279 = vmatpush1.msra.mxu0 %v267
  %280 = vmatprep.subr.mxu0 0.0
  %281 = vmatpush1.msra.mxu0 0.0
  %282 = vmatprep.subr.mxu0 0.0
  %283 = vmatpush1.msra.mxu0 0.0
  %284 = vmatprep.subr.mxu0 0.0
  %285 = vmatpush1.msra.mxu0 0.0
  %286 = vmatprep.subr.mxu0 0.0
  %287 = vmatpush1.msra.mxu0 0.0
  %288 = vmatprep.subr.mxu0 0.0
  %289 = vmatpush1.msra.mxu0 0.0
  %290 = vmatprep.subr.mxu0 0.0
  %291 = vmatpush1.msra.mxu0 0.0
  %292 = vmatprep.subr.mxu0 0.0
  %293 = vmatpush1.msra.mxu0 0.0
  %294 = vmatprep.subr.mxu0 0.0
  %295 = vmatpush1.msra.mxu0 0.0
  %296 = vmatprep.subr.mxu0 0.0
  %297 = vmatpush1.msra.mxu0 0.0
  %298 = vmatprep.subr.mxu0 0.0
  %299 = vmatpush1.msra.mxu0 0.0
  %300 = vmatprep.subr.mxu0 0.0
  %301 = vmatpush1.msra.mxu0 0.0
  %302 = vmatprep.subr.mxu0 0.0
  %303 = vmatpush1.msra.mxu0 0.0
  %304 = vmatprep.subr.mxu0 0.0
  %305 = vmatpush1.msra.mxu0 0.0
  %306 = vmatprep.subr.mxu0 0.0
  %307 = vmatpush1.msra.mxu0 0.0
  %308 = vmatprep.subr.mxu0 0.0
  %309 = vmatpush1.msra.mxu0 0.0
  %310 = vmatprep.subr.mxu0 0.0
  %311 = vmatpush1.msra.mxu0 0.0
  %312 = vmatprep.subr.mxu0 0.0
  %313 = vmatpush1.msra.mxu0 0.0
  %314 = vmatprep.subr.mxu0 0.0
  %315 = vmatpush1.msra.mxu0 0.0
  %316 = vmatprep.subr.mxu0 0.0
  %317 = vmatpush1.msra.mxu0 0.0
  %318 = vmatprep.subr.mxu0 0.0
  %319 = vmatpush1.msra.mxu0 0.0
  %320 = vmatprep.subr.mxu0 0.0
  %321 = vmatpush1.msra.mxu0 0.0
  %322 = vmatprep.subr.mxu0 0.0
  %323 = vmatpush1.msra.mxu0 0.0
  %324 = vmatprep.subr.mxu0 0.0
  %325 = vmatpush1.msra.mxu0 0.0
  %326 = vmatprep.subr.mxu0 0.0
  %327 = vmatpush1.msra.mxu0 0.0
  %328 = vmatprep.subr.mxu0 0.0
  %329 = vmatpush1.msra.mxu0 0.0
  %330 = vmatprep.subr.mxu0 0.0
  %331 = vmatpush1.msra.mxu0 0.0
  %332 = vmatprep.subr.mxu0 0.0
  %333 = vmatpush1.msra.mxu0 0.0
  %334 = vmatprep.subr.mxu0 0.0
  %335 = vmatpush1.msra.mxu0 0.0
  %336 = vmatprep.mubr.f32.mxu0 0.0
  %337 = vmatmul.mubr.f32.gmra.mrb[0].mxu0 %v183
  %v338 = vpop.f32.mrb[0].mxu0
  %v339 = vadd.f32 %v271, %v338
  %v340 = vpop.f32.mrb[0].mxu0
  %341 = vmatprep.mubr.f32.mxu0 0.0
  %342 = vmatmul.mubr.f32.gmra.mrb[0].mxu0 %v186
  %v343 = vpop.f32.mrb[0].mxu0
  %v344 = vadd.f32 %v271, %v343
  %v345 = vpop.f32.mrb[0].mxu0
  %346 = vdwg.mxu0
  %s347 = scalar_lea.vmem %s2, 256
  %v348 = vld [vmem:[%s347] sm:$0xff]
  %v349 = vld [vmem:[%s347 + $0x8] sm:$0xff]
  %v350 = vld [vmem:[%s347 + $0x10] sm:$0xff]
  %v351 = vld [vmem:[%s347 + $0x18] sm:$0xff]
  %v352 = vlaneseq
  %v353 = vshrl.u32 %v352, 7
  %v354 = vsub.s32 0, %v353
  %v355 = vrot.slane %v173, %v354
  %356 = vmatprep.subr.mxu0 0.0
  %357 = vmatpush1.msra.mxu0 %v348
  %358 = vmatprep.subr.mxu0 0.0
  %359 = vmatpush1.msra.mxu0 %v349
  %360 = vmatprep.subr.mxu0 0.0
  %361 = vmatpush1.msra.mxu0 %v350
  %362 = vmatprep.subr.mxu0 0.0
  %363 = vmatpush1.msra.mxu0 %v351
  %364 = vmatprep.subr.mxu0 0.0
  %365 = vmatpush1.msra.mxu0 0.0
  %366 = vmatprep.subr.mxu0 0.0
  %367 = vmatpush1.msra.mxu0 0.0
  %368 = vmatprep.subr.mxu0 0.0
  %369 = vmatpush1.msra.mxu0 0.0
  %370 = vmatprep.subr.mxu0 0.0
  %371 = vmatpush1.msra.mxu0 0.0
  %372 = vmatprep.subr.mxu0 0.0
  %373 = vmatpush1.msra.mxu0 0.0
  %374 = vmatprep.subr.mxu0 0.0
  %375 = vmatpush1.msra.mxu0 0.0
  %376 = vmatprep.subr.mxu0 0.0
  %377 = vmatpush1.msra.mxu0 0.0
  %378 = vmatprep.subr.mxu0 0.0
  %379 = vmatpush1.msra.mxu0 0.0
  %380 = vmatprep.subr.mxu0 0.0
  %381 = vmatpush1.msra.mxu0 0.0
  %382 = vmatprep.subr.mxu0 0.0
  %383 = vmatpush1.msra.mxu0 0.0
  %384 = vmatprep.subr.mxu0 0.0
  %385 = vmatpush1.msra.mxu0 0.0
  %386 = vmatprep.subr.mxu0 0.0
  %387 = vmatpush1.msra.mxu0 0.0
  %388 = vmatprep.subr.mxu0 0.0
  %389 = vmatpush1.msra.mxu0 0.0
  %390 = vmatprep.subr.mxu0 0.0
  %391 = vmatpush1.msra.mxu0 0.0
  %392 = vmatprep.subr.mxu0 0.0
  %393 = vmatpush1.msra.mxu0 0.0
  %394 = vmatprep.subr.mxu0 0.0
  %395 = vmatpush1.msra.mxu0 0.0
  %396 = vmatprep.subr.mxu0 0.0
  %397 = vmatpush1.msra.mxu0 0.0
  %398 = vmatprep.subr.mxu0 0.0
  %399 = vmatpush1.msra.mxu0 0.0
  %400 = vmatprep.subr.mxu0 0.0
  %401 = vmatpush1.msra.mxu0 0.0
  %402 = vmatprep.subr.mxu0 0.0
  %403 = vmatpush1.msra.mxu0 0.0
  %404 = vmatprep.subr.mxu0 0.0
  %405 = vmatpush1.msra.mxu0 0.0
  %406 = vmatprep.subr.mxu0 0.0
  %407 = vmatpush1.msra.mxu0 0.0
  %408 = vmatprep.subr.mxu0 0.0
  %409 = vmatpush1.msra.mxu0 0.0
  %410 = vmatprep.subr.mxu0 0.0
  %411 = vmatpush1.msra.mxu0 0.0
  %412 = vmatprep.subr.mxu0 0.0
  %413 = vmatpush1.msra.mxu0 0.0
  %414 = vmatprep.subr.mxu0 0.0
  %415 = vmatpush1.msra.mxu0 0.0
  %416 = vmatprep.subr.mxu0 0.0
  %417 = vmatpush1.msra.mxu0 0.0
  %418 = vmatprep.subr.mxu0 0.0
  %419 = vmatpush1.msra.mxu0 0.0
  %420 = vmatprep.mubr.f32.mxu0 0.0
  %421 = vmatmul.mubr.f32.gmra.mrb[0].mxu0 %v183
  %v422 = vpop.f32.mrb[0].mxu0
  %v423 = vadd.f32 %v355, %v422
  %v424 = vpop.f32.mrb[0].mxu0
  %425 = vmatprep.mubr.f32.mxu0 0.0
  %426 = vmatmul.mubr.f32.gmra.mrb[0].mxu0 %v186
  %v427 = vpop.f32.mrb[0].mxu0
  %v428 = vadd.f32 %v355, %v427
  %v429 = vpop.f32.mrb[0].mxu0
  %430 = vdwg.mxu0
  %vm431 = vcmask 64512
  %v433 = vsel %vm431, %v255, 0
  %v436 = vsel %vm431, %v339, 0
  %438 = vmatprep.subr.mxu0 0.0
  %439 = vmatpush1.xpose.msra.mxu0 %v436
  %440 = vmatprep.subr.mxu0 0.0
  %441 = vmatpush1.xpose.msra.mxu0 0.0
  %442 = vmatprep.subr.mxu0 0.0
  %443 = vmatpush1.xpose.msra.mxu0 0.0
  %444 = vmatprep.subr.mxu0 0.0
  %445 = vmatpush1.xpose.msra.mxu0 0.0
  %446 = vmatprep.subr.mxu0 0.0
  %447 = vmatpush1.xpose.msra.mxu0 0.0
  %448 = vmatprep.subr.mxu0 0.0
  %449 = vmatpush1.xpose.msra.mxu0 0.0
  %450 = vmatprep.subr.mxu0 0.0
  %451 = vmatpush1.xpose.msra.mxu0 0.0
  %452 = vmatprep.subr.mxu0 0.0
  %453 = vmatpush1.xpose.msra.mxu0 0.0
  %454 = vmatprep.subr.mxu0 0.0
  %455 = vmatpush1.xpose.msra.mxu0 0.0
  %456 = vmatprep.subr.mxu0 0.0
  %457 = vmatpush1.xpose.msra.mxu0 0.0
  %458 = vmatprep.subr.mxu0 0.0
  %459 = vmatpush1.xpose.msra.mxu0 0.0
  %460 = vmatprep.subr.mxu0 0.0
  %461 = vmatpush1.xpose.msra.mxu0 0.0
  %462 = vmatprep.subr.mxu0 0.0
  %463 = vmatpush1.xpose.msra.mxu0 0.0
  %464 = vmatprep.subr.mxu0 0.0
  %465 = vmatpush1.xpose.msra.mxu0 0.0
  %466 = vmatprep.subr.mxu0 0.0
  %467 = vmatpush1.xpose.msra.mxu0 0.0
  %468 = vmatprep.subr.mxu0 0.0
  %469 = vmatpush1.xpose.msra.mxu0 0.0
  %470 = vmatprep.subr.mxu0 0.0
  %471 = vmatpush1.xpose.msra.mxu0 0.0
  %472 = vmatprep.subr.mxu0 0.0
  %473 = vmatpush1.xpose.msra.mxu0 0.0
  %474 = vmatprep.subr.mxu0 0.0
  %475 = vmatpush1.xpose.msra.mxu0 0.0
  %476 = vmatprep.subr.mxu0 0.0
  %477 = vmatpush1.xpose.msra.mxu0 0.0
  %478 = vmatprep.subr.mxu0 0.0
  %479 = vmatpush1.xpose.msra.mxu0 0.0
  %480 = vmatprep.subr.mxu0 0.0
  %481 = vmatpush1.xpose.msra.mxu0 0.0
  %482 = vmatprep.subr.mxu0 0.0
  %483 = vmatpush1.xpose.msra.mxu0 0.0
  %484 = vmatprep.subr.mxu0 0.0
  %485 = vmatpush1.xpose.msra.mxu0 0.0
  %486 = vmatprep.subr.mxu0 0.0
  %487 = vmatpush1.xpose.msra.mxu0 0.0
  %488 = vmatprep.subr.mxu0 0.0
  %489 = vmatpush1.xpose.msra.mxu0 0.0
  %490 = vmatprep.subr.mxu0 0.0
  %491 = vmatpush1.xpose.msra.mxu0 0.0
  %492 = vmatprep.subr.mxu0 0.0
  %493 = vmatpush1.xpose.msra.mxu0 0.0
  %494 = vmatprep.subr.mxu0 0.0
  %495 = vmatpush1.xpose.msra.mxu0 0.0
  %496 = vmatprep.subr.mxu0 0.0
  %497 = vmatpush1.xpose.msra.mxu0 0.0
  %498 = vmatprep.subr.mxu0 0.0
  %499 = vmatpush1.xpose.msra.mxu0 0.0
  %500 = vmatprep.subr.mxu0 0.0
  %501 = vmatpush1.xpose.msra.mxu0 0.0
  %502 = vmatprep.mubr.f32.mxu0 0.0
  %503 = vmatmul.mubr.f32.gmra.mrb[0].mxu0 %v433
  %v504 = vpop.f32.mrb[0].mxu0
  %v505 = vadd.f32 0.0, %v504
  %v506 = vpop.f32.mrb[0].mxu0
  %507 = vdwg.mxu0
  %v509 = vsel %vm431, %v260, 0
  %v512 = vsel %vm431, %v344, 0
  %514 = vmatprep.subr.mxu0 0.0
  %515 = vmatpush1.xpose.msra.mxu0 %v512
  %516 = vmatprep.subr.mxu0 0.0
  %517 = vmatpush1.xpose.msra.mxu0 0.0
  %518 = vmatprep.subr.mxu0 0.0
  %519 = vmatpush1.xpose.msra.mxu0 0.0
  %520 = vmatprep.subr.mxu0 0.0
  %521 = vmatpush1.xpose.msra.mxu0 0.0
  %522 = vmatprep.subr.mxu0 0.0
  %523 = vmatpush1.xpose.msra.mxu0 0.0
  %524 = vmatprep.subr.mxu0 0.0
  %525 = vmatpush1.xpose.msra.mxu0 0.0
  %526 = vmatprep.subr.mxu0 0.0
  %527 = vmatpush1.xpose.msra.mxu0 0.0
  %528 = vmatprep.subr.mxu0 0.0
  %529 = vmatpush1.xpose.msra.mxu0 0.0
  %530 = vmatprep.subr.mxu0 0.0
  %531 = vmatpush1.xpose.msra.mxu0 0.0
  %532 = vmatprep.subr.mxu0 0.0
  %533 = vmatpush1.xpose.msra.mxu0 0.0
  %534 = vmatprep.subr.mxu0 0.0
  %535 = vmatpush1.xpose.msra.mxu0 0.0
  %536 = vmatprep.subr.mxu0 0.0
  %537 = vmatpush1.xpose.msra.mxu0 0.0
  %538 = vmatprep.subr.mxu0 0.0
  %539 = vmatpush1.xpose.msra.mxu0 0.0
  %540 = vmatprep.subr.mxu0 0.0
  %541 = vmatpush1.xpose.msra.mxu0 0.0
  %542 = vmatprep.subr.mxu0 0.0
  %543 = vmatpush1.xpose.msra.mxu0 0.0
  %544 = vmatprep.subr.mxu0 0.0
  %545 = vmatpush1.xpose.msra.mxu0 0.0
  %546 = vmatprep.subr.mxu0 0.0
  %547 = vmatpush1.xpose.msra.mxu0 0.0
  %548 = vmatprep.subr.mxu0 0.0
  %549 = vmatpush1.xpose.msra.mxu0 0.0
  %550 = vmatprep.subr.mxu0 0.0
  %551 = vmatpush1.xpose.msra.mxu0 0.0
  %552 = vmatprep.subr.mxu0 0.0
  %553 = vmatpush1.xpose.msra.mxu0 0.0
  %554 = vmatprep.subr.mxu0 0.0
  %555 = vmatpush1.xpose.msra.mxu0 0.0
  %556 = vmatprep.subr.mxu0 0.0
  %557 = vmatpush1.xpose.msra.mxu0 0.0
  %558 = vmatprep.subr.mxu0 0.0
  %559 = vmatpush1.xpose.msra.mxu0 0.0
  %560 = vmatprep.subr.mxu0 0.0
  %561 = vmatpush1.xpose.msra.mxu0 0.0
  %562 = vmatprep.subr.mxu0 0.0
  %563 = vmatpush1.xpose.msra.mxu0 0.0
  %564 = vmatprep.subr.mxu0 0.0
  %565 = vmatpush1.xpose.msra.mxu0 0.0
  %566 = vmatprep.subr.mxu0 0.0
  %567 = vmatpush1.xpose.msra.mxu0 0.0
  %568 = vmatprep.subr.mxu0 0.0
  %569 = vmatpush1.xpose.msra.mxu0 0.0
  %570 = vmatprep.subr.mxu0 0.0
  %571 = vmatpush1.xpose.msra.mxu0 0.0
  %572 = vmatprep.subr.mxu0 0.0
  %573 = vmatpush1.xpose.msra.mxu0 0.0
  %574 = vmatprep.subr.mxu0 0.0
  %575 = vmatpush1.xpose.msra.mxu0 0.0
  %576 = vmatprep.subr.mxu0 0.0
  %577 = vmatpush1.xpose.msra.mxu0 0.0
  %578 = vmatprep.mubr.f32.mxu0 0.0
  %579 = vmatmul.mubr.f32.gmra.mrb[0].mxu0 %v509
  %v580 = vpop.f32.mrb[0].mxu0
  %v581 = vadd.f32 0.0, %v580
  %v582 = vpop.f32.mrb[0].mxu0
  %583 = vdwg.mxu0
  %v584 = vsel %vm431, %v505, -inf
  %585 = vmax.xlane.f32.xlu0 %v584
  %v586 = vpop.xlane.xlu0 %585
  %v587 = vsel %vm431, %v581, -inf
  %588 = vmax.xlane.f32.xlu0 %v587
  %v589 = vpop.xlane.xlu0 %588
  %v590 = vsub.f32 %v505, %v586
  %v591 = vsub.f32 %v581, %v589
  %v592 = vmul.f32 %v590, 1.442695
  %v593 = vpow.pop %v592
  %v594 = vmul.f32 %v591, 1.442695
  %v595 = vpow.pop %v594
  %v596 = vsel %vm431, %v593, 0.0
  %597 = vadd.xlane.f32.xlu0 %v596
  %v598 = vpop.xlane.xlu0 %597
  %v599 = vsel %vm431, %v595, 0.0
  %600 = vadd.xlane.f32.xlu0 %v599
  %v601 = vpop.xlane.xlu0 %600
  %v602 = vrcp.pop %v598
  %v603 = vrcp.pop %v601
  %v604 = vmul.f32 %v593, %v602
  %v605 = vmul.f32 %v595, %v603
  %v607 = vsel %vm431, %v604, 0
  %609 = vmatprep.subr.mxu0 0.0
  %610 = vmatpush1.msra.mxu0 %v423
  %611 = vmatprep.subr.mxu0 0.0
  %612 = vmatpush1.msra.mxu0 0.0
  %613 = vmatprep.subr.mxu0 0.0
  %614 = vmatpush1.msra.mxu0 0.0
  %615 = vmatprep.subr.mxu0 0.0
  %616 = vmatpush1.msra.mxu0 0.0
  %617 = vmatprep.subr.mxu0 0.0
  %618 = vmatpush1.msra.mxu0 0.0
  %619 = vmatprep.subr.mxu0 0.0
  %620 = vmatpush1.msra.mxu0 0.0
  %621 = vmatprep.subr.mxu0 0.0
  %622 = vmatpush1.msra.mxu0 0.0
  %623 = vmatprep.subr.mxu0 0.0
  %624 = vmatpush1.msra.mxu0 0.0
  %625 = vmatprep.subr.mxu0 0.0
  %626 = vmatpush1.msra.mxu0 0.0
  %627 = vmatprep.subr.mxu0 0.0
  %628 = vmatpush1.msra.mxu0 0.0
  %629 = vmatprep.subr.mxu0 0.0
  %630 = vmatpush1.msra.mxu0 0.0
  %631 = vmatprep.subr.mxu0 0.0
  %632 = vmatpush1.msra.mxu0 0.0
  %633 = vmatprep.subr.mxu0 0.0
  %634 = vmatpush1.msra.mxu0 0.0
  %635 = vmatprep.subr.mxu0 0.0
  %636 = vmatpush1.msra.mxu0 0.0
  %637 = vmatprep.subr.mxu0 0.0
  %638 = vmatpush1.msra.mxu0 0.0
  %639 = vmatprep.subr.mxu0 0.0
  %640 = vmatpush1.msra.mxu0 0.0
  %641 = vmatprep.subr.mxu0 0.0
  %642 = vmatpush1.msra.mxu0 0.0
  %643 = vmatprep.subr.mxu0 0.0
  %644 = vmatpush1.msra.mxu0 0.0
  %645 = vmatprep.subr.mxu0 0.0
  %646 = vmatpush1.msra.mxu0 0.0
  %647 = vmatprep.subr.mxu0 0.0
  %648 = vmatpush1.msra.mxu0 0.0
  %649 = vmatprep.subr.mxu0 0.0
  %650 = vmatpush1.msra.mxu0 0.0
  %651 = vmatprep.subr.mxu0 0.0
  %652 = vmatpush1.msra.mxu0 0.0
  %653 = vmatprep.subr.mxu0 0.0
  %654 = vmatpush1.msra.mxu0 0.0
  %655 = vmatprep.subr.mxu0 0.0
  %656 = vmatpush1.msra.mxu0 0.0
  %657 = vmatprep.subr.mxu0 0.0
  %658 = vmatpush1.msra.mxu0 0.0
  %659 = vmatprep.subr.mxu0 0.0
  %660 = vmatpush1.msra.mxu0 0.0
  %661 = vmatprep.subr.mxu0 0.0
  %662 = vmatpush1.msra.mxu0 0.0
  %663 = vmatprep.subr.mxu0 0.0
  %664 = vmatpush1.msra.mxu0 0.0
  %665 = vmatprep.subr.mxu0 0.0
  %666 = vmatpush1.msra.mxu0 0.0
  %667 = vmatprep.subr.mxu0 0.0
  %668 = vmatpush1.msra.mxu0 0.0
  %669 = vmatprep.subr.mxu0 0.0
  %670 = vmatpush1.msra.mxu0 0.0
  %671 = vmatprep.subr.mxu0 0.0
  %672 = vmatpush1.msra.mxu0 0.0
  %673 = vmatprep.mubr.f32.mxu0 0.0
  %674 = vmatmul.mubr.f32.gmra.mrb[0].mxu0 %v607
  %v675 = vpop.f32.mrb[0].mxu0
  %v676 = vadd.f32 0.0, %v675
  %v677 = vpop.f32.mrb[0].mxu0
  %678 = vdwg.mxu0
  %v680 = vsel %vm431, %v605, 0
  %682 = vmatprep.subr.mxu0 0.0
  %683 = vmatpush1.msra.mxu0 %v428
  %684 = vmatprep.subr.mxu0 0.0
  %685 = vmatpush1.msra.mxu0 0.0
  %686 = vmatprep.subr.mxu0 0.0
  %687 = vmatpush1.msra.mxu0 0.0
  %688 = vmatprep.subr.mxu0 0.0
  %689 = vmatpush1.msra.mxu0 0.0
  %690 = vmatprep.subr.mxu0 0.0
  %691 = vmatpush1.msra.mxu0 0.0
  %692 = vmatprep.subr.mxu0 0.0
  %693 = vmatpush1.msra.mxu0 0.0
  %694 = vmatprep.subr.mxu0 0.0
  %695 = vmatpush1.msra.mxu0 0.0
  %696 = vmatprep.subr.mxu0 0.0
  %697 = vmatpush1.msra.mxu0 0.0
  %698 = vmatprep.subr.mxu0 0.0
  %699 = vmatpush1.msra.mxu0 0.0
  %700 = vmatprep.subr.mxu0 0.0
  %701 = vmatpush1.msra.mxu0 0.0
  %702 = vmatprep.subr.mxu0 0.0
  %703 = vmatpush1.msra.mxu0 0.0
  %704 = vmatprep.subr.mxu0 0.0
  %705 = vmatpush1.msra.mxu0 0.0
  %706 = vmatprep.subr.mxu0 0.0
  %707 = vmatpush1.msra.mxu0 0.0
  %708 = vmatprep.subr.mxu0 0.0
  %709 = vmatpush1.msra.mxu0 0.0
  %710 = vmatprep.subr.mxu0 0.0
  %711 = vmatpush1.msra.mxu0 0.0
  %712 = vmatprep.subr.mxu0 0.0
  %713 = vmatpush1.msra.mxu0 0.0
  %714 = vmatprep.subr.mxu0 0.0
  %715 = vmatpush1.msra.mxu0 0.0
  %716 = vmatprep.subr.mxu0 0.0
  %717 = vmatpush1.msra.mxu0 0.0
  %718 = vmatprep.subr.mxu0 0.0
  %719 = vmatpush1.msra.mxu0 0.0
  %720 = vmatprep.subr.mxu0 0.0
  %721 = vmatpush1.msra.mxu0 0.0
  %722 = vmatprep.subr.mxu0 0.0
  %723 = vmatpush1.msra.mxu0 0.0
  %724 = vmatprep.subr.mxu0 0.0
  %725 = vmatpush1.msra.mxu0 0.0
  %726 = vmatprep.subr.mxu0 0.0
  %727 = vmatpush1.msra.mxu0 0.0
  %728 = vmatprep.subr.mxu0 0.0
  %729 = vmatpush1.msra.mxu0 0.0
  %730 = vmatprep.subr.mxu0 0.0
  %731 = vmatpush1.msra.mxu0 0.0
  %732 = vmatprep.subr.mxu0 0.0
  %733 = vmatpush1.msra.mxu0 0.0
  %734 = vmatprep.subr.mxu0 0.0
  %735 = vmatpush1.msra.mxu0 0.0
  %736 = vmatprep.subr.mxu0 0.0
  %737 = vmatpush1.msra.mxu0 0.0
  %738 = vmatprep.subr.mxu0 0.0
  %739 = vmatpush1.msra.mxu0 0.0
  %740 = vmatprep.subr.mxu0 0.0
  %741 = vmatpush1.msra.mxu0 0.0
  %742 = vmatprep.subr.mxu0 0.0
  %743 = vmatpush1.msra.mxu0 0.0
  %744 = vmatprep.subr.mxu0 0.0
  %745 = vmatpush1.msra.mxu0 0.0
  %746 = vmatprep.mubr.f32.mxu0 0.0
  %747 = vmatmul.mubr.f32.gmra.mrb[0].mxu0 %v680
  %v748 = vpop.f32.mrb[0].mxu0
  %v749 = vadd.f32 0.0, %v748
  %v750 = vpop.f32.mrb[0].mxu0
  %751 = vdwg.mxu0
  %v752 = vld [vmem:[%s3] sm:$0xff]
  %v753 = vld [vmem:[%s5 + $0x9] sm:$0x1]
  %v754 = vld [vmem:[%s5 + $0xd] sm:$0x1]
  %v755 = vld [vmem:[%s5 + $0x11] sm:$0x1]
  %s756 = scalar_lea.vmem %s2, 32
  %v757 = vld [vmem:[%s756] sm:$0xff]
  %v758 = vld [vmem:[%s756 + $0x8] sm:$0xff]
  %v759 = vld [vmem:[%s756 + $0x10] sm:$0xff]
  %v760 = vld [vmem:[%s756 + $0x18] sm:$0xff]
  %v761 = vlaneseq
  %v762 = vshrl.u32 %v761, 7
  %v763 = vsub.s32 0, %v762
  %v764 = vrot.slane %v753, %v763
  %765 = vmatprep.subr.mxu0 0.0
  %766 = vmatpush1.msra.mxu0 %v757
  %767 = vmatprep.subr.mxu0 0.0
  %768 = vmatpush1.msra.mxu0 %v758
  %769 = vmatprep.subr.mxu0 0.0
  %770 = vmatpush1.msra.mxu0 %v759
  %771 = vmatprep.subr.mxu0 0.0
  %772 = vmatpush1.msra.mxu0 %v760
  %773 = vmatprep.subr.mxu0 0.0
  %774 = vmatpush1.msra.mxu0 0.0
  %775 = vmatprep.subr.mxu0 0.0
  %776 = vmatpush1.msra.mxu0 0.0
  %777 = vmatprep.subr.mxu0 0.0
  %778 = vmatpush1.msra.mxu0 0.0
  %779 = vmatprep.subr.mxu0 0.0
  %780 = vmatpush1.msra.mxu0 0.0
  %781 = vmatprep.subr.mxu0 0.0
  %782 = vmatpush1.msra.mxu0 0.0
  %783 = vmatprep.subr.mxu0 0.0
  %784 = vmatpush1.msra.mxu0 0.0
  %785 = vmatprep.subr.mxu0 0.0
  %786 = vmatpush1.msra.mxu0 0.0
  %787 = vmatprep.subr.mxu0 0.0
  %788 = vmatpush1.msra.mxu0 0.0
  %789 = vmatprep.subr.mxu0 0.0
  %790 = vmatpush1.msra.mxu0 0.0
  %791 = vmatprep.subr.mxu0 0.0
  %792 = vmatpush1.msra.mxu0 0.0
  %793 = vmatprep.subr.mxu0 0.0
  %794 = vmatpush1.msra.mxu0 0.0
  %795 = vmatprep.subr.mxu0 0.0
  %796 = vmatpush1.msra.mxu0 0.0
  %797 = vmatprep.subr.mxu0 0.0
  %798 = vmatpush1.msra.mxu0 0.0
  %799 = vmatprep.subr.mxu0 0.0
  %800 = vmatpush1.msra.mxu0 0.0
  %801 = vmatprep.subr.mxu0 0.0
  %802 = vmatpush1.msra.mxu0 0.0
  %803 = vmatprep.subr.mxu0 0.0
  %804 = vmatpush1.msra.mxu0 0.0
  %805 = vmatprep.subr.mxu0 0.0
  %806 = vmatpush1.msra.mxu0 0.0
  %807 = vmatprep.subr.mxu0 0.0
  %808 = vmatpush1.msra.mxu0 0.0
  %809 = vmatprep.subr.mxu0 0.0
  %810 = vmatpush1.msra.mxu0 0.0
  %811 = vmatprep.subr.mxu0 0.0
  %812 = vmatpush1.msra.mxu0 0.0
  %813 = vmatprep.subr.mxu0 0.0
  %814 = vmatpush1.msra.mxu0 0.0
  %815 = vmatprep.subr.mxu0 0.0
  %816 = vmatpush1.msra.mxu0 0.0
  %817 = vmatprep.subr.mxu0 0.0
  %818 = vmatpush1.msra.mxu0 0.0
  %819 = vmatprep.subr.mxu0 0.0
  %820 = vmatpush1.msra.mxu0 0.0
  %821 = vmatprep.subr.mxu0 0.0
  %822 = vmatpush1.msra.mxu0 0.0
  %823 = vmatprep.subr.mxu0 0.0
  %824 = vmatpush1.msra.mxu0 0.0
  %825 = vmatprep.subr.mxu0 0.0
  %826 = vmatpush1.msra.mxu0 0.0
  %827 = vmatprep.subr.mxu0 0.0
  %828 = vmatpush1.msra.mxu0 0.0
  %829 = vmatprep.mubr.f32.mxu0 0.0
  %830 = vmatmul.mubr.f32.gmra.mrb[0].mxu0 %v183
  %v831 = vpop.f32.mrb[0].mxu0
  %v832 = vadd.f32 %v764, %v831
  %v833 = vpop.f32.mrb[0].mxu0
  %834 = vmatprep.mubr.f32.mxu0 0.0
  %835 = vmatmul.mubr.f32.gmra.mrb[0].mxu0 %v186
  %v836 = vpop.f32.mrb[0].mxu0
  %v837 = vadd.f32 %v764, %v836
  %v838 = vpop.f32.mrb[0].mxu0
  %839 = vdwg.mxu0
  %s840 = scalar_lea.vmem %s2, 160
  %v841 = vld [vmem:[%s840] sm:$0xff]
  %v842 = vld [vmem:[%s840 + $0x8] sm:$0xff]
  %v843 = vld [vmem:[%s840 + $0x10] sm:$0xff]
  %v844 = vld [vmem:[%s840 + $0x18] sm:$0xff]
  %v845 = vlaneseq
  %v846 = vshrl.u32 %v845, 7
  %v847 = vsub.s32 0, %v846
  %v848 = vrot.slane %v754, %v847
  %849 = vmatprep.subr.mxu0 0.0
  %850 = vmatpush1.msra.mxu0 %v841
  %851 = vmatprep.subr.mxu0 0.0
  %852 = vmatpush1.msra.mxu0 %v842
  %853 = vmatprep.subr.mxu0 0.0
  %854 = vmatpush1.msra.mxu0 %v843
  %855 = vmatprep.subr.mxu0 0.0
  %856 = vmatpush1.msra.mxu0 %v844
  %857 = vmatprep.subr.mxu0 0.0
  %858 = vmatpush1.msra.mxu0 0.0
  %859 = vmatprep.subr.mxu0 0.0
  %860 = vmatpush1.msra.mxu0 0.0
  %861 = vmatprep.subr.mxu0 0.0
  %862 = vmatpush1.msra.mxu0 0.0
  %863 = vmatprep.subr.mxu0 0.0
  %864 = vmatpush1.msra.mxu0 0.0
  %865 = vmatprep.subr.mxu0 0.0
  %866 = vmatpush1.msra.mxu0 0.0
  %867 = vmatprep.subr.mxu0 0.0
  %868 = vmatpush1.msra.mxu0 0.0
  %869 = vmatprep.subr.mxu0 0.0
  %870 = vmatpush1.msra.mxu0 0.0
  %871 = vmatprep.subr.mxu0 0.0
  %872 = vmatpush1.msra.mxu0 0.0
  %873 = vmatprep.subr.mxu0 0.0
  %874 = vmatpush1.msra.mxu0 0.0
  %875 = vmatprep.subr.mxu0 0.0
  %876 = vmatpush1.msra.mxu0 0.0
  %877 = vmatprep.subr.mxu0 0.0
  %878 = vmatpush1.msra.mxu0 0.0
  %879 = vmatprep.subr.mxu0 0.0
  %880 = vmatpush1.msra.mxu0 0.0
  %881 = vmatprep.subr.mxu0 0.0
  %882 = vmatpush1.msra.mxu0 0.0
  %883 = vmatprep.subr.mxu0 0.0
  %884 = vmatpush1.msra.mxu0 0.0
  %885 = vmatprep.subr.mxu0 0.0
  %886 = vmatpush1.msra.mxu0 0.0
  %887 = vmatprep.subr.mxu0 0.0
  %888 = vmatpush1.msra.mxu0 0.0
  %889 = vmatprep.subr.mxu0 0.0
  %890 = vmatpush1.msra.mxu0 0.0
  %891 = vmatprep.subr.mxu0 0.0
  %892 = vmatpush1.msra.mxu0 0.0
  %893 = vmatprep.subr.mxu0 0.0
  %894 = vmatpush1.msra.mxu0 0.0
  %895 = vmatprep.subr.mxu0 0.0
  %896 = vmatpush1.msra.mxu0 0.0
  %897 = vmatprep.subr.mxu0 0.0
  %898 = vmatpush1.msra.mxu0 0.0
  %899 = vmatprep.subr.mxu0 0.0
  %900 = vmatpush1.msra.mxu0 0.0
  %901 = vmatprep.subr.mxu0 0.0
  %902 = vmatpush1.msra.mxu0 0.0
  %903 = vmatprep.subr.mxu0 0.0
  %904 = vmatpush1.msra.mxu0 0.0
  %905 = vmatprep.subr.mxu0 0.0
  %906 = vmatpush1.msra.mxu0 0.0
  %907 = vmatprep.subr.mxu0 0.0
  %908 = vmatpush1.msra.mxu0 0.0
  %909 = vmatprep.subr.mxu0 0.0
  %910 = vmatpush1.msra.mxu0 0.0
  %911 = vmatprep.subr.mxu0 0.0
  %912 = vmatpush1.msra.mxu0 0.0
  %913 = vmatprep.mubr.f32.mxu0 0.0
  %914 = vmatmul.mubr.f32.gmra.mrb[0].mxu0 %v183
  %v915 = vpop.f32.mrb[0].mxu0
  %v916 = vadd.f32 %v848, %v915
  %v917 = vpop.f32.mrb[0].mxu0
  %918 = vmatprep.mubr.f32.mxu0 0.0
  %919 = vmatmul.mubr.f32.gmra.mrb[0].mxu0 %v186
  %v920 = vpop.f32.mrb[0].mxu0
  %v921 = vadd.f32 %v848, %v920
  %v922 = vpop.f32.mrb[0].mxu0
  %923 = vdwg.mxu0
  %s924 = scalar_lea.vmem %s2, 288
  %v925 = vld [vmem:[%s924] sm:$0xff]
  %v926 = vld [vmem:[%s924 + $0x8] sm:$0xff]
  %v927 = vld [vmem:[%s924 + $0x10] sm:$0xff]
  %v928 = vld [vmem:[%s924 + $0x18] sm:$0xff]
  %v929 = vlaneseq
  %v930 = vshrl.u32 %v929, 7
  %v931 = vsub.s32 0, %v930
  %v932 = vrot.slane %v755, %v931
  %933 = vmatprep.subr.mxu0 0.0
  %934 = vmatpush1.msra.mxu0 %v925
  %935 = vmatprep.subr.mxu0 0.0
  %936 = vmatpush1.msra.mxu0 %v926
  %937 = vmatprep.subr.mxu0 0.0
  %938 = vmatpush1.msra.mxu0 %v927
  %939 = vmatprep.subr.mxu0 0.0
  %940 = vmatpush1.msra.mxu0 %v928
  %941 = vmatprep.subr.mxu0 0.0
  %942 = vmatpush1.msra.mxu0 0.0
  %943 = vmatprep.subr.mxu0 0.0
  %944 = vmatpush1.msra.mxu0 0.0
  %945 = vmatprep.subr.mxu0 0.0
  %946 = vmatpush1.msra.mxu0 0.0
  %947 = vmatprep.subr.mxu0 0.0
  %948 = vmatpush1.msra.mxu0 0.0
  %949 = vmatprep.subr.mxu0 0.0
  %950 = vmatpush1.msra.mxu0 0.0
  %951 = vmatprep.subr.mxu0 0.0
  %952 = vmatpush1.msra.mxu0 0.0
  %953 = vmatprep.subr.mxu0 0.0
  %954 = vmatpush1.msra.mxu0 0.0
  %955 = vmatprep.subr.mxu0 0.0
  %956 = vmatpush1.msra.mxu0 0.0
  %957 = vmatprep.subr.mxu0 0.0
  %958 = vmatpush1.msra.mxu0 0.0
  %959 = vmatprep.subr.mxu0 0.0
  %960 = vmatpush1.msra.mxu0 0.0
  %961 = vmatprep.subr.mxu0 0.0
  %962 = vmatpush1.msra.mxu0 0.0
  %963 = vmatprep.subr.mxu0 0.0
  %964 = vmatpush1.msra.mxu0 0.0
  %965 = vmatprep.subr.mxu0 0.0
  %966 = vmatpush1.msra.mxu0 0.0
  %967 = vmatprep.subr.mxu0 0.0
  %968 = vmatpush1.msra.mxu0 0.0
  %969 = vmatprep.subr.mxu0 0.0
  %970 = vmatpush1.msra.mxu0 0.0
  %971 = vmatprep.subr.mxu0 0.0
  %972 = vmatpush1.msra.mxu0 0.0
  %973 = vmatprep.subr.mxu0 0.0
  %974 = vmatpush1.msra.mxu0 0.0
  %975 = vmatprep.subr.mxu0 0.0
  %976 = vmatpush1.msra.mxu0 0.0
  %977 = vmatprep.subr.mxu0 0.0
  %978 = vmatpush1.msra.mxu0 0.0
  %979 = vmatprep.subr.mxu0 0.0
  %980 = vmatpush1.msra.mxu0 0.0
  %981 = vmatprep.subr.mxu0 0.0
  %982 = vmatpush1.msra.mxu0 0.0
  %983 = vmatprep.subr.mxu0 0.0
  %984 = vmatpush1.msra.mxu0 0.0
  %985 = vmatprep.subr.mxu0 0.0
  %986 = vmatpush1.msra.mxu0 0.0
  %987 = vmatprep.subr.mxu0 0.0
  %988 = vmatpush1.msra.mxu0 0.0
  %989 = vmatprep.subr.mxu0 0.0
  %990 = vmatpush1.msra.mxu0 0.0
  %991 = vmatprep.subr.mxu0 0.0
  %992 = vmatpush1.msra.mxu0 0.0
  %993 = vmatprep.subr.mxu0 0.0
  %994 = vmatpush1.msra.mxu0 0.0
  %995 = vmatprep.subr.mxu0 0.0
  %996 = vmatpush1.msra.mxu0 0.0
  %997 = vmatprep.mubr.f32.mxu0 0.0
  %998 = vmatmul.mubr.f32.gmra.mrb[0].mxu0 %v183
  %v999 = vpop.f32.mrb[0].mxu0
  %v1000 = vadd.f32 %v932, %v999
  %v1001 = vpop.f32.mrb[0].mxu0
  %1002 = vmatprep.mubr.f32.mxu0 0.0
  %1003 = vmatmul.mubr.f32.gmra.mrb[0].mxu0 %v186
  %v1004 = vpop.f32.mrb[0].mxu0
  %v1005 = vadd.f32 %v932, %v1004
  %v1006 = vpop.f32.mrb[0].mxu0
  %1007 = vdwg.mxu0
  %v1009 = vsel %vm431, %v832, 0
  %v1012 = vsel %vm431, %v916, 0
  %1014 = vmatprep.subr.mxu0 0.0
  %1015 = vmatpush1.xpose.msra.mxu0 %v1012
  %1016 = vmatprep.subr.mxu0 0.0
  %1017 = vmatpush1.xpose.msra.mxu0 0.0
  %1018 = vmatprep.subr.mxu0 0.0
  %1019 = vmatpush1.xpose.msra.mxu0 0.0
  %1020 = vmatprep.subr.mxu0 0.0
  %1021 = vmatpush1.xpose.msra.mxu0 0.0
  %1022 = vmatprep.subr.mxu0 0.0
  %1023 = vmatpush1.xpose.msra.mxu0 0.0
  %1024 = vmatprep.subr.mxu0 0.0
  %1025 = vmatpush1.xpose.msra.mxu0 0.0
  %1026 = vmatprep.subr.mxu0 0.0
  %1027 = vmatpush1.xpose.msra.mxu0 0.0
  %1028 = vmatprep.subr.mxu0 0.0
  %1029 = vmatpush1.xpose.msra.mxu0 0.0
  %1030 = vmatprep.subr.mxu0 0.0
  %1031 = vmatpush1.xpose.msra.mxu0 0.0
  %1032 = vmatprep.subr.mxu0 0.0
  %1033 = vmatpush1.xpose.msra.mxu0 0.0
  %1034 = vmatprep.subr.mxu0 0.0
  %1035 = vmatpush1.xpose.msra.mxu0 0.0
  %1036 = vmatprep.subr.mxu0 0.0
  %1037 = vmatpush1.xpose.msra.mxu0 0.0
  %1038 = vmatprep.subr.mxu0 0.0
  %1039 = vmatpush1.xpose.msra.mxu0 0.0
  %1040 = vmatprep.subr.mxu0 0.0
  %1041 = vmatpush1.xpose.msra.mxu0 0.0
  %1042 = vmatprep.subr.mxu0 0.0
  %1043 = vmatpush1.xpose.msra.mxu0 0.0
  %1044 = vmatprep.subr.mxu0 0.0
  %1045 = vmatpush1.xpose.msra.mxu0 0.0
  %1046 = vmatprep.subr.mxu0 0.0
  %1047 = vmatpush1.xpose.msra.mxu0 0.0
  %1048 = vmatprep.subr.mxu0 0.0
  %1049 = vmatpush1.xpose.msra.mxu0 0.0
  %1050 = vmatprep.subr.mxu0 0.0
  %1051 = vmatpush1.xpose.msra.mxu0 0.0
  %1052 = vmatprep.subr.mxu0 0.0
  %1053 = vmatpush1.xpose.msra.mxu0 0.0
  %1054 = vmatprep.subr.mxu0 0.0
  %1055 = vmatpush1.xpose.msra.mxu0 0.0
  %1056 = vmatprep.subr.mxu0 0.0
  %1057 = vmatpush1.xpose.msra.mxu0 0.0
  %1058 = vmatprep.subr.mxu0 0.0
  %1059 = vmatpush1.xpose.msra.mxu0 0.0
  %1060 = vmatprep.subr.mxu0 0.0
  %1061 = vmatpush1.xpose.msra.mxu0 0.0
  %1062 = vmatprep.subr.mxu0 0.0
  %1063 = vmatpush1.xpose.msra.mxu0 0.0
  %1064 = vmatprep.subr.mxu0 0.0
  %1065 = vmatpush1.xpose.msra.mxu0 0.0
  %1066 = vmatprep.subr.mxu0 0.0
  %1067 = vmatpush1.xpose.msra.mxu0 0.0
  %1068 = vmatprep.subr.mxu0 0.0
  %1069 = vmatpush1.xpose.msra.mxu0 0.0
  %1070 = vmatprep.subr.mxu0 0.0
  %1071 = vmatpush1.xpose.msra.mxu0 0.0
  %1072 = vmatprep.subr.mxu0 0.0
  %1073 = vmatpush1.xpose.msra.mxu0 0.0
  %1074 = vmatprep.subr.mxu0 0.0
  %1075 = vmatpush1.xpose.msra.mxu0 0.0
  %1076 = vmatprep.subr.mxu0 0.0
  %1077 = vmatpush1.xpose.msra.mxu0 0.0
  %1078 = vmatprep.mubr.f32.mxu0 0.0
  %1079 = vmatmul.mubr.f32.gmra.mrb[0].mxu0 %v1009
  %v1080 = vpop.f32.mrb[0].mxu0
  %v1081 = vadd.f32 0.0, %v1080
  %v1082 = vpop.f32.mrb[0].mxu0
  %1083 = vdwg.mxu0
  %v1085 = vsel %vm431, %v837, 0
  %v1088 = vsel %vm431, %v921, 0
  %1090 = vmatprep.subr.mxu0 0.0
  %1091 = vmatpush1.xpose.msra.mxu0 %v1088
  %1092 = vmatprep.subr.mxu0 0.0
  %1093 = vmatpush1.xpose.msra.mxu0 0.0
  %1094 = vmatprep.subr.mxu0 0.0
  %1095 = vmatpush1.xpose.msra.mxu0 0.0
  %1096 = vmatprep.subr.mxu0 0.0
  %1097 = vmatpush1.xpose.msra.mxu0 0.0
  %1098 = vmatprep.subr.mxu0 0.0
  %1099 = vmatpush1.xpose.msra.mxu0 0.0
  %1100 = vmatprep.subr.mxu0 0.0
  %1101 = vmatpush1.xpose.msra.mxu0 0.0
  %1102 = vmatprep.subr.mxu0 0.0
  %1103 = vmatpush1.xpose.msra.mxu0 0.0
  %1104 = vmatprep.subr.mxu0 0.0
  %1105 = vmatpush1.xpose.msra.mxu0 0.0
  %1106 = vmatprep.subr.mxu0 0.0
  %1107 = vmatpush1.xpose.msra.mxu0 0.0
  %1108 = vmatprep.subr.mxu0 0.0
  %1109 = vmatpush1.xpose.msra.mxu0 0.0
  %1110 = vmatprep.subr.mxu0 0.0
  %1111 = vmatpush1.xpose.msra.mxu0 0.0
  %1112 = vmatprep.subr.mxu0 0.0
  %1113 = vmatpush1.xpose.msra.mxu0 0.0
  %1114 = vmatprep.subr.mxu0 0.0
  %1115 = vmatpush1.xpose.msra.mxu0 0.0
  %1116 = vmatprep.subr.mxu0 0.0
  %1117 = vmatpush1.xpose.msra.mxu0 0.0
  %1118 = vmatprep.subr.mxu0 0.0
  %1119 = vmatpush1.xpose.msra.mxu0 0.0
  %1120 = vmatprep.subr.mxu0 0.0
  %1121 = vmatpush1.xpose.msra.mxu0 0.0
  %1122 = vmatprep.subr.mxu0 0.0
  %1123 = vmatpush1.xpose.msra.mxu0 0.0
  %1124 = vmatprep.subr.mxu0 0.0
  %1125 = vmatpush1.xpose.msra.mxu0 0.0
  %1126 = vmatprep.subr.mxu0 0.0
  %1127 = vmatpush1.xpose.msra.mxu0 0.0
  %1128 = vmatprep.subr.mxu0 0.0
  %1129 = vmatpush1.xpose.msra.mxu0 0.0
  %1130 = vmatprep.subr.mxu0 0.0
  %1131 = vmatpush1.xpose.msra.mxu0 0.0
  %1132 = vmatprep.subr.mxu0 0.0
  %1133 = vmatpush1.xpose.msra.mxu0 0.0
  %1134 = vmatprep.subr.mxu0 0.0
  %1135 = vmatpush1.xpose.msra.mxu0 0.0
  %1136 = vmatprep.subr.mxu0 0.0
  %1137 = vmatpush1.xpose.msra.mxu0 0.0
  %1138 = vmatprep.subr.mxu0 0.0
  %1139 = vmatpush1.xpose.msra.mxu0 0.0
  %1140 = vmatprep.subr.mxu0 0.0
  %1141 = vmatpush1.xpose.msra.mxu0 0.0
  %1142 = vmatprep.subr.mxu0 0.0
  %1143 = vmatpush1.xpose.msra.mxu0 0.0
  %1144 = vmatprep.subr.mxu0 0.0
  %1145 = vmatpush1.xpose.msra.mxu0 0.0
  %1146 = vmatprep.subr.mxu0 0.0
  %1147 = vmatpush1.xpose.msra.mxu0 0.0
  %1148 = vmatprep.subr.mxu0 0.0
  %1149 = vmatpush1.xpose.msra.mxu0 0.0
  %1150 = vmatprep.subr.mxu0 0.0
  %1151 = vmatpush1.xpose.msra.mxu0 0.0
  %1152 = vmatprep.subr.mxu0 0.0
  %1153 = vmatpush1.xpose.msra.mxu0 0.0
  %1154 = vmatprep.mubr.f32.mxu0 0.0
  %1155 = vmatmul.mubr.f32.gmra.mrb[0].mxu0 %v1085
  %v1156 = vpop.f32.mrb[0].mxu0
  %v1157 = vadd.f32 0.0, %v1156
  %v1158 = vpop.f32.mrb[0].mxu0
  %1159 = vdwg.mxu0
  %v1160 = vsel %vm431, %v1081, -inf
  %1161 = vmax.xlane.f32.xlu0 %v1160
  %v1162 = vpop.xlane.xlu0 %1161
  %v1163 = vsel %vm431, %v1157, -inf
  %1164 = vmax.xlane.f32.xlu0 %v1163
  %v1165 = vpop.xlane.xlu0 %1164
  %v1166 = vsub.f32 %v1081, %v1162
  %v1167 = vsub.f32 %v1157, %v1165
  %v1168 = vmul.f32 %v1166, 1.442695
  %v1169 = vpow.pop %v1168
  %v1170 = vmul.f32 %v1167, 1.442695
  %v1171 = vpow.pop %v1170
  %v1172 = vsel %vm431, %v1169, 0.0
  %1173 = vadd.xlane.f32.xlu0 %v1172
  %v1174 = vpop.xlane.xlu0 %1173
  %v1175 = vsel %vm431, %v1171, 0.0
  %1176 = vadd.xlane.f32.xlu0 %v1175
  %v1177 = vpop.xlane.xlu0 %1176
  %v1178 = vrcp.pop %v1174
  %v1179 = vrcp.pop %v1177
  %v1180 = vmul.f32 %v1169, %v1178
  %v1181 = vmul.f32 %v1171, %v1179
  %v1183 = vsel %vm431, %v1180, 0
  %1185 = vmatprep.subr.mxu0 0.0
  %1186 = vmatpush1.msra.mxu0 %v1000
  %1187 = vmatprep.subr.mxu0 0.0
  %1188 = vmatpush1.msra.mxu0 0.0
  %1189 = vmatprep.subr.mxu0 0.0
  %1190 = vmatpush1.msra.mxu0 0.0
  %1191 = vmatprep.subr.mxu0 0.0
  %1192 = vmatpush1.msra.mxu0 0.0
  %1193 = vmatprep.subr.mxu0 0.0
  %1194 = vmatpush1.msra.mxu0 0.0
  %1195 = vmatprep.subr.mxu0 0.0
  %1196 = vmatpush1.msra.mxu0 0.0
  %1197 = vmatprep.subr.mxu0 0.0
  %1198 = vmatpush1.msra.mxu0 0.0
  %1199 = vmatprep.subr.mxu0 0.0
  %1200 = vmatpush1.msra.mxu0 0.0
  %1201 = vmatprep.subr.mxu0 0.0
  %1202 = vmatpush1.msra.mxu0 0.0
  %1203 = vmatprep.subr.mxu0 0.0
  %1204 = vmatpush1.msra.mxu0 0.0
  %1205 = vmatprep.subr.mxu0 0.0
  %1206 = vmatpush1.msra.mxu0 0.0
  %1207 = vmatprep.subr.mxu0 0.0
  %1208 = vmatpush1.msra.mxu0 0.0
  %1209 = vmatprep.subr.mxu0 0.0
  %1210 = vmatpush1.msra.mxu0 0.0
  %1211 = vmatprep.subr.mxu0 0.0
  %1212 = vmatpush1.msra.mxu0 0.0
  %1213 = vmatprep.subr.mxu0 0.0
  %1214 = vmatpush1.msra.mxu0 0.0
  %1215 = vmatprep.subr.mxu0 0.0
  %1216 = vmatpush1.msra.mxu0 0.0
  %1217 = vmatprep.subr.mxu0 0.0
  %1218 = vmatpush1.msra.mxu0 0.0
  %1219 = vmatprep.subr.mxu0 0.0
  %1220 = vmatpush1.msra.mxu0 0.0
  %1221 = vmatprep.subr.mxu0 0.0
  %1222 = vmatpush1.msra.mxu0 0.0
  %1223 = vmatprep.subr.mxu0 0.0
  %1224 = vmatpush1.msra.mxu0 0.0
  %1225 = vmatprep.subr.mxu0 0.0
  %1226 = vmatpush1.msra.mxu0 0.0
  %1227 = vmatprep.subr.mxu0 0.0
  %1228 = vmatpush1.msra.mxu0 0.0
  %1229 = vmatprep.subr.mxu0 0.0
  %1230 = vmatpush1.msra.mxu0 0.0
  %1231 = vmatprep.subr.mxu0 0.0
  %1232 = vmatpush1.msra.mxu0 0.0
  %1233 = vmatprep.subr.mxu0 0.0
  %1234 = vmatpush1.msra.mxu0 0.0
  %1235 = vmatprep.subr.mxu0 0.0
  %1236 = vmatpush1.msra.mxu0 0.0
  %1237 = vmatprep.subr.mxu0 0.0
  %1238 = vmatpush1.msra.mxu0 0.0
  %1239 = vmatprep.subr.mxu0 0.0
  %1240 = vmatpush1.msra.mxu0 0.0
  %1241 = vmatprep.subr.mxu0 0.0
  %1242 = vmatpush1.msra.mxu0 0.0
  %1243 = vmatprep.subr.mxu0 0.0
  %1244 = vmatpush1.msra.mxu0 0.0
  %1245 = vmatprep.subr.mxu0 0.0
  %1246 = vmatpush1.msra.mxu0 0.0
  %1247 = vmatprep.subr.mxu0 0.0
  %1248 = vmatpush1.msra.mxu0 0.0
  %1249 = vmatprep.mubr.f32.mxu0 0.0
  %1250 = vmatmul.mubr.f32.gmra.mrb[0].mxu0 %v1183
  %v1251 = vpop.f32.mrb[0].mxu0
  %v1252 = vadd.f32 0.0, %v1251
  %v1253 = vpop.f32.mrb[0].mxu0
  %1254 = vdwg.mxu0
  %v1256 = vsel %vm431, %v1181, 0
  %1258 = vmatprep.subr.mxu0 0.0
  %1259 = vmatpush1.msra.mxu0 %v1005
  %1260 = vmatprep.subr.mxu0 0.0
  %1261 = vmatpush1.msra.mxu0 0.0
  %1262 = vmatprep.subr.mxu0 0.0
  %1263 = vmatpush1.msra.mxu0 0.0
  %1264 = vmatprep.subr.mxu0 0.0
  %1265 = vmatpush1.msra.mxu0 0.0
  %1266 = vmatprep.subr.mxu0 0.0
  %1267 = vmatpush1.msra.mxu0 0.0
  %1268 = vmatprep.subr.mxu0 0.0
  %1269 = vmatpush1.msra.mxu0 0.0
  %1270 = vmatprep.subr.mxu0 0.0
  %1271 = vmatpush1.msra.mxu0 0.0
  %1272 = vmatprep.subr.mxu0 0.0
  %1273 = vmatpush1.msra.mxu0 0.0
  %1274 = vmatprep.subr.mxu0 0.0
  %1275 = vmatpush1.msra.mxu0 0.0
  %1276 = vmatprep.subr.mxu0 0.0
  %1277 = vmatpush1.msra.mxu0 0.0
  %1278 = vmatprep.subr.mxu0 0.0
  %1279 = vmatpush1.msra.mxu0 0.0
  %1280 = vmatprep.subr.mxu0 0.0
  %1281 = vmatpush1.msra.mxu0 0.0
  %1282 = vmatprep.subr.mxu0 0.0
  %1283 = vmatpush1.msra.mxu0 0.0
  %1284 = vmatprep.subr.mxu0 0.0
  %1285 = vmatpush1.msra.mxu0 0.0
  %1286 = vmatprep.subr.mxu0 0.0
  %1287 = vmatpush1.msra.mxu0 0.0
  %1288 = vmatprep.subr.mxu0 0.0
  %1289 = vmatpush1.msra.mxu0 0.0
  %1290 = vmatprep.subr.mxu0 0.0
  %1291 = vmatpush1.msra.mxu0 0.0
  %1292 = vmatprep.subr.mxu0 0.0
  %1293 = vmatpush1.msra.mxu0 0.0
  %1294 = vmatprep.subr.mxu0 0.0
  %1295 = vmatpush1.msra.mxu0 0.0
  %1296 = vmatprep.subr.mxu0 0.0
  %1297 = vmatpush1.msra.mxu0 0.0
  %1298 = vmatprep.subr.mxu0 0.0
  %1299 = vmatpush1.msra.mxu0 0.0
  %1300 = vmatprep.subr.mxu0 0.0
  %1301 = vmatpush1.msra.mxu0 0.0
  %1302 = vmatprep.subr.mxu0 0.0
  %1303 = vmatpush1.msra.mxu0 0.0
  %1304 = vmatprep.subr.mxu0 0.0
  %1305 = vmatpush1.msra.mxu0 0.0
  %1306 = vmatprep.subr.mxu0 0.0
  %1307 = vmatpush1.msra.mxu0 0.0
  %1308 = vmatprep.subr.mxu0 0.0
  %1309 = vmatpush1.msra.mxu0 0.0
  %1310 = vmatprep.subr.mxu0 0.0
  %1311 = vmatpush1.msra.mxu0 0.0
  %1312 = vmatprep.subr.mxu0 0.0
  %1313 = vmatpush1.msra.mxu0 0.0
  %1314 = vmatprep.subr.mxu0 0.0
  %1315 = vmatpush1.msra.mxu0 0.0
  %1316 = vmatprep.subr.mxu0 0.0
  %1317 = vmatpush1.msra.mxu0 0.0
  %1318 = vmatprep.subr.mxu0 0.0
  %1319 = vmatpush1.msra.mxu0 0.0
  %1320 = vmatprep.subr.mxu0 0.0
  %1321 = vmatpush1.msra.mxu0 0.0
  %1322 = vmatprep.mubr.f32.mxu0 0.0
  %1323 = vmatmul.mubr.f32.gmra.mrb[0].mxu0 %v1256
  %v1324 = vpop.f32.mrb[0].mxu0
  %v1325 = vadd.f32 0.0, %v1324
  %v1326 = vpop.f32.mrb[0].mxu0
  %1327 = vdwg.mxu0
  %s1328 = scalar_lea.vmem %s3, 8
  %v1329 = vld [vmem:[%s1328] sm:$0xff]
  %v1331 = vsel %vm431, %v1252, 0
  %v1334 = vsel %vm431, %v1325, 0
  %1336 = vmatprep.subr.mxu0 0.0
  %1337 = vmatpush1.msra.mxu0 %v1329
  %1338 = vmatprep.subr.mxu0 0.0
  %1339 = vmatpush1.msra.mxu0 0.0
  %1340 = vmatprep.subr.mxu0 0.0
  %1341 = vmatpush1.msra.mxu0 0.0
  %1342 = vmatprep.subr.mxu0 0.0
  %1343 = vmatpush1.msra.mxu0 0.0
  %1344 = vmatprep.subr.mxu0 0.0
  %1345 = vmatpush1.msra.mxu0 0.0
  %1346 = vmatprep.subr.mxu0 0.0
  %1347 = vmatpush1.msra.mxu0 0.0
  %1348 = vmatprep.subr.mxu0 0.0
  %1349 = vmatpush1.msra.mxu0 0.0
  %1350 = vmatprep.subr.mxu0 0.0
  %1351 = vmatpush1.msra.mxu0 0.0
  %1352 = vmatprep.subr.mxu0 0.0
  %1353 = vmatpush1.msra.mxu0 0.0
  %1354 = vmatprep.subr.mxu0 0.0
  %1355 = vmatpush1.msra.mxu0 0.0
  %1356 = vmatprep.subr.mxu0 0.0
  %1357 = vmatpush1.msra.mxu0 0.0
  %1358 = vmatprep.subr.mxu0 0.0
  %1359 = vmatpush1.msra.mxu0 0.0
  %1360 = vmatprep.subr.mxu0 0.0
  %1361 = vmatpush1.msra.mxu0 0.0
  %1362 = vmatprep.subr.mxu0 0.0
  %1363 = vmatpush1.msra.mxu0 0.0
  %1364 = vmatprep.subr.mxu0 0.0
  %1365 = vmatpush1.msra.mxu0 0.0
  %1366 = vmatprep.subr.mxu0 0.0
  %1367 = vmatpush1.msra.mxu0 0.0
  %1368 = vmatprep.subr.mxu0 0.0
  %1369 = vmatpush1.msra.mxu0 0.0
  %1370 = vmatprep.subr.mxu0 0.0
  %1371 = vmatpush1.msra.mxu0 0.0
  %1372 = vmatprep.subr.mxu0 0.0
  %1373 = vmatpush1.msra.mxu0 0.0
  %1374 = vmatprep.subr.mxu0 0.0
  %1375 = vmatpush1.msra.mxu0 0.0
  %1376 = vmatprep.subr.mxu0 0.0
  %1377 = vmatpush1.msra.mxu0 0.0
  %1378 = vmatprep.subr.mxu0 0.0
  %1379 = vmatpush1.msra.mxu0 0.0
  %1380 = vmatprep.subr.mxu0 0.0
  %1381 = vmatpush1.msra.mxu0 0.0
  %1382 = vmatprep.subr.mxu0 0.0
  %1383 = vmatpush1.msra.mxu0 0.0
  %1384 = vmatprep.subr.mxu0 0.0
  %1385 = vmatpush1.msra.mxu0 0.0
  %1386 = vmatprep.subr.mxu0 0.0
  %1387 = vmatpush1.msra.mxu0 0.0
  %1388 = vmatprep.subr.mxu0 0.0
  %1389 = vmatpush1.msra.mxu0 0.0
  %1390 = vmatprep.subr.mxu0 0.0
  %1391 = vmatpush1.msra.mxu0 0.0
  %1392 = vmatprep.subr.mxu0 0.0
  %1393 = vmatpush1.msra.mxu0 0.0
  %1394 = vmatprep.subr.mxu0 0.0
  %1395 = vmatpush1.msra.mxu0 0.0
  %1396 = vmatprep.subr.mxu0 0.0
  %1397 = vmatpush1.msra.mxu0 0.0
  %1398 = vmatprep.subr.mxu0 0.0
  %1399 = vmatpush1.msra.mxu0 0.0
  %1400 = vmatprep.mubr.f32.mxu0 0.0
  %1401 = vmatmul.mubr.f32.gmra.mrb[0].mxu0 %v1331
  %v1402 = vpop.f32.mrb[0].mxu0
  %v1403 = vadd.f32 0.0, %v1402
  %v1404 = vpop.f32.mrb[0].mxu0
  %1405 = vmatprep.mubr.f32.mxu0 0.0
  %1406 = vmatmul.mubr.f32.gmra.mrb[0].mxu0 %v1334
  %v1407 = vpop.f32.mrb[0].mxu0
  %v1408 = vadd.f32 0.0, %v1407
  %v1409 = vpop.f32.mrb[0].mxu0
  %1410 = vdwg.mxu0
  %v1412 = vsel %vm431, %v676, 0
  %v1415 = vsel %vm431, %v749, 0
  %1417 = vmatprep.subr.mxu0 0.0
  %1418 = vmatpush1.msra.mxu0 %v752
  %1419 = vmatprep.subr.mxu0 0.0
  %1420 = vmatpush1.msra.mxu0 0.0
  %1421 = vmatprep.subr.mxu0 0.0
  %1422 = vmatpush1.msra.mxu0 0.0
  %1423 = vmatprep.subr.mxu0 0.0
  %1424 = vmatpush1.msra.mxu0 0.0
  %1425 = vmatprep.subr.mxu0 0.0
  %1426 = vmatpush1.msra.mxu0 0.0
  %1427 = vmatprep.subr.mxu0 0.0
  %1428 = vmatpush1.msra.mxu0 0.0
  %1429 = vmatprep.subr.mxu0 0.0
  %1430 = vmatpush1.msra.mxu0 0.0
  %1431 = vmatprep.subr.mxu0 0.0
  %1432 = vmatpush1.msra.mxu0 0.0
  %1433 = vmatprep.subr.mxu0 0.0
  %1434 = vmatpush1.msra.mxu0 0.0
  %1435 = vmatprep.subr.mxu0 0.0
  %1436 = vmatpush1.msra.mxu0 0.0
  %1437 = vmatprep.subr.mxu0 0.0
  %1438 = vmatpush1.msra.mxu0 0.0
  %1439 = vmatprep.subr.mxu0 0.0
  %1440 = vmatpush1.msra.mxu0 0.0
  %1441 = vmatprep.subr.mxu0 0.0
  %1442 = vmatpush1.msra.mxu0 0.0
  %1443 = vmatprep.subr.mxu0 0.0
  %1444 = vmatpush1.msra.mxu0 0.0
  %1445 = vmatprep.subr.mxu0 0.0
  %1446 = vmatpush1.msra.mxu0 0.0
  %1447 = vmatprep.subr.mxu0 0.0
  %1448 = vmatpush1.msra.mxu0 0.0
  %1449 = vmatprep.subr.mxu0 0.0
  %1450 = vmatpush1.msra.mxu0 0.0
  %1451 = vmatprep.subr.mxu0 0.0
  %1452 = vmatpush1.msra.mxu0 0.0
  %1453 = vmatprep.subr.mxu0 0.0
  %1454 = vmatpush1.msra.mxu0 0.0
  %1455 = vmatprep.subr.mxu0 0.0
  %1456 = vmatpush1.msra.mxu0 0.0
  %1457 = vmatprep.subr.mxu0 0.0
  %1458 = vmatpush1.msra.mxu0 0.0
  %1459 = vmatprep.subr.mxu0 0.0
  %1460 = vmatpush1.msra.mxu0 0.0
  %1461 = vmatprep.subr.mxu0 0.0
  %1462 = vmatpush1.msra.mxu0 0.0
  %1463 = vmatprep.subr.mxu0 0.0
  %1464 = vmatpush1.msra.mxu0 0.0
  %1465 = vmatprep.subr.mxu0 0.0
  %1466 = vmatpush1.msra.mxu0 0.0
  %1467 = vmatprep.subr.mxu0 0.0
  %1468 = vmatpush1.msra.mxu0 0.0
  %1469 = vmatprep.subr.mxu0 0.0
  %1470 = vmatpush1.msra.mxu0 0.0
  %1471 = vmatprep.subr.mxu0 0.0
  %1472 = vmatpush1.msra.mxu0 0.0
  %1473 = vmatprep.subr.mxu0 0.0
  %1474 = vmatpush1.msra.mxu0 0.0
  %1475 = vmatprep.subr.mxu0 0.0
  %1476 = vmatpush1.msra.mxu0 0.0
  %1477 = vmatprep.subr.mxu0 0.0
  %1478 = vmatpush1.msra.mxu0 0.0
  %1479 = vmatprep.subr.mxu0 0.0
  %1480 = vmatpush1.msra.mxu0 0.0
  %1481 = vmatprep.mubr.f32.mxu0 0.0
  %1482 = vmatmul.mubr.f32.gmra.mrb[0].mxu0 %v1412
  %v1483 = vpop.f32.mrb[0].mxu0
  %v1484 = vadd.f32 %v1403, %v1483
  %v1485 = vpop.f32.mrb[0].mxu0
  %1486 = vmatprep.mubr.f32.mxu0 0.0
  %1487 = vmatmul.mubr.f32.gmra.mrb[0].mxu0 %v1415
  %v1488 = vpop.f32.mrb[0].mxu0
  %v1489 = vadd.f32 %v1408, %v1488
  %v1490 = vpop.f32.mrb[0].mxu0
  %1491 = vdwg.mxu0
  %v1492 = vld [vmem:[%s5 + $0xa] sm:$0x1]
  %v1493 = vld [vmem:[%s5 + $0xe] sm:$0x1]
  %v1494 = vld [vmem:[%s5 + $0x12] sm:$0x1]
  %s1495 = scalar_lea.vmem %s2, 64
  %v1496 = vld [vmem:[%s1495] sm:$0xff]
  %v1497 = vld [vmem:[%s1495 + $0x8] sm:$0xff]
  %v1498 = vld [vmem:[%s1495 + $0x10] sm:$0xff]
  %v1499 = vld [vmem:[%s1495 + $0x18] sm:$0xff]
  %v1500 = vlaneseq
  %v1501 = vshrl.u32 %v1500, 7
  %v1502 = vsub.s32 0, %v1501
  %v1503 = vrot.slane %v1492, %v1502
  %1504 = vmatprep.subr.mxu0 0.0
  %1505 = vmatpush1.msra.mxu0 %v1496
  %1506 = vmatprep.subr.mxu0 0.0
  %1507 = vmatpush1.msra.mxu0 %v1497
  %1508 = vmatprep.subr.mxu0 0.0
  %1509 = vmatpush1.msra.mxu0 %v1498
  %1510 = vmatprep.subr.mxu0 0.0
  %1511 = vmatpush1.msra.mxu0 %v1499
  %1512 = vmatprep.subr.mxu0 0.0
  %1513 = vmatpush1.msra.mxu0 0.0
  %1514 = vmatprep.subr.mxu0 0.0
  %1515 = vmatpush1.msra.mxu0 0.0
  %1516 = vmatprep.subr.mxu0 0.0
  %1517 = vmatpush1.msra.mxu0 0.0
  %1518 = vmatprep.subr.mxu0 0.0
  %1519 = vmatpush1.msra.mxu0 0.0
  %1520 = vmatprep.subr.mxu0 0.0
  %1521 = vmatpush1.msra.mxu0 0.0
  %1522 = vmatprep.subr.mxu0 0.0
  %1523 = vmatpush1.msra.mxu0 0.0
  %1524 = vmatprep.subr.mxu0 0.0
  %1525 = vmatpush1.msra.mxu0 0.0
  %1526 = vmatprep.subr.mxu0 0.0
  %1527 = vmatpush1.msra.mxu0 0.0
  %1528 = vmatprep.subr.mxu0 0.0
  %1529 = vmatpush1.msra.mxu0 0.0
  %1530 = vmatprep.subr.mxu0 0.0
  %1531 = vmatpush1.msra.mxu0 0.0
  %1532 = vmatprep.subr.mxu0 0.0
  %1533 = vmatpush1.msra.mxu0 0.0
  %1534 = vmatprep.subr.mxu0 0.0
  %1535 = vmatpush1.msra.mxu0 0.0
  %1536 = vmatprep.subr.mxu0 0.0
  %1537 = vmatpush1.msra.mxu0 0.0
  %1538 = vmatprep.subr.mxu0 0.0
  %1539 = vmatpush1.msra.mxu0 0.0
  %1540 = vmatprep.subr.mxu0 0.0
  %1541 = vmatpush1.msra.mxu0 0.0
  %1542 = vmatprep.subr.mxu0 0.0
  %1543 = vmatpush1.msra.mxu0 0.0
  %1544 = vmatprep.subr.mxu0 0.0
  %1545 = vmatpush1.msra.mxu0 0.0
  %1546 = vmatprep.subr.mxu0 0.0
  %1547 = vmatpush1.msra.mxu0 0.0
  %1548 = vmatprep.subr.mxu0 0.0
  %1549 = vmatpush1.msra.mxu0 0.0
  %1550 = vmatprep.subr.mxu0 0.0
  %1551 = vmatpush1.msra.mxu0 0.0
  %1552 = vmatprep.subr.mxu0 0.0
  %1553 = vmatpush1.msra.mxu0 0.0
  %1554 = vmatprep.subr.mxu0 0.0
  %1555 = vmatpush1.msra.mxu0 0.0
  %1556 = vmatprep.subr.mxu0 0.0
  %1557 = vmatpush1.msra.mxu0 0.0
  %1558 = vmatprep.subr.mxu0 0.0
  %1559 = vmatpush1.msra.mxu0 0.0
  %1560 = vmatprep.subr.mxu0 0.0
  %1561 = vmatpush1.msra.mxu0 0.0
  %1562 = vmatprep.subr.mxu0 0.0
  %1563 = vmatpush1.msra.mxu0 0.0
  %1564 = vmatprep.subr.mxu0 0.0
  %1565 = vmatpush1.msra.mxu0 0.0
  %1566 = vmatprep.subr.mxu0 0.0
  %1567 = vmatpush1.msra.mxu0 0.0
  %1568 = vmatprep.mubr.f32.mxu0 0.0
  %1569 = vmatmul.mubr.f32.gmra.mrb[0].mxu0 %v183
  %v1570 = vpop.f32.mrb[0].mxu0
  %v1571 = vadd.f32 %v1503, %v1570
  %v1572 = vpop.f32.mrb[0].mxu0
  %1573 = vmatprep.mubr.f32.mxu0 0.0
  %1574 = vmatmul.mubr.f32.gmra.mrb[0].mxu0 %v186
  %v1575 = vpop.f32.mrb[0].mxu0
  %v1576 = vadd.f32 %v1503, %v1575
  %v1577 = vpop.f32.mrb[0].mxu0
  %1578 = vdwg.mxu0
  %s1579 = scalar_lea.vmem %s2, 192
  %v1580 = vld [vmem:[%s1579] sm:$0xff]
  %v1581 = vld [vmem:[%s1579 + $0x8] sm:$0xff]
  %v1582 = vld [vmem:[%s1579 + $0x10] sm:$0xff]
  %v1583 = vld [vmem:[%s1579 + $0x18] sm:$0xff]
  %v1584 = vlaneseq
  %v1585 = vshrl.u32 %v1584, 7
  %v1586 = vsub.s32 0, %v1585
  %v1587 = vrot.slane %v1493, %v1586
  %1588 = vmatprep.subr.mxu0 0.0
  %1589 = vmatpush1.msra.mxu0 %v1580
  %1590 = vmatprep.subr.mxu0 0.0
  %1591 = vmatpush1.msra.mxu0 %v1581
  %1592 = vmatprep.subr.mxu0 0.0
  %1593 = vmatpush1.msra.mxu0 %v1582
  %1594 = vmatprep.subr.mxu0 0.0
  %1595 = vmatpush1.msra.mxu0 %v1583
  %1596 = vmatprep.subr.mxu0 0.0
  %1597 = vmatpush1.msra.mxu0 0.0
  %1598 = vmatprep.subr.mxu0 0.0
  %1599 = vmatpush1.msra.mxu0 0.0
  %1600 = vmatprep.subr.mxu0 0.0
  %1601 = vmatpush1.msra.mxu0 0.0
  %1602 = vmatprep.subr.mxu0 0.0
  %1603 = vmatpush1.msra.mxu0 0.0
  %1604 = vmatprep.subr.mxu0 0.0
  %1605 = vmatpush1.msra.mxu0 0.0
  %1606 = vmatprep.subr.mxu0 0.0
  %1607 = vmatpush1.msra.mxu0 0.0
  %1608 = vmatprep.subr.mxu0 0.0
  %1609 = vmatpush1.msra.mxu0 0.0
  %1610 = vmatprep.subr.mxu0 0.0
  %1611 = vmatpush1.msra.mxu0 0.0
  %1612 = vmatprep.subr.mxu0 0.0
  %1613 = vmatpush1.msra.mxu0 0.0
  %1614 = vmatprep.subr.mxu0 0.0
  %1615 = vmatpush1.msra.mxu0 0.0
  %1616 = vmatprep.subr.mxu0 0.0
  %1617 = vmatpush1.msra.mxu0 0.0
  %1618 = vmatprep.subr.mxu0 0.0
  %1619 = vmatpush1.msra.mxu0 0.0
  %1620 = vmatprep.subr.mxu0 0.0
  %1621 = vmatpush1.msra.mxu0 0.0
  %1622 = vmatprep.subr.mxu0 0.0
  %1623 = vmatpush1.msra.mxu0 0.0
  %1624 = vmatprep.subr.mxu0 0.0
  %1625 = vmatpush1.msra.mxu0 0.0
  %1626 = vmatprep.subr.mxu0 0.0
  %1627 = vmatpush1.msra.mxu0 0.0
  %1628 = vmatprep.subr.mxu0 0.0
  %1629 = vmatpush1.msra.mxu0 0.0
  %1630 = vmatprep.subr.mxu0 0.0
  %1631 = vmatpush1.msra.mxu0 0.0
  %1632 = vmatprep.subr.mxu0 0.0
  %1633 = vmatpush1.msra.mxu0 0.0
  %1634 = vmatprep.subr.mxu0 0.0
  %1635 = vmatpush1.msra.mxu0 0.0
  %1636 = vmatprep.subr.mxu0 0.0
  %1637 = vmatpush1.msra.mxu0 0.0
  %1638 = vmatprep.subr.mxu0 0.0
  %1639 = vmatpush1.msra.mxu0 0.0
  %1640 = vmatprep.subr.mxu0 0.0
  %1641 = vmatpush1.msra.mxu0 0.0
  %1642 = vmatprep.subr.mxu0 0.0
  %1643 = vmatpush1.msra.mxu0 0.0
  %1644 = vmatprep.subr.mxu0 0.0
  %1645 = vmatpush1.msra.mxu0 0.0
  %1646 = vmatprep.subr.mxu0 0.0
  %1647 = vmatpush1.msra.mxu0 0.0
  %1648 = vmatprep.subr.mxu0 0.0
  %1649 = vmatpush1.msra.mxu0 0.0
  %1650 = vmatprep.subr.mxu0 0.0
  %1651 = vmatpush1.msra.mxu0 0.0
  %1652 = vmatprep.mubr.f32.mxu0 0.0
  %1653 = vmatmul.mubr.f32.gmra.mrb[0].mxu0 %v183
  %v1654 = vpop.f32.mrb[0].mxu0
  %v1655 = vadd.f32 %v1587, %v1654
  %v1656 = vpop.f32.mrb[0].mxu0
  %1657 = vmatprep.mubr.f32.mxu0 0.0
  %1658 = vmatmul.mubr.f32.gmra.mrb[0].mxu0 %v186
  %v1659 = vpop.f32.mrb[0].mxu0
  %v1660 = vadd.f32 %v1587, %v1659
  %v1661 = vpop.f32.mrb[0].mxu0
  %1662 = vdwg.mxu0
  %s1663 = scalar_lea.vmem %s2, 320
  %v1664 = vld [vmem:[%s1663] sm:$0xff]
  %v1665 = vld [vmem:[%s1663 + $0x8] sm:$0xff]
  %v1666 = vld [vmem:[%s1663 + $0x10] sm:$0xff]
  %v1667 = vld [vmem:[%s1663 + $0x18] sm:$0xff]
  %v1668 = vlaneseq
  %v1669 = vshrl.u32 %v1668, 7
  %v1670 = vsub.s32 0, %v1669
  %v1671 = vrot.slane %v1494, %v1670
  %1672 = vmatprep.subr.mxu0 0.0
  %1673 = vmatpush1.msra.mxu0 %v1664
  %1674 = vmatprep.subr.mxu0 0.0
  %1675 = vmatpush1.msra.mxu0 %v1665
  %1676 = vmatprep.subr.mxu0 0.0
  %1677 = vmatpush1.msra.mxu0 %v1666
  %1678 = vmatprep.subr.mxu0 0.0
  %1679 = vmatpush1.msra.mxu0 %v1667
  %1680 = vmatprep.subr.mxu0 0.0
  %1681 = vmatpush1.msra.mxu0 0.0
  %1682 = vmatprep.subr.mxu0 0.0
  %1683 = vmatpush1.msra.mxu0 0.0
  %1684 = vmatprep.subr.mxu0 0.0
  %1685 = vmatpush1.msra.mxu0 0.0
  %1686 = vmatprep.subr.mxu0 0.0
  %1687 = vmatpush1.msra.mxu0 0.0
  %1688 = vmatprep.subr.mxu0 0.0
  %1689 = vmatpush1.msra.mxu0 0.0
  %1690 = vmatprep.subr.mxu0 0.0
  %1691 = vmatpush1.msra.mxu0 0.0
  %1692 = vmatprep.subr.mxu0 0.0
  %1693 = vmatpush1.msra.mxu0 0.0
  %1694 = vmatprep.subr.mxu0 0.0
  %1695 = vmatpush1.msra.mxu0 0.0
  %1696 = vmatprep.subr.mxu0 0.0
  %1697 = vmatpush1.msra.mxu0 0.0
  %1698 = vmatprep.subr.mxu0 0.0
  %1699 = vmatpush1.msra.mxu0 0.0
  %1700 = vmatprep.subr.mxu0 0.0
  %1701 = vmatpush1.msra.mxu0 0.0
  %1702 = vmatprep.subr.mxu0 0.0
  %1703 = vmatpush1.msra.mxu0 0.0
  %1704 = vmatprep.subr.mxu0 0.0
  %1705 = vmatpush1.msra.mxu0 0.0
  %1706 = vmatprep.subr.mxu0 0.0
  %1707 = vmatpush1.msra.mxu0 0.0
  %1708 = vmatprep.subr.mxu0 0.0
  %1709 = vmatpush1.msra.mxu0 0.0
  %1710 = vmatprep.subr.mxu0 0.0
  %1711 = vmatpush1.msra.mxu0 0.0
  %1712 = vmatprep.subr.mxu0 0.0
  %1713 = vmatpush1.msra.mxu0 0.0
  %1714 = vmatprep.subr.mxu0 0.0
  %1715 = vmatpush1.msra.mxu0 0.0
  %1716 = vmatprep.subr.mxu0 0.0
  %1717 = vmatpush1.msra.mxu0 0.0
  %1718 = vmatprep.subr.mxu0 0.0
  %1719 = vmatpush1.msra.mxu0 0.0
  %1720 = vmatprep.subr.mxu0 0.0
  %1721 = vmatpush1.msra.mxu0 0.0
  %1722 = vmatprep.subr.mxu0 0.0
  %1723 = vmatpush1.msra.mxu0 0.0
  %1724 = vmatprep.subr.mxu0 0.0
  %1725 = vmatpush1.msra.mxu0 0.0
  %1726 = vmatprep.subr.mxu0 0.0
  %1727 = vmatpush1.msra.mxu0 0.0
  %1728 = vmatprep.subr.mxu0 0.0
  %1729 = vmatpush1.msra.mxu0 0.0
  %1730 = vmatprep.subr.mxu0 0.0
  %1731 = vmatpush1.msra.mxu0 0.0
  %1732 = vmatprep.subr.mxu0 0.0
  %1733 = vmatpush1.msra.mxu0 0.0
  %1734 = vmatprep.subr.mxu0 0.0
  %1735 = vmatpush1.msra.mxu0 0.0
  %1736 = vmatprep.mubr.f32.mxu0 0.0
  %1737 = vmatmul.mubr.f32.gmra.mrb[0].mxu0 %v183
  %v1738 = vpop.f32.mrb[0].mxu0
  %v1739 = vadd.f32 %v1671, %v1738
  %v1740 = vpop.f32.mrb[0].mxu0
  %1741 = vmatprep.mubr.f32.mxu0 0.0
  %1742 = vmatmul.mubr.f32.gmra.mrb[0].mxu0 %v186
  %v1743 = vpop.f32.mrb[0].mxu0
  %v1744 = vadd.f32 %v1671, %v1743
  %v1745 = vpop.f32.mrb[0].mxu0
  %1746 = vdwg.mxu0
  %v1748 = vsel %vm431, %v1571, 0
  %v1751 = vsel %vm431, %v1655, 0
  %1753 = vmatprep.subr.mxu0 0.0
  %1754 = vmatpush1.xpose.msra.mxu0 %v1751
  %1755 = vmatprep.subr.mxu0 0.0
  %1756 = vmatpush1.xpose.msra.mxu0 0.0
  %1757 = vmatprep.subr.mxu0 0.0
  %1758 = vmatpush1.xpose.msra.mxu0 0.0
  %1759 = vmatprep.subr.mxu0 0.0
  %1760 = vmatpush1.xpose.msra.mxu0 0.0
  %1761 = vmatprep.subr.mxu0 0.0
  %1762 = vmatpush1.xpose.msra.mxu0 0.0
  %1763 = vmatprep.subr.mxu0 0.0
  %1764 = vmatpush1.xpose.msra.mxu0 0.0
  %1765 = vmatprep.subr.mxu0 0.0
  %1766 = vmatpush1.xpose.msra.mxu0 0.0
  %1767 = vmatprep.subr.mxu0 0.0
  %1768 = vmatpush1.xpose.msra.mxu0 0.0
  %1769 = vmatprep.subr.mxu0 0.0
  %1770 = vmatpush1.xpose.msra.mxu0 0.0
  %1771 = vmatprep.subr.mxu0 0.0
  %1772 = vmatpush1.xpose.msra.mxu0 0.0
  %1773 = vmatprep.subr.mxu0 0.0
  %1774 = vmatpush1.xpose.msra.mxu0 0.0
  %1775 = vmatprep.subr.mxu0 0.0
  %1776 = vmatpush1.xpose.msra.mxu0 0.0
  %1777 = vmatprep.subr.mxu0 0.0
  %1778 = vmatpush1.xpose.msra.mxu0 0.0
  %1779 = vmatprep.subr.mxu0 0.0
  %1780 = vmatpush1.xpose.msra.mxu0 0.0
  %1781 = vmatprep.subr.mxu0 0.0
  %1782 = vmatpush1.xpose.msra.mxu0 0.0
  %1783 = vmatprep.subr.mxu0 0.0
  %1784 = vmatpush1.xpose.msra.mxu0 0.0
  %1785 = vmatprep.subr.mxu0 0.0
  %1786 = vmatpush1.xpose.msra.mxu0 0.0
  %1787 = vmatprep.subr.mxu0 0.0
  %1788 = vmatpush1.xpose.msra.mxu0 0.0
  %1789 = vmatprep.subr.mxu0 0.0
  %1790 = vmatpush1.xpose.msra.mxu0 0.0
  %1791 = vmatprep.subr.mxu0 0.0
  %1792 = vmatpush1.xpose.msra.mxu0 0.0
  %1793 = vmatprep.subr.mxu0 0.0
  %1794 = vmatpush1.xpose.msra.mxu0 0.0
  %1795 = vmatprep.subr.mxu0 0.0
  %1796 = vmatpush1.xpose.msra.mxu0 0.0
  %1797 = vmatprep.subr.mxu0 0.0
  %1798 = vmatpush1.xpose.msra.mxu0 0.0
  %1799 = vmatprep.subr.mxu0 0.0
  %1800 = vmatpush1.xpose.msra.mxu0 0.0
  %1801 = vmatprep.subr.mxu0 0.0
  %1802 = vmatpush1.xpose.msra.mxu0 0.0
  %1803 = vmatprep.subr.mxu0 0.0
  %1804 = vmatpush1.xpose.msra.mxu0 0.0
  %1805 = vmatprep.subr.mxu0 0.0
  %1806 = vmatpush1.xpose.msra.mxu0 0.0
  %1807 = vmatprep.subr.mxu0 0.0
  %1808 = vmatpush1.xpose.msra.mxu0 0.0
  %1809 = vmatprep.subr.mxu0 0.0
  %1810 = vmatpush1.xpose.msra.mxu0 0.0
  %1811 = vmatprep.subr.mxu0 0.0
  %1812 = vmatpush1.xpose.msra.mxu0 0.0
  %1813 = vmatprep.subr.mxu0 0.0
  %1814 = vmatpush1.xpose.msra.mxu0 0.0
  %1815 = vmatprep.subr.mxu0 0.0
  %1816 = vmatpush1.xpose.msra.mxu0 0.0
  %1817 = vmatprep.mubr.f32.mxu0 0.0
  %1818 = vmatmul.mubr.f32.gmra.mrb[0].mxu0 %v1748
  %v1819 = vpop.f32.mrb[0].mxu0
  %v1820 = vadd.f32 0.0, %v1819
  %v1821 = vpop.f32.mrb[0].mxu0
  %1822 = vdwg.mxu0
  %v1824 = vsel %vm431, %v1576, 0
  %v1827 = vsel %vm431, %v1660, 0
  %1829 = vmatprep.subr.mxu0 0.0
  %1830 = vmatpush1.xpose.msra.mxu0 %v1827
  %1831 = vmatprep.subr.mxu0 0.0
  %1832 = vmatpush1.xpose.msra.mxu0 0.0
  %1833 = vmatprep.subr.mxu0 0.0
  %1834 = vmatpush1.xpose.msra.mxu0 0.0
  %1835 = vmatprep.subr.mxu0 0.0
  %1836 = vmatpush1.xpose.msra.mxu0 0.0
  %1837 = vmatprep.subr.mxu0 0.0
  %1838 = vmatpush1.xpose.msra.mxu0 0.0
  %1839 = vmatprep.subr.mxu0 0.0
  %1840 = vmatpush1.xpose.msra.mxu0 0.0
  %1841 = vmatprep.subr.mxu0 0.0
  %1842 = vmatpush1.xpose.msra.mxu0 0.0
  %1843 = vmatprep.subr.mxu0 0.0
  %1844 = vmatpush1.xpose.msra.mxu0 0.0
  %1845 = vmatprep.subr.mxu0 0.0
  %1846 = vmatpush1.xpose.msra.mxu0 0.0
  %1847 = vmatprep.subr.mxu0 0.0
  %1848 = vmatpush1.xpose.msra.mxu0 0.0
  %1849 = vmatprep.subr.mxu0 0.0
  %1850 = vmatpush1.xpose.msra.mxu0 0.0
  %1851 = vmatprep.subr.mxu0 0.0
  %1852 = vmatpush1.xpose.msra.mxu0 0.0
  %1853 = vmatprep.subr.mxu0 0.0
  %1854 = vmatpush1.xpose.msra.mxu0 0.0
  %1855 = vmatprep.subr.mxu0 0.0
  %1856 = vmatpush1.xpose.msra.mxu0 0.0
  %1857 = vmatprep.subr.mxu0 0.0
  %1858 = vmatpush1.xpose.msra.mxu0 0.0
  %1859 = vmatprep.subr.mxu0 0.0
  %1860 = vmatpush1.xpose.msra.mxu0 0.0
  %1861 = vmatprep.subr.mxu0 0.0
  %1862 = vmatpush1.xpose.msra.mxu0 0.0
  %1863 = vmatprep.subr.mxu0 0.0
  %1864 = vmatpush1.xpose.msra.mxu0 0.0
  %1865 = vmatprep.subr.mxu0 0.0
  %1866 = vmatpush1.xpose.msra.mxu0 0.0
  %1867 = vmatprep.subr.mxu0 0.0
  %1868 = vmatpush1.xpose.msra.mxu0 0.0
  %1869 = vmatprep.subr.mxu0 0.0
  %1870 = vmatpush1.xpose.msra.mxu0 0.0
  %1871 = vmatprep.subr.mxu0 0.0
  %1872 = vmatpush1.xpose.msra.mxu0 0.0
  %1873 = vmatprep.subr.mxu0 0.0
  %1874 = vmatpush1.xpose.msra.mxu0 0.0
  %1875 = vmatprep.subr.mxu0 0.0
  %1876 = vmatpush1.xpose.msra.mxu0 0.0
  %1877 = vmatprep.subr.mxu0 0.0
  %1878 = vmatpush1.xpose.msra.mxu0 0.0
  %1879 = vmatprep.subr.mxu0 0.0
  %1880 = vmatpush1.xpose.msra.mxu0 0.0
  %1881 = vmatprep.subr.mxu0 0.0
  %1882 = vmatpush1.xpose.msra.mxu0 0.0
  %1883 = vmatprep.subr.mxu0 0.0
  %1884 = vmatpush1.xpose.msra.mxu0 0.0
  %1885 = vmatprep.subr.mxu0 0.0
  %1886 = vmatpush1.xpose.msra.mxu0 0.0
  %1887 = vmatprep.subr.mxu0 0.0
  %1888 = vmatpush1.xpose.msra.mxu0 0.0
  %1889 = vmatprep.subr.mxu0 0.0
  %1890 = vmatpush1.xpose.msra.mxu0 0.0
  %1891 = vmatprep.subr.mxu0 0.0
  %1892 = vmatpush1.xpose.msra.mxu0 0.0
  %1893 = vmatprep.mubr.f32.mxu0 0.0
  %1894 = vmatmul.mubr.f32.gmra.mrb[0].mxu0 %v1824
  %v1895 = vpop.f32.mrb[0].mxu0
  %v1896 = vadd.f32 0.0, %v1895
  %v1897 = vpop.f32.mrb[0].mxu0
  %1898 = vdwg.mxu0
  %v1899 = vsel %vm431, %v1820, -inf
  %1900 = vmax.xlane.f32.xlu0 %v1899
  %v1901 = vpop.xlane.xlu0 %1900
  %v1902 = vsel %vm431, %v1896, -inf
  %1903 = vmax.xlane.f32.xlu0 %v1902
  %v1904 = vpop.xlane.xlu0 %1903
  %v1905 = vsub.f32 %v1820, %v1901
  %v1906 = vsub.f32 %v1896, %v1904
  %v1907 = vmul.f32 %v1905, 1.442695
  %v1908 = vpow.pop %v1907
  %v1909 = vmul.f32 %v1906, 1.442695
  %v1910 = vpow.pop %v1909
  %v1911 = vsel %vm431, %v1908, 0.0
  %1912 = vadd.xlane.f32.xlu0 %v1911
  %v1913 = vpop.xlane.xlu0 %1912
  %v1914 = vsel %vm431, %v1910, 0.0
  %1915 = vadd.xlane.f32.xlu0 %v1914
  %v1916 = vpop.xlane.xlu0 %1915
  %v1917 = vrcp.pop %v1913
  %v1918 = vrcp.pop %v1916
  %v1919 = vmul.f32 %v1908, %v1917
  %v1920 = vmul.f32 %v1910, %v1918
  %v1922 = vsel %vm431, %v1919, 0
  %1924 = vmatprep.subr.mxu0 0.0
  %1925 = vmatpush1.msra.mxu0 %v1739
  %1926 = vmatprep.subr.mxu0 0.0
  %1927 = vmatpush1.msra.mxu0 0.0
  %1928 = vmatprep.subr.mxu0 0.0
  %1929 = vmatpush1.msra.mxu0 0.0
  %1930 = vmatprep.subr.mxu0 0.0
  %1931 = vmatpush1.msra.mxu0 0.0
  %1932 = vmatprep.subr.mxu0 0.0
  %1933 = vmatpush1.msra.mxu0 0.0
  %1934 = vmatprep.subr.mxu0 0.0
  %1935 = vmatpush1.msra.mxu0 0.0
  %1936 = vmatprep.subr.mxu0 0.0
  %1937 = vmatpush1.msra.mxu0 0.0
  %1938 = vmatprep.subr.mxu0 0.0
  %1939 = vmatpush1.msra.mxu0 0.0
  %1940 = vmatprep.subr.mxu0 0.0
  %1941 = vmatpush1.msra.mxu0 0.0
  %1942 = vmatprep.subr.mxu0 0.0
  %1943 = vmatpush1.msra.mxu0 0.0
  %1944 = vmatprep.subr.mxu0 0.0
  %1945 = vmatpush1.msra.mxu0 0.0
  %1946 = vmatprep.subr.mxu0 0.0
  %1947 = vmatpush1.msra.mxu0 0.0
  %1948 = vmatprep.subr.mxu0 0.0
  %1949 = vmatpush1.msra.mxu0 0.0
  %1950 = vmatprep.subr.mxu0 0.0
  %1951 = vmatpush1.msra.mxu0 0.0
  %1952 = vmatprep.subr.mxu0 0.0
  %1953 = vmatpush1.msra.mxu0 0.0
  %1954 = vmatprep.subr.mxu0 0.0
  %1955 = vmatpush1.msra.mxu0 0.0
  %1956 = vmatprep.subr.mxu0 0.0
  %1957 = vmatpush1.msra.mxu0 0.0
  %1958 = vmatprep.subr.mxu0 0.0
  %1959 = vmatpush1.msra.mxu0 0.0
  %1960 = vmatprep.subr.mxu0 0.0
  %1961 = vmatpush1.msra.mxu0 0.0
  %1962 = vmatprep.subr.mxu0 0.0
  %1963 = vmatpush1.msra.mxu0 0.0
  %1964 = vmatprep.subr.mxu0 0.0
  %1965 = vmatpush1.msra.mxu0 0.0
  %1966 = vmatprep.subr.mxu0 0.0
  %1967 = vmatpush1.msra.mxu0 0.0
  %1968 = vmatprep.subr.mxu0 0.0
  %1969 = vmatpush1.msra.mxu0 0.0
  %1970 = vmatprep.subr.mxu0 0.0
  %1971 = vmatpush1.msra.mxu0 0.0
  %1972 = vmatprep.subr.mxu0 0.0
  %1973 = vmatpush1.msra.mxu0 0.0
  %1974 = vmatprep.subr.mxu0 0.0
  %1975 = vmatpush1.msra.mxu0 0.0
  %1976 = vmatprep.subr.mxu0 0.0
  %1977 = vmatpush1.msra.mxu0 0.0
  %1978 = vmatprep.subr.mxu0 0.0
  %1979 = vmatpush1.msra.mxu0 0.0
  %1980 = vmatprep.subr.mxu0 0.0
  %1981 = vmatpush1.msra.mxu0 0.0
  %1982 = vmatprep.subr.mxu0 0.0
  %1983 = vmatpush1.msra.mxu0 0.0
  %1984 = vmatprep.subr.mxu0 0.0
  %1985 = vmatpush1.msra.mxu0 0.0
  %1986 = vmatprep.subr.mxu0 0.0
  %1987 = vmatpush1.msra.mxu0 0.0
  %1988 = vmatprep.mubr.f32.mxu0 0.0
  %1989 = vmatmul.mubr.f32.gmra.mrb[0].mxu0 %v1922
  %v1990 = vpop.f32.mrb[0].mxu0
  %v1991 = vadd.f32 0.0, %v1990
  %v1992 = vpop.f32.mrb[0].mxu0
  %1993 = vdwg.mxu0
  %v1995 = vsel %vm431, %v1920, 0
  %1997 = vmatprep.subr.mxu0 0.0
  %1998 = vmatpush1.msra.mxu0 %v1744
  %1999 = vmatprep.subr.mxu0 0.0
  %2000 = vmatpush1.msra.mxu0 0.0
  %2001 = vmatprep.subr.mxu0 0.0
  %2002 = vmatpush1.msra.mxu0 0.0
  %2003 = vmatprep.subr.mxu0 0.0
  %2004 = vmatpush1.msra.mxu0 0.0
  %2005 = vmatprep.subr.mxu0 0.0
  %2006 = vmatpush1.msra.mxu0 0.0
  %2007 = vmatprep.subr.mxu0 0.0
  %2008 = vmatpush1.msra.mxu0 0.0
  %2009 = vmatprep.subr.mxu0 0.0
  %2010 = vmatpush1.msra.mxu0 0.0
  %2011 = vmatprep.subr.mxu0 0.0
  %2012 = vmatpush1.msra.mxu0 0.0
  %2013 = vmatprep.subr.mxu0 0.0
  %2014 = vmatpush1.msra.mxu0 0.0
  %2015 = vmatprep.subr.mxu0 0.0
  %2016 = vmatpush1.msra.mxu0 0.0
  %2017 = vmatprep.subr.mxu0 0.0
  %2018 = vmatpush1.msra.mxu0 0.0
  %2019 = vmatprep.subr.mxu0 0.0
  %2020 = vmatpush1.msra.mxu0 0.0
  %2021 = vmatprep.subr.mxu0 0.0
  %2022 = vmatpush1.msra.mxu0 0.0
  %2023 = vmatprep.subr.mxu0 0.0
  %2024 = vmatpush1.msra.mxu0 0.0
  %2025 = vmatprep.subr.mxu0 0.0
  %2026 = vmatpush1.msra.mxu0 0.0
  %2027 = vmatprep.subr.mxu0 0.0
  %2028 = vmatpush1.msra.mxu0 0.0
  %2029 = vmatprep.subr.mxu0 0.0
  %2030 = vmatpush1.msra.mxu0 0.0
  %2031 = vmatprep.subr.mxu0 0.0
  %2032 = vmatpush1.msra.mxu0 0.0
  %2033 = vmatprep.subr.mxu0 0.0
  %2034 = vmatpush1.msra.mxu0 0.0
  %2035 = vmatprep.subr.mxu0 0.0
  %2036 = vmatpush1.msra.mxu0 0.0
  %2037 = vmatprep.subr.mxu0 0.0
  %2038 = vmatpush1.msra.mxu0 0.0
  %2039 = vmatprep.subr.mxu0 0.0
  %2040 = vmatpush1.msra.mxu0 0.0
  %2041 = vmatprep.subr.mxu0 0.0
  %2042 = vmatpush1.msra.mxu0 0.0
  %2043 = vmatprep.subr.mxu0 0.0
  %2044 = vmatpush1.msra.mxu0 0.0
  %2045 = vmatprep.subr.mxu0 0.0
  %2046 = vmatpush1.msra.mxu0 0.0
  %2047 = vmatprep.subr.mxu0 0.0
  %2048 = vmatpush1.msra.mxu0 0.0
  %2049 = vmatprep.subr.mxu0 0.0
  %2050 = vmatpush1.msra.mxu0 0.0
  %2051 = vmatprep.subr.mxu0 0.0
  %2052 = vmatpush1.msra.mxu0 0.0
  %2053 = vmatprep.subr.mxu0 0.0
  %2054 = vmatpush1.msra.mxu0 0.0
  %2055 = vmatprep.subr.mxu0 0.0
  %2056 = vmatpush1.msra.mxu0 0.0
  %2057 = vmatprep.subr.mxu0 0.0
  %2058 = vmatpush1.msra.mxu0 0.0
  %2059 = vmatprep.subr.mxu0 0.0
  %2060 = vmatpush1.msra.mxu0 0.0
  %2061 = vmatprep.mubr.f32.mxu0 0.0
  %2062 = vmatmul.mubr.f32.gmra.mrb[0].mxu0 %v1995
  %v2063 = vpop.f32.mrb[0].mxu0
  %v2064 = vadd.f32 0.0, %v2063
  %v2065 = vpop.f32.mrb[0].mxu0
  %2066 = vdwg.mxu0
  %s2067 = scalar_lea.vmem %s3, 16
  %v2068 = vld [vmem:[%s2067] sm:$0xff]
  %v2070 = vsel %vm431, %v1991, 0
  %v2073 = vsel %vm431, %v2064, 0
  %2075 = vmatprep.subr.mxu0 0.0
  %2076 = vmatpush1.msra.mxu0 %v2068
  %2077 = vmatprep.subr.mxu0 0.0
  %2078 = vmatpush1.msra.mxu0 0.0
  %2079 = vmatprep.subr.mxu0 0.0
  %2080 = vmatpush1.msra.mxu0 0.0
  %2081 = vmatprep.subr.mxu0 0.0
  %2082 = vmatpush1.msra.mxu0 0.0
  %2083 = vmatprep.subr.mxu0 0.0
  %2084 = vmatpush1.msra.mxu0 0.0
  %2085 = vmatprep.subr.mxu0 0.0
  %2086 = vmatpush1.msra.mxu0 0.0
  %2087 = vmatprep.subr.mxu0 0.0
  %2088 = vmatpush1.msra.mxu0 0.0
  %2089 = vmatprep.subr.mxu0 0.0
  %2090 = vmatpush1.msra.mxu0 0.0
  %2091 = vmatprep.subr.mxu0 0.0
  %2092 = vmatpush1.msra.mxu0 0.0
  %2093 = vmatprep.subr.mxu0 0.0
  %2094 = vmatpush1.msra.mxu0 0.0
  %2095 = vmatprep.subr.mxu0 0.0
  %2096 = vmatpush1.msra.mxu0 0.0
  %2097 = vmatprep.subr.mxu0 0.0
  %2098 = vmatpush1.msra.mxu0 0.0
  %2099 = vmatprep.subr.mxu0 0.0
  %2100 = vmatpush1.msra.mxu0 0.0
  %2101 = vmatprep.subr.mxu0 0.0
  %2102 = vmatpush1.msra.mxu0 0.0
  %2103 = vmatprep.subr.mxu0 0.0
  %2104 = vmatpush1.msra.mxu0 0.0
  %2105 = vmatprep.subr.mxu0 0.0
  %2106 = vmatpush1.msra.mxu0 0.0
  %2107 = vmatprep.subr.mxu0 0.0
  %2108 = vmatpush1.msra.mxu0 0.0
  %2109 = vmatprep.subr.mxu0 0.0
  %2110 = vmatpush1.msra.mxu0 0.0
  %2111 = vmatprep.subr.mxu0 0.0
  %2112 = vmatpush1.msra.mxu0 0.0
  %2113 = vmatprep.subr.mxu0 0.0
  %2114 = vmatpush1.msra.mxu0 0.0
  %2115 = vmatprep.subr.mxu0 0.0
  %2116 = vmatpush1.msra.mxu0 0.0
  %2117 = vmatprep.subr.mxu0 0.0
  %2118 = vmatpush1.msra.mxu0 0.0
  %2119 = vmatprep.subr.mxu0 0.0
  %2120 = vmatpush1.msra.mxu0 0.0
  %2121 = vmatprep.subr.mxu0 0.0
  %2122 = vmatpush1.msra.mxu0 0.0
  %2123 = vmatprep.subr.mxu0 0.0
  %2124 = vmatpush1.msra.mxu0 0.0
  %2125 = vmatprep.subr.mxu0 0.0
  %2126 = vmatpush1.msra.mxu0 0.0
  %2127 = vmatprep.subr.mxu0 0.0
  %2128 = vmatpush1.msra.mxu0 0.0
  %2129 = vmatprep.subr.mxu0 0.0
  %2130 = vmatpush1.msra.mxu0 0.0
  %2131 = vmatprep.subr.mxu0 0.0
  %2132 = vmatpush1.msra.mxu0 0.0
  %2133 = vmatprep.subr.mxu0 0.0
  %2134 = vmatpush1.msra.mxu0 0.0
  %2135 = vmatprep.subr.mxu0 0.0
  %2136 = vmatpush1.msra.mxu0 0.0
  %2137 = vmatprep.subr.mxu0 0.0
  %2138 = vmatpush1.msra.mxu0 0.0
  %2139 = vmatprep.mubr.f32.mxu0 0.0
  %2140 = vmatmul.mubr.f32.gmra.mrb[0].mxu0 %v2070
  %v2141 = vpop.f32.mrb[0].mxu0
  %v2142 = vadd.f32 0.0, %v2141
  %v2143 = vpop.f32.mrb[0].mxu0
  %2144 = vmatprep.mubr.f32.mxu0 0.0
  %2145 = vmatmul.mubr.f32.gmra.mrb[0].mxu0 %v2073
  %v2146 = vpop.f32.mrb[0].mxu0
  %v2147 = vadd.f32 0.0, %v2146
  %v2148 = vpop.f32.mrb[0].mxu0
  %2149 = vdwg.mxu0
  %v2150 = vadd.f32 %v1484, %v2142
  %v2151 = vadd.f32 %v1489, %v2147
  %v2152 = vld [vmem:[%s5 + $0xb] sm:$0x1]
  %v2153 = vld [vmem:[%s5 + $0xf] sm:$0x1]
  %v2154 = vld [vmem:[%s5 + $0x13] sm:$0x1]
  %s2155 = scalar_lea.vmem %s2, 96
  %v2156 = vld [vmem:[%s2155] sm:$0xff]
  %v2157 = vld [vmem:[%s2155 + $0x8] sm:$0xff]
  %v2158 = vld [vmem:[%s2155 + $0x10] sm:$0xff]
  %v2159 = vld [vmem:[%s2155 + $0x18] sm:$0xff]
  %v2160 = vlaneseq
  %v2161 = vshrl.u32 %v2160, 7
  %v2162 = vsub.s32 0, %v2161
  %v2163 = vrot.slane %v2152, %v2162
  %2164 = vmatprep.subr.mxu0 0.0
  %2165 = vmatpush1.msra.mxu0 %v2156
  %2166 = vmatprep.subr.mxu0 0.0
  %2167 = vmatpush1.msra.mxu0 %v2157
  %2168 = vmatprep.subr.mxu0 0.0
  %2169 = vmatpush1.msra.mxu0 %v2158
  %2170 = vmatprep.subr.mxu0 0.0
  %2171 = vmatpush1.msra.mxu0 %v2159
  %2172 = vmatprep.subr.mxu0 0.0
  %2173 = vmatpush1.msra.mxu0 0.0
  %2174 = vmatprep.subr.mxu0 0.0
  %2175 = vmatpush1.msra.mxu0 0.0
  %2176 = vmatprep.subr.mxu0 0.0
  %2177 = vmatpush1.msra.mxu0 0.0
  %2178 = vmatprep.subr.mxu0 0.0
  %2179 = vmatpush1.msra.mxu0 0.0
  %2180 = vmatprep.subr.mxu0 0.0
  %2181 = vmatpush1.msra.mxu0 0.0
  %2182 = vmatprep.subr.mxu0 0.0
  %2183 = vmatpush1.msra.mxu0 0.0
  %2184 = vmatprep.subr.mxu0 0.0
  %2185 = vmatpush1.msra.mxu0 0.0
  %2186 = vmatprep.subr.mxu0 0.0
  %2187 = vmatpush1.msra.mxu0 0.0
  %2188 = vmatprep.subr.mxu0 0.0
  %2189 = vmatpush1.msra.mxu0 0.0
  %2190 = vmatprep.subr.mxu0 0.0
  %2191 = vmatpush1.msra.mxu0 0.0
  %2192 = vmatprep.subr.mxu0 0.0
  %2193 = vmatpush1.msra.mxu0 0.0
  %2194 = vmatprep.subr.mxu0 0.0
  %2195 = vmatpush1.msra.mxu0 0.0
  %2196 = vmatprep.subr.mxu0 0.0
  %2197 = vmatpush1.msra.mxu0 0.0
  %2198 = vmatprep.subr.mxu0 0.0
  %2199 = vmatpush1.msra.mxu0 0.0
  %2200 = vmatprep.subr.mxu0 0.0
  %2201 = vmatpush1.msra.mxu0 0.0
  %2202 = vmatprep.subr.mxu0 0.0
  %2203 = vmatpush1.msra.mxu0 0.0
  %2204 = vmatprep.subr.mxu0 0.0
  %2205 = vmatpush1.msra.mxu0 0.0
  %2206 = vmatprep.subr.mxu0 0.0
  %2207 = vmatpush1.msra.mxu0 0.0
  %2208 = vmatprep.subr.mxu0 0.0
  %2209 = vmatpush1.msra.mxu0 0.0
  %2210 = vmatprep.subr.mxu0 0.0
  %2211 = vmatpush1.msra.mxu0 0.0
  %2212 = vmatprep.subr.mxu0 0.0
  %2213 = vmatpush1.msra.mxu0 0.0
  %2214 = vmatprep.subr.mxu0 0.0
  %2215 = vmatpush1.msra.mxu0 0.0
  %2216 = vmatprep.subr.mxu0 0.0
  %2217 = vmatpush1.msra.mxu0 0.0
  %2218 = vmatprep.subr.mxu0 0.0
  %2219 = vmatpush1.msra.mxu0 0.0
  %2220 = vmatprep.subr.mxu0 0.0
  %2221 = vmatpush1.msra.mxu0 0.0
  %2222 = vmatprep.subr.mxu0 0.0
  %2223 = vmatpush1.msra.mxu0 0.0
  %2224 = vmatprep.subr.mxu0 0.0
  %2225 = vmatpush1.msra.mxu0 0.0
  %2226 = vmatprep.subr.mxu0 0.0
  %2227 = vmatpush1.msra.mxu0 0.0
  %2228 = vmatprep.mubr.f32.mxu0 0.0
  %2229 = vmatmul.mubr.f32.gmra.mrb[0].mxu0 %v183
  %v2230 = vpop.f32.mrb[0].mxu0
  %v2231 = vadd.f32 %v2163, %v2230
  %v2232 = vpop.f32.mrb[0].mxu0
  %2233 = vmatprep.mubr.f32.mxu0 0.0
  %2234 = vmatmul.mubr.f32.gmra.mrb[0].mxu0 %v186
  %v2235 = vpop.f32.mrb[0].mxu0
  %v2236 = vadd.f32 %v2163, %v2235
  %v2237 = vpop.f32.mrb[0].mxu0
  %2238 = vdwg.mxu0
  %s2239 = scalar_lea.vmem %s2, 224
  %v2240 = vld [vmem:[%s2239] sm:$0xff]
  %v2241 = vld [vmem:[%s2239 + $0x8] sm:$0xff]
  %v2242 = vld [vmem:[%s2239 + $0x10] sm:$0xff]
  %v2243 = vld [vmem:[%s2239 + $0x18] sm:$0xff]
  %v2244 = vlaneseq
  %v2245 = vshrl.u32 %v2244, 7
  %v2246 = vsub.s32 0, %v2245
  %v2247 = vrot.slane %v2153, %v2246
  %2248 = vmatprep.subr.mxu0 0.0
  %2249 = vmatpush1.msra.mxu0 %v2240
  %2250 = vmatprep.subr.mxu0 0.0
  %2251 = vmatpush1.msra.mxu0 %v2241
  %2252 = vmatprep.subr.mxu0 0.0
  %2253 = vmatpush1.msra.mxu0 %v2242
  %2254 = vmatprep.subr.mxu0 0.0
  %2255 = vmatpush1.msra.mxu0 %v2243
  %2256 = vmatprep.subr.mxu0 0.0
  %2257 = vmatpush1.msra.mxu0 0.0
  %2258 = vmatprep.subr.mxu0 0.0
  %2259 = vmatpush1.msra.mxu0 0.0
  %2260 = vmatprep.subr.mxu0 0.0
  %2261 = vmatpush1.msra.mxu0 0.0
  %2262 = vmatprep.subr.mxu0 0.0
  %2263 = vmatpush1.msra.mxu0 0.0
  %2264 = vmatprep.subr.mxu0 0.0
  %2265 = vmatpush1.msra.mxu0 0.0
  %2266 = vmatprep.subr.mxu0 0.0
  %2267 = vmatpush1.msra.mxu0 0.0
  %2268 = vmatprep.subr.mxu0 0.0
  %2269 = vmatpush1.msra.mxu0 0.0
  %2270 = vmatprep.subr.mxu0 0.0
  %2271 = vmatpush1.msra.mxu0 0.0
  %2272 = vmatprep.subr.mxu0 0.0
  %2273 = vmatpush1.msra.mxu0 0.0
  %2274 = vmatprep.subr.mxu0 0.0
  %2275 = vmatpush1.msra.mxu0 0.0
  %2276 = vmatprep.subr.mxu0 0.0
  %2277 = vmatpush1.msra.mxu0 0.0
  %2278 = vmatprep.subr.mxu0 0.0
  %2279 = vmatpush1.msra.mxu0 0.0
  %2280 = vmatprep.subr.mxu0 0.0
  %2281 = vmatpush1.msra.mxu0 0.0
  %2282 = vmatprep.subr.mxu0 0.0
  %2283 = vmatpush1.msra.mxu0 0.0
  %2284 = vmatprep.subr.mxu0 0.0
  %2285 = vmatpush1.msra.mxu0 0.0
  %2286 = vmatprep.subr.mxu0 0.0
  %2287 = vmatpush1.msra.mxu0 0.0
  %2288 = vmatprep.subr.mxu0 0.0
  %2289 = vmatpush1.msra.mxu0 0.0
  %2290 = vmatprep.subr.mxu0 0.0
  %2291 = vmatpush1.msra.mxu0 0.0
  %2292 = vmatprep.subr.mxu0 0.0
  %2293 = vmatpush1.msra.mxu0 0.0
  %2294 = vmatprep.subr.mxu0 0.0
  %2295 = vmatpush1.msra.mxu0 0.0
  %2296 = vmatprep.subr.mxu0 0.0
  %2297 = vmatpush1.msra.mxu0 0.0
  %2298 = vmatprep.subr.mxu0 0.0
  %2299 = vmatpush1.msra.mxu0 0.0
  %2300 = vmatprep.subr.mxu0 0.0
  %2301 = vmatpush1.msra.mxu0 0.0
  %2302 = vmatprep.subr.mxu0 0.0
  %2303 = vmatpush1.msra.mxu0 0.0
  %2304 = vmatprep.subr.mxu0 0.0
  %2305 = vmatpush1.msra.mxu0 0.0
  %2306 = vmatprep.subr.mxu0 0.0
  %2307 = vmatpush1.msra.mxu0 0.0
  %2308 = vmatprep.subr.mxu0 0.0
  %2309 = vmatpush1.msra.mxu0 0.0
  %2310 = vmatprep.subr.mxu0 0.0
  %2311 = vmatpush1.msra.mxu0 0.0
  %2312 = vmatprep.mubr.f32.mxu0 0.0
  %2313 = vmatmul.mubr.f32.gmra.mrb[0].mxu0 %v183
  %v2314 = vpop.f32.mrb[0].mxu0
  %v2315 = vadd.f32 %v2247, %v2314
  %v2316 = vpop.f32.mrb[0].mxu0
  %2317 = vmatprep.mubr.f32.mxu0 0.0
  %2318 = vmatmul.mubr.f32.gmra.mrb[0].mxu0 %v186
  %v2319 = vpop.f32.mrb[0].mxu0
  %v2320 = vadd.f32 %v2247, %v2319
  %v2321 = vpop.f32.mrb[0].mxu0
  %2322 = vdwg.mxu0
  %s2323 = scalar_lea.vmem %s2, 352
  %v2324 = vld [vmem:[%s2323] sm:$0xff]
  %v2325 = vld [vmem:[%s2323 + $0x8] sm:$0xff]
  %v2326 = vld [vmem:[%s2323 + $0x10] sm:$0xff]
  %v2327 = vld [vmem:[%s2323 + $0x18] sm:$0xff]
  %v2328 = vlaneseq
  %v2329 = vshrl.u32 %v2328, 7
  %v2330 = vsub.s32 0, %v2329
  %v2331 = vrot.slane %v2154, %v2330
  %2332 = vmatprep.subr.mxu0 0.0
  %2333 = vmatpush1.msra.mxu0 %v2324
  %2334 = vmatprep.subr.mxu0 0.0
  %2335 = vmatpush1.msra.mxu0 %v2325
  %2336 = vmatprep.subr.mxu0 0.0
  %2337 = vmatpush1.msra.mxu0 %v2326
  %2338 = vmatprep.subr.mxu0 0.0
  %2339 = vmatpush1.msra.mxu0 %v2327
  %2340 = vmatprep.subr.mxu0 0.0
  %2341 = vmatpush1.msra.mxu0 0.0
  %2342 = vmatprep.subr.mxu0 0.0
  %2343 = vmatpush1.msra.mxu0 0.0
  %2344 = vmatprep.subr.mxu0 0.0
  %2345 = vmatpush1.msra.mxu0 0.0
  %2346 = vmatprep.subr.mxu0 0.0
  %2347 = vmatpush1.msra.mxu0 0.0
  %2348 = vmatprep.subr.mxu0 0.0
  %2349 = vmatpush1.msra.mxu0 0.0
  %2350 = vmatprep.subr.mxu0 0.0
  %2351 = vmatpush1.msra.mxu0 0.0
  %2352 = vmatprep.subr.mxu0 0.0
  %2353 = vmatpush1.msra.mxu0 0.0
  %2354 = vmatprep.subr.mxu0 0.0
  %2355 = vmatpush1.msra.mxu0 0.0
  %2356 = vmatprep.subr.mxu0 0.0
  %2357 = vmatpush1.msra.mxu0 0.0
  %2358 = vmatprep.subr.mxu0 0.0
  %2359 = vmatpush1.msra.mxu0 0.0
  %2360 = vmatprep.subr.mxu0 0.0
  %2361 = vmatpush1.msra.mxu0 0.0
  %2362 = vmatprep.subr.mxu0 0.0
  %2363 = vmatpush1.msra.mxu0 0.0
  %2364 = vmatprep.subr.mxu0 0.0
  %2365 = vmatpush1.msra.mxu0 0.0
  %2366 = vmatprep.subr.mxu0 0.0
  %2367 = vmatpush1.msra.mxu0 0.0
  %2368 = vmatprep.subr.mxu0 0.0
  %2369 = vmatpush1.msra.mxu0 0.0
  %2370 = vmatprep.subr.mxu0 0.0
  %2371 = vmatpush1.msra.mxu0 0.0
  %2372 = vmatprep.subr.mxu0 0.0
  %2373 = vmatpush1.msra.mxu0 0.0
  %2374 = vmatprep.subr.mxu0 0.0
  %2375 = vmatpush1.msra.mxu0 0.0
  %2376 = vmatprep.subr.mxu0 0.0
  %2377 = vmatpush1.msra.mxu0 0.0
  %2378 = vmatprep.subr.mxu0 0.0
  %2379 = vmatpush1.msra.mxu0 0.0
  %2380 = vmatprep.subr.mxu0 0.0
  %2381 = vmatpush1.msra.mxu0 0.0
  %2382 = vmatprep.subr.mxu0 0.0
  %2383 = vmatpush1.msra.mxu0 0.0
  %2384 = vmatprep.subr.mxu0 0.0
  %2385 = vmatpush1.msra.mxu0 0.0
  %2386 = vmatprep.subr.mxu0 0.0
  %2387 = vmatpush1.msra.mxu0 0.0
  %2388 = vmatprep.subr.mxu0 0.0
  %2389 = vmatpush1.msra.mxu0 0.0
  %2390 = vmatprep.subr.mxu0 0.0
  %2391 = vmatpush1.msra.mxu0 0.0
  %2392 = vmatprep.subr.mxu0 0.0
  %2393 = vmatpush1.msra.mxu0 0.0
  %2394 = vmatprep.subr.mxu0 0.0
  %2395 = vmatpush1.msra.mxu0 0.0
  %2396 = vmatprep.mubr.f32.mxu0 0.0
  %2397 = vmatmul.mubr.f32.gmra.mrb[0].mxu0 %v183
  %v2398 = vpop.f32.mrb[0].mxu0
  %v2399 = vadd.f32 %v2331, %v2398
  %v2400 = vpop.f32.mrb[0].mxu0
  %2401 = vmatprep.mubr.f32.mxu0 0.0
  %2402 = vmatmul.mubr.f32.gmra.mrb[0].mxu0 %v186
  %v2403 = vpop.f32.mrb[0].mxu0
  %v2404 = vadd.f32 %v2331, %v2403
  %v2405 = vpop.f32.mrb[0].mxu0
  %2406 = vdwg.mxu0
  %v2408 = vsel %vm431, %v2231, 0
  %v2411 = vsel %vm431, %v2315, 0
  %2413 = vmatprep.subr.mxu0 0.0
  %2414 = vmatpush1.xpose.msra.mxu0 %v2411
  %2415 = vmatprep.subr.mxu0 0.0
  %2416 = vmatpush1.xpose.msra.mxu0 0.0
  %2417 = vmatprep.subr.mxu0 0.0
  %2418 = vmatpush1.xpose.msra.mxu0 0.0
  %2419 = vmatprep.subr.mxu0 0.0
  %2420 = vmatpush1.xpose.msra.mxu0 0.0
  %2421 = vmatprep.subr.mxu0 0.0
  %2422 = vmatpush1.xpose.msra.mxu0 0.0
  %2423 = vmatprep.subr.mxu0 0.0
  %2424 = vmatpush1.xpose.msra.mxu0 0.0
  %2425 = vmatprep.subr.mxu0 0.0
  %2426 = vmatpush1.xpose.msra.mxu0 0.0
  %2427 = vmatprep.subr.mxu0 0.0
  %2428 = vmatpush1.xpose.msra.mxu0 0.0
  %2429 = vmatprep.subr.mxu0 0.0
  %2430 = vmatpush1.xpose.msra.mxu0 0.0
  %2431 = vmatprep.subr.mxu0 0.0
  %2432 = vmatpush1.xpose.msra.mxu0 0.0
  %2433 = vmatprep.subr.mxu0 0.0
  %2434 = vmatpush1.xpose.msra.mxu0 0.0
  %2435 = vmatprep.subr.mxu0 0.0
  %2436 = vmatpush1.xpose.msra.mxu0 0.0
  %2437 = vmatprep.subr.mxu0 0.0
  %2438 = vmatpush1.xpose.msra.mxu0 0.0
  %2439 = vmatprep.subr.mxu0 0.0
  %2440 = vmatpush1.xpose.msra.mxu0 0.0
  %2441 = vmatprep.subr.mxu0 0.0
  %2442 = vmatpush1.xpose.msra.mxu0 0.0
  %2443 = vmatprep.subr.mxu0 0.0
  %2444 = vmatpush1.xpose.msra.mxu0 0.0
  %2445 = vmatprep.subr.mxu0 0.0
  %2446 = vmatpush1.xpose.msra.mxu0 0.0
  %2447 = vmatprep.subr.mxu0 0.0
  %2448 = vmatpush1.xpose.msra.mxu0 0.0
  %2449 = vmatprep.subr.mxu0 0.0
  %2450 = vmatpush1.xpose.msra.mxu0 0.0
  %2451 = vmatprep.subr.mxu0 0.0
  %2452 = vmatpush1.xpose.msra.mxu0 0.0
  %2453 = vmatprep.subr.mxu0 0.0
  %2454 = vmatpush1.xpose.msra.mxu0 0.0
  %2455 = vmatprep.subr.mxu0 0.0
  %2456 = vmatpush1.xpose.msra.mxu0 0.0
  %2457 = vmatprep.subr.mxu0 0.0
  %2458 = vmatpush1.xpose.msra.mxu0 0.0
  %2459 = vmatprep.subr.mxu0 0.0
  %2460 = vmatpush1.xpose.msra.mxu0 0.0
  %2461 = vmatprep.subr.mxu0 0.0
  %2462 = vmatpush1.xpose.msra.mxu0 0.0
  %2463 = vmatprep.subr.mxu0 0.0
  %2464 = vmatpush1.xpose.msra.mxu0 0.0
  %2465 = vmatprep.subr.mxu0 0.0
  %2466 = vmatpush1.xpose.msra.mxu0 0.0
  %2467 = vmatprep.subr.mxu0 0.0
  %2468 = vmatpush1.xpose.msra.mxu0 0.0
  %2469 = vmatprep.subr.mxu0 0.0
  %2470 = vmatpush1.xpose.msra.mxu0 0.0
  %2471 = vmatprep.subr.mxu0 0.0
  %2472 = vmatpush1.xpose.msra.mxu0 0.0
  %2473 = vmatprep.subr.mxu0 0.0
  %2474 = vmatpush1.xpose.msra.mxu0 0.0
  %2475 = vmatprep.subr.mxu0 0.0
  %2476 = vmatpush1.xpose.msra.mxu0 0.0
  %2477 = vmatprep.mubr.f32.mxu0 0.0
  %2478 = vmatmul.mubr.f32.gmra.mrb[0].mxu0 %v2408
  %v2479 = vpop.f32.mrb[0].mxu0
  %v2480 = vadd.f32 0.0, %v2479
  %v2481 = vpop.f32.mrb[0].mxu0
  %2482 = vdwg.mxu0
  %v2484 = vsel %vm431, %v2236, 0
  %v2487 = vsel %vm431, %v2320, 0
  %2489 = vmatprep.subr.mxu0 0.0
  %2490 = vmatpush1.xpose.msra.mxu0 %v2487
  %2491 = vmatprep.subr.mxu0 0.0
  %2492 = vmatpush1.xpose.msra.mxu0 0.0
  %2493 = vmatprep.subr.mxu0 0.0
  %2494 = vmatpush1.xpose.msra.mxu0 0.0
  %2495 = vmatprep.subr.mxu0 0.0
  %2496 = vmatpush1.xpose.msra.mxu0 0.0
  %2497 = vmatprep.subr.mxu0 0.0
  %2498 = vmatpush1.xpose.msra.mxu0 0.0
  %2499 = vmatprep.subr.mxu0 0.0
  %2500 = vmatpush1.xpose.msra.mxu0 0.0
  %2501 = vmatprep.subr.mxu0 0.0
  %2502 = vmatpush1.xpose.msra.mxu0 0.0
  %2503 = vmatprep.subr.mxu0 0.0
  %2504 = vmatpush1.xpose.msra.mxu0 0.0
  %2505 = vmatprep.subr.mxu0 0.0
  %2506 = vmatpush1.xpose.msra.mxu0 0.0
  %2507 = vmatprep.subr.mxu0 0.0
  %2508 = vmatpush1.xpose.msra.mxu0 0.0
  %2509 = vmatprep.subr.mxu0 0.0
  %2510 = vmatpush1.xpose.msra.mxu0 0.0
  %2511 = vmatprep.subr.mxu0 0.0
  %2512 = vmatpush1.xpose.msra.mxu0 0.0
  %2513 = vmatprep.subr.mxu0 0.0
  %2514 = vmatpush1.xpose.msra.mxu0 0.0
  %2515 = vmatprep.subr.mxu0 0.0
  %2516 = vmatpush1.xpose.msra.mxu0 0.0
  %2517 = vmatprep.subr.mxu0 0.0
  %2518 = vmatpush1.xpose.msra.mxu0 0.0
  %2519 = vmatprep.subr.mxu0 0.0
  %2520 = vmatpush1.xpose.msra.mxu0 0.0
  %2521 = vmatprep.subr.mxu0 0.0
  %2522 = vmatpush1.xpose.msra.mxu0 0.0
  %2523 = vmatprep.subr.mxu0 0.0
  %2524 = vmatpush1.xpose.msra.mxu0 0.0
  %2525 = vmatprep.subr.mxu0 0.0
  %2526 = vmatpush1.xpose.msra.mxu0 0.0
  %2527 = vmatprep.subr.mxu0 0.0
  %2528 = vmatpush1.xpose.msra.mxu0 0.0
  %2529 = vmatprep.subr.mxu0 0.0
  %2530 = vmatpush1.xpose.msra.mxu0 0.0
  %2531 = vmatprep.subr.mxu0 0.0
  %2532 = vmatpush1.xpose.msra.mxu0 0.0
  %2533 = vmatprep.subr.mxu0 0.0
  %2534 = vmatpush1.xpose.msra.mxu0 0.0
  %2535 = vmatprep.subr.mxu0 0.0
  %2536 = vmatpush1.xpose.msra.mxu0 0.0
  %2537 = vmatprep.subr.mxu0 0.0
  %2538 = vmatpush1.xpose.msra.mxu0 0.0
  %2539 = vmatprep.subr.mxu0 0.0
  %2540 = vmatpush1.xpose.msra.mxu0 0.0
  %2541 = vmatprep.subr.mxu0 0.0
  %2542 = vmatpush1.xpose.msra.mxu0 0.0
  %2543 = vmatprep.subr.mxu0 0.0
  %2544 = vmatpush1.xpose.msra.mxu0 0.0
  %2545 = vmatprep.subr.mxu0 0.0
  %2546 = vmatpush1.xpose.msra.mxu0 0.0
  %2547 = vmatprep.subr.mxu0 0.0
  %2548 = vmatpush1.xpose.msra.mxu0 0.0
  %2549 = vmatprep.subr.mxu0 0.0
  %2550 = vmatpush1.xpose.msra.mxu0 0.0
  %2551 = vmatprep.subr.mxu0 0.0
  %2552 = vmatpush1.xpose.msra.mxu0 0.0
  %2553 = vmatprep.mubr.f32.mxu0 0.0
  %2554 = vmatmul.mubr.f32.gmra.mrb[0].mxu0 %v2484
  %v2555 = vpop.f32.mrb[0].mxu0
  %v2556 = vadd.f32 0.0, %v2555
  %v2557 = vpop.f32.mrb[0].mxu0
  %2558 = vdwg.mxu0
  %v2559 = vsel %vm431, %v2480, -inf
  %2560 = vmax.xlane.f32.xlu0 %v2559
  %v2561 = vpop.xlane.xlu0 %2560
  %v2562 = vsel %vm431, %v2556, -inf
  %2563 = vmax.xlane.f32.xlu0 %v2562
  %v2564 = vpop.xlane.xlu0 %2563
  %v2565 = vsub.f32 %v2480, %v2561
  %v2566 = vsub.f32 %v2556, %v2564
  %v2567 = vmul.f32 %v2565, 1.442695
  %v2568 = vpow.pop %v2567
  %v2569 = vmul.f32 %v2566, 1.442695
  %v2570 = vpow.pop %v2569
  %v2571 = vsel %vm431, %v2568, 0.0
  %2572 = vadd.xlane.f32.xlu0 %v2571
  %v2573 = vpop.xlane.xlu0 %2572
  %v2574 = vsel %vm431, %v2570, 0.0
  %2575 = vadd.xlane.f32.xlu0 %v2574
  %v2576 = vpop.xlane.xlu0 %2575
  %v2577 = vrcp.pop %v2573
  %v2578 = vrcp.pop %v2576
  %v2579 = vmul.f32 %v2568, %v2577
  %v2580 = vmul.f32 %v2570, %v2578
  %v2582 = vsel %vm431, %v2579, 0
  %2584 = vmatprep.subr.mxu0 0.0
  %2585 = vmatpush1.msra.mxu0 %v2399
  %2586 = vmatprep.subr.mxu0 0.0
  %2587 = vmatpush1.msra.mxu0 0.0
  %2588 = vmatprep.subr.mxu0 0.0
  %2589 = vmatpush1.msra.mxu0 0.0
  %2590 = vmatprep.subr.mxu0 0.0
  %2591 = vmatpush1.msra.mxu0 0.0
  %2592 = vmatprep.subr.mxu0 0.0
  %2593 = vmatpush1.msra.mxu0 0.0
  %2594 = vmatprep.subr.mxu0 0.0
  %2595 = vmatpush1.msra.mxu0 0.0
  %2596 = vmatprep.subr.mxu0 0.0
  %2597 = vmatpush1.msra.mxu0 0.0
  %2598 = vmatprep.subr.mxu0 0.0
  %2599 = vmatpush1.msra.mxu0 0.0
  %2600 = vmatprep.subr.mxu0 0.0
  %2601 = vmatpush1.msra.mxu0 0.0
  %2602 = vmatprep.subr.mxu0 0.0
  %2603 = vmatpush1.msra.mxu0 0.0
  %2604 = vmatprep.subr.mxu0 0.0
  %2605 = vmatpush1.msra.mxu0 0.0
  %2606 = vmatprep.subr.mxu0 0.0
  %2607 = vmatpush1.msra.mxu0 0.0
  %2608 = vmatprep.subr.mxu0 0.0
  %2609 = vmatpush1.msra.mxu0 0.0
  %2610 = vmatprep.subr.mxu0 0.0
  %2611 = vmatpush1.msra.mxu0 0.0
  %2612 = vmatprep.subr.mxu0 0.0
  %2613 = vmatpush1.msra.mxu0 0.0
  %2614 = vmatprep.subr.mxu0 0.0
  %2615 = vmatpush1.msra.mxu0 0.0
  %2616 = vmatprep.subr.mxu0 0.0
  %2617 = vmatpush1.msra.mxu0 0.0
  %2618 = vmatprep.subr.mxu0 0.0
  %2619 = vmatpush1.msra.mxu0 0.0
  %2620 = vmatprep.subr.mxu0 0.0
  %2621 = vmatpush1.msra.mxu0 0.0
  %2622 = vmatprep.subr.mxu0 0.0
  %2623 = vmatpush1.msra.mxu0 0.0
  %2624 = vmatprep.subr.mxu0 0.0
  %2625 = vmatpush1.msra.mxu0 0.0
  %2626 = vmatprep.subr.mxu0 0.0
  %2627 = vmatpush1.msra.mxu0 0.0
  %2628 = vmatprep.subr.mxu0 0.0
  %2629 = vmatpush1.msra.mxu0 0.0
  %2630 = vmatprep.subr.mxu0 0.0
  %2631 = vmatpush1.msra.mxu0 0.0
  %2632 = vmatprep.subr.mxu0 0.0
  %2633 = vmatpush1.msra.mxu0 0.0
  %2634 = vmatprep.subr.mxu0 0.0
  %2635 = vmatpush1.msra.mxu0 0.0
  %2636 = vmatprep.subr.mxu0 0.0
  %2637 = vmatpush1.msra.mxu0 0.0
  %2638 = vmatprep.subr.mxu0 0.0
  %2639 = vmatpush1.msra.mxu0 0.0
  %2640 = vmatprep.subr.mxu0 0.0
  %2641 = vmatpush1.msra.mxu0 0.0
  %2642 = vmatprep.subr.mxu0 0.0
  %2643 = vmatpush1.msra.mxu0 0.0
  %2644 = vmatprep.subr.mxu0 0.0
  %2645 = vmatpush1.msra.mxu0 0.0
  %2646 = vmatprep.subr.mxu0 0.0
  %2647 = vmatpush1.msra.mxu0 0.0
  %2648 = vmatprep.mubr.f32.mxu0 0.0
  %2649 = vmatmul.mubr.f32.gmra.mrb[0].mxu0 %v2582
  %v2650 = vpop.f32.mrb[0].mxu0
  %v2651 = vadd.f32 0.0, %v2650
  %v2652 = vpop.f32.mrb[0].mxu0
  %2653 = vdwg.mxu0
  %v2655 = vsel %vm431, %v2580, 0
  %2657 = vmatprep.subr.mxu0 0.0
  %2658 = vmatpush1.msra.mxu0 %v2404
  %2659 = vmatprep.subr.mxu0 0.0
  %2660 = vmatpush1.msra.mxu0 0.0
  %2661 = vmatprep.subr.mxu0 0.0
  %2662 = vmatpush1.msra.mxu0 0.0
  %2663 = vmatprep.subr.mxu0 0.0
  %2664 = vmatpush1.msra.mxu0 0.0
  %2665 = vmatprep.subr.mxu0 0.0
  %2666 = vmatpush1.msra.mxu0 0.0
  %2667 = vmatprep.subr.mxu0 0.0
  %2668 = vmatpush1.msra.mxu0 0.0
  %2669 = vmatprep.subr.mxu0 0.0
  %2670 = vmatpush1.msra.mxu0 0.0
  %2671 = vmatprep.subr.mxu0 0.0
  %2672 = vmatpush1.msra.mxu0 0.0
  %2673 = vmatprep.subr.mxu0 0.0
  %2674 = vmatpush1.msra.mxu0 0.0
  %2675 = vmatprep.subr.mxu0 0.0
  %2676 = vmatpush1.msra.mxu0 0.0
  %2677 = vmatprep.subr.mxu0 0.0
  %2678 = vmatpush1.msra.mxu0 0.0
  %2679 = vmatprep.subr.mxu0 0.0
  %2680 = vmatpush1.msra.mxu0 0.0
  %2681 = vmatprep.subr.mxu0 0.0
  %2682 = vmatpush1.msra.mxu0 0.0
  %2683 = vmatprep.subr.mxu0 0.0
  %2684 = vmatpush1.msra.mxu0 0.0
  %2685 = vmatprep.subr.mxu0 0.0
  %2686 = vmatpush1.msra.mxu0 0.0
  %2687 = vmatprep.subr.mxu0 0.0
  %2688 = vmatpush1.msra.mxu0 0.0
  %2689 = vmatprep.subr.mxu0 0.0
  %2690 = vmatpush1.msra.mxu0 0.0
  %2691 = vmatprep.subr.mxu0 0.0
  %2692 = vmatpush1.msra.mxu0 0.0
  %2693 = vmatprep.subr.mxu0 0.0
  %2694 = vmatpush1.msra.mxu0 0.0
  %2695 = vmatprep.subr.mxu0 0.0
  %2696 = vmatpush1.msra.mxu0 0.0
  %2697 = vmatprep.subr.mxu0 0.0
  %2698 = vmatpush1.msra.mxu0 0.0
  %2699 = vmatprep.subr.mxu0 0.0
  %2700 = vmatpush1.msra.mxu0 0.0
  %2701 = vmatprep.subr.mxu0 0.0
  %2702 = vmatpush1.msra.mxu0 0.0
  %2703 = vmatprep.subr.mxu0 0.0
  %2704 = vmatpush1.msra.mxu0 0.0
  %2705 = vmatprep.subr.mxu0 0.0
  %2706 = vmatpush1.msra.mxu0 0.0
  %2707 = vmatprep.subr.mxu0 0.0
  %2708 = vmatpush1.msra.mxu0 0.0
  %2709 = vmatprep.subr.mxu0 0.0
  %2710 = vmatpush1.msra.mxu0 0.0
  %2711 = vmatprep.subr.mxu0 0.0
  %2712 = vmatpush1.msra.mxu0 0.0
  %2713 = vmatprep.subr.mxu0 0.0
  %2714 = vmatpush1.msra.mxu0 0.0
  %2715 = vmatprep.subr.mxu0 0.0
  %2716 = vmatpush1.msra.mxu0 0.0
  %2717 = vmatprep.subr.mxu0 0.0
  %2718 = vmatpush1.msra.mxu0 0.0
  %2719 = vmatprep.subr.mxu0 0.0
  %2720 = vmatpush1.msra.mxu0 0.0
  %2721 = vmatprep.mubr.f32.mxu0 0.0
  %2722 = vmatmul.mubr.f32.gmra.mrb[0].mxu0 %v2655
  %v2723 = vpop.f32.mrb[0].mxu0
  %v2724 = vadd.f32 0.0, %v2723
  %v2725 = vpop.f32.mrb[0].mxu0
  %2726 = vdwg.mxu0
  %s2727 = scalar_lea.vmem %s3, 24
  %v2728 = vld [vmem:[%s2727] sm:$0xff]
  %v2730 = vsel %vm431, %v2651, 0
  %v2733 = vsel %vm431, %v2724, 0
  %2735 = vmatprep.subr.mxu0 0.0
  %2736 = vmatpush1.msra.mxu0 %v2728
  %2737 = vmatprep.subr.mxu0 0.0
  %2738 = vmatpush1.msra.mxu0 0.0
  %2739 = vmatprep.subr.mxu0 0.0
  %2740 = vmatpush1.msra.mxu0 0.0
  %2741 = vmatprep.subr.mxu0 0.0
  %2742 = vmatpush1.msra.mxu0 0.0
  %2743 = vmatprep.subr.mxu0 0.0
  %2744 = vmatpush1.msra.mxu0 0.0
  %2745 = vmatprep.subr.mxu0 0.0
  %2746 = vmatpush1.msra.mxu0 0.0
  %2747 = vmatprep.subr.mxu0 0.0
  %2748 = vmatpush1.msra.mxu0 0.0
  %2749 = vmatprep.subr.mxu0 0.0
  %2750 = vmatpush1.msra.mxu0 0.0
  %2751 = vmatprep.subr.mxu0 0.0
  %2752 = vmatpush1.msra.mxu0 0.0
  %2753 = vmatprep.subr.mxu0 0.0
  %2754 = vmatpush1.msra.mxu0 0.0
  %2755 = vmatprep.subr.mxu0 0.0
  %2756 = vmatpush1.msra.mxu0 0.0
  %2757 = vmatprep.subr.mxu0 0.0
  %2758 = vmatpush1.msra.mxu0 0.0
  %2759 = vmatprep.subr.mxu0 0.0
  %2760 = vmatpush1.msra.mxu0 0.0
  %2761 = vmatprep.subr.mxu0 0.0
  %2762 = vmatpush1.msra.mxu0 0.0
  %2763 = vmatprep.subr.mxu0 0.0
  %2764 = vmatpush1.msra.mxu0 0.0
  %2765 = vmatprep.subr.mxu0 0.0
  %2766 = vmatpush1.msra.mxu0 0.0
  %2767 = vmatprep.subr.mxu0 0.0
  %2768 = vmatpush1.msra.mxu0 0.0
  %2769 = vmatprep.subr.mxu0 0.0
  %2770 = vmatpush1.msra.mxu0 0.0
  %2771 = vmatprep.subr.mxu0 0.0
  %2772 = vmatpush1.msra.mxu0 0.0
  %2773 = vmatprep.subr.mxu0 0.0
  %2774 = vmatpush1.msra.mxu0 0.0
  %2775 = vmatprep.subr.mxu0 0.0
  %2776 = vmatpush1.msra.mxu0 0.0
  %2777 = vmatprep.subr.mxu0 0.0
  %2778 = vmatpush1.msra.mxu0 0.0
  %2779 = vmatprep.subr.mxu0 0.0
  %2780 = vmatpush1.msra.mxu0 0.0
  %2781 = vmatprep.subr.mxu0 0.0
  %2782 = vmatpush1.msra.mxu0 0.0
  %2783 = vmatprep.subr.mxu0 0.0
  %2784 = vmatpush1.msra.mxu0 0.0
  %2785 = vmatprep.subr.mxu0 0.0
  %2786 = vmatpush1.msra.mxu0 0.0
  %2787 = vmatprep.subr.mxu0 0.0
  %2788 = vmatpush1.msra.mxu0 0.0
  %2789 = vmatprep.subr.mxu0 0.0
  %2790 = vmatpush1.msra.mxu0 0.0
  %2791 = vmatprep.subr.mxu0 0.0
  %2792 = vmatpush1.msra.mxu0 0.0
  %2793 = vmatprep.subr.mxu0 0.0
  %2794 = vmatpush1.msra.mxu0 0.0
  %2795 = vmatprep.subr.mxu0 0.0
  %2796 = vmatpush1.msra.mxu0 0.0
  %2797 = vmatprep.subr.mxu0 0.0
  %2798 = vmatpush1.msra.mxu0 0.0
  %2799 = vmatprep.mubr.f32.mxu0 0.0
  %2800 = vmatmul.mubr.f32.gmra.mrb[0].mxu0 %v2730
  %v2801 = vpop.f32.mrb[0].mxu0
  %v2802 = vadd.f32 0.0, %v2801
  %v2803 = vpop.f32.mrb[0].mxu0
  %2804 = vmatprep.mubr.f32.mxu0 0.0
  %2805 = vmatmul.mubr.f32.gmra.mrb[0].mxu0 %v2733
  %v2806 = vpop.f32.mrb[0].mxu0
  %v2807 = vadd.f32 0.0, %v2806
  %v2808 = vpop.f32.mrb[0].mxu0
  %2809 = vdwg.mxu0
  %v2810 = vadd.f32 %v2150, %v2802
  %v2811 = vadd.f32 %v2151, %v2807
  %v2812 = vld [vmem:[%s5] sm:$0x1]
  %v2813 = vlaneseq
  %v2814 = vshrl.u32 %v2813, 7
  %v2815 = vsub.s32 0, %v2814
  %v2816 = vrot.slane %v2812, %v2815
  %v2817 = vadd.f32 %v2810, %v2816
  %v2818 = vadd.f32 %v2811, %v2816
  %v2819 = vadd.f32 %v2817, %v169
  %v2820 = vadd.f32 %v2818, %v170
  %v2821 = vld [vmem:[%s5 + $0x1] sm:$0x1]
  %v2822 = vld [vmem:[%s5 + $0x2] sm:$0x1]
  %v2823 = vsel %vm131, %v2819, 0.0
  %2824 = vadd.xlane.f32.xlu0 %v2823
  %v2825 = vpop.xlane.xlu0 %2824
  %v2826 = vsel %vm131, %v2820, 0.0
  %2827 = vadd.xlane.f32.xlu0 %v2826
  %v2828 = vpop.xlane.xlu0 %2827
  %v2829 = vmul.f32 %v2825, %v138
  %v2830 = vmul.f32 %v2828, %v138
  %v2831 = vsub.f32 %v2819, %v2829
  %v2832 = vsub.f32 %v2820, %v2830
  %v2833 = vmul.f32 %v2831, %v2831
  %v2834 = vmul.f32 %v2832, %v2832
  %v2835 = vsel %vm131, %v2833, 0.0
  %2836 = vadd.xlane.f32.xlu0 %v2835
  %v2837 = vpop.xlane.xlu0 %2836
  %v2838 = vsel %vm131, %v2834, 0.0
  %2839 = vadd.xlane.f32.xlu0 %v2838
  %v2840 = vpop.xlane.xlu0 %2839
  %v2841 = vmul.f32 %v2837, %v138
  %v2842 = vmul.f32 %v2840, %v138
  %v2843 = vadd.f32 %v2841, 1e-12
  %v2844 = vadd.f32 %v2842, 1e-12
  %v2845 = vrsqrt.pop %v2843
  %v2846 = vrsqrt.pop %v2844
  %v2847 = vmul.f32 %v2831, %v2845
  %v2848 = vmul.f32 %v2832, %v2846
  %v2849 = vlaneseq
  %v2850 = vshrl.u32 %v2849, 7
  %v2851 = vsub.s32 0, %v2850
  %v2852 = vrot.slane %v2821, %v2851
  %v2853 = vmul.f32 %v2847, %v2852
  %v2854 = vmul.f32 %v2848, %v2852
  %v2855 = vlaneseq
  %v2856 = vshrl.u32 %v2855, 7
  %v2857 = vsub.s32 0, %v2856
  %v2858 = vrot.slane %v2822, %v2857
  %v2859 = vadd.f32 %v2853, %v2858
  %v2860 = vadd.f32 %v2854, %v2858
  %v2861 = vld [vmem:[%s4] sm:$0xff]
  %v2862 = vld [vmem:[%s4 + $0x8] sm:$0xff]
  %v2863 = vld [vmem:[%s4 + $0x10] sm:$0xff]
  %v2864 = vld [vmem:[%s4 + $0x18] sm:$0xff]
  %v2865 = vld [vmem:[%s5 + $0x3] sm:$0x1]
  %v2866 = vlaneseq
  %v2867 = vshrl.u32 %v2866, 7
  %v2868 = vsub.s32 0, %v2867
  %v2869 = vrot.slane %v2865, %v2868
  %v2871 = vsel %vm131, %v2859, 0
  %v2874 = vsel %vm131, %v2860, 0
  %2876 = vmatprep.subr.mxu0 0.0
  %2877 = vmatpush1.msra.mxu0 %v2861
  %2878 = vmatprep.subr.mxu0 0.0
  %2879 = vmatpush1.msra.mxu0 %v2862
  %2880 = vmatprep.subr.mxu0 0.0
  %2881 = vmatpush1.msra.mxu0 %v2863
  %2882 = vmatprep.subr.mxu0 0.0
  %2883 = vmatpush1.msra.mxu0 %v2864
  %2884 = vmatprep.subr.mxu0 0.0
  %2885 = vmatpush1.msra.mxu0 0.0
  %2886 = vmatprep.subr.mxu0 0.0
  %2887 = vmatpush1.msra.mxu0 0.0
  %2888 = vmatprep.subr.mxu0 0.0
  %2889 = vmatpush1.msra.mxu0 0.0
  %2890 = vmatprep.subr.mxu0 0.0
  %2891 = vmatpush1.msra.mxu0 0.0
  %2892 = vmatprep.subr.mxu0 0.0
  %2893 = vmatpush1.msra.mxu0 0.0
  %2894 = vmatprep.subr.mxu0 0.0
  %2895 = vmatpush1.msra.mxu0 0.0
  %2896 = vmatprep.subr.mxu0 0.0
  %2897 = vmatpush1.msra.mxu0 0.0
  %2898 = vmatprep.subr.mxu0 0.0
  %2899 = vmatpush1.msra.mxu0 0.0
  %2900 = vmatprep.subr.mxu0 0.0
  %2901 = vmatpush1.msra.mxu0 0.0
  %2902 = vmatprep.subr.mxu0 0.0
  %2903 = vmatpush1.msra.mxu0 0.0
  %2904 = vmatprep.subr.mxu0 0.0
  %2905 = vmatpush1.msra.mxu0 0.0
  %2906 = vmatprep.subr.mxu0 0.0
  %2907 = vmatpush1.msra.mxu0 0.0
  %2908 = vmatprep.subr.mxu0 0.0
  %2909 = vmatpush1.msra.mxu0 0.0
  %2910 = vmatprep.subr.mxu0 0.0
  %2911 = vmatpush1.msra.mxu0 0.0
  %2912 = vmatprep.subr.mxu0 0.0
  %2913 = vmatpush1.msra.mxu0 0.0
  %2914 = vmatprep.subr.mxu0 0.0
  %2915 = vmatpush1.msra.mxu0 0.0
  %2916 = vmatprep.subr.mxu0 0.0
  %2917 = vmatpush1.msra.mxu0 0.0
  %2918 = vmatprep.subr.mxu0 0.0
  %2919 = vmatpush1.msra.mxu0 0.0
  %2920 = vmatprep.subr.mxu0 0.0
  %2921 = vmatpush1.msra.mxu0 0.0
  %2922 = vmatprep.subr.mxu0 0.0
  %2923 = vmatpush1.msra.mxu0 0.0
  %2924 = vmatprep.subr.mxu0 0.0
  %2925 = vmatpush1.msra.mxu0 0.0
  %2926 = vmatprep.subr.mxu0 0.0
  %2927 = vmatpush1.msra.mxu0 0.0
  %2928 = vmatprep.subr.mxu0 0.0
  %2929 = vmatpush1.msra.mxu0 0.0
  %2930 = vmatprep.subr.mxu0 0.0
  %2931 = vmatpush1.msra.mxu0 0.0
  %2932 = vmatprep.subr.mxu0 0.0
  %2933 = vmatpush1.msra.mxu0 0.0
  %2934 = vmatprep.subr.mxu0 0.0
  %2935 = vmatpush1.msra.mxu0 0.0
  %2936 = vmatprep.subr.mxu0 0.0
  %2937 = vmatpush1.msra.mxu0 0.0
  %2938 = vmatprep.subr.mxu0 0.0
  %2939 = vmatpush1.msra.mxu0 0.0
  %2940 = vmatprep.mubr.f32.mxu0 0.0
  %2941 = vmatmul.mubr.f32.gmra.mrb[0].mxu0 %v2871
  %v2942 = vpop.f32.mrb[0].mxu0
  %v2943 = vadd.f32 %v2869, %v2942
  %v2944 = vpop.f32.mrb[0].mxu0
  %2945 = vmatprep.mubr.f32.mxu0 0.0
  %2946 = vmatmul.mubr.f32.gmra.mrb[0].mxu0 %v2874
  %v2947 = vpop.f32.mrb[0].mxu0
  %v2948 = vadd.f32 %v2869, %v2947
  %v2949 = vpop.f32.mrb[0].mxu0
  %2950 = vdwg.mxu0
  %v2951 = vmax.f32 %v2943, 0.0
  %v2952 = vmax.f32 %v2948, 0.0
  %v2953 = vld [vmem:[%s4 + $0x20] sm:$0xff]
  %v2954 = vld [vmem:[%s4 + $0x28] sm:$0xff]
  %v2955 = vld [vmem:[%s4 + $0x30] sm:$0xff]
  %v2956 = vld [vmem:[%s4 + $0x38] sm:$0xff]
  %v2957 = vld [vmem:[%s4 + $0x40] sm:$0xff]
  %v2958 = vld [vmem:[%s4 + $0x48] sm:$0xff]
  %v2959 = vld [vmem:[%s4 + $0x50] sm:$0xff]
  %v2960 = vld [vmem:[%s4 + $0x58] sm:$0xff]
  %v2961 = vld [vmem:[%s5 + $0x4] sm:$0x1]
  %v2962 = vlaneseq
  %v2963 = vshrl.u32 %v2962, 7
  %v2964 = vsub.s32 0, %v2963
  %v2965 = vrot.slane %v2961, %v2964
  %vm2966 = vcmask 523264
  %v2968 = vsel %vm2966, %v2951, 0
  %v2971 = vsel %vm2966, %v2952, 0
  %2973 = vmatprep.subr.mxu0 0.0
  %2974 = vmatpush1.msra.mxu0 %v2953
  %2975 = vmatprep.subr.mxu0 0.0
  %2976 = vmatpush1.msra.mxu0 %v2954
  %2977 = vmatprep.subr.mxu0 0.0
  %2978 = vmatpush1.msra.mxu0 %v2955
  %2979 = vmatprep.subr.mxu0 0.0
  %2980 = vmatpush1.msra.mxu0 %v2956
  %2981 = vmatprep.subr.mxu0 0.0
  %2982 = vmatpush1.msra.mxu0 %v2957
  %2983 = vmatprep.subr.mxu0 0.0
  %2984 = vmatpush1.msra.mxu0 %v2958
  %2985 = vmatprep.subr.mxu0 0.0
  %2986 = vmatpush1.msra.mxu0 %v2959
  %2987 = vmatprep.subr.mxu0 0.0
  %2988 = vmatpush1.msra.mxu0 %v2960
  %2989 = vmatprep.subr.mxu0 0.0
  %2990 = vmatpush1.msra.mxu0 0.0
  %2991 = vmatprep.subr.mxu0 0.0
  %2992 = vmatpush1.msra.mxu0 0.0
  %2993 = vmatprep.subr.mxu0 0.0
  %2994 = vmatpush1.msra.mxu0 0.0
  %2995 = vmatprep.subr.mxu0 0.0
  %2996 = vmatpush1.msra.mxu0 0.0
  %2997 = vmatprep.subr.mxu0 0.0
  %2998 = vmatpush1.msra.mxu0 0.0
  %2999 = vmatprep.subr.mxu0 0.0
  %3000 = vmatpush1.msra.mxu0 0.0
  %3001 = vmatprep.subr.mxu0 0.0
  %3002 = vmatpush1.msra.mxu0 0.0
  %3003 = vmatprep.subr.mxu0 0.0
  %3004 = vmatpush1.msra.mxu0 0.0
  %3005 = vmatprep.subr.mxu0 0.0
  %3006 = vmatpush1.msra.mxu0 0.0
  %3007 = vmatprep.subr.mxu0 0.0
  %3008 = vmatpush1.msra.mxu0 0.0
  %3009 = vmatprep.subr.mxu0 0.0
  %3010 = vmatpush1.msra.mxu0 0.0
  %3011 = vmatprep.subr.mxu0 0.0
  %3012 = vmatpush1.msra.mxu0 0.0
  %3013 = vmatprep.subr.mxu0 0.0
  %3014 = vmatpush1.msra.mxu0 0.0
  %3015 = vmatprep.subr.mxu0 0.0
  %3016 = vmatpush1.msra.mxu0 0.0
  %3017 = vmatprep.subr.mxu0 0.0
  %3018 = vmatpush1.msra.mxu0 0.0
  %3019 = vmatprep.subr.mxu0 0.0
  %3020 = vmatpush1.msra.mxu0 0.0
  %3021 = vmatprep.subr.mxu0 0.0
  %3022 = vmatpush1.msra.mxu0 0.0
  %3023 = vmatprep.subr.mxu0 0.0
  %3024 = vmatpush1.msra.mxu0 0.0
  %3025 = vmatprep.subr.mxu0 0.0
  %3026 = vmatpush1.msra.mxu0 0.0
  %3027 = vmatprep.subr.mxu0 0.0
  %3028 = vmatpush1.msra.mxu0 0.0
  %3029 = vmatprep.subr.mxu0 0.0
  %3030 = vmatpush1.msra.mxu0 0.0
  %3031 = vmatprep.subr.mxu0 0.0
  %3032 = vmatpush1.msra.mxu0 0.0
  %3033 = vmatprep.subr.mxu0 0.0
  %3034 = vmatpush1.msra.mxu0 0.0
  %3035 = vmatprep.subr.mxu0 0.0
  %3036 = vmatpush1.msra.mxu0 0.0
  %3037 = vmatprep.mubr.f32.mxu0 0.0
  %3038 = vmatmul.mubr.f32.gmra.mrb[0].mxu0 %v2968
  %v3039 = vpop.f32.mrb[0].mxu0
  %v3040 = vadd.f32 %v2965, %v3039
  %v3041 = vpop.f32.mrb[0].mxu0
  %3042 = vmatprep.mubr.f32.mxu0 0.0
  %3043 = vmatmul.mubr.f32.gmra.mrb[0].mxu0 %v2971
  %v3044 = vpop.f32.mrb[0].mxu0
  %v3045 = vadd.f32 %v2965, %v3044
  %v3046 = vpop.f32.mrb[0].mxu0
  %3047 = vdwg.mxu0
  %v3048 = vadd.f32 %v3040, %v2859
  %v3049 = vadd.f32 %v3045, %v2860
  %v3050 = vld [vmem:[%s5 + $0x5] sm:$0x1]
  %v3051 = vld [vmem:[%s5 + $0x6] sm:$0x1]
  %v3052 = vsel %vm131, %v3048, 0.0
  %3053 = vadd.xlane.f32.xlu0 %v3052
  %v3054 = vpop.xlane.xlu0 %3053
  %v3055 = vsel %vm131, %v3049, 0.0
  %3056 = vadd.xlane.f32.xlu0 %v3055
  %v3057 = vpop.xlane.xlu0 %3056
  %v3058 = vmul.f32 %v3054, %v138
  %v3059 = vmul.f32 %v3057, %v138
  %v3060 = vsub.f32 %v3048, %v3058
  %v3061 = vsub.f32 %v3049, %v3059
  %v3062 = vmul.f32 %v3060, %v3060
  %v3063 = vmul.f32 %v3061, %v3061
  %v3064 = vsel %vm131, %v3062, 0.0
  %3065 = vadd.xlane.f32.xlu0 %v3064
  %v3066 = vpop.xlane.xlu0 %3065
  %v3067 = vsel %vm131, %v3063, 0.0
  %3068 = vadd.xlane.f32.xlu0 %v3067
  %v3069 = vpop.xlane.xlu0 %3068
  %v3070 = vmul.f32 %v3066, %v138
  %v3071 = vmul.f32 %v3069, %v138
  %v3072 = vadd.f32 %v3070, 1e-12
  %v3073 = vadd.f32 %v3071, 1e-12
  %v3074 = vrsqrt.pop %v3072
  %v3075 = vrsqrt.pop %v3073
  %v3076 = vmul.f32 %v3060, %v3074
  %v3077 = vmul.f32 %v3061, %v3075
  %v3078 = vlaneseq
  %v3079 = vshrl.u32 %v3078, 7
  %v3080 = vsub.s32 0, %v3079
  %v3081 = vrot.slane %v3050, %v3080
  %v3082 = vmul.f32 %v3076, %v3081
  %v3083 = vmul.f32 %v3077, %v3081
  %v3084 = vlaneseq
  %v3085 = vshrl.u32 %v3084, 7
  %v3086 = vsub.s32 0, %v3085
  %v3087 = vrot.slane %v3051, %v3086
  %v3088 = vadd.f32 %v3082, %v3087
  %v3089 = vadd.f32 %v3083, %v3087
  %s3090 = scalar_lea.vmem %s5, 24
  %v3091 = vld [vmem:[%s3090 + $0x8] sm:$0x1]
  %v3092 = vld [vmem:[%s3090 + $0xc] sm:$0x1]
  %v3093 = vld [vmem:[%s3090 + $0x10] sm:$0x1]
  %s3094 = scalar_lea.vmem %s2, 384
  %v3095 = vld [vmem:[%s3094] sm:$0xff]
  %v3096 = vld [vmem:[%s3094 + $0x8] sm:$0xff]
  %v3097 = vld [vmem:[%s3094 + $0x10] sm:$0xff]
  %v3098 = vld [vmem:[%s3094 + $0x18] sm:$0xff]
  %v3099 = vlaneseq
  %v3100 = vshrl.u32 %v3099, 7
  %v3101 = vsub.s32 0, %v3100
  %v3102 = vrot.slane %v3091, %v3101
  %v3104 = vsel %vm131, %v3088, 0
  %v3107 = vsel %vm131, %v3089, 0
  %3109 = vmatprep.subr.mxu0 0.0
  %3110 = vmatpush1.msra.mxu0 %v3095
  %3111 = vmatprep.subr.mxu0 0.0
  %3112 = vmatpush1.msra.mxu0 %v3096
  %3113 = vmatprep.subr.mxu0 0.0
  %3114 = vmatpush1.msra.mxu0 %v3097
  %3115 = vmatprep.subr.mxu0 0.0
  %3116 = vmatpush1.msra.mxu0 %v3098
  %3117 = vmatprep.subr.mxu0 0.0
  %3118 = vmatpush1.msra.mxu0 0.0
  %3119 = vmatprep.subr.mxu0 0.0
  %3120 = vmatpush1.msra.mxu0 0.0
  %3121 = vmatprep.subr.mxu0 0.0
  %3122 = vmatpush1.msra.mxu0 0.0
  %3123 = vmatprep.subr.mxu0 0.0
  %3124 = vmatpush1.msra.mxu0 0.0
  %3125 = vmatprep.subr.mxu0 0.0
  %3126 = vmatpush1.msra.mxu0 0.0
  %3127 = vmatprep.subr.mxu0 0.0
  %3128 = vmatpush1.msra.mxu0 0.0
  %3129 = vmatprep.subr.mxu0 0.0
  %3130 = vmatpush1.msra.mxu0 0.0
  %3131 = vmatprep.subr.mxu0 0.0
  %3132 = vmatpush1.msra.mxu0 0.0
  %3133 = vmatprep.subr.mxu0 0.0
  %3134 = vmatpush1.msra.mxu0 0.0
  %3135 = vmatprep.subr.mxu0 0.0
  %3136 = vmatpush1.msra.mxu0 0.0
  %3137 = vmatprep.subr.mxu0 0.0
  %3138 = vmatpush1.msra.mxu0 0.0
  %3139 = vmatprep.subr.mxu0 0.0
  %3140 = vmatpush1.msra.mxu0 0.0
  %3141 = vmatprep.subr.mxu0 0.0
  %3142 = vmatpush1.msra.mxu0 0.0
  %3143 = vmatprep.subr.mxu0 0.0
  %3144 = vmatpush1.msra.mxu0 0.0
  %3145 = vmatprep.subr.mxu0 0.0
  %3146 = vmatpush1.msra.mxu0 0.0
  %3147 = vmatprep.subr.mxu0 0.0
  %3148 = vmatpush1.msra.mxu0 0.0
  %3149 = vmatprep.subr.mxu0 0.0
  %3150 = vmatpush1.msra.mxu0 0.0
  %3151 = vmatprep.subr.mxu0 0.0
  %3152 = vmatpush1.msra.mxu0 0.0
  %3153 = vmatprep.subr.mxu0 0.0
  %3154 = vmatpush1.msra.mxu0 0.0
  %3155 = vmatprep.subr.mxu0 0.0
  %3156 = vmatpush1.msra.mxu0 0.0
  %3157 = vmatprep.subr.mxu0 0.0
  %3158 = vmatpush1.msra.mxu0 0.0
  %3159 = vmatprep.subr.mxu0 0.0
  %3160 = vmatpush1.msra.mxu0 0.0
  %3161 = vmatprep.subr.mxu0 0.0
  %3162 = vmatpush1.msra.mxu0 0.0
  %3163 = vmatprep.subr.mxu0 0.0
  %3164 = vmatpush1.msra.mxu0 0.0
  %3165 = vmatprep.subr.mxu0 0.0
  %3166 = vmatpush1.msra.mxu0 0.0
  %3167 = vmatprep.subr.mxu0 0.0
  %3168 = vmatpush1.msra.mxu0 0.0
  %3169 = vmatprep.subr.mxu0 0.0
  %3170 = vmatpush1.msra.mxu0 0.0
  %3171 = vmatprep.subr.mxu0 0.0
  %3172 = vmatpush1.msra.mxu0 0.0
  %3173 = vmatprep.mubr.f32.mxu0 0.0
  %3174 = vmatmul.mubr.f32.gmra.mrb[0].mxu0 %v3104
  %v3175 = vpop.f32.mrb[0].mxu0
  %v3176 = vadd.f32 %v3102, %v3175
  %v3177 = vpop.f32.mrb[0].mxu0
  %3178 = vmatprep.mubr.f32.mxu0 0.0
  %3179 = vmatmul.mubr.f32.gmra.mrb[0].mxu0 %v3107
  %v3180 = vpop.f32.mrb[0].mxu0
  %v3181 = vadd.f32 %v3102, %v3180
  %v3182 = vpop.f32.mrb[0].mxu0
  %3183 = vdwg.mxu0
  %s3184 = scalar_lea.vmem %s2, 512
  %v3185 = vld [vmem:[%s3184] sm:$0xff]
  %v3186 = vld [vmem:[%s3184 + $0x8] sm:$0xff]
  %v3187 = vld [vmem:[%s3184 + $0x10] sm:$0xff]
  %v3188 = vld [vmem:[%s3184 + $0x18] sm:$0xff]
  %v3189 = vlaneseq
  %v3190 = vshrl.u32 %v3189, 7
  %v3191 = vsub.s32 0, %v3190
  %v3192 = vrot.slane %v3092, %v3191
  %3193 = vmatprep.subr.mxu0 0.0
  %3194 = vmatpush1.msra.mxu0 %v3185
  %3195 = vmatprep.subr.mxu0 0.0
  %3196 = vmatpush1.msra.mxu0 %v3186
  %3197 = vmatprep.subr.mxu0 0.0
  %3198 = vmatpush1.msra.mxu0 %v3187
  %3199 = vmatprep.subr.mxu0 0.0
  %3200 = vmatpush1.msra.mxu0 %v3188
  %3201 = vmatprep.subr.mxu0 0.0
  %3202 = vmatpush1.msra.mxu0 0.0
  %3203 = vmatprep.subr.mxu0 0.0
  %3204 = vmatpush1.msra.mxu0 0.0
  %3205 = vmatprep.subr.mxu0 0.0
  %3206 = vmatpush1.msra.mxu0 0.0
  %3207 = vmatprep.subr.mxu0 0.0
  %3208 = vmatpush1.msra.mxu0 0.0
  %3209 = vmatprep.subr.mxu0 0.0
  %3210 = vmatpush1.msra.mxu0 0.0
  %3211 = vmatprep.subr.mxu0 0.0
  %3212 = vmatpush1.msra.mxu0 0.0
  %3213 = vmatprep.subr.mxu0 0.0
  %3214 = vmatpush1.msra.mxu0 0.0
  %3215 = vmatprep.subr.mxu0 0.0
  %3216 = vmatpush1.msra.mxu0 0.0
  %3217 = vmatprep.subr.mxu0 0.0
  %3218 = vmatpush1.msra.mxu0 0.0
  %3219 = vmatprep.subr.mxu0 0.0
  %3220 = vmatpush1.msra.mxu0 0.0
  %3221 = vmatprep.subr.mxu0 0.0
  %3222 = vmatpush1.msra.mxu0 0.0
  %3223 = vmatprep.subr.mxu0 0.0
  %3224 = vmatpush1.msra.mxu0 0.0
  %3225 = vmatprep.subr.mxu0 0.0
  %3226 = vmatpush1.msra.mxu0 0.0
  %3227 = vmatprep.subr.mxu0 0.0
  %3228 = vmatpush1.msra.mxu0 0.0
  %3229 = vmatprep.subr.mxu0 0.0
  %3230 = vmatpush1.msra.mxu0 0.0
  %3231 = vmatprep.subr.mxu0 0.0
  %3232 = vmatpush1.msra.mxu0 0.0
  %3233 = vmatprep.subr.mxu0 0.0
  %3234 = vmatpush1.msra.mxu0 0.0
  %3235 = vmatprep.subr.mxu0 0.0
  %3236 = vmatpush1.msra.mxu0 0.0
  %3237 = vmatprep.subr.mxu0 0.0
  %3238 = vmatpush1.msra.mxu0 0.0
  %3239 = vmatprep.subr.mxu0 0.0
  %3240 = vmatpush1.msra.mxu0 0.0
  %3241 = vmatprep.subr.mxu0 0.0
  %3242 = vmatpush1.msra.mxu0 0.0
  %3243 = vmatprep.subr.mxu0 0.0
  %3244 = vmatpush1.msra.mxu0 0.0
  %3245 = vmatprep.subr.mxu0 0.0
  %3246 = vmatpush1.msra.mxu0 0.0
  %3247 = vmatprep.subr.mxu0 0.0
  %3248 = vmatpush1.msra.mxu0 0.0
  %3249 = vmatprep.subr.mxu0 0.0
  %3250 = vmatpush1.msra.mxu0 0.0
  %3251 = vmatprep.subr.mxu0 0.0
  %3252 = vmatpush1.msra.mxu0 0.0
  %3253 = vmatprep.subr.mxu0 0.0
  %3254 = vmatpush1.msra.mxu0 0.0
  %3255 = vmatprep.subr.mxu0 0.0
  %3256 = vmatpush1.msra.mxu0 0.0
  %3257 = vmatprep.mubr.f32.mxu0 0.0
  %3258 = vmatmul.mubr.f32.gmra.mrb[0].mxu0 %v3104
  %v3259 = vpop.f32.mrb[0].mxu0
  %v3260 = vadd.f32 %v3192, %v3259
  %v3261 = vpop.f32.mrb[0].mxu0
  %3262 = vmatprep.mubr.f32.mxu0 0.0
  %3263 = vmatmul.mubr.f32.gmra.mrb[0].mxu0 %v3107
  %v3264 = vpop.f32.mrb[0].mxu0
  %v3265 = vadd.f32 %v3192, %v3264
  %v3266 = vpop.f32.mrb[0].mxu0
  %3267 = vdwg.mxu0
  %s3268 = scalar_lea.vmem %s2, 640
  %v3269 = vld [vmem:[%s3268] sm:$0xff]
  %v3270 = vld [vmem:[%s3268 + $0x8] sm:$0xff]
  %v3271 = vld [vmem:[%s3268 + $0x10] sm:$0xff]
  %v3272 = vld [vmem:[%s3268 + $0x18] sm:$0xff]
  %v3273 = vlaneseq
  %v3274 = vshrl.u32 %v3273, 7
  %v3275 = vsub.s32 0, %v3274
  %v3276 = vrot.slane %v3093, %v3275
  %3277 = vmatprep.subr.mxu0 0.0
  %3278 = vmatpush1.msra.mxu0 %v3269
  %3279 = vmatprep.subr.mxu0 0.0
  %3280 = vmatpush1.msra.mxu0 %v3270
  %3281 = vmatprep.subr.mxu0 0.0
  %3282 = vmatpush1.msra.mxu0 %v3271
  %3283 = vmatprep.subr.mxu0 0.0
  %3284 = vmatpush1.msra.mxu0 %v3272
  %3285 = vmatprep.subr.mxu0 0.0
  %3286 = vmatpush1.msra.mxu0 0.0
  %3287 = vmatprep.subr.mxu0 0.0
  %3288 = vmatpush1.msra.mxu0 0.0
  %3289 = vmatprep.subr.mxu0 0.0
  %3290 = vmatpush1.msra.mxu0 0.0
  %3291 = vmatprep.subr.mxu0 0.0
  %3292 = vmatpush1.msra.mxu0 0.0
  %3293 = vmatprep.subr.mxu0 0.0
  %3294 = vmatpush1.msra.mxu0 0.0
  %3295 = vmatprep.subr.mxu0 0.0
  %3296 = vmatpush1.msra.mxu0 0.0
  %3297 = vmatprep.subr.mxu0 0.0
  %3298 = vmatpush1.msra.mxu0 0.0
  %3299 = vmatprep.subr.mxu0 0.0
  %3300 = vmatpush1.msra.mxu0 0.0
  %3301 = vmatprep.subr.mxu0 0.0
  %3302 = vmatpush1.msra.mxu0 0.0
  %3303 = vmatprep.subr.mxu0 0.0
  %3304 = vmatpush1.msra.mxu0 0.0
  %3305 = vmatprep.subr.mxu0 0.0
  %3306 = vmatpush1.msra.mxu0 0.0
  %3307 = vmatprep.subr.mxu0 0.0
  %3308 = vmatpush1.msra.mxu0 0.0
  %3309 = vmatprep.subr.mxu0 0.0
  %3310 = vmatpush1.msra.mxu0 0.0
  %3311 = vmatprep.subr.mxu0 0.0
  %3312 = vmatpush1.msra.mxu0 0.0
  %3313 = vmatprep.subr.mxu0 0.0
  %3314 = vmatpush1.msra.mxu0 0.0
  %3315 = vmatprep.subr.mxu0 0.0
  %3316 = vmatpush1.msra.mxu0 0.0
  %3317 = vmatprep.subr.mxu0 0.0
  %3318 = vmatpush1.msra.mxu0 0.0
  %3319 = vmatprep.subr.mxu0 0.0
  %3320 = vmatpush1.msra.mxu0 0.0
  %3321 = vmatprep.subr.mxu0 0.0
  %3322 = vmatpush1.msra.mxu0 0.0
  %3323 = vmatprep.subr.mxu0 0.0
  %3324 = vmatpush1.msra.mxu0 0.0
  %3325 = vmatprep.subr.mxu0 0.0
  %3326 = vmatpush1.msra.mxu0 0.0
  %3327 = vmatprep.subr.mxu0 0.0
  %3328 = vmatpush1.msra.mxu0 0.0
  %3329 = vmatprep.subr.mxu0 0.0
  %3330 = vmatpush1.msra.mxu0 0.0
  %3331 = vmatprep.subr.mxu0 0.0
  %3332 = vmatpush1.msra.mxu0 0.0
  %3333 = vmatprep.subr.mxu0 0.0
  %3334 = vmatpush1.msra.mxu0 0.0
  %3335 = vmatprep.subr.mxu0 0.0
  %3336 = vmatpush1.msra.mxu0 0.0
  %3337 = vmatprep.subr.mxu0 0.0
  %3338 = vmatpush1.msra.mxu0 0.0
  %3339 = vmatprep.subr.mxu0 0.0
  %3340 = vmatpush1.msra.mxu0 0.0
  %3341 = vmatprep.mubr.f32.mxu0 0.0
  %3342 = vmatmul.mubr.f32.gmra.mrb[0].mxu0 %v3104
  %v3343 = vpop.f32.mrb[0].mxu0
  %v3344 = vadd.f32 %v3276, %v3343
  %v3345 = vpop.f32.mrb[0].mxu0
  %3346 = vmatprep.mubr.f32.mxu0 0.0
  %3347 = vmatmul.mubr.f32.gmra.mrb[0].mxu0 %v3107
  %v3348 = vpop.f32.mrb[0].mxu0
  %v3349 = vadd.f32 %v3276, %v3348
  %v3350 = vpop.f32.mrb[0].mxu0
  %3351 = vdwg.mxu0
  %v3353 = vsel %vm431, %v3176, 0
  %v3356 = vsel %vm431, %v3260, 0
  %3358 = vmatprep.subr.mxu0 0.0
  %3359 = vmatpush1.xpose.msra.mxu0 %v3356
  %3360 = vmatprep.subr.mxu0 0.0
  %3361 = vmatpush1.xpose.msra.mxu0 0.0
  %3362 = vmatprep.subr.mxu0 0.0
  %3363 = vmatpush1.xpose.msra.mxu0 0.0
  %3364 = vmatprep.subr.mxu0 0.0
  %3365 = vmatpush1.xpose.msra.mxu0 0.0
  %3366 = vmatprep.subr.mxu0 0.0
  %3367 = vmatpush1.xpose.msra.mxu0 0.0
  %3368 = vmatprep.subr.mxu0 0.0
  %3369 = vmatpush1.xpose.msra.mxu0 0.0
  %3370 = vmatprep.subr.mxu0 0.0
  %3371 = vmatpush1.xpose.msra.mxu0 0.0
  %3372 = vmatprep.subr.mxu0 0.0
  %3373 = vmatpush1.xpose.msra.mxu0 0.0
  %3374 = vmatprep.subr.mxu0 0.0
  %3375 = vmatpush1.xpose.msra.mxu0 0.0
  %3376 = vmatprep.subr.mxu0 0.0
  %3377 = vmatpush1.xpose.msra.mxu0 0.0
  %3378 = vmatprep.subr.mxu0 0.0
  %3379 = vmatpush1.xpose.msra.mxu0 0.0
  %3380 = vmatprep.subr.mxu0 0.0
  %3381 = vmatpush1.xpose.msra.mxu0 0.0
  %3382 = vmatprep.subr.mxu0 0.0
  %3383 = vmatpush1.xpose.msra.mxu0 0.0
  %3384 = vmatprep.subr.mxu0 0.0
  %3385 = vmatpush1.xpose.msra.mxu0 0.0
  %3386 = vmatprep.subr.mxu0 0.0
  %3387 = vmatpush1.xpose.msra.mxu0 0.0
  %3388 = vmatprep.subr.mxu0 0.0
  %3389 = vmatpush1.xpose.msra.mxu0 0.0
  %3390 = vmatprep.subr.mxu0 0.0
  %3391 = vmatpush1.xpose.msra.mxu0 0.0
  %3392 = vmatprep.subr.mxu0 0.0
  %3393 = vmatpush1.xpose.msra.mxu0 0.0
  %3394 = vmatprep.subr.mxu0 0.0
  %3395 = vmatpush1.xpose.msra.mxu0 0.0
  %3396 = vmatprep.subr.mxu0 0.0
  %3397 = vmatpush1.xpose.msra.mxu0 0.0
  %3398 = vmatprep.subr.mxu0 0.0
  %3399 = vmatpush1.xpose.msra.mxu0 0.0
  %3400 = vmatprep.subr.mxu0 0.0
  %3401 = vmatpush1.xpose.msra.mxu0 0.0
  %3402 = vmatprep.subr.mxu0 0.0
  %3403 = vmatpush1.xpose.msra.mxu0 0.0
  %3404 = vmatprep.subr.mxu0 0.0
  %3405 = vmatpush1.xpose.msra.mxu0 0.0
  %3406 = vmatprep.subr.mxu0 0.0
  %3407 = vmatpush1.xpose.msra.mxu0 0.0
  %3408 = vmatprep.subr.mxu0 0.0
  %3409 = vmatpush1.xpose.msra.mxu0 0.0
  %3410 = vmatprep.subr.mxu0 0.0
  %3411 = vmatpush1.xpose.msra.mxu0 0.0
  %3412 = vmatprep.subr.mxu0 0.0
  %3413 = vmatpush1.xpose.msra.mxu0 0.0
  %3414 = vmatprep.subr.mxu0 0.0
  %3415 = vmatpush1.xpose.msra.mxu0 0.0
  %3416 = vmatprep.subr.mxu0 0.0
  %3417 = vmatpush1.xpose.msra.mxu0 0.0
  %3418 = vmatprep.subr.mxu0 0.0
  %3419 = vmatpush1.xpose.msra.mxu0 0.0
  %3420 = vmatprep.subr.mxu0 0.0
  %3421 = vmatpush1.xpose.msra.mxu0 0.0
  %3422 = vmatprep.mubr.f32.mxu0 0.0
  %3423 = vmatmul.mubr.f32.gmra.mrb[0].mxu0 %v3353
  %v3424 = vpop.f32.mrb[0].mxu0
  %v3425 = vadd.f32 0.0, %v3424
  %v3426 = vpop.f32.mrb[0].mxu0
  %3427 = vdwg.mxu0
  %v3429 = vsel %vm431, %v3181, 0
  %v3432 = vsel %vm431, %v3265, 0
  %3434 = vmatprep.subr.mxu0 0.0
  %3435 = vmatpush1.xpose.msra.mxu0 %v3432
  %3436 = vmatprep.subr.mxu0 0.0
  %3437 = vmatpush1.xpose.msra.mxu0 0.0
  %3438 = vmatprep.subr.mxu0 0.0
  %3439 = vmatpush1.xpose.msra.mxu0 0.0
  %3440 = vmatprep.subr.mxu0 0.0
  %3441 = vmatpush1.xpose.msra.mxu0 0.0
  %3442 = vmatprep.subr.mxu0 0.0
  %3443 = vmatpush1.xpose.msra.mxu0 0.0
  %3444 = vmatprep.subr.mxu0 0.0
  %3445 = vmatpush1.xpose.msra.mxu0 0.0
  %3446 = vmatprep.subr.mxu0 0.0
  %3447 = vmatpush1.xpose.msra.mxu0 0.0
  %3448 = vmatprep.subr.mxu0 0.0
  %3449 = vmatpush1.xpose.msra.mxu0 0.0
  %3450 = vmatprep.subr.mxu0 0.0
  %3451 = vmatpush1.xpose.msra.mxu0 0.0
  %3452 = vmatprep.subr.mxu0 0.0
  %3453 = vmatpush1.xpose.msra.mxu0 0.0
  %3454 = vmatprep.subr.mxu0 0.0
  %3455 = vmatpush1.xpose.msra.mxu0 0.0
  %3456 = vmatprep.subr.mxu0 0.0
  %3457 = vmatpush1.xpose.msra.mxu0 0.0
  %3458 = vmatprep.subr.mxu0 0.0
  %3459 = vmatpush1.xpose.msra.mxu0 0.0
  %3460 = vmatprep.subr.mxu0 0.0
  %3461 = vmatpush1.xpose.msra.mxu0 0.0
  %3462 = vmatprep.subr.mxu0 0.0
  %3463 = vmatpush1.xpose.msra.mxu0 0.0
  %3464 = vmatprep.subr.mxu0 0.0
  %3465 = vmatpush1.xpose.msra.mxu0 0.0
  %3466 = vmatprep.subr.mxu0 0.0
  %3467 = vmatpush1.xpose.msra.mxu0 0.0
  %3468 = vmatprep.subr.mxu0 0.0
  %3469 = vmatpush1.xpose.msra.mxu0 0.0
  %3470 = vmatprep.subr.mxu0 0.0
  %3471 = vmatpush1.xpose.msra.mxu0 0.0
  %3472 = vmatprep.subr.mxu0 0.0
  %3473 = vmatpush1.xpose.msra.mxu0 0.0
  %3474 = vmatprep.subr.mxu0 0.0
  %3475 = vmatpush1.xpose.msra.mxu0 0.0
  %3476 = vmatprep.subr.mxu0 0.0
  %3477 = vmatpush1.xpose.msra.mxu0 0.0
  %3478 = vmatprep.subr.mxu0 0.0
  %3479 = vmatpush1.xpose.msra.mxu0 0.0
  %3480 = vmatprep.subr.mxu0 0.0
  %3481 = vmatpush1.xpose.msra.mxu0 0.0
  %3482 = vmatprep.subr.mxu0 0.0
  %3483 = vmatpush1.xpose.msra.mxu0 0.0
  %3484 = vmatprep.subr.mxu0 0.0
  %3485 = vmatpush1.xpose.msra.mxu0 0.0
  %3486 = vmatprep.subr.mxu0 0.0
  %3487 = vmatpush1.xpose.msra.mxu0 0.0
  %3488 = vmatprep.subr.mxu0 0.0
  %3489 = vmatpush1.xpose.msra.mxu0 0.0
  %3490 = vmatprep.subr.mxu0 0.0
  %3491 = vmatpush1.xpose.msra.mxu0 0.0
  %3492 = vmatprep.subr.mxu0 0.0
  %3493 = vmatpush1.xpose.msra.mxu0 0.0
  %3494 = vmatprep.subr.mxu0 0.0
  %3495 = vmatpush1.xpose.msra.mxu0 0.0
  %3496 = vmatprep.subr.mxu0 0.0
  %3497 = vmatpush1.xpose.msra.mxu0 0.0
  %3498 = vmatprep.mubr.f32.mxu0 0.0
  %3499 = vmatmul.mubr.f32.gmra.mrb[0].mxu0 %v3429
  %v3500 = vpop.f32.mrb[0].mxu0
  %v3501 = vadd.f32 0.0, %v3500
  %v3502 = vpop.f32.mrb[0].mxu0
  %3503 = vdwg.mxu0
  %v3504 = vsel %vm431, %v3425, -inf
  %3505 = vmax.xlane.f32.xlu0 %v3504
  %v3506 = vpop.xlane.xlu0 %3505
  %v3507 = vsel %vm431, %v3501, -inf
  %3508 = vmax.xlane.f32.xlu0 %v3507
  %v3509 = vpop.xlane.xlu0 %3508
  %v3510 = vsub.f32 %v3425, %v3506
  %v3511 = vsub.f32 %v3501, %v3509
  %v3512 = vmul.f32 %v3510, 1.442695
  %v3513 = vpow.pop %v3512
  %v3514 = vmul.f32 %v3511, 1.442695
  %v3515 = vpow.pop %v3514
  %v3516 = vsel %vm431, %v3513, 0.0
  %3517 = vadd.xlane.f32.xlu0 %v3516
  %v3518 = vpop.xlane.xlu0 %3517
  %v3519 = vsel %vm431, %v3515, 0.0
  %3520 = vadd.xlane.f32.xlu0 %v3519
  %v3521 = vpop.xlane.xlu0 %3520
  %v3522 = vrcp.pop %v3518
  %v3523 = vrcp.pop %v3521
  %v3524 = vmul.f32 %v3513, %v3522
  %v3525 = vmul.f32 %v3515, %v3523
  %v3527 = vsel %vm431, %v3524, 0
  %3529 = vmatprep.subr.mxu0 0.0
  %3530 = vmatpush1.msra.mxu0 %v3344
  %3531 = vmatprep.subr.mxu0 0.0
  %3532 = vmatpush1.msra.mxu0 0.0
  %3533 = vmatprep.subr.mxu0 0.0
  %3534 = vmatpush1.msra.mxu0 0.0
  %3535 = vmatprep.subr.mxu0 0.0
  %3536 = vmatpush1.msra.mxu0 0.0
  %3537 = vmatprep.subr.mxu0 0.0
  %3538 = vmatpush1.msra.mxu0 0.0
  %3539 = vmatprep.subr.mxu0 0.0
  %3540 = vmatpush1.msra.mxu0 0.0
  %3541 = vmatprep.subr.mxu0 0.0
  %3542 = vmatpush1.msra.mxu0 0.0
  %3543 = vmatprep.subr.mxu0 0.0
  %3544 = vmatpush1.msra.mxu0 0.0
  %3545 = vmatprep.subr.mxu0 0.0
  %3546 = vmatpush1.msra.mxu0 0.0
  %3547 = vmatprep.subr.mxu0 0.0
  %3548 = vmatpush1.msra.mxu0 0.0
  %3549 = vmatprep.subr.mxu0 0.0
  %3550 = vmatpush1.msra.mxu0 0.0
  %3551 = vmatprep.subr.mxu0 0.0
  %3552 = vmatpush1.msra.mxu0 0.0
  %3553 = vmatprep.subr.mxu0 0.0
  %3554 = vmatpush1.msra.mxu0 0.0
  %3555 = vmatprep.subr.mxu0 0.0
  %3556 = vmatpush1.msra.mxu0 0.0
  %3557 = vmatprep.subr.mxu0 0.0
  %3558 = vmatpush1.msra.mxu0 0.0
  %3559 = vmatprep.subr.mxu0 0.0
  %3560 = vmatpush1.msra.mxu0 0.0
  %3561 = vmatprep.subr.mxu0 0.0
  %3562 = vmatpush1.msra.mxu0 0.0
  %3563 = vmatprep.subr.mxu0 0.0
  %3564 = vmatpush1.msra.mxu0 0.0
  %3565 = vmatprep.subr.mxu0 0.0
  %3566 = vmatpush1.msra.mxu0 0.0
  %3567 = vmatprep.subr.mxu0 0.0
  %3568 = vmatpush1.msra.mxu0 0.0
  %3569 = vmatprep.subr.mxu0 0.0
  %3570 = vmatpush1.msra.mxu0 0.0
  %3571 = vmatprep.subr.mxu0 0.0
  %3572 = vmatpush1.msra.mxu0 0.0
  %3573 = vmatprep.subr.mxu0 0.0
  %3574 = vmatpush1.msra.mxu0 0.0
  %3575 = vmatprep.subr.mxu0 0.0
  %3576 = vmatpush1.msra.mxu0 0.0
  %3577 = vmatprep.subr.mxu0 0.0
  %3578 = vmatpush1.msra.mxu0 0.0
  %3579 = vmatprep.subr.mxu0 0.0
  %3580 = vmatpush1.msra.mxu0 0.0
  %3581 = vmatprep.subr.mxu0 0.0
  %3582 = vmatpush1.msra.mxu0 0.0
  %3583 = vmatprep.subr.mxu0 0.0
  %3584 = vmatpush1.msra.mxu0 0.0
  %3585 = vmatprep.subr.mxu0 0.0
  %3586 = vmatpush1.msra.mxu0 0.0
  %3587 = vmatprep.subr.mxu0 0.0
  %3588 = vmatpush1.msra.mxu0 0.0
  %3589 = vmatprep.subr.mxu0 0.0
  %3590 = vmatpush1.msra.mxu0 0.0
  %3591 = vmatprep.subr.mxu0 0.0
  %3592 = vmatpush1.msra.mxu0 0.0
  %3593 = vmatprep.mubr.f32.mxu0 0.0
  %3594 = vmatmul.mubr.f32.gmra.mrb[0].mxu0 %v3527
  %v3595 = vpop.f32.mrb[0].mxu0
  %v3596 = vadd.f32 0.0, %v3595
  %v3597 = vpop.f32.mrb[0].mxu0
  %3598 = vdwg.mxu0
  %v3600 = vsel %vm431, %v3525, 0
  %3602 = vmatprep.subr.mxu0 0.0
  %3603 = vmatpush1.msra.mxu0 %v3349
  %3604 = vmatprep.subr.mxu0 0.0
  %3605 = vmatpush1.msra.mxu0 0.0
  %3606 = vmatprep.subr.mxu0 0.0
  %3607 = vmatpush1.msra.mxu0 0.0
  %3608 = vmatprep.subr.mxu0 0.0
  %3609 = vmatpush1.msra.mxu0 0.0
  %3610 = vmatprep.subr.mxu0 0.0
  %3611 = vmatpush1.msra.mxu0 0.0
  %3612 = vmatprep.subr.mxu0 0.0
  %3613 = vmatpush1.msra.mxu0 0.0
  %3614 = vmatprep.subr.mxu0 0.0
  %3615 = vmatpush1.msra.mxu0 0.0
  %3616 = vmatprep.subr.mxu0 0.0
  %3617 = vmatpush1.msra.mxu0 0.0
  %3618 = vmatprep.subr.mxu0 0.0
  %3619 = vmatpush1.msra.mxu0 0.0
  %3620 = vmatprep.subr.mxu0 0.0
  %3621 = vmatpush1.msra.mxu0 0.0
  %3622 = vmatprep.subr.mxu0 0.0
  %3623 = vmatpush1.msra.mxu0 0.0
  %3624 = vmatprep.subr.mxu0 0.0
  %3625 = vmatpush1.msra.mxu0 0.0
  %3626 = vmatprep.subr.mxu0 0.0
  %3627 = vmatpush1.msra.mxu0 0.0
  %3628 = vmatprep.subr.mxu0 0.0
  %3629 = vmatpush1.msra.mxu0 0.0
  %3630 = vmatprep.subr.mxu0 0.0
  %3631 = vmatpush1.msra.mxu0 0.0
  %3632 = vmatprep.subr.mxu0 0.0
  %3633 = vmatpush1.msra.mxu0 0.0
  %3634 = vmatprep.subr.mxu0 0.0
  %3635 = vmatpush1.msra.mxu0 0.0
  %3636 = vmatprep.subr.mxu0 0.0
  %3637 = vmatpush1.msra.mxu0 0.0
  %3638 = vmatprep.subr.mxu0 0.0
  %3639 = vmatpush1.msra.mxu0 0.0
  %3640 = vmatprep.subr.mxu0 0.0
  %3641 = vmatpush1.msra.mxu0 0.0
  %3642 = vmatprep.subr.mxu0 0.0
  %3643 = vmatpush1.msra.mxu0 0.0
  %3644 = vmatprep.subr.mxu0 0.0
  %3645 = vmatpush1.msra.mxu0 0.0
  %3646 = vmatprep.subr.mxu0 0.0
  %3647 = vmatpush1.msra.mxu0 0.0
  %3648 = vmatprep.subr.mxu0 0.0
  %3649 = vmatpush1.msra.mxu0 0.0
  %3650 = vmatprep.subr.mxu0 0.0
  %3651 = vmatpush1.msra.mxu0 0.0
  %3652 = vmatprep.subr.mxu0 0.0
  %3653 = vmatpush1.msra.mxu0 0.0
  %3654 = vmatprep.subr.mxu0 0.0
  %3655 = vmatpush1.msra.mxu0 0.0
  %3656 = vmatprep.subr.mxu0 0.0
  %3657 = vmatpush1.msra.mxu0 0.0
  %3658 = vmatprep.subr.mxu0 0.0
  %3659 = vmatpush1.msra.mxu0 0.0
  %3660 = vmatprep.subr.mxu0 0.0
  %3661 = vmatpush1.msra.mxu0 0.0
  %3662 = vmatprep.subr.mxu0 0.0
  %3663 = vmatpush1.msra.mxu0 0.0
  %3664 = vmatprep.subr.mxu0 0.0
  %3665 = vmatpush1.msra.mxu0 0.0
  %3666 = vmatprep.mubr.f32.mxu0 0.0
  %3667 = vmatmul.mubr.f32.gmra.mrb[0].mxu0 %v3600
  %v3668 = vpop.f32.mrb[0].mxu0
  %v3669 = vadd.f32 0.0, %v3668
  %v3670 = vpop.f32.mrb[0].mxu0
  %3671 = vdwg.mxu0
  %s3672 = scalar_lea.vmem %s3, 32
  %v3673 = vld [vmem:[%s3672] sm:$0xff]
  %v3674 = vld [vmem:[%s3090 + $0x9] sm:$0x1]
  %v3675 = vld [vmem:[%s3090 + $0xd] sm:$0x1]
  %v3676 = vld [vmem:[%s3090 + $0x11] sm:$0x1]
  %s3677 = scalar_lea.vmem %s2, 416
  %v3678 = vld [vmem:[%s3677] sm:$0xff]
  %v3679 = vld [vmem:[%s3677 + $0x8] sm:$0xff]
  %v3680 = vld [vmem:[%s3677 + $0x10] sm:$0xff]
  %v3681 = vld [vmem:[%s3677 + $0x18] sm:$0xff]
  %v3682 = vlaneseq
  %v3683 = vshrl.u32 %v3682, 7
  %v3684 = vsub.s32 0, %v3683
  %v3685 = vrot.slane %v3674, %v3684
  %3686 = vmatprep.subr.mxu0 0.0
  %3687 = vmatpush1.msra.mxu0 %v3678
  %3688 = vmatprep.subr.mxu0 0.0
  %3689 = vmatpush1.msra.mxu0 %v3679
  %3690 = vmatprep.subr.mxu0 0.0
  %3691 = vmatpush1.msra.mxu0 %v3680
  %3692 = vmatprep.subr.mxu0 0.0
  %3693 = vmatpush1.msra.mxu0 %v3681
  %3694 = vmatprep.subr.mxu0 0.0
  %3695 = vmatpush1.msra.mxu0 0.0
  %3696 = vmatprep.subr.mxu0 0.0
  %3697 = vmatpush1.msra.mxu0 0.0
  %3698 = vmatprep.subr.mxu0 0.0
  %3699 = vmatpush1.msra.mxu0 0.0
  %3700 = vmatprep.subr.mxu0 0.0
  %3701 = vmatpush1.msra.mxu0 0.0
  %3702 = vmatprep.subr.mxu0 0.0
  %3703 = vmatpush1.msra.mxu0 0.0
  %3704 = vmatprep.subr.mxu0 0.0
  %3705 = vmatpush1.msra.mxu0 0.0
  %3706 = vmatprep.subr.mxu0 0.0
  %3707 = vmatpush1.msra.mxu0 0.0
  %3708 = vmatprep.subr.mxu0 0.0
  %3709 = vmatpush1.msra.mxu0 0.0
  %3710 = vmatprep.subr.mxu0 0.0
  %3711 = vmatpush1.msra.mxu0 0.0
  %3712 = vmatprep.subr.mxu0 0.0
  %3713 = vmatpush1.msra.mxu0 0.0
  %3714 = vmatprep.subr.mxu0 0.0
  %3715 = vmatpush1.msra.mxu0 0.0
  %3716 = vmatprep.subr.mxu0 0.0
  %3717 = vmatpush1.msra.mxu0 0.0
  %3718 = vmatprep.subr.mxu0 0.0
  %3719 = vmatpush1.msra.mxu0 0.0
  %3720 = vmatprep.subr.mxu0 0.0
  %3721 = vmatpush1.msra.mxu0 0.0
  %3722 = vmatprep.subr.mxu0 0.0
  %3723 = vmatpush1.msra.mxu0 0.0
  %3724 = vmatprep.subr.mxu0 0.0
  %3725 = vmatpush1.msra.mxu0 0.0
  %3726 = vmatprep.subr.mxu0 0.0
  %3727 = vmatpush1.msra.mxu0 0.0
  %3728 = vmatprep.subr.mxu0 0.0
  %3729 = vmatpush1.msra.mxu0 0.0
  %3730 = vmatprep.subr.mxu0 0.0
  %3731 = vmatpush1.msra.mxu0 0.0
  %3732 = vmatprep.subr.mxu0 0.0
  %3733 = vmatpush1.msra.mxu0 0.0
  %3734 = vmatprep.subr.mxu0 0.0
  %3735 = vmatpush1.msra.mxu0 0.0
  %3736 = vmatprep.subr.mxu0 0.0
  %3737 = vmatpush1.msra.mxu0 0.0
  %3738 = vmatprep.subr.mxu0 0.0
  %3739 = vmatpush1.msra.mxu0 0.0
  %3740 = vmatprep.subr.mxu0 0.0
  %3741 = vmatpush1.msra.mxu0 0.0
  %3742 = vmatprep.subr.mxu0 0.0
  %3743 = vmatpush1.msra.mxu0 0.0
  %3744 = vmatprep.subr.mxu0 0.0
  %3745 = vmatpush1.msra.mxu0 0.0
  %3746 = vmatprep.subr.mxu0 0.0
  %3747 = vmatpush1.msra.mxu0 0.0
  %3748 = vmatprep.subr.mxu0 0.0
  %3749 = vmatpush1.msra.mxu0 0.0
  %3750 = vmatprep.mubr.f32.mxu0 0.0
  %3751 = vmatmul.mubr.f32.gmra.mrb[0].mxu0 %v3104
  %v3752 = vpop.f32.mrb[0].mxu0
  %v3753 = vadd.f32 %v3685, %v3752
  %v3754 = vpop.f32.mrb[0].mxu0
  %3755 = vmatprep.mubr.f32.mxu0 0.0
  %3756 = vmatmul.mubr.f32.gmra.mrb[0].mxu0 %v3107
  %v3757 = vpop.f32.mrb[0].mxu0
  %v3758 = vadd.f32 %v3685, %v3757
  %v3759 = vpop.f32.mrb[0].mxu0
  %3760 = vdwg.mxu0
  %s3761 = scalar_lea.vmem %s2, 544
  %v3762 = vld [vmem:[%s3761] sm:$0xff]
  %v3763 = vld [vmem:[%s3761 + $0x8] sm:$0xff]
  %v3764 = vld [vmem:[%s3761 + $0x10] sm:$0xff]
  %v3765 = vld [vmem:[%s3761 + $0x18] sm:$0xff]
  %v3766 = vlaneseq
  %v3767 = vshrl.u32 %v3766, 7
  %v3768 = vsub.s32 0, %v3767
  %v3769 = vrot.slane %v3675, %v3768
  %3770 = vmatprep.subr.mxu0 0.0
  %3771 = vmatpush1.msra.mxu0 %v3762
  %3772 = vmatprep.subr.mxu0 0.0
  %3773 = vmatpush1.msra.mxu0 %v3763
  %3774 = vmatprep.subr.mxu0 0.0
  %3775 = vmatpush1.msra.mxu0 %v3764
  %3776 = vmatprep.subr.mxu0 0.0
  %3777 = vmatpush1.msra.mxu0 %v3765
  %3778 = vmatprep.subr.mxu0 0.0
  %3779 = vmatpush1.msra.mxu0 0.0
  %3780 = vmatprep.subr.mxu0 0.0
  %3781 = vmatpush1.msra.mxu0 0.0
  %3782 = vmatprep.subr.mxu0 0.0
  %3783 = vmatpush1.msra.mxu0 0.0
  %3784 = vmatprep.subr.mxu0 0.0
  %3785 = vmatpush1.msra.mxu0 0.0
  %3786 = vmatprep.subr.mxu0 0.0
  %3787 = vmatpush1.msra.mxu0 0.0
  %3788 = vmatprep.subr.mxu0 0.0
  %3789 = vmatpush1.msra.mxu0 0.0
  %3790 = vmatprep.subr.mxu0 0.0
  %3791 = vmatpush1.msra.mxu0 0.0
  %3792 = vmatprep.subr.mxu0 0.0
  %3793 = vmatpush1.msra.mxu0 0.0
  %3794 = vmatprep.subr.mxu0 0.0
  %3795 = vmatpush1.msra.mxu0 0.0
  %3796 = vmatprep.subr.mxu0 0.0
  %3797 = vmatpush1.msra.mxu0 0.0
  %3798 = vmatprep.subr.mxu0 0.0
  %3799 = vmatpush1.msra.mxu0 0.0
  %3800 = vmatprep.subr.mxu0 0.0
  %3801 = vmatpush1.msra.mxu0 0.0
  %3802 = vmatprep.subr.mxu0 0.0
  %3803 = vmatpush1.msra.mxu0 0.0
  %3804 = vmatprep.subr.mxu0 0.0
  %3805 = vmatpush1.msra.mxu0 0.0
  %3806 = vmatprep.subr.mxu0 0.0
  %3807 = vmatpush1.msra.mxu0 0.0
  %3808 = vmatprep.subr.mxu0 0.0
  %3809 = vmatpush1.msra.mxu0 0.0
  %3810 = vmatprep.subr.mxu0 0.0
  %3811 = vmatpush1.msra.mxu0 0.0
  %3812 = vmatprep.subr.mxu0 0.0
  %3813 = vmatpush1.msra.mxu0 0.0
  %3814 = vmatprep.subr.mxu0 0.0
  %3815 = vmatpush1.msra.mxu0 0.0
  %3816 = vmatprep.subr.mxu0 0.0
  %3817 = vmatpush1.msra.mxu0 0.0
  %3818 = vmatprep.subr.mxu0 0.0
  %3819 = vmatpush1.msra.mxu0 0.0
  %3820 = vmatprep.subr.mxu0 0.0
  %3821 = vmatpush1.msra.mxu0 0.0
  %3822 = vmatprep.subr.mxu0 0.0
  %3823 = vmatpush1.msra.mxu0 0.0
  %3824 = vmatprep.subr.mxu0 0.0
  %3825 = vmatpush1.msra.mxu0 0.0
  %3826 = vmatprep.subr.mxu0 0.0
  %3827 = vmatpush1.msra.mxu0 0.0
  %3828 = vmatprep.subr.mxu0 0.0
  %3829 = vmatpush1.msra.mxu0 0.0
  %3830 = vmatprep.subr.mxu0 0.0
  %3831 = vmatpush1.msra.mxu0 0.0
  %3832 = vmatprep.subr.mxu0 0.0
  %3833 = vmatpush1.msra.mxu0 0.0
  %3834 = vmatprep.mubr.f32.mxu0 0.0
  %3835 = vmatmul.mubr.f32.gmra.mrb[0].mxu0 %v3104
  %v3836 = vpop.f32.mrb[0].mxu0
  %v3837 = vadd.f32 %v3769, %v3836
  %v3838 = vpop.f32.mrb[0].mxu0
  %3839 = vmatprep.mubr.f32.mxu0 0.0
  %3840 = vmatmul.mubr.f32.gmra.mrb[0].mxu0 %v3107
  %v3841 = vpop.f32.mrb[0].mxu0
  %v3842 = vadd.f32 %v3769, %v3841
  %v3843 = vpop.f32.mrb[0].mxu0
  %3844 = vdwg.mxu0
  %s3845 = scalar_lea.vmem %s2, 672
  %v3846 = vld [vmem:[%s3845] sm:$0xff]
  %v3847 = vld [vmem:[%s3845 + $0x8] sm:$0xff]
  %v3848 = vld [vmem:[%s3845 + $0x10] sm:$0xff]
  %v3849 = vld [vmem:[%s3845 + $0x18] sm:$0xff]
  %v3850 = vlaneseq
  %v3851 = vshrl.u32 %v3850, 7
  %v3852 = vsub.s32 0, %v3851
  %v3853 = vrot.slane %v3676, %v3852
  %3854 = vmatprep.subr.mxu0 0.0
  %3855 = vmatpush1.msra.mxu0 %v3846
  %3856 = vmatprep.subr.mxu0 0.0
  %3857 = vmatpush1.msra.mxu0 %v3847
  %3858 = vmatprep.subr.mxu0 0.0
  %3859 = vmatpush1.msra.mxu0 %v3848
  %3860 = vmatprep.subr.mxu0 0.0
  %3861 = vmatpush1.msra.mxu0 %v3849
  %3862 = vmatprep.subr.mxu0 0.0
  %3863 = vmatpush1.msra.mxu0 0.0
  %3864 = vmatprep.subr.mxu0 0.0
  %3865 = vmatpush1.msra.mxu0 0.0
  %3866 = vmatprep.subr.mxu0 0.0
  %3867 = vmatpush1.msra.mxu0 0.0
  %3868 = vmatprep.subr.mxu0 0.0
  %3869 = vmatpush1.msra.mxu0 0.0
  %3870 = vmatprep.subr.mxu0 0.0
  %3871 = vmatpush1.msra.mxu0 0.0
  %3872 = vmatprep.subr.mxu0 0.0
  %3873 = vmatpush1.msra.mxu0 0.0
  %3874 = vmatprep.subr.mxu0 0.0
  %3875 = vmatpush1.msra.mxu0 0.0
  %3876 = vmatprep.subr.mxu0 0.0
  %3877 = vmatpush1.msra.mxu0 0.0
  %3878 = vmatprep.subr.mxu0 0.0
  %3879 = vmatpush1.msra.mxu0 0.0
  %3880 = vmatprep.subr.mxu0 0.0
  %3881 = vmatpush1.msra.mxu0 0.0
  %3882 = vmatprep.subr.mxu0 0.0
  %3883 = vmatpush1.msra.mxu0 0.0
  %3884 = vmatprep.subr.mxu0 0.0
  %3885 = vmatpush1.msra.mxu0 0.0
  %3886 = vmatprep.subr.mxu0 0.0
  %3887 = vmatpush1.msra.mxu0 0.0
  %3888 = vmatprep.subr.mxu0 0.0
  %3889 = vmatpush1.msra.mxu0 0.0
  %3890 = vmatprep.subr.mxu0 0.0
  %3891 = vmatpush1.msra.mxu0 0.0
  %3892 = vmatprep.subr.mxu0 0.0
  %3893 = vmatpush1.msra.mxu0 0.0
  %3894 = vmatprep.subr.mxu0 0.0
  %3895 = vmatpush1.msra.mxu0 0.0
  %3896 = vmatprep.subr.mxu0 0.0
  %3897 = vmatpush1.msra.mxu0 0.0
  %3898 = vmatprep.subr.mxu0 0.0
  %3899 = vmatpush1.msra.mxu0 0.0
  %3900 = vmatprep.subr.mxu0 0.0
  %3901 = vmatpush1.msra.mxu0 0.0
  %3902 = vmatprep.subr.mxu0 0.0
  %3903 = vmatpush1.msra.mxu0 0.0
  %3904 = vmatprep.subr.mxu0 0.0
  %3905 = vmatpush1.msra.mxu0 0.0
  %3906 = vmatprep.subr.mxu0 0.0
  %3907 = vmatpush1.msra.mxu0 0.0
  %3908 = vmatprep.subr.mxu0 0.0
  %3909 = vmatpush1.msra.mxu0 0.0
  %3910 = vmatprep.subr.mxu0 0.0
  %3911 = vmatpush1.msra.mxu0 0.0
  %3912 = vmatprep.subr.mxu0 0.0
  %3913 = vmatpush1.msra.mxu0 0.0
  %3914 = vmatprep.subr.mxu0 0.0
  %3915 = vmatpush1.msra.mxu0 0.0
  %3916 = vmatprep.subr.mxu0 0.0
  %3917 = vmatpush1.msra.mxu0 0.0
  %3918 = vmatprep.mubr.f32.mxu0 0.0
  %3919 = vmatmul.mubr.f32.gmra.mrb[0].mxu0 %v3104
  %v3920 = vpop.f32.mrb[0].mxu0
  %v3921 = vadd.f32 %v3853, %v3920
  %v3922 = vpop.f32.mrb[0].mxu0
  %3923 = vmatprep.mubr.f32.mxu0 0.0
  %3924 = vmatmul.mubr.f32.gmra.mrb[0].mxu0 %v3107
  %v3925 = vpop.f32.mrb[0].mxu0
  %v3926 = vadd.f32 %v3853, %v3925
  %v3927 = vpop.f32.mrb[0].mxu0
  %3928 = vdwg.mxu0
  %v3930 = vsel %vm431, %v3753, 0
  %v3933 = vsel %vm431, %v3837, 0
  %3935 = vmatprep.subr.mxu0 0.0
  %3936 = vmatpush1.xpose.msra.mxu0 %v3933
  %3937 = vmatprep.subr.mxu0 0.0
  %3938 = vmatpush1.xpose.msra.mxu0 0.0
  %3939 = vmatprep.subr.mxu0 0.0
  %3940 = vmatpush1.xpose.msra.mxu0 0.0
  %3941 = vmatprep.subr.mxu0 0.0
  %3942 = vmatpush1.xpose.msra.mxu0 0.0
  %3943 = vmatprep.subr.mxu0 0.0
  %3944 = vmatpush1.xpose.msra.mxu0 0.0
  %3945 = vmatprep.subr.mxu0 0.0
  %3946 = vmatpush1.xpose.msra.mxu0 0.0
  %3947 = vmatprep.subr.mxu0 0.0
  %3948 = vmatpush1.xpose.msra.mxu0 0.0
  %3949 = vmatprep.subr.mxu0 0.0
  %3950 = vmatpush1.xpose.msra.mxu0 0.0
  %3951 = vmatprep.subr.mxu0 0.0
  %3952 = vmatpush1.xpose.msra.mxu0 0.0
  %3953 = vmatprep.subr.mxu0 0.0
  %3954 = vmatpush1.xpose.msra.mxu0 0.0
  %3955 = vmatprep.subr.mxu0 0.0
  %3956 = vmatpush1.xpose.msra.mxu0 0.0
  %3957 = vmatprep.subr.mxu0 0.0
  %3958 = vmatpush1.xpose.msra.mxu0 0.0
  %3959 = vmatprep.subr.mxu0 0.0
  %3960 = vmatpush1.xpose.msra.mxu0 0.0
  %3961 = vmatprep.subr.mxu0 0.0
  %3962 = vmatpush1.xpose.msra.mxu0 0.0
  %3963 = vmatprep.subr.mxu0 0.0
  %3964 = vmatpush1.xpose.msra.mxu0 0.0
  %3965 = vmatprep.subr.mxu0 0.0
  %3966 = vmatpush1.xpose.msra.mxu0 0.0
  %3967 = vmatprep.subr.mxu0 0.0
  %3968 = vmatpush1.xpose.msra.mxu0 0.0
  %3969 = vmatprep.subr.mxu0 0.0
  %3970 = vmatpush1.xpose.msra.mxu0 0.0
  %3971 = vmatprep.subr.mxu0 0.0
  %3972 = vmatpush1.xpose.msra.mxu0 0.0
  %3973 = vmatprep.subr.mxu0 0.0
  %3974 = vmatpush1.xpose.msra.mxu0 0.0
  %3975 = vmatprep.subr.mxu0 0.0
  %3976 = vmatpush1.xpose.msra.mxu0 0.0
  %3977 = vmatprep.subr.mxu0 0.0
  %3978 = vmatpush1.xpose.msra.mxu0 0.0
  %3979 = vmatprep.subr.mxu0 0.0
  %3980 = vmatpush1.xpose.msra.mxu0 0.0
  %3981 = vmatprep.subr.mxu0 0.0
  %3982 = vmatpush1.xpose.msra.mxu0 0.0
  %3983 = vmatprep.subr.mxu0 0.0
  %3984 = vmatpush1.xpose.msra.mxu0 0.0
  %3985 = vmatprep.subr.mxu0 0.0
  %3986 = vmatpush1.xpose.msra.mxu0 0.0
  %3987 = vmatprep.subr.mxu0 0.0
  %3988 = vmatpush1.xpose.msra.mxu0 0.0
  %3989 = vmatprep.subr.mxu0 0.0
  %3990 = vmatpush1.xpose.msra.mxu0 0.0
  %3991 = vmatprep.subr.mxu0 0.0
  %3992 = vmatpush1.xpose.msra.mxu0 0.0
  %3993 = vmatprep.subr.mxu0 0.0
  %3994 = vmatpush1.xpose.msra.mxu0 0.0
  %3995 = vmatprep.subr.mxu0 0.0
  %3996 = vmatpush1.xpose.msra.mxu0 0.0
  %3997 = vmatprep.subr.mxu0 0.0
  %3998 = vmatpush1.xpose.msra.mxu0 0.0
  %3999 = vmatprep.mubr.f32.mxu0 0.0
  %4000 = vmatmul.mubr.f32.gmra.mrb[0].mxu0 %v3930
  %v4001 = vpop.f32.mrb[0].mxu0
  %v4002 = vadd.f32 0.0, %v4001
  %v4003 = vpop.f32.mrb[0].mxu0
  %4004 = vdwg.mxu0
  %v4006 = vsel %vm431, %v3758, 0
  %v4009 = vsel %vm431, %v3842, 0
  %4011 = vmatprep.subr.mxu0 0.0
  %4012 = vmatpush1.xpose.msra.mxu0 %v4009
  %4013 = vmatprep.subr.mxu0 0.0
  %4014 = vmatpush1.xpose.msra.mxu0 0.0
  %4015 = vmatprep.subr.mxu0 0.0
  %4016 = vmatpush1.xpose.msra.mxu0 0.0
  %4017 = vmatprep.subr.mxu0 0.0
  %4018 = vmatpush1.xpose.msra.mxu0 0.0
  %4019 = vmatprep.subr.mxu0 0.0
  %4020 = vmatpush1.xpose.msra.mxu0 0.0
  %4021 = vmatprep.subr.mxu0 0.0
  %4022 = vmatpush1.xpose.msra.mxu0 0.0
  %4023 = vmatprep.subr.mxu0 0.0
  %4024 = vmatpush1.xpose.msra.mxu0 0.0
  %4025 = vmatprep.subr.mxu0 0.0
  %4026 = vmatpush1.xpose.msra.mxu0 0.0
  %4027 = vmatprep.subr.mxu0 0.0
  %4028 = vmatpush1.xpose.msra.mxu0 0.0
  %4029 = vmatprep.subr.mxu0 0.0
  %4030 = vmatpush1.xpose.msra.mxu0 0.0
  %4031 = vmatprep.subr.mxu0 0.0
  %4032 = vmatpush1.xpose.msra.mxu0 0.0
  %4033 = vmatprep.subr.mxu0 0.0
  %4034 = vmatpush1.xpose.msra.mxu0 0.0
  %4035 = vmatprep.subr.mxu0 0.0
  %4036 = vmatpush1.xpose.msra.mxu0 0.0
  %4037 = vmatprep.subr.mxu0 0.0
  %4038 = vmatpush1.xpose.msra.mxu0 0.0
  %4039 = vmatprep.subr.mxu0 0.0
  %4040 = vmatpush1.xpose.msra.mxu0 0.0
  %4041 = vmatprep.subr.mxu0 0.0
  %4042 = vmatpush1.xpose.msra.mxu0 0.0
  %4043 = vmatprep.subr.mxu0 0.0
  %4044 = vmatpush1.xpose.msra.mxu0 0.0
  %4045 = vmatprep.subr.mxu0 0.0
  %4046 = vmatpush1.xpose.msra.mxu0 0.0
  %4047 = vmatprep.subr.mxu0 0.0
  %4048 = vmatpush1.xpose.msra.mxu0 0.0
  %4049 = vmatprep.subr.mxu0 0.0
  %4050 = vmatpush1.xpose.msra.mxu0 0.0
  %4051 = vmatprep.subr.mxu0 0.0
  %4052 = vmatpush1.xpose.msra.mxu0 0.0
  %4053 = vmatprep.subr.mxu0 0.0
  %4054 = vmatpush1.xpose.msra.mxu0 0.0
  %4055 = vmatprep.subr.mxu0 0.0
  %4056 = vmatpush1.xpose.msra.mxu0 0.0
  %4057 = vmatprep.subr.mxu0 0.0
  %4058 = vmatpush1.xpose.msra.mxu0 0.0
  %4059 = vmatprep.subr.mxu0 0.0
  %4060 = vmatpush1.xpose.msra.mxu0 0.0
  %4061 = vmatprep.subr.mxu0 0.0
  %4062 = vmatpush1.xpose.msra.mxu0 0.0
  %4063 = vmatprep.subr.mxu0 0.0
  %4064 = vmatpush1.xpose.msra.mxu0 0.0
  %4065 = vmatprep.subr.mxu0 0.0
  %4066 = vmatpush1.xpose.msra.mxu0 0.0
  %4067 = vmatprep.subr.mxu0 0.0
  %4068 = vmatpush1.xpose.msra.mxu0 0.0
  %4069 = vmatprep.subr.mxu0 0.0
  %4070 = vmatpush1.xpose.msra.mxu0 0.0
  %4071 = vmatprep.subr.mxu0 0.0
  %4072 = vmatpush1.xpose.msra.mxu0 0.0
  %4073 = vmatprep.subr.mxu0 0.0
  %4074 = vmatpush1.xpose.msra.mxu0 0.0
  %4075 = vmatprep.mubr.f32.mxu0 0.0
  %4076 = vmatmul.mubr.f32.gmra.mrb[0].mxu0 %v4006
  %v4077 = vpop.f32.mrb[0].mxu0
  %v4078 = vadd.f32 0.0, %v4077
  %v4079 = vpop.f32.mrb[0].mxu0
  %4080 = vdwg.mxu0
  %v4081 = vsel %vm431, %v4002, -inf
  %4082 = vmax.xlane.f32.xlu0 %v4081
  %v4083 = vpop.xlane.xlu0 %4082
  %v4084 = vsel %vm431, %v4078, -inf
  %4085 = vmax.xlane.f32.xlu0 %v4084
  %v4086 = vpop.xlane.xlu0 %4085
  %v4087 = vsub.f32 %v4002, %v4083
  %v4088 = vsub.f32 %v4078, %v4086
  %v4089 = vmul.f32 %v4087, 1.442695
  %v4090 = vpow.pop %v4089
  %v4091 = vmul.f32 %v4088, 1.442695
  %v4092 = vpow.pop %v4091
  %v4093 = vsel %vm431, %v4090, 0.0
  %4094 = vadd.xlane.f32.xlu0 %v4093
  %v4095 = vpop.xlane.xlu0 %4094
  %v4096 = vsel %vm431, %v4092, 0.0
  %4097 = vadd.xlane.f32.xlu0 %v4096
  %v4098 = vpop.xlane.xlu0 %4097
  %v4099 = vrcp.pop %v4095
  %v4100 = vrcp.pop %v4098
  %v4101 = vmul.f32 %v4090, %v4099
  %v4102 = vmul.f32 %v4092, %v4100
  %v4104 = vsel %vm431, %v4101, 0
  %4106 = vmatprep.subr.mxu0 0.0
  %4107 = vmatpush1.msra.mxu0 %v3921
  %4108 = vmatprep.subr.mxu0 0.0
  %4109 = vmatpush1.msra.mxu0 0.0
  %4110 = vmatprep.subr.mxu0 0.0
  %4111 = vmatpush1.msra.mxu0 0.0
  %4112 = vmatprep.subr.mxu0 0.0
  %4113 = vmatpush1.msra.mxu0 0.0
  %4114 = vmatprep.subr.mxu0 0.0
  %4115 = vmatpush1.msra.mxu0 0.0
  %4116 = vmatprep.subr.mxu0 0.0
  %4117 = vmatpush1.msra.mxu0 0.0
  %4118 = vmatprep.subr.mxu0 0.0
  %4119 = vmatpush1.msra.mxu0 0.0
  %4120 = vmatprep.subr.mxu0 0.0
  %4121 = vmatpush1.msra.mxu0 0.0
  %4122 = vmatprep.subr.mxu0 0.0
  %4123 = vmatpush1.msra.mxu0 0.0
  %4124 = vmatprep.subr.mxu0 0.0
  %4125 = vmatpush1.msra.mxu0 0.0
  %4126 = vmatprep.subr.mxu0 0.0
  %4127 = vmatpush1.msra.mxu0 0.0
  %4128 = vmatprep.subr.mxu0 0.0
  %4129 = vmatpush1.msra.mxu0 0.0
  %4130 = vmatprep.subr.mxu0 0.0
  %4131 = vmatpush1.msra.mxu0 0.0
  %4132 = vmatprep.subr.mxu0 0.0
  %4133 = vmatpush1.msra.mxu0 0.0
  %4134 = vmatprep.subr.mxu0 0.0
  %4135 = vmatpush1.msra.mxu0 0.0
  %4136 = vmatprep.subr.mxu0 0.0
  %4137 = vmatpush1.msra.mxu0 0.0
  %4138 = vmatprep.subr.mxu0 0.0
  %4139 = vmatpush1.msra.mxu0 0.0
  %4140 = vmatprep.subr.mxu0 0.0
  %4141 = vmatpush1.msra.mxu0 0.0
  %4142 = vmatprep.subr.mxu0 0.0
  %4143 = vmatpush1.msra.mxu0 0.0
  %4144 = vmatprep.subr.mxu0 0.0
  %4145 = vmatpush1.msra.mxu0 0.0
  %4146 = vmatprep.subr.mxu0 0.0
  %4147 = vmatpush1.msra.mxu0 0.0
  %4148 = vmatprep.subr.mxu0 0.0
  %4149 = vmatpush1.msra.mxu0 0.0
  %4150 = vmatprep.subr.mxu0 0.0
  %4151 = vmatpush1.msra.mxu0 0.0
  %4152 = vmatprep.subr.mxu0 0.0
  %4153 = vmatpush1.msra.mxu0 0.0
  %4154 = vmatprep.subr.mxu0 0.0
  %4155 = vmatpush1.msra.mxu0 0.0
  %4156 = vmatprep.subr.mxu0 0.0
  %4157 = vmatpush1.msra.mxu0 0.0
  %4158 = vmatprep.subr.mxu0 0.0
  %4159 = vmatpush1.msra.mxu0 0.0
  %4160 = vmatprep.subr.mxu0 0.0
  %4161 = vmatpush1.msra.mxu0 0.0
  %4162 = vmatprep.subr.mxu0 0.0
  %4163 = vmatpush1.msra.mxu0 0.0
  %4164 = vmatprep.subr.mxu0 0.0
  %4165 = vmatpush1.msra.mxu0 0.0
  %4166 = vmatprep.subr.mxu0 0.0
  %4167 = vmatpush1.msra.mxu0 0.0
  %4168 = vmatprep.subr.mxu0 0.0
  %4169 = vmatpush1.msra.mxu0 0.0
  %4170 = vmatprep.mubr.f32.mxu0 0.0
  %4171 = vmatmul.mubr.f32.gmra.mrb[0].mxu0 %v4104
  %v4172 = vpop.f32.mrb[0].mxu0
  %v4173 = vadd.f32 0.0, %v4172
  %v4174 = vpop.f32.mrb[0].mxu0
  %4175 = vdwg.mxu0
  %v4177 = vsel %vm431, %v4102, 0
  %4179 = vmatprep.subr.mxu0 0.0
  %4180 = vmatpush1.msra.mxu0 %v3926
  %4181 = vmatprep.subr.mxu0 0.0
  %4182 = vmatpush1.msra.mxu0 0.0
  %4183 = vmatprep.subr.mxu0 0.0
  %4184 = vmatpush1.msra.mxu0 0.0
  %4185 = vmatprep.subr.mxu0 0.0
  %4186 = vmatpush1.msra.mxu0 0.0
  %4187 = vmatprep.subr.mxu0 0.0
  %4188 = vmatpush1.msra.mxu0 0.0
  %4189 = vmatprep.subr.mxu0 0.0
  %4190 = vmatpush1.msra.mxu0 0.0
  %4191 = vmatprep.subr.mxu0 0.0
  %4192 = vmatpush1.msra.mxu0 0.0
  %4193 = vmatprep.subr.mxu0 0.0
  %4194 = vmatpush1.msra.mxu0 0.0
  %4195 = vmatprep.subr.mxu0 0.0
  %4196 = vmatpush1.msra.mxu0 0.0
  %4197 = vmatprep.subr.mxu0 0.0
  %4198 = vmatpush1.msra.mxu0 0.0
  %4199 = vmatprep.subr.mxu0 0.0
  %4200 = vmatpush1.msra.mxu0 0.0
  %4201 = vmatprep.subr.mxu0 0.0
  %4202 = vmatpush1.msra.mxu0 0.0
  %4203 = vmatprep.subr.mxu0 0.0
  %4204 = vmatpush1.msra.mxu0 0.0
  %4205 = vmatprep.subr.mxu0 0.0
  %4206 = vmatpush1.msra.mxu0 0.0
  %4207 = vmatprep.subr.mxu0 0.0
  %4208 = vmatpush1.msra.mxu0 0.0
  %4209 = vmatprep.subr.mxu0 0.0
  %4210 = vmatpush1.msra.mxu0 0.0
  %4211 = vmatprep.subr.mxu0 0.0
  %4212 = vmatpush1.msra.mxu0 0.0
  %4213 = vmatprep.subr.mxu0 0.0
  %4214 = vmatpush1.msra.mxu0 0.0
  %4215 = vmatprep.subr.mxu0 0.0
  %4216 = vmatpush1.msra.mxu0 0.0
  %4217 = vmatprep.subr.mxu0 0.0
  %4218 = vmatpush1.msra.mxu0 0.0
  %4219 = vmatprep.subr.mxu0 0.0
  %4220 = vmatpush1.msra.mxu0 0.0
  %4221 = vmatprep.subr.mxu0 0.0
  %4222 = vmatpush1.msra.mxu0 0.0
  %4223 = vmatprep.subr.mxu0 0.0
  %4224 = vmatpush1.msra.mxu0 0.0
  %4225 = vmatprep.subr.mxu0 0.0
  %4226 = vmatpush1.msra.mxu0 0.0
  %4227 = vmatprep.subr.mxu0 0.0
  %4228 = vmatpush1.msra.mxu0 0.0
  %4229 = vmatprep.subr.mxu0 0.0
  %4230 = vmatpush1.msra.mxu0 0.0
  %4231 = vmatprep.subr.mxu0 0.0
  %4232 = vmatpush1.msra.mxu0 0.0
  %4233 = vmatprep.subr.mxu0 0.0
  %4234 = vmatpush1.msra.mxu0 0.0
  %4235 = vmatprep.subr.mxu0 0.0
  %4236 = vmatpush1.msra.mxu0 0.0
  %4237 = vmatprep.subr.mxu0 0.0
  %4238 = vmatpush1.msra.mxu0 0.0
  %4239 = vmatprep.subr.mxu0 0.0
  %4240 = vmatpush1.msra.mxu0 0.0
  %4241 = vmatprep.subr.mxu0 0.0
  %4242 = vmatpush1.msra.mxu0 0.0
  %4243 = vmatprep.mubr.f32.mxu0 0.0
  %4244 = vmatmul.mubr.f32.gmra.mrb[0].mxu0 %v4177
  %v4245 = vpop.f32.mrb[0].mxu0
  %v4246 = vadd.f32 0.0, %v4245
  %v4247 = vpop.f32.mrb[0].mxu0
  %4248 = vdwg.mxu0
  %s4249 = scalar_lea.vmem %s3, 40
  %v4250 = vld [vmem:[%s4249] sm:$0xff]
  %v4252 = vsel %vm431, %v4173, 0
  %v4255 = vsel %vm431, %v4246, 0
  %4257 = vmatprep.subr.mxu0 0.0
  %4258 = vmatpush1.msra.mxu0 %v4250
  %4259 = vmatprep.subr.mxu0 0.0
  %4260 = vmatpush1.msra.mxu0 0.0
  %4261 = vmatprep.subr.mxu0 0.0
  %4262 = vmatpush1.msra.mxu0 0.0
  %4263 = vmatprep.subr.mxu0 0.0
  %4264 = vmatpush1.msra.mxu0 0.0
  %4265 = vmatprep.subr.mxu0 0.0
  %4266 = vmatpush1.msra.mxu0 0.0
  %4267 = vmatprep.subr.mxu0 0.0
  %4268 = vmatpush1.msra.mxu0 0.0
  %4269 = vmatprep.subr.mxu0 0.0
  %4270 = vmatpush1.msra.mxu0 0.0
  %4271 = vmatprep.subr.mxu0 0.0
  %4272 = vmatpush1.msra.mxu0 0.0
  %4273 = vmatprep.subr.mxu0 0.0
  %4274 = vmatpush1.msra.mxu0 0.0
  %4275 = vmatprep.subr.mxu0 0.0
  %4276 = vmatpush1.msra.mxu0 0.0
  %4277 = vmatprep.subr.mxu0 0.0
  %4278 = vmatpush1.msra.mxu0 0.0
  %4279 = vmatprep.subr.mxu0 0.0
  %4280 = vmatpush1.msra.mxu0 0.0
  %4281 = vmatprep.subr.mxu0 0.0
  %4282 = vmatpush1.msra.mxu0 0.0
  %4283 = vmatprep.subr.mxu0 0.0
  %4284 = vmatpush1.msra.mxu0 0.0
  %4285 = vmatprep.subr.mxu0 0.0
  %4286 = vmatpush1.msra.mxu0 0.0
  %4287 = vmatprep.subr.mxu0 0.0
  %4288 = vmatpush1.msra.mxu0 0.0
  %4289 = vmatprep.subr.mxu0 0.0
  %4290 = vmatpush1.msra.mxu0 0.0
  %4291 = vmatprep.subr.mxu0 0.0
  %4292 = vmatpush1.msra.mxu0 0.0
  %4293 = vmatprep.subr.mxu0 0.0
  %4294 = vmatpush1.msra.mxu0 0.0
  %4295 = vmatprep.subr.mxu0 0.0
  %4296 = vmatpush1.msra.mxu0 0.0
  %4297 = vmatprep.subr.mxu0 0.0
  %4298 = vmatpush1.msra.mxu0 0.0
  %4299 = vmatprep.subr.mxu0 0.0
  %4300 = vmatpush1.msra.mxu0 0.0
  %4301 = vmatprep.subr.mxu0 0.0
  %4302 = vmatpush1.msra.mxu0 0.0
  %4303 = vmatprep.subr.mxu0 0.0
  %4304 = vmatpush1.msra.mxu0 0.0
  %4305 = vmatprep.subr.mxu0 0.0
  %4306 = vmatpush1.msra.mxu0 0.0
  %4307 = vmatprep.subr.mxu0 0.0
  %4308 = vmatpush1.msra.mxu0 0.0
  %4309 = vmatprep.subr.mxu0 0.0
  %4310 = vmatpush1.msra.mxu0 0.0
  %4311 = vmatprep.subr.mxu0 0.0
  %4312 = vmatpush1.msra.mxu0 0.0
  %4313 = vmatprep.subr.mxu0 0.0
  %4314 = vmatpush1.msra.mxu0 0.0
  %4315 = vmatprep.subr.mxu0 0.0
  %4316 = vmatpush1.msra.mxu0 0.0
  %4317 = vmatprep.subr.mxu0 0.0
  %4318 = vmatpush1.msra.mxu0 0.0
  %4319 = vmatprep.subr.mxu0 0.0
  %4320 = vmatpush1.msra.mxu0 0.0
  %4321 = vmatprep.mubr.f32.mxu0 0.0
  %4322 = vmatmul.mubr.f32.gmra.mrb[0].mxu0 %v4252
  %v4323 = vpop.f32.mrb[0].mxu0
  %v4324 = vadd.f32 0.0, %v4323
  %v4325 = vpop.f32.mrb[0].mxu0
  %4326 = vmatprep.mubr.f32.mxu0 0.0
  %4327 = vmatmul.mubr.f32.gmra.mrb[0].mxu0 %v4255
  %v4328 = vpop.f32.mrb[0].mxu0
  %v4329 = vadd.f32 0.0, %v4328
  %v4330 = vpop.f32.mrb[0].mxu0
  %4331 = vdwg.mxu0
  %v4333 = vsel %vm431, %v3596, 0
  %v4336 = vsel %vm431, %v3669, 0
  %4338 = vmatprep.subr.mxu0 0.0
  %4339 = vmatpush1.msra.mxu0 %v3673
  %4340 = vmatprep.subr.mxu0 0.0
  %4341 = vmatpush1.msra.mxu0 0.0
  %4342 = vmatprep.subr.mxu0 0.0
  %4343 = vmatpush1.msra.mxu0 0.0
  %4344 = vmatprep.subr.mxu0 0.0
  %4345 = vmatpush1.msra.mxu0 0.0
  %4346 = vmatprep.subr.mxu0 0.0
  %4347 = vmatpush1.msra.mxu0 0.0
  %4348 = vmatprep.subr.mxu0 0.0
  %4349 = vmatpush1.msra.mxu0 0.0
  %4350 = vmatprep.subr.mxu0 0.0
  %4351 = vmatpush1.msra.mxu0 0.0
  %4352 = vmatprep.subr.mxu0 0.0
  %4353 = vmatpush1.msra.mxu0 0.0
  %4354 = vmatprep.subr.mxu0 0.0
  %4355 = vmatpush1.msra.mxu0 0.0
  %4356 = vmatprep.subr.mxu0 0.0
  %4357 = vmatpush1.msra.mxu0 0.0
  %4358 = vmatprep.subr.mxu0 0.0
  %4359 = vmatpush1.msra.mxu0 0.0
  %4360 = vmatprep.subr.mxu0 0.0
  %4361 = vmatpush1.msra.mxu0 0.0
  %4362 = vmatprep.subr.mxu0 0.0
  %4363 = vmatpush1.msra.mxu0 0.0
  %4364 = vmatprep.subr.mxu0 0.0
  %4365 = vmatpush1.msra.mxu0 0.0
  %4366 = vmatprep.subr.mxu0 0.0
  %4367 = vmatpush1.msra.mxu0 0.0
  %4368 = vmatprep.subr.mxu0 0.0
  %4369 = vmatpush1.msra.mxu0 0.0
  %4370 = vmatprep.subr.mxu0 0.0
  %4371 = vmatpush1.msra.mxu0 0.0
  %4372 = vmatprep.subr.mxu0 0.0
  %4373 = vmatpush1.msra.mxu0 0.0
  %4374 = vmatprep.subr.mxu0 0.0
  %4375 = vmatpush1.msra.mxu0 0.0
  %4376 = vmatprep.subr.mxu0 0.0
  %4377 = vmatpush1.msra.mxu0 0.0
  %4378 = vmatprep.subr.mxu0 0.0
  %4379 = vmatpush1.msra.mxu0 0.0
  %4380 = vmatprep.subr.mxu0 0.0
  %4381 = vmatpush1.msra.mxu0 0.0
  %4382 = vmatprep.subr.mxu0 0.0
  %4383 = vmatpush1.msra.mxu0 0.0
  %4384 = vmatprep.subr.mxu0 0.0
  %4385 = vmatpush1.msra.mxu0 0.0
  %4386 = vmatprep.subr.mxu0 0.0
  %4387 = vmatpush1.msra.mxu0 0.0
  %4388 = vmatprep.subr.mxu0 0.0
  %4389 = vmatpush1.msra.mxu0 0.0
  %4390 = vmatprep.subr.mxu0 0.0
  %4391 = vmatpush1.msra.mxu0 0.0
  %4392 = vmatprep.subr.mxu0 0.0
  %4393 = vmatpush1.msra.mxu0 0.0
  %4394 = vmatprep.subr.mxu0 0.0
  %4395 = vmatpush1.msra.mxu0 0.0
  %4396 = vmatprep.subr.mxu0 0.0
  %4397 = vmatpush1.msra.mxu0 0.0
  %4398 = vmatprep.subr.mxu0 0.0
  %4399 = vmatpush1.msra.mxu0 0.0
  %4400 = vmatprep.subr.mxu0 0.0
  %4401 = vmatpush1.msra.mxu0 0.0
  %4402 = vmatprep.mubr.f32.mxu0 0.0
  %4403 = vmatmul.mubr.f32.gmra.mrb[0].mxu0 %v4333
  %v4404 = vpop.f32.mrb[0].mxu0
  %v4405 = vadd.f32 %v4324, %v4404
  %v4406 = vpop.f32.mrb[0].mxu0
  %4407 = vmatprep.mubr.f32.mxu0 0.0
  %4408 = vmatmul.mubr.f32.gmra.mrb[0].mxu0 %v4336
  %v4409 = vpop.f32.mrb[0].mxu0
  %v4410 = vadd.f32 %v4329, %v4409
  %v4411 = vpop.f32.mrb[0].mxu0
  %4412 = vdwg.mxu0
  %v4413 = vld [vmem:[%s3090 + $0xa] sm:$0x1]
  %v4414 = vld [vmem:[%s3090 + $0xe] sm:$0x1]
  %v4415 = vld [vmem:[%s3090 + $0x12] sm:$0x1]
  %s4416 = scalar_lea.vmem %s2, 448
  %v4417 = vld [vmem:[%s4416] sm:$0xff]
  %v4418 = vld [vmem:[%s4416 + $0x8] sm:$0xff]
  %v4419 = vld [vmem:[%s4416 + $0x10] sm:$0xff]
  %v4420 = vld [vmem:[%s4416 + $0x18] sm:$0xff]
  %v4421 = vlaneseq
  %v4422 = vshrl.u32 %v4421, 7
  %v4423 = vsub.s32 0, %v4422
  %v4424 = vrot.slane %v4413, %v4423
  %4425 = vmatprep.subr.mxu0 0.0
  %4426 = vmatpush1.msra.mxu0 %v4417
  %4427 = vmatprep.subr.mxu0 0.0
  %4428 = vmatpush1.msra.mxu0 %v4418
  %4429 = vmatprep.subr.mxu0 0.0
  %4430 = vmatpush1.msra.mxu0 %v4419
  %4431 = vmatprep.subr.mxu0 0.0
  %4432 = vmatpush1.msra.mxu0 %v4420
  %4433 = vmatprep.subr.mxu0 0.0
  %4434 = vmatpush1.msra.mxu0 0.0
  %4435 = vmatprep.subr.mxu0 0.0
  %4436 = vmatpush1.msra.mxu0 0.0
  %4437 = vmatprep.subr.mxu0 0.0
  %4438 = vmatpush1.msra.mxu0 0.0
  %4439 = vmatprep.subr.mxu0 0.0
  %4440 = vmatpush1.msra.mxu0 0.0
  %4441 = vmatprep.subr.mxu0 0.0
  %4442 = vmatpush1.msra.mxu0 0.0
  %4443 = vmatprep.subr.mxu0 0.0
  %4444 = vmatpush1.msra.mxu0 0.0
  %4445 = vmatprep.subr.mxu0 0.0
  %4446 = vmatpush1.msra.mxu0 0.0
  %4447 = vmatprep.subr.mxu0 0.0
  %4448 = vmatpush1.msra.mxu0 0.0
  %4449 = vmatprep.subr.mxu0 0.0
  %4450 = vmatpush1.msra.mxu0 0.0
  %4451 = vmatprep.subr.mxu0 0.0
  %4452 = vmatpush1.msra.mxu0 0.0
  %4453 = vmatprep.subr.mxu0 0.0
  %4454 = vmatpush1.msra.mxu0 0.0
  %4455 = vmatprep.subr.mxu0 0.0
  %4456 = vmatpush1.msra.mxu0 0.0
  %4457 = vmatprep.subr.mxu0 0.0
  %4458 = vmatpush1.msra.mxu0 0.0
  %4459 = vmatprep.subr.mxu0 0.0
  %4460 = vmatpush1.msra.mxu0 0.0
  %4461 = vmatprep.subr.mxu0 0.0
  %4462 = vmatpush1.msra.mxu0 0.0
  %4463 = vmatprep.subr.mxu0 0.0
  %4464 = vmatpush1.msra.mxu0 0.0
  %4465 = vmatprep.subr.mxu0 0.0
  %4466 = vmatpush1.msra.mxu0 0.0
  %4467 = vmatprep.subr.mxu0 0.0
  %4468 = vmatpush1.msra.mxu0 0.0
  %4469 = vmatprep.subr.mxu0 0.0
  %4470 = vmatpush1.msra.mxu0 0.0
  %4471 = vmatprep.subr.mxu0 0.0
  %4472 = vmatpush1.msra.mxu0 0.0
  %4473 = vmatprep.subr.mxu0 0.0
  %4474 = vmatpush1.msra.mxu0 0.0
  %4475 = vmatprep.subr.mxu0 0.0
  %4476 = vmatpush1.msra.mxu0 0.0
  %4477 = vmatprep.subr.mxu0 0.0
  %4478 = vmatpush1.msra.mxu0 0.0
  %4479 = vmatprep.subr.mxu0 0.0
  %4480 = vmatpush1.msra.mxu0 0.0
  %4481 = vmatprep.subr.mxu0 0.0
  %4482 = vmatpush1.msra.mxu0 0.0
  %4483 = vmatprep.subr.mxu0 0.0
  %4484 = vmatpush1.msra.mxu0 0.0
  %4485 = vmatprep.subr.mxu0 0.0
  %4486 = vmatpush1.msra.mxu0 0.0
  %4487 = vmatprep.subr.mxu0 0.0
  %4488 = vmatpush1.msra.mxu0 0.0
  %4489 = vmatprep.mubr.f32.mxu0 0.0
  %4490 = vmatmul.mubr.f32.gmra.mrb[0].mxu0 %v3104
  %v4491 = vpop.f32.mrb[0].mxu0
  %v4492 = vadd.f32 %v4424, %v4491
  %v4493 = vpop.f32.mrb[0].mxu0
  %4494 = vmatprep.mubr.f32.mxu0 0.0
  %4495 = vmatmul.mubr.f32.gmra.mrb[0].mxu0 %v3107
  %v4496 = vpop.f32.mrb[0].mxu0
  %v4497 = vadd.f32 %v4424, %v4496
  %v4498 = vpop.f32.mrb[0].mxu0
  %4499 = vdwg.mxu0
  %s4500 = scalar_lea.vmem %s2, 576
  %v4501 = vld [vmem:[%s4500] sm:$0xff]
  %v4502 = vld [vmem:[%s4500 + $0x8] sm:$0xff]
  %v4503 = vld [vmem:[%s4500 + $0x10] sm:$0xff]
  %v4504 = vld [vmem:[%s4500 + $0x18] sm:$0xff]
  %v4505 = vlaneseq
  %v4506 = vshrl.u32 %v4505, 7
  %v4507 = vsub.s32 0, %v4506
  %v4508 = vrot.slane %v4414, %v4507
  %4509 = vmatprep.subr.mxu0 0.0
  %4510 = vmatpush1.msra.mxu0 %v4501
  %4511 = vmatprep.subr.mxu0 0.0
  %4512 = vmatpush1.msra.mxu0 %v4502
  %4513 = vmatprep.subr.mxu0 0.0
  %4514 = vmatpush1.msra.mxu0 %v4503
  %4515 = vmatprep.subr.mxu0 0.0
  %4516 = vmatpush1.msra.mxu0 %v4504
  %4517 = vmatprep.subr.mxu0 0.0
  %4518 = vmatpush1.msra.mxu0 0.0
  %4519 = vmatprep.subr.mxu0 0.0
  %4520 = vmatpush1.msra.mxu0 0.0
  %4521 = vmatprep.subr.mxu0 0.0
  %4522 = vmatpush1.msra.mxu0 0.0
  %4523 = vmatprep.subr.mxu0 0.0
  %4524 = vmatpush1.msra.mxu0 0.0
  %4525 = vmatprep.subr.mxu0 0.0
  %4526 = vmatpush1.msra.mxu0 0.0
  %4527 = vmatprep.subr.mxu0 0.0
  %4528 = vmatpush1.msra.mxu0 0.0
  %4529 = vmatprep.subr.mxu0 0.0
  %4530 = vmatpush1.msra.mxu0 0.0
  %4531 = vmatprep.subr.mxu0 0.0
  %4532 = vmatpush1.msra.mxu0 0.0
  %4533 = vmatprep.subr.mxu0 0.0
  %4534 = vmatpush1.msra.mxu0 0.0
  %4535 = vmatprep.subr.mxu0 0.0
  %4536 = vmatpush1.msra.mxu0 0.0
  %4537 = vmatprep.subr.mxu0 0.0
  %4538 = vmatpush1.msra.mxu0 0.0
  %4539 = vmatprep.subr.mxu0 0.0
  %4540 = vmatpush1.msra.mxu0 0.0
  %4541 = vmatprep.subr.mxu0 0.0
  %4542 = vmatpush1.msra.mxu0 0.0
  %4543 = vmatprep.subr.mxu0 0.0
  %4544 = vmatpush1.msra.mxu0 0.0
  %4545 = vmatprep.subr.mxu0 0.0
  %4546 = vmatpush1.msra.mxu0 0.0
  %4547 = vmatprep.subr.mxu0 0.0
  %4548 = vmatpush1.msra.mxu0 0.0
  %4549 = vmatprep.subr.mxu0 0.0
  %4550 = vmatpush1.msra.mxu0 0.0
  %4551 = vmatprep.subr.mxu0 0.0
  %4552 = vmatpush1.msra.mxu0 0.0
  %4553 = vmatprep.subr.mxu0 0.0
  %4554 = vmatpush1.msra.mxu0 0.0
  %4555 = vmatprep.subr.mxu0 0.0
  %4556 = vmatpush1.msra.mxu0 0.0
  %4557 = vmatprep.subr.mxu0 0.0
  %4558 = vmatpush1.msra.mxu0 0.0
  %4559 = vmatprep.subr.mxu0 0.0
  %4560 = vmatpush1.msra.mxu0 0.0
  %4561 = vmatprep.subr.mxu0 0.0
  %4562 = vmatpush1.msra.mxu0 0.0
  %4563 = vmatprep.subr.mxu0 0.0
  %4564 = vmatpush1.msra.mxu0 0.0
  %4565 = vmatprep.subr.mxu0 0.0
  %4566 = vmatpush1.msra.mxu0 0.0
  %4567 = vmatprep.subr.mxu0 0.0
  %4568 = vmatpush1.msra.mxu0 0.0
  %4569 = vmatprep.subr.mxu0 0.0
  %4570 = vmatpush1.msra.mxu0 0.0
  %4571 = vmatprep.subr.mxu0 0.0
  %4572 = vmatpush1.msra.mxu0 0.0
  %4573 = vmatprep.mubr.f32.mxu0 0.0
  %4574 = vmatmul.mubr.f32.gmra.mrb[0].mxu0 %v3104
  %v4575 = vpop.f32.mrb[0].mxu0
  %v4576 = vadd.f32 %v4508, %v4575
  %v4577 = vpop.f32.mrb[0].mxu0
  %4578 = vmatprep.mubr.f32.mxu0 0.0
  %4579 = vmatmul.mubr.f32.gmra.mrb[0].mxu0 %v3107
  %v4580 = vpop.f32.mrb[0].mxu0
  %v4581 = vadd.f32 %v4508, %v4580
  %v4582 = vpop.f32.mrb[0].mxu0
  %4583 = vdwg.mxu0
  %s4584 = scalar_lea.vmem %s2, 704
  %v4585 = vld [vmem:[%s4584] sm:$0xff]
  %v4586 = vld [vmem:[%s4584 + $0x8] sm:$0xff]
  %v4587 = vld [vmem:[%s4584 + $0x10] sm:$0xff]
  %v4588 = vld [vmem:[%s4584 + $0x18] sm:$0xff]
  %v4589 = vlaneseq
  %v4590 = vshrl.u32 %v4589, 7
  %v4591 = vsub.s32 0, %v4590
  %v4592 = vrot.slane %v4415, %v4591
  %4593 = vmatprep.subr.mxu0 0.0
  %4594 = vmatpush1.msra.mxu0 %v4585
  %4595 = vmatprep.subr.mxu0 0.0
  %4596 = vmatpush1.msra.mxu0 %v4586
  %4597 = vmatprep.subr.mxu0 0.0
  %4598 = vmatpush1.msra.mxu0 %v4587
  %4599 = vmatprep.subr.mxu0 0.0
  %4600 = vmatpush1.msra.mxu0 %v4588
  %4601 = vmatprep.subr.mxu0 0.0
  %4602 = vmatpush1.msra.mxu0 0.0
  %4603 = vmatprep.subr.mxu0 0.0
  %4604 = vmatpush1.msra.mxu0 0.0
  %4605 = vmatprep.subr.mxu0 0.0
  %4606 = vmatpush1.msra.mxu0 0.0
  %4607 = vmatprep.subr.mxu0 0.0
  %4608 = vmatpush1.msra.mxu0 0.0
  %4609 = vmatprep.subr.mxu0 0.0
  %4610 = vmatpush1.msra.mxu0 0.0
  %4611 = vmatprep.subr.mxu0 0.0
  %4612 = vmatpush1.msra.mxu0 0.0
  %4613 = vmatprep.subr.mxu0 0.0
  %4614 = vmatpush1.msra.mxu0 0.0
  %4615 = vmatprep.subr.mxu0 0.0
  %4616 = vmatpush1.msra.mxu0 0.0
  %4617 = vmatprep.subr.mxu0 0.0
  %4618 = vmatpush1.msra.mxu0 0.0
  %4619 = vmatprep.subr.mxu0 0.0
  %4620 = vmatpush1.msra.mxu0 0.0
  %4621 = vmatprep.subr.mxu0 0.0
  %4622 = vmatpush1.msra.mxu0 0.0
  %4623 = vmatprep.subr.mxu0 0.0
  %4624 = vmatpush1.msra.mxu0 0.0
  %4625 = vmatprep.subr.mxu0 0.0
  %4626 = vmatpush1.msra.mxu0 0.0
  %4627 = vmatprep.subr.mxu0 0.0
  %4628 = vmatpush1.msra.mxu0 0.0
  %4629 = vmatprep.subr.mxu0 0.0
  %4630 = vmatpush1.msra.mxu0 0.0
  %4631 = vmatprep.subr.mxu0 0.0
  %4632 = vmatpush1.msra.mxu0 0.0
  %4633 = vmatprep.subr.mxu0 0.0
  %4634 = vmatpush1.msra.mxu0 0.0
  %4635 = vmatprep.subr.mxu0 0.0
  %4636 = vmatpush1.msra.mxu0 0.0
  %4637 = vmatprep.subr.mxu0 0.0
  %4638 = vmatpush1.msra.mxu0 0.0
  %4639 = vmatprep.subr.mxu0 0.0
  %4640 = vmatpush1.msra.mxu0 0.0
  %4641 = vmatprep.subr.mxu0 0.0
  %4642 = vmatpush1.msra.mxu0 0.0
  %4643 = vmatprep.subr.mxu0 0.0
  %4644 = vmatpush1.msra.mxu0 0.0
  %4645 = vmatprep.subr.mxu0 0.0
  %4646 = vmatpush1.msra.mxu0 0.0
  %4647 = vmatprep.subr.mxu0 0.0
  %4648 = vmatpush1.msra.mxu0 0.0
  %4649 = vmatprep.subr.mxu0 0.0
  %4650 = vmatpush1.msra.mxu0 0.0
  %4651 = vmatprep.subr.mxu0 0.0
  %4652 = vmatpush1.msra.mxu0 0.0
  %4653 = vmatprep.subr.mxu0 0.0
  %4654 = vmatpush1.msra.mxu0 0.0
  %4655 = vmatprep.subr.mxu0 0.0
  %4656 = vmatpush1.msra.mxu0 0.0
  %4657 = vmatprep.mubr.f32.mxu0 0.0
  %4658 = vmatmul.mubr.f32.gmra.mrb[0].mxu0 %v3104
  %v4659 = vpop.f32.mrb[0].mxu0
  %v4660 = vadd.f32 %v4592, %v4659
  %v4661 = vpop.f32.mrb[0].mxu0
  %4662 = vmatprep.mubr.f32.mxu0 0.0
  %4663 = vmatmul.mubr.f32.gmra.mrb[0].mxu0 %v3107
  %v4664 = vpop.f32.mrb[0].mxu0
  %v4665 = vadd.f32 %v4592, %v4664
  %v4666 = vpop.f32.mrb[0].mxu0
  %4667 = vdwg.mxu0
  %v4669 = vsel %vm431, %v4492, 0
  %v4672 = vsel %vm431, %v4576, 0
  %4674 = vmatprep.subr.mxu0 0.0
  %4675 = vmatpush1.xpose.msra.mxu0 %v4672
  %4676 = vmatprep.subr.mxu0 0.0
  %4677 = vmatpush1.xpose.msra.mxu0 0.0
  %4678 = vmatprep.subr.mxu0 0.0
  %4679 = vmatpush1.xpose.msra.mxu0 0.0
  %4680 = vmatprep.subr.mxu0 0.0
  %4681 = vmatpush1.xpose.msra.mxu0 0.0
  %4682 = vmatprep.subr.mxu0 0.0
  %4683 = vmatpush1.xpose.msra.mxu0 0.0
  %4684 = vmatprep.subr.mxu0 0.0
  %4685 = vmatpush1.xpose.msra.mxu0 0.0
  %4686 = vmatprep.subr.mxu0 0.0
  %4687 = vmatpush1.xpose.msra.mxu0 0.0
  %4688 = vmatprep.subr.mxu0 0.0
  %4689 = vmatpush1.xpose.msra.mxu0 0.0
  %4690 = vmatprep.subr.mxu0 0.0
  %4691 = vmatpush1.xpose.msra.mxu0 0.0
  %4692 = vmatprep.subr.mxu0 0.0
  %4693 = vmatpush1.xpose.msra.mxu0 0.0
  %4694 = vmatprep.subr.mxu0 0.0
  %4695 = vmatpush1.xpose.msra.mxu0 0.0
  %4696 = vmatprep.subr.mxu0 0.0
  %4697 = vmatpush1.xpose.msra.mxu0 0.0
  %4698 = vmatprep.subr.mxu0 0.0
  %4699 = vmatpush1.xpose.msra.mxu0 0.0
  %4700 = vmatprep.subr.mxu0 0.0
  %4701 = vmatpush1.xpose.msra.mxu0 0.0
  %4702 = vmatprep.subr.mxu0 0.0
  %4703 = vmatpush1.xpose.msra.mxu0 0.0
  %4704 = vmatprep.subr.mxu0 0.0
  %4705 = vmatpush1.xpose.msra.mxu0 0.0
  %4706 = vmatprep.subr.mxu0 0.0
  %4707 = vmatpush1.xpose.msra.mxu0 0.0
  %4708 = vmatprep.subr.mxu0 0.0
  %4709 = vmatpush1.xpose.msra.mxu0 0.0
  %4710 = vmatprep.subr.mxu0 0.0
  %4711 = vmatpush1.xpose.msra.mxu0 0.0
  %4712 = vmatprep.subr.mxu0 0.0
  %4713 = vmatpush1.xpose.msra.mxu0 0.0
  %4714 = vmatprep.subr.mxu0 0.0
  %4715 = vmatpush1.xpose.msra.mxu0 0.0
  %4716 = vmatprep.subr.mxu0 0.0
  %4717 = vmatpush1.xpose.msra.mxu0 0.0
  %4718 = vmatprep.subr.mxu0 0.0
  %4719 = vmatpush1.xpose.msra.mxu0 0.0
  %4720 = vmatprep.subr.mxu0 0.0
  %4721 = vmatpush1.xpose.msra.mxu0 0.0
  %4722 = vmatprep.subr.mxu0 0.0
  %4723 = vmatpush1.xpose.msra.mxu0 0.0
  %4724 = vmatprep.subr.mxu0 0.0
  %4725 = vmatpush1.xpose.msra.mxu0 0.0
  %4726 = vmatprep.subr.mxu0 0.0
  %4727 = vmatpush1.xpose.msra.mxu0 0.0
  %4728 = vmatprep.subr.mxu0 0.0
  %4729 = vmatpush1.xpose.msra.mxu0 0.0
  %4730 = vmatprep.subr.mxu0 0.0
  %4731 = vmatpush1.xpose.msra.mxu0 0.0
  %4732 = vmatprep.subr.mxu0 0.0
  %4733 = vmatpush1.xpose.msra.mxu0 0.0
  %4734 = vmatprep.subr.mxu0 0.0
  %4735 = vmatpush1.xpose.msra.mxu0 0.0
  %4736 = vmatprep.subr.mxu0 0.0
  %4737 = vmatpush1.xpose.msra.mxu0 0.0
  %4738 = vmatprep.mubr.f32.mxu0 0.0
  %4739 = vmatmul.mubr.f32.gmra.mrb[0].mxu0 %v4669
  %v4740 = vpop.f32.mrb[0].mxu0
  %v4741 = vadd.f32 0.0, %v4740
  %v4742 = vpop.f32.mrb[0].mxu0
  %4743 = vdwg.mxu0
  %v4745 = vsel %vm431, %v4497, 0
  %v4748 = vsel %vm431, %v4581, 0
  %4750 = vmatprep.subr.mxu0 0.0
  %4751 = vmatpush1.xpose.msra.mxu0 %v4748
  %4752 = vmatprep.subr.mxu0 0.0
  %4753 = vmatpush1.xpose.msra.mxu0 0.0
  %4754 = vmatprep.subr.mxu0 0.0
  %4755 = vmatpush1.xpose.msra.mxu0 0.0
  %4756 = vmatprep.subr.mxu0 0.0
  %4757 = vmatpush1.xpose.msra.mxu0 0.0
  %4758 = vmatprep.subr.mxu0 0.0
  %4759 = vmatpush1.xpose.msra.mxu0 0.0
  %4760 = vmatprep.subr.mxu0 0.0
  %4761 = vmatpush1.xpose.msra.mxu0 0.0
  %4762 = vmatprep.subr.mxu0 0.0
  %4763 = vmatpush1.xpose.msra.mxu0 0.0
  %4764 = vmatprep.subr.mxu0 0.0
  %4765 = vmatpush1.xpose.msra.mxu0 0.0
  %4766 = vmatprep.subr.mxu0 0.0
  %4767 = vmatpush1.xpose.msra.mxu0 0.0
  %4768 = vmatprep.subr.mxu0 0.0
  %4769 = vmatpush1.xpose.msra.mxu0 0.0
  %4770 = vmatprep.subr.mxu0 0.0
  %4771 = vmatpush1.xpose.msra.mxu0 0.0
  %4772 = vmatprep.subr.mxu0 0.0
  %4773 = vmatpush1.xpose.msra.mxu0 0.0
  %4774 = vmatprep.subr.mxu0 0.0
  %4775 = vmatpush1.xpose.msra.mxu0 0.0
  %4776 = vmatprep.subr.mxu0 0.0
  %4777 = vmatpush1.xpose.msra.mxu0 0.0
  %4778 = vmatprep.subr.mxu0 0.0
  %4779 = vmatpush1.xpose.msra.mxu0 0.0
  %4780 = vmatprep.subr.mxu0 0.0
  %4781 = vmatpush1.xpose.msra.mxu0 0.0
  %4782 = vmatprep.subr.mxu0 0.0
  %4783 = vmatpush1.xpose.msra.mxu0 0.0
  %4784 = vmatprep.subr.mxu0 0.0
  %4785 = vmatpush1.xpose.msra.mxu0 0.0
  %4786 = vmatprep.subr.mxu0 0.0
  %4787 = vmatpush1.xpose.msra.mxu0 0.0
  %4788 = vmatprep.subr.mxu0 0.0
  %4789 = vmatpush1.xpose.msra.mxu0 0.0
  %4790 = vmatprep.subr.mxu0 0.0
  %4791 = vmatpush1.xpose.msra.mxu0 0.0
  %4792 = vmatprep.subr.mxu0 0.0
  %4793 = vmatpush1.xpose.msra.mxu0 0.0
  %4794 = vmatprep.subr.mxu0 0.0
  %4795 = vmatpush1.xpose.msra.mxu0 0.0
  %4796 = vmatprep.subr.mxu0 0.0
  %4797 = vmatpush1.xpose.msra.mxu0 0.0
  %4798 = vmatprep.subr.mxu0 0.0
  %4799 = vmatpush1.xpose.msra.mxu0 0.0
  %4800 = vmatprep.subr.mxu0 0.0
  %4801 = vmatpush1.xpose.msra.mxu0 0.0
  %4802 = vmatprep.subr.mxu0 0.0
  %4803 = vmatpush1.xpose.msra.mxu0 0.0
  %4804 = vmatprep.subr.mxu0 0.0
  %4805 = vmatpush1.xpose.msra.mxu0 0.0
  %4806 = vmatprep.subr.mxu0 0.0
  %4807 = vmatpush1.xpose.msra.mxu0 0.0
  %4808 = vmatprep.subr.mxu0 0.0
  %4809 = vmatpush1.xpose.msra.mxu0 0.0
  %4810 = vmatprep.subr.mxu0 0.0
  %4811 = vmatpush1.xpose.msra.mxu0 0.0
  %4812 = vmatprep.subr.mxu0 0.0
  %4813 = vmatpush1.xpose.msra.mxu0 0.0
  %4814 = vmatprep.mubr.f32.mxu0 0.0
  %4815 = vmatmul.mubr.f32.gmra.mrb[0].mxu0 %v4745
  %v4816 = vpop.f32.mrb[0].mxu0
  %v4817 = vadd.f32 0.0, %v4816
  %v4818 = vpop.f32.mrb[0].mxu0
  %4819 = vdwg.mxu0
  %v4820 = vsel %vm431, %v4741, -inf
  %4821 = vmax.xlane.f32.xlu0 %v4820
  %v4822 = vpop.xlane.xlu0 %4821
  %v4823 = vsel %vm431, %v4817, -inf
  %4824 = vmax.xlane.f32.xlu0 %v4823
  %v4825 = vpop.xlane.xlu0 %4824
  %v4826 = vsub.f32 %v4741, %v4822
  %v4827 = vsub.f32 %v4817, %v4825
  %v4828 = vmul.f32 %v4826, 1.442695
  %v4829 = vpow.pop %v4828
  %v4830 = vmul.f32 %v4827, 1.442695
  %v4831 = vpow.pop %v4830
  %v4832 = vsel %vm431, %v4829, 0.0
  %4833 = vadd.xlane.f32.xlu0 %v4832
  %v4834 = vpop.xlane.xlu0 %4833
  %v4835 = vsel %vm431, %v4831, 0.0
  %4836 = vadd.xlane.f32.xlu0 %v4835
  %v4837 = vpop.xlane.xlu0 %4836
  %v4838 = vrcp.pop %v4834
  %v4839 = vrcp.pop %v4837
  %v4840 = vmul.f32 %v4829, %v4838
  %v4841 = vmul.f32 %v4831, %v4839
  %v4843 = vsel %vm431, %v4840, 0
  %4845 = vmatprep.subr.mxu0 0.0
  %4846 = vmatpush1.msra.mxu0 %v4660
  %4847 = vmatprep.subr.mxu0 0.0
  %4848 = vmatpush1.msra.mxu0 0.0
  %4849 = vmatprep.subr.mxu0 0.0
  %4850 = vmatpush1.msra.mxu0 0.0
  %4851 = vmatprep.subr.mxu0 0.0
  %4852 = vmatpush1.msra.mxu0 0.0
  %4853 = vmatprep.subr.mxu0 0.0
  %4854 = vmatpush1.msra.mxu0 0.0
  %4855 = vmatprep.subr.mxu0 0.0
  %4856 = vmatpush1.msra.mxu0 0.0
  %4857 = vmatprep.subr.mxu0 0.0
  %4858 = vmatpush1.msra.mxu0 0.0
  %4859 = vmatprep.subr.mxu0 0.0
  %4860 = vmatpush1.msra.mxu0 0.0
  %4861 = vmatprep.subr.mxu0 0.0
  %4862 = vmatpush1.msra.mxu0 0.0
  %4863 = vmatprep.subr.mxu0 0.0
  %4864 = vmatpush1.msra.mxu0 0.0
  %4865 = vmatprep.subr.mxu0 0.0
  %4866 = vmatpush1.msra.mxu0 0.0
  %4867 = vmatprep.subr.mxu0 0.0
  %4868 = vmatpush1.msra.mxu0 0.0
  %4869 = vmatprep.subr.mxu0 0.0
  %4870 = vmatpush1.msra.mxu0 0.0
  %4871 = vmatprep.subr.mxu0 0.0
  %4872 = vmatpush1.msra.mxu0 0.0
  %4873 = vmatprep.subr.mxu0 0.0
  %4874 = vmatpush1.msra.mxu0 0.0
  %4875 = vmatprep.subr.mxu0 0.0
  %4876 = vmatpush1.msra.mxu0 0.0
  %4877 = vmatprep.subr.mxu0 0.0
  %4878 = vmatpush1.msra.mxu0 0.0
  %4879 = vmatprep.subr.mxu0 0.0
  %4880 = vmatpush1.msra.mxu0 0.0
  %4881 = vmatprep.subr.mxu0 0.0
  %4882 = vmatpush1.msra.mxu0 0.0
  %4883 = vmatprep.subr.mxu0 0.0
  %4884 = vmatpush1.msra.mxu0 0.0
  %4885 = vmatprep.subr.mxu0 0.0
  %4886 = vmatpush1.msra.mxu0 0.0
  %4887 = vmatprep.subr.mxu0 0.0
  %4888 = vmatpush1.msra.mxu0 0.0
  %4889 = vmatprep.subr.mxu0 0.0
  %4890 = vmatpush1.msra.mxu0 0.0
  %4891 = vmatprep.subr.mxu0 0.0
  %4892 = vmatpush1.msra.mxu0 0.0
  %4893 = vmatprep.subr.mxu0 0.0
  %4894 = vmatpush1.msra.mxu0 0.0
  %4895 = vmatprep.subr.mxu0 0.0
  %4896 = vmatpush1.msra.mxu0 0.0
  %4897 = vmatprep.subr.mxu0 0.0
  %4898 = vmatpush1.msra.mxu0 0.0
  %4899 = vmatprep.subr.mxu0 0.0
  %4900 = vmatpush1.msra.mxu0 0.0
  %4901 = vmatprep.subr.mxu0 0.0
  %4902 = vmatpush1.msra.mxu0 0.0
  %4903 = vmatprep.subr.mxu0 0.0
  %4904 = vmatpush1.msra.mxu0 0.0
  %4905 = vmatprep.subr.mxu0 0.0
  %4906 = vmatpush1.msra.mxu0 0.0
  %4907 = vmatprep.subr.mxu0 0.0
  %4908 = vmatpush1.msra.mxu0 0.0
  %4909 = vmatprep.mubr.f32.mxu0 0.0
  %4910 = vmatmul.mubr.f32.gmra.mrb[0].mxu0 %v4843
  %v4911 = vpop.f32.mrb[0].mxu0
  %v4912 = vadd.f32 0.0, %v4911
  %v4913 = vpop.f32.mrb[0].mxu0
  %4914 = vdwg.mxu0
  %v4916 = vsel %vm431, %v4841, 0
  %4918 = vmatprep.subr.mxu0 0.0
  %4919 = vmatpush1.msra.mxu0 %v4665
  %4920 = vmatprep.subr.mxu0 0.0
  %4921 = vmatpush1.msra.mxu0 0.0
  %4922 = vmatprep.subr.mxu0 0.0
  %4923 = vmatpush1.msra.mxu0 0.0
  %4924 = vmatprep.subr.mxu0 0.0
  %4925 = vmatpush1.msra.mxu0 0.0
  %4926 = vmatprep.subr.mxu0 0.0
  %4927 = vmatpush1.msra.mxu0 0.0
  %4928 = vmatprep.subr.mxu0 0.0
  %4929 = vmatpush1.msra.mxu0 0.0
  %4930 = vmatprep.subr.mxu0 0.0
  %4931 = vmatpush1.msra.mxu0 0.0
  %4932 = vmatprep.subr.mxu0 0.0
  %4933 = vmatpush1.msra.mxu0 0.0
  %4934 = vmatprep.subr.mxu0 0.0
  %4935 = vmatpush1.msra.mxu0 0.0
  %4936 = vmatprep.subr.mxu0 0.0
  %4937 = vmatpush1.msra.mxu0 0.0
  %4938 = vmatprep.subr.mxu0 0.0
  %4939 = vmatpush1.msra.mxu0 0.0
  %4940 = vmatprep.subr.mxu0 0.0
  %4941 = vmatpush1.msra.mxu0 0.0
  %4942 = vmatprep.subr.mxu0 0.0
  %4943 = vmatpush1.msra.mxu0 0.0
  %4944 = vmatprep.subr.mxu0 0.0
  %4945 = vmatpush1.msra.mxu0 0.0
  %4946 = vmatprep.subr.mxu0 0.0
  %4947 = vmatpush1.msra.mxu0 0.0
  %4948 = vmatprep.subr.mxu0 0.0
  %4949 = vmatpush1.msra.mxu0 0.0
  %4950 = vmatprep.subr.mxu0 0.0
  %4951 = vmatpush1.msra.mxu0 0.0
  %4952 = vmatprep.subr.mxu0 0.0
  %4953 = vmatpush1.msra.mxu0 0.0
  %4954 = vmatprep.subr.mxu0 0.0
  %4955 = vmatpush1.msra.mxu0 0.0
  %4956 = vmatprep.subr.mxu0 0.0
  %4957 = vmatpush1.msra.mxu0 0.0
  %4958 = vmatprep.subr.mxu0 0.0
  %4959 = vmatpush1.msra.mxu0 0.0
  %4960 = vmatprep.subr.mxu0 0.0
  %4961 = vmatpush1.msra.mxu0 0.0
  %4962 = vmatprep.subr.mxu0 0.0
  %4963 = vmatpush1.msra.mxu0 0.0
  %4964 = vmatprep.subr.mxu0 0.0
  %4965 = vmatpush1.msra.mxu0 0.0
  %4966 = vmatprep.subr.mxu0 0.0
  %4967 = vmatpush1.msra.mxu0 0.0
  %4968 = vmatprep.subr.mxu0 0.0
  %4969 = vmatpush1.msra.mxu0 0.0
  %4970 = vmatprep.subr.mxu0 0.0
  %4971 = vmatpush1.msra.mxu0 0.0
  %4972 = vmatprep.subr.mxu0 0.0
  %4973 = vmatpush1.msra.mxu0 0.0
  %4974 = vmatprep.subr.mxu0 0.0
  %4975 = vmatpush1.msra.mxu0 0.0
  %4976 = vmatprep.subr.mxu0 0.0
  %4977 = vmatpush1.msra.mxu0 0.0
  %4978 = vmatprep.subr.mxu0 0.0
  %4979 = vmatpush1.msra.mxu0 0.0
  %4980 = vmatprep.subr.mxu0 0.0
  %4981 = vmatpush1.msra.mxu0 0.0
  %4982 = vmatprep.mubr.f32.mxu0 0.0
  %4983 = vmatmul.mubr.f32.gmra.mrb[0].mxu0 %v4916
  %v4984 = vpop.f32.mrb[0].mxu0
  %v4985 = vadd.f32 0.0, %v4984
  %v4986 = vpop.f32.mrb[0].mxu0
  %4987 = vdwg.mxu0
  %s4988 = scalar_lea.vmem %s3, 48
  %v4989 = vld [vmem:[%s4988] sm:$0xff]
  %v4991 = vsel %vm431, %v4912, 0
  %v4994 = vsel %vm431, %v4985, 0
  %4996 = vmatprep.subr.mxu0 0.0
  %4997 = vmatpush1.msra.mxu0 %v4989
  %4998 = vmatprep.subr.mxu0 0.0
  %4999 = vmatpush1.msra.mxu0 0.0
  %5000 = vmatprep.subr.mxu0 0.0
  %5001 = vmatpush1.msra.mxu0 0.0
  %5002 = vmatprep.subr.mxu0 0.0
  %5003 = vmatpush1.msra.mxu0 0.0
  %5004 = vmatprep.subr.mxu0 0.0
  %5005 = vmatpush1.msra.mxu0 0.0
  %5006 = vmatprep.subr.mxu0 0.0
  %5007 = vmatpush1.msra.mxu0 0.0
  %5008 = vmatprep.subr.mxu0 0.0
  %5009 = vmatpush1.msra.mxu0 0.0
  %5010 = vmatprep.subr.mxu0 0.0
  %5011 = vmatpush1.msra.mxu0 0.0
  %5012 = vmatprep.subr.mxu0 0.0
  %5013 = vmatpush1.msra.mxu0 0.0
  %5014 = vmatprep.subr.mxu0 0.0
  %5015 = vmatpush1.msra.mxu0 0.0
  %5016 = vmatprep.subr.mxu0 0.0
  %5017 = vmatpush1.msra.mxu0 0.0
  %5018 = vmatprep.subr.mxu0 0.0
  %5019 = vmatpush1.msra.mxu0 0.0
  %5020 = vmatprep.subr.mxu0 0.0
  %5021 = vmatpush1.msra.mxu0 0.0
  %5022 = vmatprep.subr.mxu0 0.0
  %5023 = vmatpush1.msra.mxu0 0.0
  %5024 = vmatprep.subr.mxu0 0.0
  %5025 = vmatpush1.msra.mxu0 0.0
  %5026 = vmatprep.subr.mxu0 0.0
  %5027 = vmatpush1.msra.mxu0 0.0
  %5028 = vmatprep.subr.mxu0 0.0
  %5029 = vmatpush1.msra.mxu0 0.0
  %5030 = vmatprep.subr.mxu0 0.0
  %5031 = vmatpush1.msra.mxu0 0.0
  %5032 = vmatprep.subr.mxu0 0.0
  %5033 = vmatpush1.msra.mxu0 0.0
  %5034 = vmatprep.subr.mxu0 0.0
  %5035 = vmatpush1.msra.mxu0 0.0
  %5036 = vmatprep.subr.mxu0 0.0
  %5037 = vmatpush1.msra.mxu0 0.0
  %5038 = vmatprep.subr.mxu0 0.0
  %5039 = vmatpush1.msra.mxu0 0.0
  %5040 = vmatprep.subr.mxu0 0.0
  %5041 = vmatpush1.msra.mxu0 0.0
  %5042 = vmatprep.subr.mxu0 0.0
  %5043 = vmatpush1.msra.mxu0 0.0
  %5044 = vmatprep.subr.mxu0 0.0
  %5045 = vmatpush1.msra.mxu0 0.0
  %5046 = vmatprep.subr.mxu0 0.0
  %5047 = vmatpush1.msra.mxu0 0.0
  %5048 = vmatprep.subr.mxu0 0.0
  %5049 = vmatpush1.msra.mxu0 0.0
  %5050 = vmatprep.subr.mxu0 0.0
  %5051 = vmatpush1.msra.mxu0 0.0
  %5052 = vmatprep.subr.mxu0 0.0
  %5053 = vmatpush1.msra.mxu0 0.0
  %5054 = vmatprep.subr.mxu0 0.0
  %5055 = vmatpush1.msra.mxu0 0.0
  %5056 = vmatprep.subr.mxu0 0.0
  %5057 = vmatpush1.msra.mxu0 0.0
  %5058 = vmatprep.subr.mxu0 0.0
  %5059 = vmatpush1.msra.mxu0 0.0
  %5060 = vmatprep.mubr.f32.mxu0 0.0
  %5061 = vmatmul.mubr.f32.gmra.mrb[0].mxu0 %v4991
  %v5062 = vpop.f32.mrb[0].mxu0
  %v5063 = vadd.f32 0.0, %v5062
  %v5064 = vpop.f32.mrb[0].mxu0
  %5065 = vmatprep.mubr.f32.mxu0 0.0
  %5066 = vmatmul.mubr.f32.gmra.mrb[0].mxu0 %v4994
  %v5067 = vpop.f32.mrb[0].mxu0
  %v5068 = vadd.f32 0.0, %v5067
  %v5069 = vpop.f32.mrb[0].mxu0
  %5070 = vdwg.mxu0
  %v5071 = vadd.f32 %v4405, %v5063
  %v5072 = vadd.f32 %v4410, %v5068
  %v5073 = vld [vmem:[%s3090 + $0xb] sm:$0x1]
  %v5074 = vld [vmem:[%s3090 + $0xf] sm:$0x1]
  %v5075 = vld [vmem:[%s3090 + $0x13] sm:$0x1]
  %s5076 = scalar_lea.vmem %s2, 480
  %v5077 = vld [vmem:[%s5076] sm:$0xff]
  %v5078 = vld [vmem:[%s5076 + $0x8] sm:$0xff]
  %v5079 = vld [vmem:[%s5076 + $0x10] sm:$0xff]
  %v5080 = vld [vmem:[%s5076 + $0x18] sm:$0xff]
  %v5081 = vlaneseq
  %v5082 = vshrl.u32 %v5081, 7
  %v5083 = vsub.s32 0, %v5082
  %v5084 = vrot.slane %v5073, %v5083
  %5085 = vmatprep.subr.mxu0 0.0
  %5086 = vmatpush1.msra.mxu0 %v5077
  %5087 = vmatprep.subr.mxu0 0.0
  %5088 = vmatpush1.msra.mxu0 %v5078
  %5089 = vmatprep.subr.mxu0 0.0
  %5090 = vmatpush1.msra.mxu0 %v5079
  %5091 = vmatprep.subr.mxu0 0.0
  %5092 = vmatpush1.msra.mxu0 %v5080
  %5093 = vmatprep.subr.mxu0 0.0
  %5094 = vmatpush1.msra.mxu0 0.0
  %5095 = vmatprep.subr.mxu0 0.0
  %5096 = vmatpush1.msra.mxu0 0.0
  %5097 = vmatprep.subr.mxu0 0.0
  %5098 = vmatpush1.msra.mxu0 0.0
  %5099 = vmatprep.subr.mxu0 0.0
  %5100 = vmatpush1.msra.mxu0 0.0
  %5101 = vmatprep.subr.mxu0 0.0
  %5102 = vmatpush1.msra.mxu0 0.0
  %5103 = vmatprep.subr.mxu0 0.0
  %5104 = vmatpush1.msra.mxu0 0.0
  %5105 = vmatprep.subr.mxu0 0.0
  %5106 = vmatpush1.msra.mxu0 0.0
  %5107 = vmatprep.subr.mxu0 0.0
  %5108 = vmatpush1.msra.mxu0 0.0
  %5109 = vmatprep.subr.mxu0 0.0
  %5110 = vmatpush1.msra.mxu0 0.0
  %5111 = vmatprep.subr.mxu0 0.0
  %5112 = vmatpush1.msra.mxu0 0.0
  %5113 = vmatprep.subr.mxu0 0.0
  %5114 = vmatpush1.msra.mxu0 0.0
  %5115 = vmatprep.subr.mxu0 0.0
  %5116 = vmatpush1.msra.mxu0 0.0
  %5117 = vmatprep.subr.mxu0 0.0
  %5118 = vmatpush1.msra.mxu0 0.0
  %5119 = vmatprep.subr.mxu0 0.0
  %5120 = vmatpush1.msra.mxu0 0.0
  %5121 = vmatprep.subr.mxu0 0.0
  %5122 = vmatpush1.msra.mxu0 0.0
  %5123 = vmatprep.subr.mxu0 0.0
  %5124 = vmatpush1.msra.mxu0 0.0
  %5125 = vmatprep.subr.mxu0 0.0
  %5126 = vmatpush1.msra.mxu0 0.0
  %5127 = vmatprep.subr.mxu0 0.0
  %5128 = vmatpush1.msra.mxu0 0.0
  %5129 = vmatprep.subr.mxu0 0.0
  %5130 = vmatpush1.msra.mxu0 0.0
  %5131 = vmatprep.subr.mxu0 0.0
  %5132 = vmatpush1.msra.mxu0 0.0
  %5133 = vmatprep.subr.mxu0 0.0
  %5134 = vmatpush1.msra.mxu0 0.0
  %5135 = vmatprep.subr.mxu0 0.0
  %5136 = vmatpush1.msra.mxu0 0.0
  %5137 = vmatprep.subr.mxu0 0.0
  %5138 = vmatpush1.msra.mxu0 0.0
  %5139 = vmatprep.subr.mxu0 0.0
  %5140 = vmatpush1.msra.mxu0 0.0
  %5141 = vmatprep.subr.mxu0 0.0
  %5142 = vmatpush1.msra.mxu0 0.0
  %5143 = vmatprep.subr.mxu0 0.0
  %5144 = vmatpush1.msra.mxu0 0.0
  %5145 = vmatprep.subr.mxu0 0.0
  %5146 = vmatpush1.msra.mxu0 0.0
  %5147 = vmatprep.subr.mxu0 0.0
  %5148 = vmatpush1.msra.mxu0 0.0
  %5149 = vmatprep.mubr.f32.mxu0 0.0
  %5150 = vmatmul.mubr.f32.gmra.mrb[0].mxu0 %v3104
  %v5151 = vpop.f32.mrb[0].mxu0
  %v5152 = vadd.f32 %v5084, %v5151
  %v5153 = vpop.f32.mrb[0].mxu0
  %5154 = vmatprep.mubr.f32.mxu0 0.0
  %5155 = vmatmul.mubr.f32.gmra.mrb[0].mxu0 %v3107
  %v5156 = vpop.f32.mrb[0].mxu0
  %v5157 = vadd.f32 %v5084, %v5156
  %v5158 = vpop.f32.mrb[0].mxu0
  %5159 = vdwg.mxu0
  %s5160 = scalar_lea.vmem %s2, 608
  %v5161 = vld [vmem:[%s5160] sm:$0xff]
  %v5162 = vld [vmem:[%s5160 + $0x8] sm:$0xff]
  %v5163 = vld [vmem:[%s5160 + $0x10] sm:$0xff]
  %v5164 = vld [vmem:[%s5160 + $0x18] sm:$0xff]
  %v5165 = vlaneseq
  %v5166 = vshrl.u32 %v5165, 7
  %v5167 = vsub.s32 0, %v5166
  %v5168 = vrot.slane %v5074, %v5167
  %5169 = vmatprep.subr.mxu0 0.0
  %5170 = vmatpush1.msra.mxu0 %v5161
  %5171 = vmatprep.subr.mxu0 0.0
  %5172 = vmatpush1.msra.mxu0 %v5162
  %5173 = vmatprep.subr.mxu0 0.0
  %5174 = vmatpush1.msra.mxu0 %v5163
  %5175 = vmatprep.subr.mxu0 0.0
  %5176 = vmatpush1.msra.mxu0 %v5164
  %5177 = vmatprep.subr.mxu0 0.0
  %5178 = vmatpush1.msra.mxu0 0.0
  %5179 = vmatprep.subr.mxu0 0.0
  %5180 = vmatpush1.msra.mxu0 0.0
  %5181 = vmatprep.subr.mxu0 0.0
  %5182 = vmatpush1.msra.mxu0 0.0
  %5183 = vmatprep.subr.mxu0 0.0
  %5184 = vmatpush1.msra.mxu0 0.0
  %5185 = vmatprep.subr.mxu0 0.0
  %5186 = vmatpush1.msra.mxu0 0.0
  %5187 = vmatprep.subr.mxu0 0.0
  %5188 = vmatpush1.msra.mxu0 0.0
  %5189 = vmatprep.subr.mxu0 0.0
  %5190 = vmatpush1.msra.mxu0 0.0
  %5191 = vmatprep.subr.mxu0 0.0
  %5192 = vmatpush1.msra.mxu0 0.0
  %5193 = vmatprep.subr.mxu0 0.0
  %5194 = vmatpush1.msra.mxu0 0.0
  %5195 = vmatprep.subr.mxu0 0.0
  %5196 = vmatpush1.msra.mxu0 0.0
  %5197 = vmatprep.subr.mxu0 0.0
  %5198 = vmatpush1.msra.mxu0 0.0
  %5199 = vmatprep.subr.mxu0 0.0
  %5200 = vmatpush1.msra.mxu0 0.0
  %5201 = vmatprep.subr.mxu0 0.0
  %5202 = vmatpush1.msra.mxu0 0.0
  %5203 = vmatprep.subr.mxu0 0.0
  %5204 = vmatpush1.msra.mxu0 0.0
  %5205 = vmatprep.subr.mxu0 0.0
  %5206 = vmatpush1.msra.mxu0 0.0
  %5207 = vmatprep.subr.mxu0 0.0
  %5208 = vmatpush1.msra.mxu0 0.0
  %5209 = vmatprep.subr.mxu0 0.0
  %5210 = vmatpush1.msra.mxu0 0.0
  %5211 = vmatprep.subr.mxu0 0.0
  %5212 = vmatpush1.msra.mxu0 0.0
  %5213 = vmatprep.subr.mxu0 0.0
  %5214 = vmatpush1.msra.mxu0 0.0
  %5215 = vmatprep.subr.mxu0 0.0
  %5216 = vmatpush1.msra.mxu0 0.0
  %5217 = vmatprep.subr.mxu0 0.0
  %5218 = vmatpush1.msra.mxu0 0.0
  %5219 = vmatprep.subr.mxu0 0.0
  %5220 = vmatpush1.msra.mxu0 0.0
  %5221 = vmatprep.subr.mxu0 0.0
  %5222 = vmatpush1.msra.mxu0 0.0
  %5223 = vmatprep.subr.mxu0 0.0
  %5224 = vmatpush1.msra.mxu0 0.0
  %5225 = vmatprep.subr.mxu0 0.0
  %5226 = vmatpush1.msra.mxu0 0.0
  %5227 = vmatprep.subr.mxu0 0.0
  %5228 = vmatpush1.msra.mxu0 0.0
  %5229 = vmatprep.subr.mxu0 0.0
  %5230 = vmatpush1.msra.mxu0 0.0
  %5231 = vmatprep.subr.mxu0 0.0
  %5232 = vmatpush1.msra.mxu0 0.0
  %5233 = vmatprep.mubr.f32.mxu0 0.0
  %5234 = vmatmul.mubr.f32.gmra.mrb[0].mxu0 %v3104
  %v5235 = vpop.f32.mrb[0].mxu0
  %v5236 = vadd.f32 %v5168, %v5235
  %v5237 = vpop.f32.mrb[0].mxu0
  %5238 = vmatprep.mubr.f32.mxu0 0.0
  %5239 = vmatmul.mubr.f32.gmra.mrb[0].mxu0 %v3107
  %v5240 = vpop.f32.mrb[0].mxu0
  %v5241 = vadd.f32 %v5168, %v5240
  %v5242 = vpop.f32.mrb[0].mxu0
  %5243 = vdwg.mxu0
  %s5244 = scalar_lea.vmem %s2, 736
  %v5245 = vld [vmem:[%s5244] sm:$0xff]
  %v5246 = vld [vmem:[%s5244 + $0x8] sm:$0xff]
  %v5247 = vld [vmem:[%s5244 + $0x10] sm:$0xff]
  %v5248 = vld [vmem:[%s5244 + $0x18] sm:$0xff]
  %v5249 = vlaneseq
  %v5250 = vshrl.u32 %v5249, 7
  %v5251 = vsub.s32 0, %v5250
  %v5252 = vrot.slane %v5075, %v5251
  %5253 = vmatprep.subr.mxu0 0.0
  %5254 = vmatpush1.msra.mxu0 %v5245
  %5255 = vmatprep.subr.mxu0 0.0
  %5256 = vmatpush1.msra.mxu0 %v5246
  %5257 = vmatprep.subr.mxu0 0.0
  %5258 = vmatpush1.msra.mxu0 %v5247
  %5259 = vmatprep.subr.mxu0 0.0
  %5260 = vmatpush1.msra.mxu0 %v5248
  %5261 = vmatprep.subr.mxu0 0.0
  %5262 = vmatpush1.msra.mxu0 0.0
  %5263 = vmatprep.subr.mxu0 0.0
  %5264 = vmatpush1.msra.mxu0 0.0
  %5265 = vmatprep.subr.mxu0 0.0
  %5266 = vmatpush1.msra.mxu0 0.0
  %5267 = vmatprep.subr.mxu0 0.0
  %5268 = vmatpush1.msra.mxu0 0.0
  %5269 = vmatprep.subr.mxu0 0.0
  %5270 = vmatpush1.msra.mxu0 0.0
  %5271 = vmatprep.subr.mxu0 0.0
  %5272 = vmatpush1.msra.mxu0 0.0
  %5273 = vmatprep.subr.mxu0 0.0
  %5274 = vmatpush1.msra.mxu0 0.0
  %5275 = vmatprep.subr.mxu0 0.0
  %5276 = vmatpush1.msra.mxu0 0.0
  %5277 = vmatprep.subr.mxu0 0.0
  %5278 = vmatpush1.msra.mxu0 0.0
  %5279 = vmatprep.subr.mxu0 0.0
  %5280 = vmatpush1.msra.mxu0 0.0
  %5281 = vmatprep.subr.mxu0 0.0
  %5282 = vmatpush1.msra.mxu0 0.0
  %5283 = vmatprep.subr.mxu0 0.0
  %5284 = vmatpush1.msra.mxu0 0.0
  %5285 = vmatprep.subr.mxu0 0.0
  %5286 = vmatpush1.msra.mxu0 0.0
  %5287 = vmatprep.subr.mxu0 0.0
  %5288 = vmatpush1.msra.mxu0 0.0
  %5289 = vmatprep.subr.mxu0 0.0
  %5290 = vmatpush1.msra.mxu0 0.0
  %5291 = vmatprep.subr.mxu0 0.0
  %5292 = vmatpush1.msra.mxu0 0.0
  %5293 = vmatprep.subr.mxu0 0.0
  %5294 = vmatpush1.msra.mxu0 0.0
  %5295 = vmatprep.subr.mxu0 0.0
  %5296 = vmatpush1.msra.mxu0 0.0
  %5297 = vmatprep.subr.mxu0 0.0
  %5298 = vmatpush1.msra.mxu0 0.0
  %5299 = vmatprep.subr.mxu0 0.0
  %5300 = vmatpush1.msra.mxu0 0.0
  %5301 = vmatprep.subr.mxu0 0.0
  %5302 = vmatpush1.msra.mxu0 0.0
  %5303 = vmatprep.subr.mxu0 0.0
  %5304 = vmatpush1.msra.mxu0 0.0
  %5305 = vmatprep.subr.mxu0 0.0
  %5306 = vmatpush1.msra.mxu0 0.0
  %5307 = vmatprep.subr.mxu0 0.0
  %5308 = vmatpush1.msra.mxu0 0.0
  %5309 = vmatprep.subr.mxu0 0.0
  %5310 = vmatpush1.msra.mxu0 0.0
  %5311 = vmatprep.subr.mxu0 0.0
  %5312 = vmatpush1.msra.mxu0 0.0
  %5313 = vmatprep.subr.mxu0 0.0
  %5314 = vmatpush1.msra.mxu0 0.0
  %5315 = vmatprep.subr.mxu0 0.0
  %5316 = vmatpush1.msra.mxu0 0.0
  %5317 = vmatprep.mubr.f32.mxu0 0.0
  %5318 = vmatmul.mubr.f32.gmra.mrb[0].mxu0 %v3104
  %v5319 = vpop.f32.mrb[0].mxu0
  %v5320 = vadd.f32 %v5252, %v5319
  %v5321 = vpop.f32.mrb[0].mxu0
  %5322 = vmatprep.mubr.f32.mxu0 0.0
  %5323 = vmatmul.mubr.f32.gmra.mrb[0].mxu0 %v3107
  %v5324 = vpop.f32.mrb[0].mxu0
  %v5325 = vadd.f32 %v5252, %v5324
  %v5326 = vpop.f32.mrb[0].mxu0
  %5327 = vdwg.mxu0
  %v5329 = vsel %vm431, %v5152, 0
  %v5332 = vsel %vm431, %v5236, 0
  %5334 = vmatprep.subr.mxu0 0.0
  %5335 = vmatpush1.xpose.msra.mxu0 %v5332
  %5336 = vmatprep.subr.mxu0 0.0
  %5337 = vmatpush1.xpose.msra.mxu0 0.0
  %5338 = vmatprep.subr.mxu0 0.0
  %5339 = vmatpush1.xpose.msra.mxu0 0.0
  %5340 = vmatprep.subr.mxu0 0.0
  %5341 = vmatpush1.xpose.msra.mxu0 0.0
  %5342 = vmatprep.subr.mxu0 0.0
  %5343 = vmatpush1.xpose.msra.mxu0 0.0
  %5344 = vmatprep.subr.mxu0 0.0
  %5345 = vmatpush1.xpose.msra.mxu0 0.0
  %5346 = vmatprep.subr.mxu0 0.0
  %5347 = vmatpush1.xpose.msra.mxu0 0.0
  %5348 = vmatprep.subr.mxu0 0.0
  %5349 = vmatpush1.xpose.msra.mxu0 0.0
  %5350 = vmatprep.subr.mxu0 0.0
  %5351 = vmatpush1.xpose.msra.mxu0 0.0
  %5352 = vmatprep.subr.mxu0 0.0
  %5353 = vmatpush1.xpose.msra.mxu0 0.0
  %5354 = vmatprep.subr.mxu0 0.0
  %5355 = vmatpush1.xpose.msra.mxu0 0.0
  %5356 = vmatprep.subr.mxu0 0.0
  %5357 = vmatpush1.xpose.msra.mxu0 0.0
  %5358 = vmatprep.subr.mxu0 0.0
  %5359 = vmatpush1.xpose.msra.mxu0 0.0
  %5360 = vmatprep.subr.mxu0 0.0
  %5361 = vmatpush1.xpose.msra.mxu0 0.0
  %5362 = vmatprep.subr.mxu0 0.0
  %5363 = vmatpush1.xpose.msra.mxu0 0.0
  %5364 = vmatprep.subr.mxu0 0.0
  %5365 = vmatpush1.xpose.msra.mxu0 0.0
  %5366 = vmatprep.subr.mxu0 0.0
  %5367 = vmatpush1.xpose.msra.mxu0 0.0
  %5368 = vmatprep.subr.mxu0 0.0
  %5369 = vmatpush1.xpose.msra.mxu0 0.0
  %5370 = vmatprep.subr.mxu0 0.0
  %5371 = vmatpush1.xpose.msra.mxu0 0.0
  %5372 = vmatprep.subr.mxu0 0.0
  %5373 = vmatpush1.xpose.msra.mxu0 0.0
  %5374 = vmatprep.subr.mxu0 0.0
  %5375 = vmatpush1.xpose.msra.mxu0 0.0
  %5376 = vmatprep.subr.mxu0 0.0
  %5377 = vmatpush1.xpose.msra.mxu0 0.0
  %5378 = vmatprep.subr.mxu0 0.0
  %5379 = vmatpush1.xpose.msra.mxu0 0.0
  %5380 = vmatprep.subr.mxu0 0.0
  %5381 = vmatpush1.xpose.msra.mxu0 0.0
  %5382 = vmatprep.subr.mxu0 0.0
  %5383 = vmatpush1.xpose.msra.mxu0 0.0
  %5384 = vmatprep.subr.mxu0 0.0
  %5385 = vmatpush1.xpose.msra.mxu0 0.0
  %5386 = vmatprep.subr.mxu0 0.0
  %5387 = vmatpush1.xpose.msra.mxu0 0.0
  %5388 = vmatprep.subr.mxu0 0.0
  %5389 = vmatpush1.xpose.msra.mxu0 0.0
  %5390 = vmatprep.subr.mxu0 0.0
  %5391 = vmatpush1.xpose.msra.mxu0 0.0
  %5392 = vmatprep.subr.mxu0 0.0
  %5393 = vmatpush1.xpose.msra.mxu0 0.0
  %5394 = vmatprep.subr.mxu0 0.0
  %5395 = vmatpush1.xpose.msra.mxu0 0.0
  %5396 = vmatprep.subr.mxu0 0.0
  %5397 = vmatpush1.xpose.msra.mxu0 0.0
  %5398 = vmatprep.mubr.f32.mxu0 0.0
  %5399 = vmatmul.mubr.f32.gmra.mrb[0].mxu0 %v5329
  %v5400 = vpop.f32.mrb[0].mxu0
  %v5401 = vadd.f32 0.0, %v5400
  %v5402 = vpop.f32.mrb[0].mxu0
  %5403 = vdwg.mxu0
  %v5405 = vsel %vm431, %v5157, 0
  %v5408 = vsel %vm431, %v5241, 0
  %5410 = vmatprep.subr.mxu0 0.0
  %5411 = vmatpush1.xpose.msra.mxu0 %v5408
  %5412 = vmatprep.subr.mxu0 0.0
  %5413 = vmatpush1.xpose.msra.mxu0 0.0
  %5414 = vmatprep.subr.mxu0 0.0
  %5415 = vmatpush1.xpose.msra.mxu0 0.0
  %5416 = vmatprep.subr.mxu0 0.0
  %5417 = vmatpush1.xpose.msra.mxu0 0.0
  %5418 = vmatprep.subr.mxu0 0.0
  %5419 = vmatpush1.xpose.msra.mxu0 0.0
  %5420 = vmatprep.subr.mxu0 0.0
  %5421 = vmatpush1.xpose.msra.mxu0 0.0
  %5422 = vmatprep.subr.mxu0 0.0
  %5423 = vmatpush1.xpose.msra.mxu0 0.0
  %5424 = vmatprep.subr.mxu0 0.0
  %5425 = vmatpush1.xpose.msra.mxu0 0.0
  %5426 = vmatprep.subr.mxu0 0.0
  %5427 = vmatpush1.xpose.msra.mxu0 0.0
  %5428 = vmatprep.subr.mxu0 0.0
  %5429 = vmatpush1.xpose.msra.mxu0 0.0
  %5430 = vmatprep.subr.mxu0 0.0
  %5431 = vmatpush1.xpose.msra.mxu0 0.0
  %5432 = vmatprep.subr.mxu0 0.0
  %5433 = vmatpush1.xpose.msra.mxu0 0.0
  %5434 = vmatprep.subr.mxu0 0.0
  %5435 = vmatpush1.xpose.msra.mxu0 0.0
  %5436 = vmatprep.subr.mxu0 0.0
  %5437 = vmatpush1.xpose.msra.mxu0 0.0
  %5438 = vmatprep.subr.mxu0 0.0
  %5439 = vmatpush1.xpose.msra.mxu0 0.0
  %5440 = vmatprep.subr.mxu0 0.0
  %5441 = vmatpush1.xpose.msra.mxu0 0.0
  %5442 = vmatprep.subr.mxu0 0.0
  %5443 = vmatpush1.xpose.msra.mxu0 0.0
  %5444 = vmatprep.subr.mxu0 0.0
  %5445 = vmatpush1.xpose.msra.mxu0 0.0
  %5446 = vmatprep.subr.mxu0 0.0
  %5447 = vmatpush1.xpose.msra.mxu0 0.0
  %5448 = vmatprep.subr.mxu0 0.0
  %5449 = vmatpush1.xpose.msra.mxu0 0.0
  %5450 = vmatprep.subr.mxu0 0.0
  %5451 = vmatpush1.xpose.msra.mxu0 0.0
  %5452 = vmatprep.subr.mxu0 0.0
  %5453 = vmatpush1.xpose.msra.mxu0 0.0
  %5454 = vmatprep.subr.mxu0 0.0
  %5455 = vmatpush1.xpose.msra.mxu0 0.0
  %5456 = vmatprep.subr.mxu0 0.0
  %5457 = vmatpush1.xpose.msra.mxu0 0.0
  %5458 = vmatprep.subr.mxu0 0.0
  %5459 = vmatpush1.xpose.msra.mxu0 0.0
  %5460 = vmatprep.subr.mxu0 0.0
  %5461 = vmatpush1.xpose.msra.mxu0 0.0
  %5462 = vmatprep.subr.mxu0 0.0
  %5463 = vmatpush1.xpose.msra.mxu0 0.0
  %5464 = vmatprep.subr.mxu0 0.0
  %5465 = vmatpush1.xpose.msra.mxu0 0.0
  %5466 = vmatprep.subr.mxu0 0.0
  %5467 = vmatpush1.xpose.msra.mxu0 0.0
  %5468 = vmatprep.subr.mxu0 0.0
  %5469 = vmatpush1.xpose.msra.mxu0 0.0
  %5470 = vmatprep.subr.mxu0 0.0
  %5471 = vmatpush1.xpose.msra.mxu0 0.0
  %5472 = vmatprep.subr.mxu0 0.0
  %5473 = vmatpush1.xpose.msra.mxu0 0.0
  %5474 = vmatprep.mubr.f32.mxu0 0.0
  %5475 = vmatmul.mubr.f32.gmra.mrb[0].mxu0 %v5405
  %v5476 = vpop.f32.mrb[0].mxu0
  %v5477 = vadd.f32 0.0, %v5476
  %v5478 = vpop.f32.mrb[0].mxu0
  %5479 = vdwg.mxu0
  %v5480 = vsel %vm431, %v5401, -inf
  %5481 = vmax.xlane.f32.xlu0 %v5480
  %v5482 = vpop.xlane.xlu0 %5481
  %v5483 = vsel %vm431, %v5477, -inf
  %5484 = vmax.xlane.f32.xlu0 %v5483
  %v5485 = vpop.xlane.xlu0 %5484
  %v5486 = vsub.f32 %v5401, %v5482
  %v5487 = vsub.f32 %v5477, %v5485
  %v5488 = vmul.f32 %v5486, 1.442695
  %v5489 = vpow.pop %v5488
  %v5490 = vmul.f32 %v5487, 1.442695
  %v5491 = vpow.pop %v5490
  %v5492 = vsel %vm431, %v5489, 0.0
  %5493 = vadd.xlane.f32.xlu0 %v5492
  %v5494 = vpop.xlane.xlu0 %5493
  %v5495 = vsel %vm431, %v5491, 0.0
  %5496 = vadd.xlane.f32.xlu0 %v5495
  %v5497 = vpop.xlane.xlu0 %5496
  %v5498 = vrcp.pop %v5494
  %v5499 = vrcp.pop %v5497
  %v5500 = vmul.f32 %v5489, %v5498
  %v5501 = vmul.f32 %v5491, %v5499
  %v5503 = vsel %vm431, %v5500, 0
  %5505 = vmatprep.subr.mxu0 0.0
  %5506 = vmatpush1.msra.mxu0 %v5320
  %5507 = vmatprep.subr.mxu0 0.0
  %5508 = vmatpush1.msra.mxu0 0.0
  %5509 = vmatprep.subr.mxu0 0.0
  %5510 = vmatpush1.msra.mxu0 0.0
  %5511 = vmatprep.subr.mxu0 0.0
  %5512 = vmatpush1.msra.mxu0 0.0
  %5513 = vmatprep.subr.mxu0 0.0
  %5514 = vmatpush1.msra.mxu0 0.0
  %5515 = vmatprep.subr.mxu0 0.0
  %5516 = vmatpush1.msra.mxu0 0.0
  %5517 = vmatprep.subr.mxu0 0.0
  %5518 = vmatpush1.msra.mxu0 0.0
  %5519 = vmatprep.subr.mxu0 0.0
  %5520 = vmatpush1.msra.mxu0 0.0
  %5521 = vmatprep.subr.mxu0 0.0
  %5522 = vmatpush1.msra.mxu0 0.0
  %5523 = vmatprep.subr.mxu0 0.0
  %5524 = vmatpush1.msra.mxu0 0.0
  %5525 = vmatprep.subr.mxu0 0.0
  %5526 = vmatpush1.msra.mxu0 0.0
  %5527 = vmatprep.subr.mxu0 0.0
  %5528 = vmatpush1.msra.mxu0 0.0
  %5529 = vmatprep.subr.mxu0 0.0
  %5530 = vmatpush1.msra.mxu0 0.0
  %5531 = vmatprep.subr.mxu0 0.0
  %5532 = vmatpush1.msra.mxu0 0.0
  %5533 = vmatprep.subr.mxu0 0.0
  %5534 = vmatpush1.msra.mxu0 0.0
  %5535 = vmatprep.subr.mxu0 0.0
  %5536 = vmatpush1.msra.mxu0 0.0
  %5537 = vmatprep.subr.mxu0 0.0
  %5538 = vmatpush1.msra.mxu0 0.0
  %5539 = vmatprep.subr.mxu0 0.0
  %5540 = vmatpush1.msra.mxu0 0.0
  %5541 = vmatprep.subr.mxu0 0.0
  %5542 = vmatpush1.msra.mxu0 0.0
  %5543 = vmatprep.subr.mxu0 0.0
  %5544 = vmatpush1.msra.mxu0 0.0
  %5545 = vmatprep.subr.mxu0 0.0
  %5546 = vmatpush1.msra.mxu0 0.0
  %5547 = vmatprep.subr.mxu0 0.0
  %5548 = vmatpush1.msra.mxu0 0.0
  %5549 = vmatprep.subr.mxu0 0.0
  %5550 = vmatpush1.msra.mxu0 0.0
  %5551 = vmatprep.subr.mxu0 0.0
  %5552 = vmatpush1.msra.mxu0 0.0
  %5553 = vmatprep.subr.mxu0 0.0
  %5554 = vmatpush1.msra.mxu0 0.0
  %5555 = vmatprep.subr.mxu0 0.0
  %5556 = vmatpush1.msra.mxu0 0.0
  %5557 = vmatprep.subr.mxu0 0.0
  %5558 = vmatpush1.msra.mxu0 0.0
  %5559 = vmatprep.subr.mxu0 0.0
  %5560 = vmatpush1.msra.mxu0 0.0
  %5561 = vmatprep.subr.mxu0 0.0
  %5562 = vmatpush1.msra.mxu0 0.0
  %5563 = vmatprep.subr.mxu0 0.0
  %5564 = vmatpush1.msra.mxu0 0.0
  %5565 = vmatprep.subr.mxu0 0.0
  %5566 = vmatpush1.msra.mxu0 0.0
  %5567 = vmatprep.subr.mxu0 0.0
  %5568 = vmatpush1.msra.mxu0 0.0
  %5569 = vmatprep.mubr.f32.mxu0 0.0
  %5570 = vmatmul.mubr.f32.gmra.mrb[0].mxu0 %v5503
  %v5571 = vpop.f32.mrb[0].mxu0
  %v5572 = vadd.f32 0.0, %v5571
  %v5573 = vpop.f32.mrb[0].mxu0
  %5574 = vdwg.mxu0
  %v5576 = vsel %vm431, %v5501, 0
  %5578 = vmatprep.subr.mxu0 0.0
  %5579 = vmatpush1.msra.mxu0 %v5325
  %5580 = vmatprep.subr.mxu0 0.0
  %5581 = vmatpush1.msra.mxu0 0.0
  %5582 = vmatprep.subr.mxu0 0.0
  %5583 = vmatpush1.msra.mxu0 0.0
  %5584 = vmatprep.subr.mxu0 0.0
  %5585 = vmatpush1.msra.mxu0 0.0
  %5586 = vmatprep.subr.mxu0 0.0
  %5587 = vmatpush1.msra.mxu0 0.0
  %5588 = vmatprep.subr.mxu0 0.0
  %5589 = vmatpush1.msra.mxu0 0.0
  %5590 = vmatprep.subr.mxu0 0.0
  %5591 = vmatpush1.msra.mxu0 0.0
  %5592 = vmatprep.subr.mxu0 0.0
  %5593 = vmatpush1.msra.mxu0 0.0
  %5594 = vmatprep.subr.mxu0 0.0
  %5595 = vmatpush1.msra.mxu0 0.0
  %5596 = vmatprep.subr.mxu0 0.0
  %5597 = vmatpush1.msra.mxu0 0.0
  %5598 = vmatprep.subr.mxu0 0.0
  %5599 = vmatpush1.msra.mxu0 0.0
  %5600 = vmatprep.subr.mxu0 0.0
  %5601 = vmatpush1.msra.mxu0 0.0
  %5602 = vmatprep.subr.mxu0 0.0
  %5603 = vmatpush1.msra.mxu0 0.0
  %5604 = vmatprep.subr.mxu0 0.0
  %5605 = vmatpush1.msra.mxu0 0.0
  %5606 = vmatprep.subr.mxu0 0.0
  %5607 = vmatpush1.msra.mxu0 0.0
  %5608 = vmatprep.subr.mxu0 0.0
  %5609 = vmatpush1.msra.mxu0 0.0
  %5610 = vmatprep.subr.mxu0 0.0
  %5611 = vmatpush1.msra.mxu0 0.0
  %5612 = vmatprep.subr.mxu0 0.0
  %5613 = vmatpush1.msra.mxu0 0.0
  %5614 = vmatprep.subr.mxu0 0.0
  %5615 = vmatpush1.msra.mxu0 0.0
  %5616 = vmatprep.subr.mxu0 0.0
  %5617 = vmatpush1.msra.mxu0 0.0
  %5618 = vmatprep.subr.mxu0 0.0
  %5619 = vmatpush1.msra.mxu0 0.0
  %5620 = vmatprep.subr.mxu0 0.0
  %5621 = vmatpush1.msra.mxu0 0.0
  %5622 = vmatprep.subr.mxu0 0.0
  %5623 = vmatpush1.msra.mxu0 0.0
  %5624 = vmatprep.subr.mxu0 0.0
  %5625 = vmatpush1.msra.mxu0 0.0
  %5626 = vmatprep.subr.mxu0 0.0
  %5627 = vmatpush1.msra.mxu0 0.0
  %5628 = vmatprep.subr.mxu0 0.0
  %5629 = vmatpush1.msra.mxu0 0.0
  %5630 = vmatprep.subr.mxu0 0.0
  %5631 = vmatpush1.msra.mxu0 0.0
  %5632 = vmatprep.subr.mxu0 0.0
  %5633 = vmatpush1.msra.mxu0 0.0
  %5634 = vmatprep.subr.mxu0 0.0
  %5635 = vmatpush1.msra.mxu0 0.0
  %5636 = vmatprep.subr.mxu0 0.0
  %5637 = vmatpush1.msra.mxu0 0.0
  %5638 = vmatprep.subr.mxu0 0.0
  %5639 = vmatpush1.msra.mxu0 0.0
  %5640 = vmatprep.subr.mxu0 0.0
  %5641 = vmatpush1.msra.mxu0 0.0
  %5642 = vmatprep.mubr.f32.mxu0 0.0
  %5643 = vmatmul.mubr.f32.gmra.mrb[0].mxu0 %v5576
  %v5644 = vpop.f32.mrb[0].mxu0
  %v5645 = vadd.f32 0.0, %v5644
  %v5646 = vpop.f32.mrb[0].mxu0
  %5647 = vdwg.mxu0
  %s5648 = scalar_lea.vmem %s3, 56
  %v5649 = vld [vmem:[%s5648] sm:$0xff]
  %v5651 = vsel %vm431, %v5572, 0
  %v5654 = vsel %vm431, %v5645, 0
  %5656 = vmatprep.subr.mxu0 0.0
  %5657 = vmatpush1.msra.mxu0 %v5649
  %5658 = vmatprep.subr.mxu0 0.0
  %5659 = vmatpush1.msra.mxu0 0.0
  %5660 = vmatprep.subr.mxu0 0.0
  %5661 = vmatpush1.msra.mxu0 0.0
  %5662 = vmatprep.subr.mxu0 0.0
  %5663 = vmatpush1.msra.mxu0 0.0
  %5664 = vmatprep.subr.mxu0 0.0
  %5665 = vmatpush1.msra.mxu0 0.0
  %5666 = vmatprep.subr.mxu0 0.0
  %5667 = vmatpush1.msra.mxu0 0.0
  %5668 = vmatprep.subr.mxu0 0.0
  %5669 = vmatpush1.msra.mxu0 0.0
  %5670 = vmatprep.subr.mxu0 0.0
  %5671 = vmatpush1.msra.mxu0 0.0
  %5672 = vmatprep.subr.mxu0 0.0
  %5673 = vmatpush1.msra.mxu0 0.0
  %5674 = vmatprep.subr.mxu0 0.0
  %5675 = vmatpush1.msra.mxu0 0.0
  %5676 = vmatprep.subr.mxu0 0.0
  %5677 = vmatpush1.msra.mxu0 0.0
  %5678 = vmatprep.subr.mxu0 0.0
  %5679 = vmatpush1.msra.mxu0 0.0
  %5680 = vmatprep.subr.mxu0 0.0
  %5681 = vmatpush1.msra.mxu0 0.0
  %5682 = vmatprep.subr.mxu0 0.0
  %5683 = vmatpush1.msra.mxu0 0.0
  %5684 = vmatprep.subr.mxu0 0.0
  %5685 = vmatpush1.msra.mxu0 0.0
  %5686 = vmatprep.subr.mxu0 0.0
  %5687 = vmatpush1.msra.mxu0 0.0
  %5688 = vmatprep.subr.mxu0 0.0
  %5689 = vmatpush1.msra.mxu0 0.0
  %5690 = vmatprep.subr.mxu0 0.0
  %5691 = vmatpush1.msra.mxu0 0.0
  %5692 = vmatprep.subr.mxu0 0.0
  %5693 = vmatpush1.msra.mxu0 0.0
  %5694 = vmatprep.subr.mxu0 0.0
  %5695 = vmatpush1.msra.mxu0 0.0
  %5696 = vmatprep.subr.mxu0 0.0
  %5697 = vmatpush1.msra.mxu0 0.0
  %5698 = vmatprep.subr.mxu0 0.0
  %5699 = vmatpush1.msra.mxu0 0.0
  %5700 = vmatprep.subr.mxu0 0.0
  %5701 = vmatpush1.msra.mxu0 0.0
  %5702 = vmatprep.subr.mxu0 0.0
  %5703 = vmatpush1.msra.mxu0 0.0
  %5704 = vmatprep.subr.mxu0 0.0
  %5705 = vmatpush1.msra.mxu0 0.0
  %5706 = vmatprep.subr.mxu0 0.0
  %5707 = vmatpush1.msra.mxu0 0.0
  %5708 = vmatprep.subr.mxu0 0.0
  %5709 = vmatpush1.msra.mxu0 0.0
  %5710 = vmatprep.subr.mxu0 0.0
  %5711 = vmatpush1.msra.mxu0 0.0
  %5712 = vmatprep.subr.mxu0 0.0
  %5713 = vmatpush1.msra.mxu0 0.0
  %5714 = vmatprep.subr.mxu0 0.0
  %5715 = vmatpush1.msra.mxu0 0.0
  %5716 = vmatprep.subr.mxu0 0.0
  %5717 = vmatpush1.msra.mxu0 0.0
  %5718 = vmatprep.subr.mxu0 0.0
  %5719 = vmatpush1.msra.mxu0 0.0
  %5720 = vmatprep.mubr.f32.mxu0 0.0
  %5721 = vmatmul.mubr.f32.gmra.mrb[0].mxu0 %v5651
  %v5722 = vpop.f32.mrb[0].mxu0
  %v5723 = vadd.f32 0.0, %v5722
  %v5724 = vpop.f32.mrb[0].mxu0
  %5725 = vmatprep.mubr.f32.mxu0 0.0
  %5726 = vmatmul.mubr.f32.gmra.mrb[0].mxu0 %v5654
  %v5727 = vpop.f32.mrb[0].mxu0
  %v5728 = vadd.f32 0.0, %v5727
  %v5729 = vpop.f32.mrb[0].mxu0
  %5730 = vdwg.mxu0
  %v5731 = vadd.f32 %v5071, %v5723
  %v5732 = vadd.f32 %v5072, %v5728
  %v5733 = vld [vmem:[%s3090] sm:$0x1]
  %v5734 = vlaneseq
  %v5735 = vshrl.u32 %v5734, 7
  %v5736 = vsub.s32 0, %v5735
  %v5737 = vrot.slane %v5733, %v5736
  %v5738 = vadd.f32 %v5731, %v5737
  %v5739 = vadd.f32 %v5732, %v5737
  %v5740 = vadd.f32 %v5738, %v3088
  %v5741 = vadd.f32 %v5739, %v3089
  %v5742 = vld [vmem:[%s3090 + $0x1] sm:$0x1]
  %v5743 = vld [vmem:[%s3090 + $0x2] sm:$0x1]
  %v5744 = vsel %vm131, %v5740, 0.0
  %5745 = vadd.xlane.f32.xlu0 %v5744
  %v5746 = vpop.xlane.xlu0 %5745
  %v5747 = vsel %vm131, %v5741, 0.0
  %5748 = vadd.xlane.f32.xlu0 %v5747
  %v5749 = vpop.xlane.xlu0 %5748
  %v5750 = vmul.f32 %v5746, %v138
  %v5751 = vmul.f32 %v5749, %v138
  %v5752 = vsub.f32 %v5740, %v5750
  %v5753 = vsub.f32 %v5741, %v5751
  %v5754 = vmul.f32 %v5752, %v5752
  %v5755 = vmul.f32 %v5753, %v5753
  %v5756 = vsel %vm131, %v5754, 0.0
  %5757 = vadd.xlane.f32.xlu0 %v5756
  %v5758 = vpop.xlane.xlu0 %5757
  %v5759 = vsel %vm131, %v5755, 0.0
  %5760 = vadd.xlane.f32.xlu0 %v5759
  %v5761 = vpop.xlane.xlu0 %5760
  %v5762 = vmul.f32 %v5758, %v138
  %v5763 = vmul.f32 %v5761, %v138
  %v5764 = vadd.f32 %v5762, 1e-12
  %v5765 = vadd.f32 %v5763, 1e-12
  %v5766 = vrsqrt.pop %v5764
  %v5767 = vrsqrt.pop %v5765
  %v5768 = vmul.f32 %v5752, %v5766
  %v5769 = vmul.f32 %v5753, %v5767
  %v5770 = vlaneseq
  %v5771 = vshrl.u32 %v5770, 7
  %v5772 = vsub.s32 0, %v5771
  %v5773 = vrot.slane %v5742, %v5772
  %v5774 = vmul.f32 %v5768, %v5773
  %v5775 = vmul.f32 %v5769, %v5773
  %v5776 = vlaneseq
  %v5777 = vshrl.u32 %v5776, 7
  %v5778 = vsub.s32 0, %v5777
  %v5779 = vrot.slane %v5743, %v5778
  %v5780 = vadd.f32 %v5774, %v5779
  %v5781 = vadd.f32 %v5775, %v5779
  %s5782 = scalar_lea.vmem %s4, 96
  %v5783 = vld [vmem:[%s5782] sm:$0xff]
  %v5784 = vld [vmem:[%s5782 + $0x8] sm:$0xff]
  %v5785 = vld [vmem:[%s5782 + $0x10] sm:$0xff]
  %v5786 = vld [vmem:[%s5782 + $0x18] sm:$0xff]
  %v5787 = vld [vmem:[%s3090 + $0x3] sm:$0x1]
  %v5788 = vlaneseq
  %v5789 = vshrl.u32 %v5788, 7
  %v5790 = vsub.s32 0, %v5789
  %v5791 = vrot.slane %v5787, %v5790
  %v5793 = vsel %vm131, %v5780, 0
  %v5796 = vsel %vm131, %v5781, 0
  %5798 = vmatprep.subr.mxu0 0.0
  %5799 = vmatpush1.msra.mxu0 %v5783
  %5800 = vmatprep.subr.mxu0 0.0
  %5801 = vmatpush1.msra.mxu0 %v5784
  %5802 = vmatprep.subr.mxu0 0.0
  %5803 = vmatpush1.msra.mxu0 %v5785
  %5804 = vmatprep.subr.mxu0 0.0
  %5805 = vmatpush1.msra.mxu0 %v5786
  %5806 = vmatprep.subr.mxu0 0.0
  %5807 = vmatpush1.msra.mxu0 0.0
  %5808 = vmatprep.subr.mxu0 0.0
  %5809 = vmatpush1.msra.mxu0 0.0
  %5810 = vmatprep.subr.mxu0 0.0
  %5811 = vmatpush1.msra.mxu0 0.0
  %5812 = vmatprep.subr.mxu0 0.0
  %5813 = vmatpush1.msra.mxu0 0.0
  %5814 = vmatprep.subr.mxu0 0.0
  %5815 = vmatpush1.msra.mxu0 0.0
  %5816 = vmatprep.subr.mxu0 0.0
  %5817 = vmatpush1.msra.mxu0 0.0
  %5818 = vmatprep.subr.mxu0 0.0
  %5819 = vmatpush1.msra.mxu0 0.0
  %5820 = vmatprep.subr.mxu0 0.0
  %5821 = vmatpush1.msra.mxu0 0.0
  %5822 = vmatprep.subr.mxu0 0.0
  %5823 = vmatpush1.msra.mxu0 0.0
  %5824 = vmatprep.subr.mxu0 0.0
  %5825 = vmatpush1.msra.mxu0 0.0
  %5826 = vmatprep.subr.mxu0 0.0
  %5827 = vmatpush1.msra.mxu0 0.0
  %5828 = vmatprep.subr.mxu0 0.0
  %5829 = vmatpush1.msra.mxu0 0.0
  %5830 = vmatprep.subr.mxu0 0.0
  %5831 = vmatpush1.msra.mxu0 0.0
  %5832 = vmatprep.subr.mxu0 0.0
  %5833 = vmatpush1.msra.mxu0 0.0
  %5834 = vmatprep.subr.mxu0 0.0
  %5835 = vmatpush1.msra.mxu0 0.0
  %5836 = vmatprep.subr.mxu0 0.0
  %5837 = vmatpush1.msra.mxu0 0.0
  %5838 = vmatprep.subr.mxu0 0.0
  %5839 = vmatpush1.msra.mxu0 0.0
  %5840 = vmatprep.subr.mxu0 0.0
  %5841 = vmatpush1.msra.mxu0 0.0
  %5842 = vmatprep.subr.mxu0 0.0
  %5843 = vmatpush1.msra.mxu0 0.0
  %5844 = vmatprep.subr.mxu0 0.0
  %5845 = vmatpush1.msra.mxu0 0.0
  %5846 = vmatprep.subr.mxu0 0.0
  %5847 = vmatpush1.msra.mxu0 0.0
  %5848 = vmatprep.subr.mxu0 0.0
  %5849 = vmatpush1.msra.mxu0 0.0
  %5850 = vmatprep.subr.mxu0 0.0
  %5851 = vmatpush1.msra.mxu0 0.0
  %5852 = vmatprep.subr.mxu0 0.0
  %5853 = vmatpush1.msra.mxu0 0.0
  %5854 = vmatprep.subr.mxu0 0.0
  %5855 = vmatpush1.msra.mxu0 0.0
  %5856 = vmatprep.subr.mxu0 0.0
  %5857 = vmatpush1.msra.mxu0 0.0
  %5858 = vmatprep.subr.mxu0 0.0
  %5859 = vmatpush1.msra.mxu0 0.0
  %5860 = vmatprep.subr.mxu0 0.0
  %5861 = vmatpush1.msra.mxu0 0.0
  %5862 = vmatprep.mubr.f32.mxu0 0.0
  %5863 = vmatmul.mubr.f32.gmra.mrb[0].mxu0 %v5793
  %v5864 = vpop.f32.mrb[0].mxu0
  %v5865 = vadd.f32 %v5791, %v5864
  %v5866 = vpop.f32.mrb[0].mxu0
  %5867 = vmatprep.mubr.f32.mxu0 0.0
  %5868 = vmatmul.mubr.f32.gmra.mrb[0].mxu0 %v5796
  %v5869 = vpop.f32.mrb[0].mxu0
  %v5870 = vadd.f32 %v5791, %v5869
  %v5871 = vpop.f32.mrb[0].mxu0
  %5872 = vdwg.mxu0
  %v5873 = vmax.f32 %v5865, 0.0
  %v5874 = vmax.f32 %v5870, 0.0
  %v5875 = vld [vmem:[%s5782 + $0x20] sm:$0xff]
  %v5876 = vld [vmem:[%s5782 + $0x28] sm:$0xff]
  %v5877 = vld [vmem:[%s5782 + $0x30] sm:$0xff]
  %v5878 = vld [vmem:[%s5782 + $0x38] sm:$0xff]
  %v5879 = vld [vmem:[%s5782 + $0x40] sm:$0xff]
  %v5880 = vld [vmem:[%s5782 + $0x48] sm:$0xff]
  %v5881 = vld [vmem:[%s5782 + $0x50] sm:$0xff]
  %v5882 = vld [vmem:[%s5782 + $0x58] sm:$0xff]
  %v5883 = vld [vmem:[%s3090 + $0x4] sm:$0x1]
  %v5884 = vlaneseq
  %v5885 = vshrl.u32 %v5884, 7
  %v5886 = vsub.s32 0, %v5885
  %v5887 = vrot.slane %v5883, %v5886
  %v5889 = vsel %vm2966, %v5873, 0
  %v5892 = vsel %vm2966, %v5874, 0
  %5894 = vmatprep.subr.mxu0 0.0
  %5895 = vmatpush1.msra.mxu0 %v5875
  %5896 = vmatprep.subr.mxu0 0.0
  %5897 = vmatpush1.msra.mxu0 %v5876
  %5898 = vmatprep.subr.mxu0 0.0
  %5899 = vmatpush1.msra.mxu0 %v5877
  %5900 = vmatprep.subr.mxu0 0.0
  %5901 = vmatpush1.msra.mxu0 %v5878
  %5902 = vmatprep.subr.mxu0 0.0
  %5903 = vmatpush1.msra.mxu0 %v5879
  %5904 = vmatprep.subr.mxu0 0.0
  %5905 = vmatpush1.msra.mxu0 %v5880
  %5906 = vmatprep.subr.mxu0 0.0
  %5907 = vmatpush1.msra.mxu0 %v5881
  %5908 = vmatprep.subr.mxu0 0.0
  %5909 = vmatpush1.msra.mxu0 %v5882
  %5910 = vmatprep.subr.mxu0 0.0
  %5911 = vmatpush1.msra.mxu0 0.0
  %5912 = vmatprep.subr.mxu0 0.0
  %5913 = vmatpush1.msra.mxu0 0.0
  %5914 = vmatprep.subr.mxu0 0.0
  %5915 = vmatpush1.msra.mxu0 0.0
  %5916 = vmatprep.subr.mxu0 0.0
  %5917 = vmatpush1.msra.mxu0 0.0
  %5918 = vmatprep.subr.mxu0 0.0
  %5919 = vmatpush1.msra.mxu0 0.0
  %5920 = vmatprep.subr.mxu0 0.0
  %5921 = vmatpush1.msra.mxu0 0.0
  %5922 = vmatprep.subr.mxu0 0.0
  %5923 = vmatpush1.msra.mxu0 0.0
  %5924 = vmatprep.subr.mxu0 0.0
  %5925 = vmatpush1.msra.mxu0 0.0
  %5926 = vmatprep.subr.mxu0 0.0
  %5927 = vmatpush1.msra.mxu0 0.0
  %5928 = vmatprep.subr.mxu0 0.0
  %5929 = vmatpush1.msra.mxu0 0.0
  %5930 = vmatprep.subr.mxu0 0.0
  %5931 = vmatpush1.msra.mxu0 0.0
  %5932 = vmatprep.subr.mxu0 0.0
  %5933 = vmatpush1.msra.mxu0 0.0
  %5934 = vmatprep.subr.mxu0 0.0
  %5935 = vmatpush1.msra.mxu0 0.0
  %5936 = vmatprep.subr.mxu0 0.0
  %5937 = vmatpush1.msra.mxu0 0.0
  %5938 = vmatprep.subr.mxu0 0.0
  %5939 = vmatpush1.msra.mxu0 0.0
  %5940 = vmatprep.subr.mxu0 0.0
  %5941 = vmatpush1.msra.mxu0 0.0
  %5942 = vmatprep.subr.mxu0 0.0
  %5943 = vmatpush1.msra.mxu0 0.0
  %5944 = vmatprep.subr.mxu0 0.0
  %5945 = vmatpush1.msra.mxu0 0.0
  %5946 = vmatprep.subr.mxu0 0.0
  %5947 = vmatpush1.msra.mxu0 0.0
  %5948 = vmatprep.subr.mxu0 0.0
  %5949 = vmatpush1.msra.mxu0 0.0
  %5950 = vmatprep.subr.mxu0 0.0
  %5951 = vmatpush1.msra.mxu0 0.0
  %5952 = vmatprep.subr.mxu0 0.0
  %5953 = vmatpush1.msra.mxu0 0.0
  %5954 = vmatprep.subr.mxu0 0.0
  %5955 = vmatpush1.msra.mxu0 0.0
  %5956 = vmatprep.subr.mxu0 0.0
  %5957 = vmatpush1.msra.mxu0 0.0
  %5958 = vmatprep.mubr.f32.mxu0 0.0
  %5959 = vmatmul.mubr.f32.gmra.mrb[0].mxu0 %v5889
  %v5960 = vpop.f32.mrb[0].mxu0
  %v5961 = vadd.f32 %v5887, %v5960
  %v5962 = vpop.f32.mrb[0].mxu0
  %5963 = vmatprep.mubr.f32.mxu0 0.0
  %5964 = vmatmul.mubr.f32.gmra.mrb[0].mxu0 %v5892
  %v5965 = vpop.f32.mrb[0].mxu0
  %v5966 = vadd.f32 %v5887, %v5965
  %v5967 = vpop.f32.mrb[0].mxu0
  %5968 = vdwg.mxu0
  %v5969 = vadd.f32 %v5961, %v5780
  %v5970 = vadd.f32 %v5966, %v5781
  %v5971 = vld [vmem:[%s3090 + $0x5] sm:$0x1]
  %v5972 = vld [vmem:[%s3090 + $0x6] sm:$0x1]
  %v5973 = vsel %vm131, %v5969, 0.0
  %5974 = vadd.xlane.f32.xlu0 %v5973
  %v5975 = vpop.xlane.xlu0 %5974
  %v5976 = vsel %vm131, %v5970, 0.0
  %5977 = vadd.xlane.f32.xlu0 %v5976
  %v5978 = vpop.xlane.xlu0 %5977
  %v5979 = vmul.f32 %v5975, %v138
  %v5980 = vmul.f32 %v5978, %v138
  %v5981 = vsub.f32 %v5969, %v5979
  %v5982 = vsub.f32 %v5970, %v5980
  %v5983 = vmul.f32 %v5981, %v5981
  %v5984 = vmul.f32 %v5982, %v5982
  %v5985 = vsel %vm131, %v5983, 0.0
  %5986 = vadd.xlane.f32.xlu0 %v5985
  %v5987 = vpop.xlane.xlu0 %5986
  %v5988 = vsel %vm131, %v5984, 0.0
  %5989 = vadd.xlane.f32.xlu0 %v5988
  %v5990 = vpop.xlane.xlu0 %5989
  %v5991 = vmul.f32 %v5987, %v138
  %v5992 = vmul.f32 %v5990, %v138
  %v5993 = vadd.f32 %v5991, 1e-12
  %v5994 = vadd.f32 %v5992, 1e-12
  %v5995 = vrsqrt.pop %v5993
  %v5996 = vrsqrt.pop %v5994
  %v5997 = vmul.f32 %v5981, %v5995
  %v5998 = vmul.f32 %v5982, %v5996
  %v5999 = vlaneseq
  %v6000 = vshrl.u32 %v5999, 7
  %v6001 = vsub.s32 0, %v6000
  %v6002 = vrot.slane %v5971, %v6001
  %v6003 = vmul.f32 %v5997, %v6002
  %v6004 = vmul.f32 %v5998, %v6002
  %v6005 = vlaneseq
  %v6006 = vshrl.u32 %v6005, 7
  %v6007 = vsub.s32 0, %v6006
  %v6008 = vrot.slane %v5972, %v6007
  %v6009 = vadd.f32 %v6003, %v6008
  %v6010 = vadd.f32 %v6004, %v6008
  %v6011 = vld [vmem:[%s1 + $0x40] sm:$0xff]
  %v6012 = vld [vmem:[%s1 + $0x48] sm:$0xff]
  %v6013 = vld [vmem:[%s1 + $0x50] sm:$0xff]
  %v6014 = vld [vmem:[%s1 + $0x58] sm:$0xff]
  %v6015 = vld [vmem:[%s1 + $0x60] sm:$0x1]
  %v6016 = vlaneseq
  %v6017 = vshrl.u32 %v6016, 7
  %v6018 = vsub.s32 0, %v6017
  %v6019 = vrot.slane %v6015, %v6018
  %v6021 = vsel %vm131, %v6009, 0
  %v6024 = vsel %vm131, %v6010, 0
  %6026 = vmatprep.subr.mxu0 0.0
  %6027 = vmatpush1.msra.mxu0 %v6011
  %6028 = vmatprep.subr.mxu0 0.0
  %6029 = vmatpush1.msra.mxu0 %v6012
  %6030 = vmatprep.subr.mxu0 0.0
  %6031 = vmatpush1.msra.mxu0 %v6013
  %6032 = vmatprep.subr.mxu0 0.0
  %6033 = vmatpush1.msra.mxu0 %v6014
  %6034 = vmatprep.subr.mxu0 0.0
  %6035 = vmatpush1.msra.mxu0 0.0
  %6036 = vmatprep.subr.mxu0 0.0
  %6037 = vmatpush1.msra.mxu0 0.0
  %6038 = vmatprep.subr.mxu0 0.0
  %6039 = vmatpush1.msra.mxu0 0.0
  %6040 = vmatprep.subr.mxu0 0.0
  %6041 = vmatpush1.msra.mxu0 0.0
  %6042 = vmatprep.subr.mxu0 0.0
  %6043 = vmatpush1.msra.mxu0 0.0
  %6044 = vmatprep.subr.mxu0 0.0
  %6045 = vmatpush1.msra.mxu0 0.0
  %6046 = vmatprep.subr.mxu0 0.0
  %6047 = vmatpush1.msra.mxu0 0.0
  %6048 = vmatprep.subr.mxu0 0.0
  %6049 = vmatpush1.msra.mxu0 0.0
  %6050 = vmatprep.subr.mxu0 0.0
  %6051 = vmatpush1.msra.mxu0 0.0
  %6052 = vmatprep.subr.mxu0 0.0
  %6053 = vmatpush1.msra.mxu0 0.0
  %6054 = vmatprep.subr.mxu0 0.0
  %6055 = vmatpush1.msra.mxu0 0.0
  %6056 = vmatprep.subr.mxu0 0.0
  %6057 = vmatpush1.msra.mxu0 0.0
  %6058 = vmatprep.subr.mxu0 0.0
  %6059 = vmatpush1.msra.mxu0 0.0
  %6060 = vmatprep.subr.mxu0 0.0
  %6061 = vmatpush1.msra.mxu0 0.0
  %6062 = vmatprep.subr.mxu0 0.0
  %6063 = vmatpush1.msra.mxu0 0.0
  %6064 = vmatprep.subr.mxu0 0.0
  %6065 = vmatpush1.msra.mxu0 0.0
  %6066 = vmatprep.subr.mxu0 0.0
  %6067 = vmatpush1.msra.mxu0 0.0
  %6068 = vmatprep.subr.mxu0 0.0
  %6069 = vmatpush1.msra.mxu0 0.0
  %6070 = vmatprep.subr.mxu0 0.0
  %6071 = vmatpush1.msra.mxu0 0.0
  %6072 = vmatprep.subr.mxu0 0.0
  %6073 = vmatpush1.msra.mxu0 0.0
  %6074 = vmatprep.subr.mxu0 0.0
  %6075 = vmatpush1.msra.mxu0 0.0
  %6076 = vmatprep.subr.mxu0 0.0
  %6077 = vmatpush1.msra.mxu0 0.0
  %6078 = vmatprep.subr.mxu0 0.0
  %6079 = vmatpush1.msra.mxu0 0.0
  %6080 = vmatprep.subr.mxu0 0.0
  %6081 = vmatpush1.msra.mxu0 0.0
  %6082 = vmatprep.subr.mxu0 0.0
  %6083 = vmatpush1.msra.mxu0 0.0
  %6084 = vmatprep.subr.mxu0 0.0
  %6085 = vmatpush1.msra.mxu0 0.0
  %6086 = vmatprep.subr.mxu0 0.0
  %6087 = vmatpush1.msra.mxu0 0.0
  %6088 = vmatprep.subr.mxu0 0.0
  %6089 = vmatpush1.msra.mxu0 0.0
  %6090 = vmatprep.mubr.f32.mxu0 0.0
  %6091 = vmatmul.mubr.f32.gmra.mrb[0].mxu0 %v6021
  %v6092 = vpop.f32.mrb[0].mxu0
  %v6093 = vadd.f32 %v6019, %v6092
  %v6094 = vpop.f32.mrb[0].mxu0
  %6095 = vmatprep.mubr.f32.mxu0 0.0
  %6096 = vmatmul.mubr.f32.gmra.mrb[0].mxu0 %v6024
  %v6097 = vpop.f32.mrb[0].mxu0
  %v6098 = vadd.f32 %v6019, %v6097
  %v6099 = vpop.f32.mrb[0].mxu0
  %6100 = vdwg.mxu0
  %vm6101 = vcmask 31744
  %v6102 = vsel %vm6101, %v6093, -inf
  %6103 = vmax.xlane.f32.xlu0 %v6102
  %v6104 = vpop.xlane.xlu0 %6103
  %v6105 = vsel %vm6101, %v6098, -inf
  %6106 = vmax.xlane.f32.xlu0 %v6105
  %v6107 = vpop.xlane.xlu0 %6106
  %v6108 = vsub.f32 %v6093, %v6104
  %v6109 = vsub.f32 %v6098, %v6107
  %v6110 = vmul.f32 %v6108, 1.442695
  %v6111 = vpow.pop %v6110
  %v6112 = vmul.f32 %v6109, 1.442695
  %v6113 = vpow.pop %v6112
  %v6114 = vsel %vm6101, %v6111, 0.0
  %6115 = vadd.xlane.f32.xlu0 %v6114
  %v6116 = vpop.xlane.xlu0 %6115
  %v6117 = vsel %vm6101, %v6113, 0.0
  %6118 = vadd.xlane.f32.xlu0 %v6117
  %v6119 = vpop.xlane.xlu0 %6118
  %v6120 = vrcp.pop %v6116
  %v6121 = vmul.f32 %v6111, %v6120
  %v6122 = vrcp.pop %v6119
  %v6123 = vmul.f32 %v6113, %v6122
  %6124 = vst.msk [vmem:[%s6] sm:$0xff] %vm6101, %v6121
  %6125 = vst.msk [vmem:[%s6 + $0x8] sm:$0xff] %vm6101, %v6123
  // Predicated region
  $region26: #{bert_forward.1} parent=0 // pred_check
    _
  $region27: #{bert_forward.1} parent=0 // pred_check_branch
    %6127 = sbr.rel (0) target = $region29
  $region28: #{bert_forward.1} parent=0 // pred_region
    _
  $region29: #{bert_forward.1} parent=0 // pred_fallthru
    _
  // Predicated region
  $region30: #{bert_forward.1} parent=0 // pred_check
    _
  $region31: #{bert_forward.1} parent=0 // pred_check_branch
    %6129 = sbr.rel (0) target = $region33
  $region32: #{bert_forward.1} parent=0 // pred_region
    _
  $region33: #{bert_forward.1} parent=0 // pred_fallthru
    _

</llo_original>
